<compile_context>
chip_gen: v6e
topology: v6e:2x2x1
jax: 0.10.0
libtpu: 0.0.40
codegen_flags: <defaults>
</compile_context>

<pallas_src>
import functools

import jax
import jax.numpy as jnp
from jax.experimental import pallas as pl
from jax.experimental.pallas import tpu as pltpu


def _round_up(x, m):
    return ((x + m - 1) // m) * m


# ----------------------------------------------------------------------------
# Fused kernel: conv3x3+BN+ReLU (x3) + fused 1x1 heads, per batch element.
# ----------------------------------------------------------------------------
def _fused_head_kernel(mask_ref, x0_ref, w0_ref, s0_ref, b0_ref,
                       w1_ref, s1_ref, b1_ref,
                       w2_ref, s2_ref, b2_ref,
                       wh_ref, bh_ref,
                       o_ref,
                       pbuf_ref,
                       *, H, W, margin):
    # mask_ref: (HWp, 1) f32   1.0 on the real HxW interior of the padded grid
    # x0_ref:   (1, HWp, 9*Cin) layer-0 im2col over the padded grid, bf16
    # w0_ref:   (9*Cin, 64)     layer-0 weight, bf16
    # w1/w2:    (9, 64, 64)     tap = dh*3+dw, bf16
    # s*/b*:    (1, 64)         folded BN scale/bias, f32
    # wh_ref:   (64, C_pad)     fused zero-padded 1x1 head weight, bf16
    # bh_ref:   (1, C_pad)      fused zero-padded head bias, f32
    # o_ref:    (1, HWp, C_pad) head output over the padded grid, f32
    # pbuf_ref: (HWp + 2*margin, 64) flat padded activation buffer, bf16
    Wp = W + 2
    HWp = (H + 2) * Wp
    C = w1_ref.shape[-1]
    cdt = pbuf_ref.dtype

    mask = mask_ref[...] > 0.5  # (HWp, 1) bool, True on interior positions

    # Zero only the guard margins (once). The padded-image region of the
    # buffer is fully overwritten below, so no full clear is needed, and
    # uninitialized VMEM can never leak into the interior.
    pbuf_ref[pl.ds(0, margin), :] = jnp.zeros((margin, C), cdt)
    pbuf_ref[pl.ds(margin + HWp, margin), :] = jnp.zeros((margin, C), cdt)

    # --- layer 0: 3x3 conv as ONE whole-(padded)-image matmul, K = 9*Cin ----
    y = jnp.dot(x0_ref[0], w0_ref[...], preferred_element_type=jnp.float32)
    y = jnp.maximum(y * s0_ref[...] + b0_ref[...], 0.0)
    y = jnp.where(mask, y, 0.0)                 # enforce zero border ring
    pbuf_ref[pl.ds(margin, HWp), :] = y.astype(cdt)

    # --- layers 1 & 2: 9 statically shifted whole-image matmuls -------------
    def conv3x3_bn_relu(w_ref, s_ref, b_ref):
        acc = None
        for dh in range(3):
            for dw in range(3):
                start = margin + (dh - 1) * Wp + (dw - 1)   # static, >= 0
                tap = pbuf_ref[pl.ds(start, HWp), :]        # (HWp, C) bf16
                part = jnp.dot(tap, w_ref[dh * 3 + dw],
                               preferred_element_type=jnp.float32)
                acc = part if acc is None else acc + part
        return jnp.maximum(acc * s_ref[...] + b_ref[...], 0.0)  # (HWp, C) f32

    y = conv3x3_bn_relu(w1_ref, s1_ref, b1_ref)
    y = jnp.where(mask, y, 0.0)
    pbuf_ref[pl.ds(margin, HWp), :] = y.astype(cdt)

    y = conv3x3_bn_relu(w2_ref, s2_ref, b2_ref)   # border rows discarded later

    # --- fused 1x1 heads: one lane-dense matmul + bias ----------------------
    out = jnp.dot(y.astype(cdt), wh_ref[...],
                  preferred_element_type=jnp.float32) + bh_ref[...]
    o_ref[0] = out.astype(o_ref.dtype)


def fused_head_call(mask, x0, w0, s0, b0, w1, s1, b1, w2, s2, b2, wh, bh,
                    *, H, W):
    N, HWp, K0 = x0.shape
    C = w1.shape[-1]
    C_pad = wh.shape[-1]
    # Margin must cover the largest tap shift (W+3); round up to the bf16
    # sublane tile so the big interior stores are sublane-aligned.
    margin = _round_up(W + 3, 16)
    kernel = functools.partial(_fused_head_kernel, H=H, W=W, margin=margin)
    return pl.pallas_call(
        kernel,
        out_shape=jax.ShapeDtypeStruct((N, HWp, C_pad), jnp.float32),
        grid=(N,),
        in_specs=[
            pl.BlockSpec((HWp, 1), lambda n: (0, 0)),         # interior mask
            pl.BlockSpec((1, HWp, K0), lambda n: (n, 0, 0)),  # x0 (im2col)
            pl.BlockSpec((K0, C), lambda n: (0, 0)),          # w0
            pl.BlockSpec((1, C), lambda n: (0, 0)),           # scale0
            pl.BlockSpec((1, C), lambda n: (0, 0)),           # bias0
            pl.BlockSpec((9, C, C), lambda n: (0, 0, 0)),     # w1
            pl.BlockSpec((1, C), lambda n: (0, 0)),           # scale1
            pl.BlockSpec((1, C), lambda n: (0, 0)),           # bias1
            pl.BlockSpec((9, C, C), lambda n: (0, 0, 0)),     # w2
            pl.BlockSpec((1, C), lambda n: (0, 0)),           # scale2
            pl.BlockSpec((1, C), lambda n: (0, 0)),           # bias2
            pl.BlockSpec((C, C_pad), lambda n: (0, 0)),       # fused head W
            pl.BlockSpec((1, C_pad), lambda n: (0, 0)),       # fused head b
        ],
        out_specs=pl.BlockSpec((1, HWp, C_pad), lambda n: (n, 0, 0)),
        scratch_shapes=[pltpu.VMEM((HWp + 2 * margin, C), jnp.bfloat16)],
        compiler_params=pltpu.CompilerParams(
            dimension_semantics=("parallel",)),
    )(mask, x0, w0, s0, b0, w1, s1, b1, w2, s2, b2, wh, bh)


# ----------------------------------------------------------------------------
# Parameter construction (deterministic, synthetic).
# ----------------------------------------------------------------------------
def init_params(key, num_filters, num_class, num_anchor_per_loc,
                box_code_size, num_direction_bins,
                encode_background_as_zeros=True):
    num_cls = num_anchor_per_loc * (
        num_class if encode_background_as_zeros else num_class + 1)
    eps = 1e-5
    params = {}
    cin = num_filters
    for i in range(3):
        key, kw, kg, kb, km, kv = jax.random.split(key, 6)
        fan_in = cin * 9
        w = jax.random.normal(kw, (3, 3, cin, 64), jnp.float32) / jnp.sqrt(
            jnp.float32(fan_in))
        gamma = 1.0 + 0.1 * jax.random.normal(kg, (64,), jnp.float32)
        beta = 0.1 * jax.random.normal(kb, (64,), jnp.float32)
        mean = 0.1 * jax.random.normal(km, (64,), jnp.float32)
        var = jnp.abs(jax.random.normal(kv, (64,), jnp.float32)) + 0.5
        scale = gamma / jnp.sqrt(var + eps)       # inference-mode BN, folded
        bias = beta - mean * scale
        params[f"w{i}"] = w
        params[f"scale{i}"] = scale
        params[f"bias{i}"] = bias
        cin = 64

    def head(key, cout):
        kw, kb = jax.random.split(key)
        w = jax.random.normal(kw, (64, cout), jnp.float32) / jnp.sqrt(64.0)
        b = 0.1 * jax.random.normal(kb, (cout,), jnp.float32)
        return w, b

    key, k1, k2, k3 = jax.random.split(key, 4)
    # Head output-channel ordering matches PyTorch's (anchor, per-anchor-k)
    # factorization: channel index = a * k + c.
    params["w_box"], params["b_box"] = head(
        k1, num_anchor_per_loc * box_code_size)
    params["w_cls"], params["b_cls"] = head(k2, num_cls)
    params["w_dir"], params["b_dir"] = head(
        k3, num_anchor_per_loc * num_direction_bins)
    return params


# ----------------------------------------------------------------------------
# Forward pass matching SmallObjectHead.forward (BN in inference mode).
# ----------------------------------------------------------------------------
@functools.partial(jax.jit, static_argnames=(
    "num_class", "num_anchor_per_loc", "box_code_size", "num_direction_bins"))
def small_object_head_forward(x_nchw, params, *, num_class,
                              num_anchor_per_loc, box_code_size,
                              num_direction_bins):
    x = jnp.transpose(x_nchw, (0, 2, 3, 1)).astype(jnp.float32)  # NCHW -> NHWC
    N, H, W, Cin = x.shape
    Hp, Wp = H + 2, W + 2
    HWp = Hp * Wp

    # Layer-0 im2col over the PADDED (Hp x Wp) output grid: the kernel keeps
    # activations in a flat zero-bordered layout so the later 3x3 convs are
    # just 9 statically shifted row slices of one VMEM buffer.
    x_pad2 = jnp.pad(x, ((0, 0), (2, 2), (2, 2), (0, 0)))
    cols = [x_pad2[:, dh:dh + Hp, dw:dw + Wp, :]
            for dh in range(3) for dw in range(3)]
    x0 = jnp.concatenate(cols, axis=-1).reshape(N, HWp, 9 * Cin)
    x0 = x0.astype(jnp.bfloat16)

    # Interior mask over the padded grid (1.0 inside the real HxW image).
    rr = jnp.arange(Hp)
    cc = jnp.arange(Wp)
    m2 = (((rr >= 1) & (rr <= H))[:, None]
          & ((cc >= 1) & (cc <= W))[None, :])
    mask = m2.reshape(HWp, 1).astype(jnp.float32)

    mm = jnp.bfloat16  # MXU operand dtype (f32 accumulation inside the kernel)
    w0 = params["w0"].reshape(9 * Cin, 64).astype(mm)
    w1 = params["w1"].reshape(9, 64, 64).astype(mm)
    w2 = params["w2"].reshape(9, 64, 64).astype(mm)
    s = [params[f"scale{i}"].reshape(1, 64).astype(jnp.float32)
         for i in range(3)]
    b = [params[f"bias{i}"].reshape(1, 64).astype(jnp.float32)
         for i in range(3)]

    # Fused 1x1 heads, zero-padded to a lane-dense output width.
    wh = jnp.concatenate(
        [params["w_box"], params["w_cls"], params["w_dir"]], axis=1)
    bh = jnp.concatenate(
        [params["b_box"], params["b_cls"], params["b_dir"]], axis=0)
    C_total = wh.shape[1]
    C_pad = _round_up(C_total, 128)
    wh_p = jnp.pad(wh, ((0, 0), (0, C_pad - C_total))).astype(mm)
    bh_p = jnp.pad(bh, (0, C_pad - C_total)).reshape(1, C_pad).astype(
        jnp.float32)

    heads = fused_head_call(mask, x0, w0, s[0], b[0], w1, s[1], b[1],
                            w2, s[2], b[2], wh_p, bh_p, H=H, W=W)
    # Drop border rows of the padded grid and the lane padding.
    heads = heads.reshape(N, Hp, Wp, C_pad)[:, 1:H + 1, 1:W + 1, :C_total]

    A = num_anchor_per_loc
    n_box = A * box_code_size
    n_cls = params["w_cls"].shape[1]
    box = heads[..., :n_box]
    cls_ = heads[..., n_box:n_box + n_cls]
    dirp = heads[..., n_box + n_cls:]

    def head_reshape(y, k):
        # matches: view(N, A, k, H, W).permute(0,1,3,4,2).view(N, -1, k)
        y = y.reshape(N, H, W, A, k)
        y = jnp.transpose(y, (0, 3, 1, 2, 4))  # (N, A, H, W, k)
        return y.reshape(N, A * H * W, k)

    return {
        "box_preds": head_reshape(box, box_code_size),
        "cls_preds": head_reshape(cls_, num_class),
        "dir_cls_preds": head_reshape(dirp, num_direction_bins),
    }


if __name__ == "__main__":
    # Module hyper-parameters (small, consistent with the constructor).
    num_filters = 4
    num_class = 3
    num_anchor_per_loc = 2
    box_code_size = 7
    num_direction_bins = 2

    key = jax.random.PRNGKey(0)
    key, kx, kp = jax.random.split(key, 3)
    x = jax.random.normal(kx, (2, num_filters, 16, 16), jnp.float32)  # NCHW

    params = init_params(kp, num_filters, num_class, num_anchor_per_loc,
                         box_code_size, num_direction_bins,
                         encode_background_as_zeros=True)

    out = small_object_head_forward(
        x, params,
        num_class=num_class,
        num_anchor_per_loc=num_anchor_per_loc,
        box_code_size=box_code_size,
        num_direction_bins=num_direction_bins)
    out = jax.block_until_ready(out)

    N, _, H, W = x.shape
    assert out["box_preds"].shape == (N, num_anchor_per_loc * H * W,
                                      box_code_size)
    assert out["cls_preds"].shape == (N, num_anchor_per_loc * H * W, num_class)
    assert out["dir_cls_preds"].shape == (N, num_anchor_per_loc * H * W,
                                          num_direction_bins)
    assert bool(jnp.all(jnp.isfinite(out["box_preds"])))
    assert bool(jnp.all(jnp.isfinite(out["cls_preds"])))
    assert bool(jnp.all(jnp.isfinite(out["dir_cls_preds"])))
    print("KERNEL_OK")
</pallas_src>

<mosaic_0001>
module attributes {stable_mosaic.version = 11 : i64} {
  func.func @_fused_head_kernel(%arg0: i32, %arg1: memref<324x1xf32, #tpu.memory_space<vmem>>, %arg2: memref<1x324x36xbf16, #tpu.memory_space<vmem>>, %arg3: memref<36x64xbf16, #tpu.memory_space<vmem>>, %arg4: memref<1x64xf32, #tpu.memory_space<vmem>>, %arg5: memref<1x64xf32, #tpu.memory_space<vmem>>, %arg6: memref<9x64x64xbf16, #tpu.memory_space<vmem>>, %arg7: memref<1x64xf32, #tpu.memory_space<vmem>>, %arg8: memref<1x64xf32, #tpu.memory_space<vmem>>, %arg9: memref<9x64x64xbf16, #tpu.memory_space<vmem>>, %arg10: memref<1x64xf32, #tpu.memory_space<vmem>>, %arg11: memref<1x64xf32, #tpu.memory_space<vmem>>, %arg12: memref<64x128xbf16, #tpu.memory_space<vmem>>, %arg13: memref<1x128xf32, #tpu.memory_space<vmem>>, %arg14: memref<1x324x128xf32, #tpu.memory_space<vmem>>, %arg15: memref<388x64xbf16, #tpu.memory_space<vmem>>) attributes {dimension_semantics = [#tpu.dimension_semantics<parallel>], iteration_bounds = array<i64: 2>, scalar_prefetch = 0 : i64, scratch_operands = 1 : i64, tpu.core_type = #tpu.core_type<tc>, window_params = [{pipeline_mode = #tpu.pipeline_mode<synchronous>, transform_indices = @transform_0, window_bounds = array<i64: 324, 1>}, {transform_indices = @transform_1, window_bounds = array<i64: 1, 324, 36>}, {pipeline_mode = #tpu.pipeline_mode<synchronous>, transform_indices = @transform_2, window_bounds = array<i64: 36, 64>}, {pipeline_mode = #tpu.pipeline_mode<synchronous>, transform_indices = @transform_3, window_bounds = array<i64: 1, 64>}, {pipeline_mode = #tpu.pipeline_mode<synchronous>, transform_indices = @transform_4, window_bounds = array<i64: 1, 64>}, {pipeline_mode = #tpu.pipeline_mode<synchronous>, transform_indices = @transform_5, window_bounds = array<i64: 9, 64, 64>}, {pipeline_mode = #tpu.pipeline_mode<synchronous>, transform_indices = @transform_6, window_bounds = array<i64: 1, 64>}, {pipeline_mode = #tpu.pipeline_mode<synchronous>, transform_indices = @transform_7, window_bounds = array<i64: 1, 64>}, {pipeline_mode = #tpu.pipeline_mode<synchronous>, transform_indices = @transform_8, window_bounds = array<i64: 9, 64, 64>}, {pipeline_mode = #tpu.pipeline_mode<synchronous>, transform_indices = @transform_9, window_bounds = array<i64: 1, 64>}, {pipeline_mode = #tpu.pipeline_mode<synchronous>, transform_indices = @transform_10, window_bounds = array<i64: 1, 64>}, {pipeline_mode = #tpu.pipeline_mode<synchronous>, transform_indices = @transform_11, window_bounds = array<i64: 64, 128>}, {pipeline_mode = #tpu.pipeline_mode<synchronous>, transform_indices = @transform_12, window_bounds = array<i64: 1, 128>}, {transform_indices = @transform_13, window_bounds = array<i64: 1, 324, 128>}]} {
    %c0 = arith.constant 0 : index
    %c0_0 = arith.constant 0 : index
    %0 = vector.load %arg1[%c0, %c0_0] : memref<324x1xf32, #tpu.memory_space<vmem>>, vector<324x1xf32>
    %cst = arith.constant 5.000000e-01 : f32
    %1 = vector.broadcast %cst : f32 to vector<324x1xf32>
    %2 = arith.cmpf ogt, %0, %1 : vector<324x1xf32>
    %cst_1 = arith.constant 0.000000e+00 : bf16
    %3 = vector.broadcast %cst_1 : bf16 to vector<32x64xbf16>
    %c0_2 = arith.constant 0 : index
    %c0_3 = arith.constant 0 : index
    %4 = vector.load %arg15[%c0_2, %c0_3] : memref<388x64xbf16, #tpu.memory_space<vmem>>, vector<32x64xbf16>
    tpu.vector_store %arg15[%c0_2, %c0_3], %3 {strides = array<i32>} : memref<388x64xbf16, #tpu.memory_space<vmem>>, vector<32x64xbf16>,
    %cst_4 = arith.constant 0.000000e+00 : bf16
    %5 = vector.broadcast %cst_4 : bf16 to vector<32x64xbf16>
    %c356 = arith.constant 356 : index
    %c0_5 = arith.constant 0 : index
    %6 = vector.load %arg15[%c356, %c0_5] : memref<388x64xbf16, #tpu.memory_space<vmem>>, vector<32x64xbf16>
    tpu.vector_store %arg15[%c356, %c0_5], %5 {strides = array<i32>} : memref<388x64xbf16, #tpu.memory_space<vmem>>, vector<32x64xbf16>,
    %c0_6 = arith.constant 0 : index
    %c0_7 = arith.constant 0 : index
    %c0_8 = arith.constant 0 : index
    %7 = vector.load %arg2[%c0_6, %c0_7, %c0_8] : memref<1x324x36xbf16, #tpu.memory_space<vmem>>, vector<1x324x36xbf16>
    %8 = vector.shape_cast %7 : vector<1x324x36xbf16> to vector<324x36xbf16>
    %c0_9 = arith.constant 0 : index
    %c0_10 = arith.constant 0 : index
    %9 = vector.load %arg3[%c0_9, %c0_10] : memref<36x64xbf16, #tpu.memory_space<vmem>>, vector<36x64xbf16>
    %cst_11 = arith.constant dense<0.000000e+00> : vector<324x64xf32>
    %10 = tpu.matmul %8, %9, %cst_11 {dimension_numbers = #tpu.dot_dimension_numbers<[1], [0], [0], [1], [0, 0, 1, 1], [], []>} : vector<324x36xbf16>, vector<36x64xbf16>, vector<324x64xf32> -> vector<324x64xf32>
    %c0_12 = arith.constant 0 : index
    %c0_13 = arith.constant 0 : index
    %11 = vector.load %arg4[%c0_12, %c0_13] : memref<1x64xf32, #tpu.memory_space<vmem>>, vector<1x64xf32>
    %12 = vector.broadcast %11 : vector<1x64xf32> to vector<324x64xf32>
    %13 = arith.mulf %10, %12 : vector<324x64xf32>
    %c0_14 = arith.constant 0 : index
    %c0_15 = arith.constant 0 : index
    %14 = vector.load %arg5[%c0_14, %c0_15] : memref<1x64xf32, #tpu.memory_space<vmem>>, vector<1x64xf32>
    %15 = vector.broadcast %14 : vector<1x64xf32> to vector<324x64xf32>
    %16 = arith.addf %13, %15 : vector<324x64xf32>
    %cst_16 = arith.constant 0.000000e+00 : f32
    %17 = vector.broadcast %cst_16 : f32 to vector<324x64xf32>
    %18 = arith.maximumf %16, %17 : vector<324x64xf32>
    %cst_17 = arith.constant 0.000000e+00 : f32
    %19 = vector.shape_cast %2 : vector<324x1xi1> to vector<324x1xi1>
    %20 = vector.broadcast %19 : vector<324x1xi1> to vector<324x64xi1>
    %21 = vector.broadcast %cst_17 : f32 to vector<324x64xf32>
    %22 = arith.select %20, %18, %21 : vector<324x64xi1>, vector<324x64xf32>
    %23 = arith.truncf %22 : vector<324x64xf32> to vector<324x64xbf16>
    %c32 = arith.constant 32 : index
    %c0_18 = arith.constant 0 : index
    %24 = vector.load %arg15[%c32, %c0_18] : memref<388x64xbf16, #tpu.memory_space<vmem>>, vector<324x64xbf16>
    tpu.vector_store %arg15[%c32, %c0_18], %23 {strides = array<i32>} : memref<388x64xbf16, #tpu.memory_space<vmem>>, vector<324x64xbf16>,
    %c13 = arith.constant 13 : index
    %c0_19 = arith.constant 0 : index
    %25 = vector.load %arg15[%c13, %c0_19] : memref<388x64xbf16, #tpu.memory_space<vmem>>, vector<324x64xbf16>
    %c0_20 = arith.constant 0 : index
    %c0_21 = arith.constant 0 : index
    %c0_22 = arith.constant 0 : index
    %26 = vector.load %arg6[%c0_20, %c0_21, %c0_22] : memref<9x64x64xbf16, #tpu.memory_space<vmem>>, vector<1x64x64xbf16>
    %27 = vector.shape_cast %26 : vector<1x64x64xbf16> to vector<64x64xbf16>
    %cst_23 = arith.constant dense<0.000000e+00> : vector<324x64xf32>
    %28 = tpu.matmul %25, %27, %cst_23 {dimension_numbers = #tpu.dot_dimension_numbers<[1], [0], [0], [1], [0, 0, 1, 1], [], []>} : vector<324x64xbf16>, vector<64x64xbf16>, vector<324x64xf32> -> vector<324x64xf32>
    %c14 = arith.constant 14 : index
    %c0_24 = arith.constant 0 : index
    %29 = vector.load %arg15[%c14, %c0_24] : memref<388x64xbf16, #tpu.memory_space<vmem>>, vector<324x64xbf16>
    %c1 = arith.constant 1 : index
    %c0_25 = arith.constant 0 : index
    %c0_26 = arith.constant 0 : index
    %30 = vector.load %arg6[%c1, %c0_25, %c0_26] : memref<9x64x64xbf16, #tpu.memory_space<vmem>>, vector<1x64x64xbf16>
    %31 = vector.shape_cast %30 : vector<1x64x64xbf16> to vector<64x64xbf16>
    %cst_27 = arith.constant dense<0.000000e+00> : vector<324x64xf32>
    %32 = tpu.matmul %29, %31, %cst_27 {dimension_numbers = #tpu.dot_dimension_numbers<[1], [0], [0], [1], [0, 0, 1, 1], [], []>} : vector<324x64xbf16>, vector<64x64xbf16>, vector<324x64xf32> -> vector<324x64xf32>
    %33 = arith.addf %28, %32 : vector<324x64xf32>
    %c15 = arith.constant 15 : index
    %c0_28 = arith.constant 0 : index
    %34 = vector.load %arg15[%c15, %c0_28] : memref<388x64xbf16, #tpu.memory_space<vmem>>, vector<324x64xbf16>
    %c2 = arith.constant 2 : index
    %c0_29 = arith.constant 0 : index
    %c0_30 = arith.constant 0 : index
    %35 = vector.load %arg6[%c2, %c0_29, %c0_30] : memref<9x64x64xbf16, #tpu.memory_space<vmem>>, vector<1x64x64xbf16>
    %36 = vector.shape_cast %35 : vector<1x64x64xbf16> to vector<64x64xbf16>
    %cst_31 = arith.constant dense<0.000000e+00> : vector<324x64xf32>
    %37 = tpu.matmul %34, %36, %cst_31 {dimension_numbers = #tpu.dot_dimension_numbers<[1], [0], [0], [1], [0, 0, 1, 1], [], []>} : vector<324x64xbf16>, vector<64x64xbf16>, vector<324x64xf32> -> vector<324x64xf32>
    %38 = arith.addf %33, %37 : vector<324x64xf32>
    %c31 = arith.constant 31 : index
    %c0_32 = arith.constant 0 : index
    %39 = vector.load %arg15[%c31, %c0_32] : memref<388x64xbf16, #tpu.memory_space<vmem>>, vector<324x64xbf16>
    %c3 = arith.constant 3 : index
    %c0_33 = arith.constant 0 : index
    %c0_34 = arith.constant 0 : index
    %40 = vector.load %arg6[%c3, %c0_33, %c0_34] : memref<9x64x64xbf16, #tpu.memory_space<vmem>>, vector<1x64x64xbf16>
    %41 = vector.shape_cast %40 : vector<1x64x64xbf16> to vector<64x64xbf16>
    %cst_35 = arith.constant dense<0.000000e+00> : vector<324x64xf32>
    %42 = tpu.matmul %39, %41, %cst_35 {dimension_numbers = #tpu.dot_dimension_numbers<[1], [0], [0], [1], [0, 0, 1, 1], [], []>} : vector<324x64xbf16>, vector<64x64xbf16>, vector<324x64xf32> -> vector<324x64xf32>
    %43 = arith.addf %38, %42 : vector<324x64xf32>
    %c32_36 = arith.constant 32 : index
    %c0_37 = arith.constant 0 : index
    %44 = vector.load %arg15[%c32_36, %c0_37] : memref<388x64xbf16, #tpu.memory_space<vmem>>, vector<324x64xbf16>
    %c4 = arith.constant 4 : index
    %c0_38 = arith.constant 0 : index
    %c0_39 = arith.constant 0 : index
    %45 = vector.load %arg6[%c4, %c0_38, %c0_39] : memref<9x64x64xbf16, #tpu.memory_space<vmem>>, vector<1x64x64xbf16>
    %46 = vector.shape_cast %45 : vector<1x64x64xbf16> to vector<64x64xbf16>
    %cst_40 = arith.constant dense<0.000000e+00> : vector<324x64xf32>
    %47 = tpu.matmul %44, %46, %cst_40 {dimension_numbers = #tpu.dot_dimension_numbers<[1], [0], [0], [1], [0, 0, 1, 1], [], []>} : vector<324x64xbf16>, vector<64x64xbf16>, vector<324x64xf32> -> vector<324x64xf32>
    %48 = arith.addf %43, %47 : vector<324x64xf32>
    %c33 = arith.constant 33 : index
    %c0_41 = arith.constant 0 : index
    %49 = vector.load %arg15[%c33, %c0_41] : memref<388x64xbf16, #tpu.memory_space<vmem>>, vector<324x64xbf16>
    %c5 = arith.constant 5 : index
    %c0_42 = arith.constant 0 : index
    %c0_43 = arith.constant 0 : index
    %50 = vector.load %arg6[%c5, %c0_42, %c0_43] : memref<9x64x64xbf16, #tpu.memory_space<vmem>>, vector<1x64x64xbf16>
    %51 = vector.shape_cast %50 : vector<1x64x64xbf16> to vector<64x64xbf16>
    %cst_44 = arith.constant dense<0.000000e+00> : vector<324x64xf32>
    %52 = tpu.matmul %49, %51, %cst_44 {dimension_numbers = #tpu.dot_dimension_numbers<[1], [0], [0], [1], [0, 0, 1, 1], [], []>} : vector<324x64xbf16>, vector<64x64xbf16>, vector<324x64xf32> -> vector<324x64xf32>
    %53 = arith.addf %48, %52 : vector<324x64xf32>
    %c49 = arith.constant 49 : index
    %c0_45 = arith.constant 0 : index
    %54 = vector.load %arg15[%c49, %c0_45] : memref<388x64xbf16, #tpu.memory_space<vmem>>, vector<324x64xbf16>
    %c6 = arith.constant 6 : index
    %c0_46 = arith.constant 0 : index
    %c0_47 = arith.constant 0 : index
    %55 = vector.load %arg6[%c6, %c0_46, %c0_47] : memref<9x64x64xbf16, #tpu.memory_space<vmem>>, vector<1x64x64xbf16>
    %56 = vector.shape_cast %55 : vector<1x64x64xbf16> to vector<64x64xbf16>
    %cst_48 = arith.constant dense<0.000000e+00> : vector<324x64xf32>
    %57 = tpu.matmul %54, %56, %cst_48 {dimension_numbers = #tpu.dot_dimension_numbers<[1], [0], [0], [1], [0, 0, 1, 1], [], []>} : vector<324x64xbf16>, vector<64x64xbf16>, vector<324x64xf32> -> vector<324x64xf32>
    %58 = arith.addf %53, %57 : vector<324x64xf32>
    %c50 = arith.constant 50 : index
    %c0_49 = arith.constant 0 : index
    %59 = vector.load %arg15[%c50, %c0_49] : memref<388x64xbf16, #tpu.memory_space<vmem>>, vector<324x64xbf16>
    %c7 = arith.constant 7 : index
    %c0_50 = arith.constant 0 : index
    %c0_51 = arith.constant 0 : index
    %60 = vector.load %arg6[%c7, %c0_50, %c0_51] : memref<9x64x64xbf16, #tpu.memory_space<vmem>>, vector<1x64x64xbf16>
    %61 = vector.shape_cast %60 : vector<1x64x64xbf16> to vector<64x64xbf16>
    %cst_52 = arith.constant dense<0.000000e+00> : vector<324x64xf32>
    %62 = tpu.matmul %59, %61, %cst_52 {dimension_numbers = #tpu.dot_dimension_numbers<[1], [0], [0], [1], [0, 0, 1, 1], [], []>} : vector<324x64xbf16>, vector<64x64xbf16>, vector<324x64xf32> -> vector<324x64xf32>
    %63 = arith.addf %58, %62 : vector<324x64xf32>
    %c51 = arith.constant 51 : index
    %c0_53 = arith.constant 0 : index
    %64 = vector.load %arg15[%c51, %c0_53] : memref<388x64xbf16, #tpu.memory_space<vmem>>, vector<324x64xbf16>
    %c8 = arith.constant 8 : index
    %c0_54 = arith.constant 0 : index
    %c0_55 = arith.constant 0 : index
    %65 = vector.load %arg6[%c8, %c0_54, %c0_55] : memref<9x64x64xbf16, #tpu.memory_space<vmem>>, vector<1x64x64xbf16>
    %66 = vector.shape_cast %65 : vector<1x64x64xbf16> to vector<64x64xbf16>
    %cst_56 = arith.constant dense<0.000000e+00> : vector<324x64xf32>
    %67 = tpu.matmul %64, %66, %cst_56 {dimension_numbers = #tpu.dot_dimension_numbers<[1], [0], [0], [1], [0, 0, 1, 1], [], []>} : vector<324x64xbf16>, vector<64x64xbf16>, vector<324x64xf32> -> vector<324x64xf32>
    %68 = arith.addf %63, %67 : vector<324x64xf32>
    %c0_57 = arith.constant 0 : index
    %c0_58 = arith.constant 0 : index
    %69 = vector.load %arg7[%c0_57, %c0_58] : memref<1x64xf32, #tpu.memory_space<vmem>>, vector<1x64xf32>
    %70 = vector.broadcast %69 : vector<1x64xf32> to vector<324x64xf32>
    %71 = arith.mulf %68, %70 : vector<324x64xf32>
    %c0_59 = arith.constant 0 : index
    %c0_60 = arith.constant 0 : index
    %72 = vector.load %arg8[%c0_59, %c0_60] : memref<1x64xf32, #tpu.memory_space<vmem>>, vector<1x64xf32>
    %73 = vector.broadcast %72 : vector<1x64xf32> to vector<324x64xf32>
    %74 = arith.addf %71, %73 : vector<324x64xf32>
    %cst_61 = arith.constant 0.000000e+00 : f32
    %75 = vector.broadcast %cst_61 : f32 to vector<324x64xf32>
    %76 = arith.maximumf %74, %75 : vector<324x64xf32>
    %cst_62 = arith.constant 0.000000e+00 : f32
    %77 = vector.shape_cast %2 : vector<324x1xi1> to vector<324x1xi1>
    %78 = vector.broadcast %77 : vector<324x1xi1> to vector<324x64xi1>
    %79 = vector.broadcast %cst_62 : f32 to vector<324x64xf32>
    %80 = arith.select %78, %76, %79 : vector<324x64xi1>, vector<324x64xf32>
    %81 = arith.truncf %80 : vector<324x64xf32> to vector<324x64xbf16>
    %c32_63 = arith.constant 32 : index
    %c0_64 = arith.constant 0 : index
    %82 = vector.load %arg15[%c32_63, %c0_64] : memref<388x64xbf16, #tpu.memory_space<vmem>>, vector<324x64xbf16>
    tpu.vector_store %arg15[%c32_63, %c0_64], %81 {strides = array<i32>} : memref<388x64xbf16, #tpu.memory_space<vmem>>, vector<324x64xbf16>,
    %c13_65 = arith.constant 13 : index
    %c0_66 = arith.constant 0 : index
    %83 = vector.load %arg15[%c13_65, %c0_66] : memref<388x64xbf16, #tpu.memory_space<vmem>>, vector<324x64xbf16>
    %c0_67 = arith.constant 0 : index
    %c0_68 = arith.constant 0 : index
    %c0_69 = arith.constant 0 : index
    %84 = vector.load %arg9[%c0_67, %c0_68, %c0_69] : memref<9x64x64xbf16, #tpu.memory_space<vmem>>, vector<1x64x64xbf16>
    %85 = vector.shape_cast %84 : vector<1x64x64xbf16> to vector<64x64xbf16>
    %cst_70 = arith.constant dense<0.000000e+00> : vector<324x64xf32>
    %86 = tpu.matmul %83, %85, %cst_70 {dimension_numbers = #tpu.dot_dimension_numbers<[1], [0], [0], [1], [0, 0, 1, 1], [], []>} : vector<324x64xbf16>, vector<64x64xbf16>, vector<324x64xf32> -> vector<324x64xf32>
    %c14_71 = arith.constant 14 : index
    %c0_72 = arith.constant 0 : index
    %87 = vector.load %arg15[%c14_71, %c0_72] : memref<388x64xbf16, #tpu.memory_space<vmem>>, vector<324x64xbf16>
    %c1_73 = arith.constant 1 : index
    %c0_74 = arith.constant 0 : index
    %c0_75 = arith.constant 0 : index
    %88 = vector.load %arg9[%c1_73, %c0_74, %c0_75] : memref<9x64x64xbf16, #tpu.memory_space<vmem>>, vector<1x64x64xbf16>
    %89 = vector.shape_cast %88 : vector<1x64x64xbf16> to vector<64x64xbf16>
    %cst_76 = arith.constant dense<0.000000e+00> : vector<324x64xf32>
    %90 = tpu.matmul %87, %89, %cst_76 {dimension_numbers = #tpu.dot_dimension_numbers<[1], [0], [0], [1], [0, 0, 1, 1], [], []>} : vector<324x64xbf16>, vector<64x64xbf16>, vector<324x64xf32> -> vector<324x64xf32>
    %91 = arith.addf %86, %90 : vector<324x64xf32>
    %c15_77 = arith.constant 15 : index
    %c0_78 = arith.constant 0 : index
    %92 = vector.load %arg15[%c15_77, %c0_78] : memref<388x64xbf16, #tpu.memory_space<vmem>>, vector<324x64xbf16>
    %c2_79 = arith.constant 2 : index
    %c0_80 = arith.constant 0 : index
    %c0_81 = arith.constant 0 : index
    %93 = vector.load %arg9[%c2_79, %c0_80, %c0_81] : memref<9x64x64xbf16, #tpu.memory_space<vmem>>, vector<1x64x64xbf16>
    %94 = vector.shape_cast %93 : vector<1x64x64xbf16> to vector<64x64xbf16>
    %cst_82 = arith.constant dense<0.000000e+00> : vector<324x64xf32>
    %95 = tpu.matmul %92, %94, %cst_82 {dimension_numbers = #tpu.dot_dimension_numbers<[1], [0], [0], [1], [0, 0, 1, 1], [], []>} : vector<324x64xbf16>, vector<64x64xbf16>, vector<324x64xf32> -> vector<324x64xf32>
    %96 = arith.addf %91, %95 : vector<324x64xf32>
    %c31_83 = arith.constant 31 : index
    %c0_84 = arith.constant 0 : index
    %97 = vector.load %arg15[%c31_83, %c0_84] : memref<388x64xbf16, #tpu.memory_space<vmem>>, vector<324x64xbf16>
    %c3_85 = arith.constant 3 : index
    %c0_86 = arith.constant 0 : index
    %c0_87 = arith.constant 0 : index
    %98 = vector.load %arg9[%c3_85, %c0_86, %c0_87] : memref<9x64x64xbf16, #tpu.memory_space<vmem>>, vector<1x64x64xbf16>
    %99 = vector.shape_cast %98 : vector<1x64x64xbf16> to vector<64x64xbf16>
    %cst_88 = arith.constant dense<0.000000e+00> : vector<324x64xf32>
    %100 = tpu.matmul %97, %99, %cst_88 {dimension_numbers = #tpu.dot_dimension_numbers<[1], [0], [0], [1], [0, 0, 1, 1], [], []>} : vector<324x64xbf16>, vector<64x64xbf16>, vector<324x64xf32> -> vector<324x64xf32>
    %101 = arith.addf %96, %100 : vector<324x64xf32>
    %c32_89 = arith.constant 32 : index
    %c0_90 = arith.constant 0 : index
    %102 = vector.load %arg15[%c32_89, %c0_90] : memref<388x64xbf16, #tpu.memory_space<vmem>>, vector<324x64xbf16>
    %c4_91 = arith.constant 4 : index
    %c0_92 = arith.constant 0 : index
    %c0_93 = arith.constant 0 : index
    %103 = vector.load %arg9[%c4_91, %c0_92, %c0_93] : memref<9x64x64xbf16, #tpu.memory_space<vmem>>, vector<1x64x64xbf16>
    %104 = vector.shape_cast %103 : vector<1x64x64xbf16> to vector<64x64xbf16>
    %cst_94 = arith.constant dense<0.000000e+00> : vector<324x64xf32>
    %105 = tpu.matmul %102, %104, %cst_94 {dimension_numbers = #tpu.dot_dimension_numbers<[1], [0], [0], [1], [0, 0, 1, 1], [], []>} : vector<324x64xbf16>, vector<64x64xbf16>, vector<324x64xf32> -> vector<324x64xf32>
    %106 = arith.addf %101, %105 : vector<324x64xf32>
    %c33_95 = arith.constant 33 : index
    %c0_96 = arith.constant 0 : index
    %107 = vector.load %arg15[%c33_95, %c0_96] : memref<388x64xbf16, #tpu.memory_space<vmem>>, vector<324x64xbf16>
    %c5_97 = arith.constant 5 : index
    %c0_98 = arith.constant 0 : index
    %c0_99 = arith.constant 0 : index
    %108 = vector.load %arg9[%c5_97, %c0_98, %c0_99] : memref<9x64x64xbf16, #tpu.memory_space<vmem>>, vector<1x64x64xbf16>
    %109 = vector.shape_cast %108 : vector<1x64x64xbf16> to vector<64x64xbf16>
    %cst_100 = arith.constant dense<0.000000e+00> : vector<324x64xf32>
    %110 = tpu.matmul %107, %109, %cst_100 {dimension_numbers = #tpu.dot_dimension_numbers<[1], [0], [0], [1], [0, 0, 1, 1], [], []>} : vector<324x64xbf16>, vector<64x64xbf16>, vector<324x64xf32> -> vector<324x64xf32>
    %111 = arith.addf %106, %110 : vector<324x64xf32>
    %c49_101 = arith.constant 49 : index
    %c0_102 = arith.constant 0 : index
    %112 = vector.load %arg15[%c49_101, %c0_102] : memref<388x64xbf16, #tpu.memory_space<vmem>>, vector<324x64xbf16>
    %c6_103 = arith.constant 6 : index
    %c0_104 = arith.constant 0 : index
    %c0_105 = arith.constant 0 : index
    %113 = vector.load %arg9[%c6_103, %c0_104, %c0_105] : memref<9x64x64xbf16, #tpu.memory_space<vmem>>, vector<1x64x64xbf16>
    %114 = vector.shape_cast %113 : vector<1x64x64xbf16> to vector<64x64xbf16>
    %cst_106 = arith.constant dense<0.000000e+00> : vector<324x64xf32>
    %115 = tpu.matmul %112, %114, %cst_106 {dimension_numbers = #tpu.dot_dimension_numbers<[1], [0], [0], [1], [0, 0, 1, 1], [], []>} : vector<324x64xbf16>, vector<64x64xbf16>, vector<324x64xf32> -> vector<324x64xf32>
    %116 = arith.addf %111, %115 : vector<324x64xf32>
    %c50_107 = arith.constant 50 : index
    %c0_108 = arith.constant 0 : index
    %117 = vector.load %arg15[%c50_107, %c0_108] : memref<388x64xbf16, #tpu.memory_space<vmem>>, vector<324x64xbf16>
    %c7_109 = arith.constant 7 : index
    %c0_110 = arith.constant 0 : index
    %c0_111 = arith.constant 0 : index
    %118 = vector.load %arg9[%c7_109, %c0_110, %c0_111] : memref<9x64x64xbf16, #tpu.memory_space<vmem>>, vector<1x64x64xbf16>
    %119 = vector.shape_cast %118 : vector<1x64x64xbf16> to vector<64x64xbf16>
    %cst_112 = arith.constant dense<0.000000e+00> : vector<324x64xf32>
    %120 = tpu.matmul %117, %119, %cst_112 {dimension_numbers = #tpu.dot_dimension_numbers<[1], [0], [0], [1], [0, 0, 1, 1], [], []>} : vector<324x64xbf16>, vector<64x64xbf16>, vector<324x64xf32> -> vector<324x64xf32>
    %121 = arith.addf %116, %120 : vector<324x64xf32>
    %c51_113 = arith.constant 51 : index
    %c0_114 = arith.constant 0 : index
    %122 = vector.load %arg15[%c51_113, %c0_114] : memref<388x64xbf16, #tpu.memory_space<vmem>>, vector<324x64xbf16>
    %c8_115 = arith.constant 8 : index
    %c0_116 = arith.constant 0 : index
    %c0_117 = arith.constant 0 : index
    %123 = vector.load %arg9[%c8_115, %c0_116, %c0_117] : memref<9x64x64xbf16, #tpu.memory_space<vmem>>, vector<1x64x64xbf16>
    %124 = vector.shape_cast %123 : vector<1x64x64xbf16> to vector<64x64xbf16>
    %cst_118 = arith.constant dense<0.000000e+00> : vector<324x64xf32>
    %125 = tpu.matmul %122, %124, %cst_118 {dimension_numbers = #tpu.dot_dimension_numbers<[1], [0], [0], [1], [0, 0, 1, 1], [], []>} : vector<324x64xbf16>, vector<64x64xbf16>, vector<324x64xf32> -> vector<324x64xf32>
    %126 = arith.addf %121, %125 : vector<324x64xf32>
    %c0_119 = arith.constant 0 : index
    %c0_120 = arith.constant 0 : index
    %127 = vector.load %arg10[%c0_119, %c0_120] : memref<1x64xf32, #tpu.memory_space<vmem>>, vector<1x64xf32>
    %128 = vector.broadcast %127 : vector<1x64xf32> to vector<324x64xf32>
    %129 = arith.mulf %126, %128 : vector<324x64xf32>
    %c0_121 = arith.constant 0 : index
    %c0_122 = arith.constant 0 : index
    %130 = vector.load %arg11[%c0_121, %c0_122] : memref<1x64xf32, #tpu.memory_space<vmem>>, vector<1x64xf32>
    %131 = vector.broadcast %130 : vector<1x64xf32> to vector<324x64xf32>
    %132 = arith.addf %129, %131 : vector<324x64xf32>
    %cst_123 = arith.constant 0.000000e+00 : f32
    %133 = vector.broadcast %cst_123 : f32 to vector<324x64xf32>
    %134 = arith.maximumf %132, %133 : vector<324x64xf32>
    %135 = arith.truncf %134 : vector<324x64xf32> to vector<324x64xbf16>
    %c0_124 = arith.constant 0 : index
    %c0_125 = arith.constant 0 : index
    %136 = vector.load %arg12[%c0_124, %c0_125] : memref<64x128xbf16, #tpu.memory_space<vmem>>, vector<64x128xbf16>
    %cst_126 = arith.constant dense<0.000000e+00> : vector<324x128xf32>
    %137 = tpu.matmul %135, %136, %cst_126 {dimension_numbers = #tpu.dot_dimension_numbers<[1], [0], [0], [1], [0, 0, 1, 1], [], []>} : vector<324x64xbf16>, vector<64x128xbf16>, vector<324x128xf32> -> vector<324x128xf32>
    %c0_127 = arith.constant 0 : index
    %c0_128 = arith.constant 0 : index
    %138 = vector.load %arg13[%c0_127, %c0_128] : memref<1x128xf32, #tpu.memory_space<vmem>>, vector<1x128xf32>
    %139 = vector.broadcast %138 : vector<1x128xf32> to vector<324x128xf32>
    %140 = arith.addf %137, %139 : vector<324x128xf32>
    %c0_129 = arith.constant 0 : index
    %c0_130 = arith.constant 0 : index
    %c0_131 = arith.constant 0 : index
    %141 = vector.load %arg14[%c0_129, %c0_130, %c0_131] : memref<1x324x128xf32, #tpu.memory_space<vmem>>, vector<1x324x128xf32>
    %142 = vector.shape_cast %141 : vector<1x324x128xf32> to vector<324x128xf32>
    %143 = vector.shape_cast %140 : vector<324x128xf32> to vector<1x324x128xf32>
    tpu.vector_store %arg14[%c0_129, %c0_130, %c0_131], %143 {strides = array<i32>} : memref<1x324x128xf32, #tpu.memory_space<vmem>>, vector<1x324x128xf32>,
    return
  }
  func.func @transform_0(%arg0: i32) -> (i32, i32) {
    %c0_i32 = arith.constant 0 : i32
    %c0_i32_0 = arith.constant 0 : i32
    %c0_i32_1 = arith.constant 0 : i32
    return %c0_i32, %c0_i32_0 : i32, i32
  }
  func.func @transform_1(%arg0: i32) -> (i32, i32, i32) {
    %c0_i32 = arith.constant 0 : i32
    %c0_i32_0 = arith.constant 0 : i32
    %c0_i32_1 = arith.constant 0 : i32
    return %arg0, %c0_i32, %c0_i32_0 : i32, i32, i32
  }
  func.func @transform_2(%arg0: i32) -> (i32, i32) {
    %c0_i32 = arith.constant 0 : i32
    %c0_i32_0 = arith.constant 0 : i32
    %c0_i32_1 = arith.constant 0 : i32
    return %c0_i32, %c0_i32_0 : i32, i32
  }
  func.func @transform_3(%arg0: i32) -> (i32, i32) {
    %c0_i32 = arith.constant 0 : i32
    %c0_i32_0 = arith.constant 0 : i32
    %c0_i32_1 = arith.constant 0 : i32
    return %c0_i32, %c0_i32_0 : i32, i32
  }
  func.func @transform_4(%arg0: i32) -> (i32, i32) {
    %c0_i32 = arith.constant 0 : i32
    %c0_i32_0 = arith.constant 0 : i32
    %c0_i32_1 = arith.constant 0 : i32
    return %c0_i32, %c0_i32_0 : i32, i32
  }
  func.func @transform_5(%arg0: i32) -> (i32, i32, i32) {
    %c0_i32 = arith.constant 0 : i32
    %c0_i32_0 = arith.constant 0 : i32
    %c0_i32_1 = arith.constant 0 : i32
    %c0_i32_2 = arith.constant 0 : i32
    return %c0_i32, %c0_i32_0, %c0_i32_1 : i32, i32, i32
  }
  func.func @transform_6(%arg0: i32) -> (i32, i32) {
    %c0_i32 = arith.constant 0 : i32
    %c0_i32_0 = arith.constant 0 : i32
    %c0_i32_1 = arith.constant 0 : i32
    return %c0_i32, %c0_i32_0 : i32, i32
  }
  func.func @transform_7(%arg0: i32) -> (i32, i32) {
    %c0_i32 = arith.constant 0 : i32
    %c0_i32_0 = arith.constant 0 : i32
    %c0_i32_1 = arith.constant 0 : i32
    return %c0_i32, %c0_i32_0 : i32, i32
  }
  func.func @transform_8(%arg0: i32) -> (i32, i32, i32) {
    %c0_i32 = arith.constant 0 : i32
    %c0_i32_0 = arith.constant 0 : i32
    %c0_i32_1 = arith.constant 0 : i32
    %c0_i32_2 = arith.constant 0 : i32
    return %c0_i32, %c0_i32_0, %c0_i32_1 : i32, i32, i32
  }
  func.func @transform_9(%arg0: i32) -> (i32, i32) {
    %c0_i32 = arith.constant 0 : i32
    %c0_i32_0 = arith.constant 0 : i32
    %c0_i32_1 = arith.constant 0 : i32
    return %c0_i32, %c0_i32_0 : i32, i32
  }
  func.func @transform_10(%arg0: i32) -> (i32, i32) {
    %c0_i32 = arith.constant 0 : i32
    %c0_i32_0 = arith.constant 0 : i32
    %c0_i32_1 = arith.constant 0 : i32
    return %c0_i32, %c0_i32_0 : i32, i32
  }
  func.func @transform_11(%arg0: i32) -> (i32, i32) {
    %c0_i32 = arith.constant 0 : i32
    %c0_i32_0 = arith.constant 0 : i32
    %c0_i32_1 = arith.constant 0 : i32
    return %c0_i32, %c0_i32_0 : i32, i32
  }
  func.func @transform_12(%arg0: i32) -> (i32, i32) {
    %c0_i32 = arith.constant 0 : i32
    %c0_i32_0 = arith.constant 0 : i32
    %c0_i32_1 = arith.constant 0 : i32
    return %c0_i32, %c0_i32_0 : i32, i32
  }
  func.func @transform_13(%arg0: i32) -> (i32, i32, i32) {
    %c0_i32 = arith.constant 0 : i32
    %c0_i32_0 = arith.constant 0 : i32
    %c0_i32_1 = arith.constant 0 : i32
    return %arg0, %c0_i32, %c0_i32_0 : i32, i32, i32
  }
}

</mosaic_0001>

<llo_original>
// kernel: small_object_head_forward.1
$region0: #{small_object_head_forward.1}
  #allocation0 [shape = 'u32[]', space=smem, size = 0x4, offset = 0x4, fixed_abs, tag = 'smem constant byte address 0x4 - core index']
  #allocation1 [shape = 'u32[144,128]{1,0:T(1,128)}', space=vmem, size = 0x12000, scoped, tag = 'internal scratch']
  #allocation2 [shape = 'bf16[388,64]{1,0:T(8,128)(2,1)}', space=vmem, size = 0x18800, scoped, tag = 'scratch operand']
  %s0 = inlined_call_operand.vmem [shape: f32[324,1], index: 0, kind: input, shape index: {}]
  %s1 = inlined_call_operand.vmem [shape: bf16[2,324,36], index: 1, kind: input, shape index: {}]
  %s2 = inlined_call_operand.vmem [shape: bf16[36,64], index: 2, kind: input, shape index: {}]
  %s3 = inlined_call_operand.vmem [shape: f32[1,64], index: 3, kind: input, shape index: {}]
  %s4 = inlined_call_operand.vmem [shape: f32[1,64], index: 4, kind: input, shape index: {}]
  %s5 = inlined_call_operand.vmem [shape: bf16[9,64,64], index: 5, kind: input, shape index: {}]
  %s6 = inlined_call_operand.vmem [shape: f32[1,64], index: 6, kind: input, shape index: {}]
  %s7 = inlined_call_operand.vmem [shape: f32[1,64], index: 7, kind: input, shape index: {}]
  %s8 = inlined_call_operand.vmem [shape: bf16[9,64,64], index: 8, kind: input, shape index: {}]
  %s9 = inlined_call_operand.vmem [shape: f32[1,64], index: 9, kind: input, shape index: {}]
  %s10 = inlined_call_operand.vmem [shape: f32[1,64], index: 10, kind: input, shape index: {}]
  %s11 = inlined_call_operand.vmem [shape: bf16[64,128], index: 11, kind: input, shape index: {}]
  %s12 = inlined_call_operand.vmem [shape: f32[1,128], index: 12, kind: input, shape index: {}]
  %s13 = inlined_call_operand.vmem [shape: f32[2,324,128], index: 13, kind: output, shape index: {}]
  %s14 = sld [smem:[#allocation0]]
  $region85: #{small_object_head_forward.1} parent=0
    _
  %s16 = ssub.s32 1, %s14
  %s17 = scalar_select 0, %s16, %s14
  loop: start=0, step=1, limit=4
  $region2: #{small_object_head_forward.1} parent=0 // loop_pre_header
    _
  $region3: #{small_object_head_forward.1} parent=0 // loop_header
    %s19 = sphi 0, %s23
    %p20 = scmp.ge.s32.totalorder %s19, 4
    %s27 = sphi 0, %s27
    %s29 = sphi 0, %s27
    %s30 = sphi 0, %s29
    %s44 = sphi 0, %s30
    %s50 = sphi 0, %s52
    %s53 = sphi 0, %s50
    %s54 = sphi 0, %s53
    %s70 = sphi 0, %s54
    %s74 = sphi 0, %s74
    %s76 = sphi 0, %s74
    %s77 = sphi 0, %s76
    %s91 = sphi 0, %s77
    %s95 = sphi 0, %s95
    %s97 = sphi 0, %s95
    %s98 = sphi 0, %s97
    %s112 = sphi 0, %s98
    %s116 = sphi 0, %s116
    %s118 = sphi 0, %s116
    %s119 = sphi 0, %s118
    %s133 = sphi 0, %s119
    %s137 = sphi 0, %s137
    %s139 = sphi 0, %s137
    %s140 = sphi 0, %s139
    %s154 = sphi 0, %s140
    %s158 = sphi 0, %s158
    %s160 = sphi 0, %s158
    %s161 = sphi 0, %s160
    %s175 = sphi 0, %s161
    %s179 = sphi 0, %s179
    %s181 = sphi 0, %s179
    %s182 = sphi 0, %s181
    %s196 = sphi 0, %s182
    %s200 = sphi 0, %s200
    %s202 = sphi 0, %s200
    %s203 = sphi 0, %s202
    %s217 = sphi 0, %s203
    %s221 = sphi 0, %s221
    %s223 = sphi 0, %s221
    %s224 = sphi 0, %s223
    %s238 = sphi 0, %s224
    %s242 = sphi 0, %s242
    %s244 = sphi 0, %s242
    %s245 = sphi 0, %s244
    %s259 = sphi 0, %s245
    %s263 = sphi 0, %s263
    %s265 = sphi 0, %s263
    %s266 = sphi 0, %s265
    %s280 = sphi 0, %s266
    %s284 = sphi 0, %s284
    %s286 = sphi 0, %s284
    %s287 = sphi 0, %s286
    %s301 = sphi 0, %s287
    %s307 = sphi 0, %s309
    %s310 = sphi 0, %s307
    %s311 = sphi 0, %s310
    %s327 = sphi 0, %s311
  $region4: #{small_object_head_forward.1} parent=0 // loop_header_branch
    %22 = sbr.rel (%p20) target = $region8
  $region5: #{small_object_head_forward.1} parent=0 // loop_body
    %s24 = ssub.s32 %s19, 1
    %s25 = ssub.s32 %s19, 2
    %s26 = sadd.s32 %s19, 1
    %s28 = sadd.s32 %s27, 1
    %p31 = scmp.eq.s32.totalorder %s19, 1
    %p32 = scmp.ne.s32.totalorder %s27, %s29
    %p33 = scmp.eq.s32.totalorder %s19, 0
    %p34 = por %p32, %p33
    %p35 = scmp.ne.s32.totalorder %s27, %s29
    %p36 = scmp.eq.s32.totalorder %s24, 1
    %p37 = por %p35, %p36
    %p38 = scmp.ne.s32.totalorder %s29, %s30
    %p39 = scmp.eq.s32.totalorder %s24, 0
    %p40 = por %p38, %p39
    %p41 = scmp.ne.s32.totalorder %s29, %s30
    %p42 = scmp.eq.s32.totalorder %s25, 1
    %p43 = por %p41, %p42
    %p45 = scmp.ne.s32.totalorder %s30, %s44
    %p46 = scmp.eq.s32.totalorder %s25, 0
    %p47 = por %p45, %p46
    %s48 = ssub.s32 %s19, %s26
    %p49 = scmp.eq.s32.totalorder %s48, 0
    %s51 = sadd.s32 %s50, 1
    %s52 = scalar_select %p49, %s50, %s51
    %p55 = pneg %p49
    %p56 = scmp.eq.s32.totalorder %s19, 1
    %p57 = por %p55, %p56
    %p58 = scmp.ne.s32.totalorder %s50, %s53
    %p59 = scmp.eq.s32.totalorder %s19, 0
    %p60 = por %p58, %p59
    %p61 = scmp.ne.s32.totalorder %s50, %s53
    %p62 = scmp.eq.s32.totalorder %s24, 1
    %p63 = por %p61, %p62
    %p64 = scmp.ne.s32.totalorder %s53, %s54
    %p65 = scmp.eq.s32.totalorder %s24, 0
    %p66 = por %p64, %p65
    %p67 = scmp.ne.s32.totalorder %s53, %s54
    %p68 = scmp.eq.s32.totalorder %s25, 1
    %p69 = por %p67, %p68
    %p71 = scmp.ne.s32.totalorder %s54, %s70
    %p72 = scmp.eq.s32.totalorder %s25, 0
    %p73 = por %p71, %p72
    %s75 = sadd.s32 %s74, 1
    %p78 = scmp.eq.s32.totalorder %s19, 1
    %p79 = scmp.ne.s32.totalorder %s74, %s76
    %p80 = scmp.eq.s32.totalorder %s19, 0
    %p81 = por %p79, %p80
    %p82 = scmp.ne.s32.totalorder %s74, %s76
    %p83 = scmp.eq.s32.totalorder %s24, 1
    %p84 = por %p82, %p83
    %p85 = scmp.ne.s32.totalorder %s76, %s77
    %p86 = scmp.eq.s32.totalorder %s24, 0
    %p87 = por %p85, %p86
    %p88 = scmp.ne.s32.totalorder %s76, %s77
    %p89 = scmp.eq.s32.totalorder %s25, 1
    %p90 = por %p88, %p89
    %p92 = scmp.ne.s32.totalorder %s77, %s91
    %p93 = scmp.eq.s32.totalorder %s25, 0
    %p94 = por %p92, %p93
    %s96 = sadd.s32 %s95, 1
    %p99 = scmp.eq.s32.totalorder %s19, 1
    %p100 = scmp.ne.s32.totalorder %s95, %s97
    %p101 = scmp.eq.s32.totalorder %s19, 0
    %p102 = por %p100, %p101
    %p103 = scmp.ne.s32.totalorder %s95, %s97
    %p104 = scmp.eq.s32.totalorder %s24, 1
    %p105 = por %p103, %p104
    %p106 = scmp.ne.s32.totalorder %s97, %s98
    %p107 = scmp.eq.s32.totalorder %s24, 0
    %p108 = por %p106, %p107
    %p109 = scmp.ne.s32.totalorder %s97, %s98
    %p110 = scmp.eq.s32.totalorder %s25, 1
    %p111 = por %p109, %p110
    %p113 = scmp.ne.s32.totalorder %s98, %s112
    %p114 = scmp.eq.s32.totalorder %s25, 0
    %p115 = por %p113, %p114
    %s117 = sadd.s32 %s116, 1
    %p120 = scmp.eq.s32.totalorder %s19, 1
    %p121 = scmp.ne.s32.totalorder %s116, %s118
    %p122 = scmp.eq.s32.totalorder %s19, 0
    %p123 = por %p121, %p122
    %p124 = scmp.ne.s32.totalorder %s116, %s118
    %p125 = scmp.eq.s32.totalorder %s24, 1
    %p126 = por %p124, %p125
    %p127 = scmp.ne.s32.totalorder %s118, %s119
    %p128 = scmp.eq.s32.totalorder %s24, 0
    %p129 = por %p127, %p128
    %p130 = scmp.ne.s32.totalorder %s118, %s119
    %p131 = scmp.eq.s32.totalorder %s25, 1
    %p132 = por %p130, %p131
    %p134 = scmp.ne.s32.totalorder %s119, %s133
    %p135 = scmp.eq.s32.totalorder %s25, 0
    %p136 = por %p134, %p135
    %s138 = sadd.s32 %s137, 1
    %p141 = scmp.eq.s32.totalorder %s19, 1
    %p142 = scmp.ne.s32.totalorder %s137, %s139
    %p143 = scmp.eq.s32.totalorder %s19, 0
    %p144 = por %p142, %p143
    %p145 = scmp.ne.s32.totalorder %s137, %s139
    %p146 = scmp.eq.s32.totalorder %s24, 1
    %p147 = por %p145, %p146
    %p148 = scmp.ne.s32.totalorder %s139, %s140
    %p149 = scmp.eq.s32.totalorder %s24, 0
    %p150 = por %p148, %p149
    %p151 = scmp.ne.s32.totalorder %s139, %s140
    %p152 = scmp.eq.s32.totalorder %s25, 1
    %p153 = por %p151, %p152
    %p155 = scmp.ne.s32.totalorder %s140, %s154
    %p156 = scmp.eq.s32.totalorder %s25, 0
    %p157 = por %p155, %p156
    %s159 = sadd.s32 %s158, 1
    %p162 = scmp.eq.s32.totalorder %s19, 1
    %p163 = scmp.ne.s32.totalorder %s158, %s160
    %p164 = scmp.eq.s32.totalorder %s19, 0
    %p165 = por %p163, %p164
    %p166 = scmp.ne.s32.totalorder %s158, %s160
    %p167 = scmp.eq.s32.totalorder %s24, 1
    %p168 = por %p166, %p167
    %p169 = scmp.ne.s32.totalorder %s160, %s161
    %p170 = scmp.eq.s32.totalorder %s24, 0
    %p171 = por %p169, %p170
    %p172 = scmp.ne.s32.totalorder %s160, %s161
    %p173 = scmp.eq.s32.totalorder %s25, 1
    %p174 = por %p172, %p173
    %p176 = scmp.ne.s32.totalorder %s161, %s175
    %p177 = scmp.eq.s32.totalorder %s25, 0
    %p178 = por %p176, %p177
    %s180 = sadd.s32 %s179, 1
    %p183 = scmp.eq.s32.totalorder %s19, 1
    %p184 = scmp.ne.s32.totalorder %s179, %s181
    %p185 = scmp.eq.s32.totalorder %s19, 0
    %p186 = por %p184, %p185
    %p187 = scmp.ne.s32.totalorder %s179, %s181
    %p188 = scmp.eq.s32.totalorder %s24, 1
    %p189 = por %p187, %p188
    %p190 = scmp.ne.s32.totalorder %s181, %s182
    %p191 = scmp.eq.s32.totalorder %s24, 0
    %p192 = por %p190, %p191
    %p193 = scmp.ne.s32.totalorder %s181, %s182
    %p194 = scmp.eq.s32.totalorder %s25, 1
    %p195 = por %p193, %p194
    %p197 = scmp.ne.s32.totalorder %s182, %s196
    %p198 = scmp.eq.s32.totalorder %s25, 0
    %p199 = por %p197, %p198
    %s201 = sadd.s32 %s200, 1
    %p204 = scmp.eq.s32.totalorder %s19, 1
    %p205 = scmp.ne.s32.totalorder %s200, %s202
    %p206 = scmp.eq.s32.totalorder %s19, 0
    %p207 = por %p205, %p206
    %p208 = scmp.ne.s32.totalorder %s200, %s202
    %p209 = scmp.eq.s32.totalorder %s24, 1
    %p210 = por %p208, %p209
    %p211 = scmp.ne.s32.totalorder %s202, %s203
    %p212 = scmp.eq.s32.totalorder %s24, 0
    %p213 = por %p211, %p212
    %p214 = scmp.ne.s32.totalorder %s202, %s203
    %p215 = scmp.eq.s32.totalorder %s25, 1
    %p216 = por %p214, %p215
    %p218 = scmp.ne.s32.totalorder %s203, %s217
    %p219 = scmp.eq.s32.totalorder %s25, 0
    %p220 = por %p218, %p219
    %s222 = sadd.s32 %s221, 1
    %p225 = scmp.eq.s32.totalorder %s19, 1
    %p226 = scmp.ne.s32.totalorder %s221, %s223
    %p227 = scmp.eq.s32.totalorder %s19, 0
    %p228 = por %p226, %p227
    %p229 = scmp.ne.s32.totalorder %s221, %s223
    %p230 = scmp.eq.s32.totalorder %s24, 1
    %p231 = por %p229, %p230
    %p232 = scmp.ne.s32.totalorder %s223, %s224
    %p233 = scmp.eq.s32.totalorder %s24, 0
    %p234 = por %p232, %p233
    %p235 = scmp.ne.s32.totalorder %s223, %s224
    %p236 = scmp.eq.s32.totalorder %s25, 1
    %p237 = por %p235, %p236
    %p239 = scmp.ne.s32.totalorder %s224, %s238
    %p240 = scmp.eq.s32.totalorder %s25, 0
    %p241 = por %p239, %p240
    %s243 = sadd.s32 %s242, 1
    %p246 = scmp.eq.s32.totalorder %s19, 1
    %p247 = scmp.ne.s32.totalorder %s242, %s244
    %p248 = scmp.eq.s32.totalorder %s19, 0
    %p249 = por %p247, %p248
    %p250 = scmp.ne.s32.totalorder %s242, %s244
    %p251 = scmp.eq.s32.totalorder %s24, 1
    %p252 = por %p250, %p251
    %p253 = scmp.ne.s32.totalorder %s244, %s245
    %p254 = scmp.eq.s32.totalorder %s24, 0
    %p255 = por %p253, %p254
    %p256 = scmp.ne.s32.totalorder %s244, %s245
    %p257 = scmp.eq.s32.totalorder %s25, 1
    %p258 = por %p256, %p257
    %p260 = scmp.ne.s32.totalorder %s245, %s259
    %p261 = scmp.eq.s32.totalorder %s25, 0
    %p262 = por %p260, %p261
    %s264 = sadd.s32 %s263, 1
    %p267 = scmp.eq.s32.totalorder %s19, 1
    %p268 = scmp.ne.s32.totalorder %s263, %s265
    %p269 = scmp.eq.s32.totalorder %s19, 0
    %p270 = por %p268, %p269
    %p271 = scmp.ne.s32.totalorder %s263, %s265
    %p272 = scmp.eq.s32.totalorder %s24, 1
    %p273 = por %p271, %p272
    %p274 = scmp.ne.s32.totalorder %s265, %s266
    %p275 = scmp.eq.s32.totalorder %s24, 0
    %p276 = por %p274, %p275
    %p277 = scmp.ne.s32.totalorder %s265, %s266
    %p278 = scmp.eq.s32.totalorder %s25, 1
    %p279 = por %p277, %p278
    %p281 = scmp.ne.s32.totalorder %s266, %s280
    %p282 = scmp.eq.s32.totalorder %s25, 0
    %p283 = por %p281, %p282
    %s285 = sadd.s32 %s284, 1
    %p288 = scmp.eq.s32.totalorder %s19, 1
    %p289 = scmp.ne.s32.totalorder %s284, %s286
    %p290 = scmp.eq.s32.totalorder %s19, 0
    %p291 = por %p289, %p290
    %p292 = scmp.ne.s32.totalorder %s284, %s286
    %p293 = scmp.eq.s32.totalorder %s24, 1
    %p294 = por %p292, %p293
    %p295 = scmp.ne.s32.totalorder %s286, %s287
    %p296 = scmp.eq.s32.totalorder %s24, 0
    %p297 = por %p295, %p296
    %p298 = scmp.ne.s32.totalorder %s286, %s287
    %p299 = scmp.eq.s32.totalorder %s25, 1
    %p300 = por %p298, %p299
    %p302 = scmp.ne.s32.totalorder %s287, %s301
    %p303 = scmp.eq.s32.totalorder %s25, 0
    %p304 = por %p302, %p303
    %s305 = ssub.s32 %s19, %s26
    %p306 = scmp.eq.s32.totalorder %s305, 0
    %s308 = sadd.s32 %s307, 1
    %s309 = scalar_select %p306, %s307, %s308
    %p312 = pneg %p306
    %p313 = scmp.eq.s32.totalorder %s19, 1
    %p314 = por %p312, %p313
    %p315 = scmp.ne.s32.totalorder %s307, %s310
    %p316 = scmp.eq.s32.totalorder %s19, 0
    %p317 = por %p315, %p316
    %p318 = scmp.ne.s32.totalorder %s307, %s310
    %p319 = scmp.eq.s32.totalorder %s24, 1
    %p320 = por %p318, %p319
    %p321 = scmp.ne.s32.totalorder %s310, %s311
    %p322 = scmp.eq.s32.totalorder %s24, 0
    %p323 = por %p321, %p322
    %p324 = scmp.ne.s32.totalorder %s310, %s311
    %p325 = scmp.eq.s32.totalorder %s25, 1
    %p326 = por %p324, %p325
    %p328 = scmp.ne.s32.totalorder %s311, %s327
    %p329 = scmp.eq.s32.totalorder %s25, 0
    %p330 = por %p328, %p329
    %p331 = scmp.le.s32.totalorder 1, %s19
    %p332 = scmp.lt.s32.totalorder %s19, 3
    %p333 = pnand %p331, %p332
    %p334 = pneg %p333
    // Predicated region
    $region9: #{small_object_head_forward.1} parent=5 // pred_check
      _
    $region10: #{small_object_head_forward.1} parent=5 // pred_check_branch
      %336 = sbr.rel (%p333) target = $region12
    $region11: #{small_object_head_forward.1} parent=5 // pred_region
      %s337 = ssub.s32 %s19, 1
      // Predicated region
      $region13: #{small_object_head_forward.1} parent=11 // pred_check
        %p338 = pneg %p40
      $region14: #{small_object_head_forward.1} parent=11 // pred_check_branch
        %340 = sbr.rel (%p338) target = $region16
      $region15: #{small_object_head_forward.1} parent=11 // pred_region
        _
      $region16: #{small_object_head_forward.1} parent=11 // pred_fallthru
        _
      // Predicated region
      $region17: #{small_object_head_forward.1} parent=11 // pred_check
        %p341 = pneg %p87
      $region18: #{small_object_head_forward.1} parent=11 // pred_check_branch
        %343 = sbr.rel (%p341) target = $region20
      $region19: #{small_object_head_forward.1} parent=11 // pred_region
        _
      $region20: #{small_object_head_forward.1} parent=11 // pred_fallthru
        _
      // Predicated region
      $region21: #{small_object_head_forward.1} parent=11 // pred_check
        %p344 = pneg %p108
      $region22: #{small_object_head_forward.1} parent=11 // pred_check_branch
        %346 = sbr.rel (%p344) target = $region24
      $region23: #{small_object_head_forward.1} parent=11 // pred_region
        _
      $region24: #{small_object_head_forward.1} parent=11 // pred_fallthru
        _
      // Predicated region
      $region25: #{small_object_head_forward.1} parent=11 // pred_check
        %p347 = pneg %p129
      $region26: #{small_object_head_forward.1} parent=11 // pred_check_branch
        %349 = sbr.rel (%p347) target = $region28
      $region27: #{small_object_head_forward.1} parent=11 // pred_region
        _
      $region28: #{small_object_head_forward.1} parent=11 // pred_fallthru
        _
      // Predicated region
      $region29: #{small_object_head_forward.1} parent=11 // pred_check
        %p350 = pneg %p150
      $region30: #{small_object_head_forward.1} parent=11 // pred_check_branch
        %352 = sbr.rel (%p350) target = $region32
      $region31: #{small_object_head_forward.1} parent=11 // pred_region
        _
      $region32: #{small_object_head_forward.1} parent=11 // pred_fallthru
        _
      // Predicated region
      $region33: #{small_object_head_forward.1} parent=11 // pred_check
        %p353 = pneg %p171
      $region34: #{small_object_head_forward.1} parent=11 // pred_check_branch
        %355 = sbr.rel (%p353) target = $region36
      $region35: #{small_object_head_forward.1} parent=11 // pred_region
        _
      $region36: #{small_object_head_forward.1} parent=11 // pred_fallthru
        _
      // Predicated region
      $region37: #{small_object_head_forward.1} parent=11 // pred_check
        %p356 = pneg %p192
      $region38: #{small_object_head_forward.1} parent=11 // pred_check_branch
        %358 = sbr.rel (%p356) target = $region40
      $region39: #{small_object_head_forward.1} parent=11 // pred_region
        _
      $region40: #{small_object_head_forward.1} parent=11 // pred_fallthru
        _
      // Predicated region
      $region41: #{small_object_head_forward.1} parent=11 // pred_check
        %p359 = pneg %p213
      $region42: #{small_object_head_forward.1} parent=11 // pred_check_branch
        %361 = sbr.rel (%p359) target = $region44
      $region43: #{small_object_head_forward.1} parent=11 // pred_region
        _
      $region44: #{small_object_head_forward.1} parent=11 // pred_fallthru
        _
      // Predicated region
      $region45: #{small_object_head_forward.1} parent=11 // pred_check
        %p362 = pneg %p234
      $region46: #{small_object_head_forward.1} parent=11 // pred_check_branch
        %364 = sbr.rel (%p362) target = $region48
      $region47: #{small_object_head_forward.1} parent=11 // pred_region
        _
      $region48: #{small_object_head_forward.1} parent=11 // pred_fallthru
        _
      // Predicated region
      $region49: #{small_object_head_forward.1} parent=11 // pred_check
        %p365 = pneg %p255
      $region50: #{small_object_head_forward.1} parent=11 // pred_check_branch
        %367 = sbr.rel (%p365) target = $region52
      $region51: #{small_object_head_forward.1} parent=11 // pred_region
        _
      $region52: #{small_object_head_forward.1} parent=11 // pred_fallthru
        _
      // Predicated region
      $region53: #{small_object_head_forward.1} parent=11 // pred_check
        %p368 = pneg %p276
      $region54: #{small_object_head_forward.1} parent=11 // pred_check_branch
        %370 = sbr.rel (%p368) target = $region56
      $region55: #{small_object_head_forward.1} parent=11 // pred_region
        _
      $region56: #{small_object_head_forward.1} parent=11 // pred_fallthru
        _
      // Predicated region
      $region57: #{small_object_head_forward.1} parent=11 // pred_check
        %p371 = pneg %p297
      $region58: #{small_object_head_forward.1} parent=11 // pred_check_branch
        %373 = sbr.rel (%p371) target = $region60
      $region59: #{small_object_head_forward.1} parent=11 // pred_region
        _
      $region60: #{small_object_head_forward.1} parent=11 // pred_fallthru
        _
    $region12: #{small_object_head_forward.1} parent=5 // pred_fallthru
      _
    %p374 = scmp.lt.s32.totalorder %s19, 2
    // Predicated region
    $region61: #{small_object_head_forward.1} parent=5 // pred_check
      %p375 = pneg %p374
    $region62: #{small_object_head_forward.1} parent=5 // pred_check_branch
      %377 = sbr.rel (%p375) target = $region64
    $region63: #{small_object_head_forward.1} parent=5 // pred_region
      // Predicated region
      $region65: #{small_object_head_forward.1} parent=63 // pred_check
        %p378 = pneg %p60
      $region66: #{small_object_head_forward.1} parent=63 // pred_check_branch
        %380 = sbr.rel (%p378) target = $region68
      $region67: #{small_object_head_forward.1} parent=63 // pred_region
        %p381 = scmp.lt.s32.totalorder %s19, 1
        %s382 = scalar_select %p381, %s19, 1
        %s383 = smul.addr %s382, 41
        %s384 = smul.addr %s383, 4
        %s385 = scalar_lea.vmem %s1, %s384
      $region68: #{small_object_head_forward.1} parent=63 // pred_fallthru
        _
    $region64: #{small_object_head_forward.1} parent=5 // pred_fallthru
      _
    %p386 = scmp.le.s32.totalorder 1, %s19
    %p387 = scmp.lt.s32.totalorder %s19, 3
    %p388 = pnand %p386, %p387
    %p389 = pneg %p388
    // Predicated region
    $region69: #{small_object_head_forward.1} parent=5 // pred_check
      _
    $region70: #{small_object_head_forward.1} parent=5 // pred_check_branch
      %391 = sbr.rel (%p388) target = $region72
    $region71: #{small_object_head_forward.1} parent=5 // pred_region
      %s392 = ssub.s32 %s19, 1
      %p393 = pneg %p40
      %p394 = pneg %p37
      %p395 = scmp.lt.s32.totalorder %s24, 1
      %s396 = scalar_select %p395, %s24, 1
      %s397 = smul.addr %s396, 41
      %s398 = smul.addr %s397, 4
      %s399 = scalar_lea.vmem %s1, %s398
      %p400 = pneg %p66
      %p401 = pneg %p63
      %p402 = pneg %p87
      %p403 = pneg %p84
      %p404 = pneg %p108
      %p405 = pneg %p105
      %p406 = pneg %p129
      %p407 = pneg %p126
      %p408 = pneg %p150
      %p409 = pneg %p147
      %p410 = pneg %p171
      %p411 = pneg %p168
      %p412 = pneg %p192
      %p413 = pneg %p189
      %p414 = pneg %p213
      %p415 = pneg %p210
      %p416 = pneg %p234
      %p417 = pneg %p231
      %p418 = pneg %p255
      %p419 = pneg %p252
      %p420 = pneg %p276
      %p421 = pneg %p273
      %p422 = pneg %p297
      %p423 = pneg %p294
      %p424 = pneg %p323
      %p425 = pneg %p320
      %p426 = scmp.lt.s32.totalorder %s24, 1
      %s427 = scalar_select %p426, %s24, 1
      %s428 = smul.addr %s427, 41
      %s429 = smul.addr %s428, 8
      %s430 = scalar_lea.vmem %s13, %s429
      %p431 = scmp.lt.s32.totalorder %s24, 1
      %s432 = scalar_select %p431, %s24, 1
      %s433 = smul.addr %s432, 41
      %s434 = smul.addr %s433, 4
      %s435 = scalar_lea.vmem %s1, %s434
      %p436 = scmp.lt.s32.totalorder %s24, 1
      %s437 = scalar_select %p436, %s24, 1
      %s438 = smul.addr %s437, 41
      %s439 = smul.addr %s438, 8
      %s440 = scalar_lea.vmem %s13, %s439
      %v442 = vld [vmem:[%s0] sm:$0xff]
      %v443 = vld [vmem:[%s0 + $0x8] sm:$0xff]
      %v444 = vld [vmem:[%s0 + $0x10] sm:$0xff]
      %v445 = vld [vmem:[%s0 + $0x18] sm:$0xff]
      %v446 = vld [vmem:[%s0 + $0x20] sm:$0xff]
      %v447 = vld [vmem:[%s0 + $0x28] sm:$0xff]
      %v448 = vld [vmem:[%s0 + $0x30] sm:$0xff]
      %v449 = vld [vmem:[%s0 + $0x38] sm:$0xff]
      %v450 = vld [vmem:[%s0 + $0x40] sm:$0xff]
      %v451 = vld [vmem:[%s0 + $0x48] sm:$0xff]
      %v452 = vld [vmem:[%s0 + $0x50] sm:$0xff]
      %v453 = vld [vmem:[%s0 + $0x58] sm:$0xff]
      %v454 = vld [vmem:[%s0 + $0x60] sm:$0xff]
      %v455 = vld [vmem:[%s0 + $0x68] sm:$0xff]
      %v456 = vld [vmem:[%s0 + $0x70] sm:$0xff]
      %v457 = vld [vmem:[%s0 + $0x78] sm:$0xff]
      %v458 = vld [vmem:[%s0 + $0x80] sm:$0xff]
      %v459 = vld [vmem:[%s0 + $0x88] sm:$0xff]
      %v460 = vld [vmem:[%s0 + $0x90] sm:$0xff]
      %v461 = vld [vmem:[%s0 + $0x98] sm:$0xff]
      %v462 = vld [vmem:[%s0 + $0xa0] sm:$0xff]
      %v463 = vld [vmem:[%s0 + $0xa8] sm:$0xff]
      %v464 = vld [vmem:[%s0 + $0xb0] sm:$0xff]
      %v465 = vld [vmem:[%s0 + $0xb8] sm:$0xff]
      %v466 = vld [vmem:[%s0 + $0xc0] sm:$0xff]
      %v467 = vld [vmem:[%s0 + $0xc8] sm:$0xff]
      %v468 = vld [vmem:[%s0 + $0xd0] sm:$0xff]
      %v469 = vld [vmem:[%s0 + $0xd8] sm:$0xff]
      %v470 = vld [vmem:[%s0 + $0xe0] sm:$0xff]
      %v471 = vld [vmem:[%s0 + $0xe8] sm:$0xff]
      %v472 = vld [vmem:[%s0 + $0xf0] sm:$0xff]
      %v473 = vld [vmem:[%s0 + $0xf8] sm:$0xff]
      %v474 = vld [vmem:[%s0 + $0x100] sm:$0xff]
      %v475 = vld [vmem:[%s0 + $0x108] sm:$0xff]
      %v476 = vld [vmem:[%s0 + $0x110] sm:$0xff]
      %v477 = vld [vmem:[%s0 + $0x118] sm:$0xff]
      %v478 = vld [vmem:[%s0 + $0x120] sm:$0xff]
      %v479 = vld [vmem:[%s0 + $0x128] sm:$0xff]
      %v480 = vld [vmem:[%s0 + $0x130] sm:$0xff]
      %v481 = vld [vmem:[%s0 + $0x138] sm:$0xff]
      %v482 = vld [vmem:[%s0 + $0x140] sm:$0xf]
      %vm483 = vcmp.gt.f32.partialorder %v442, 0.5
      %vm484 = vcmp.gt.f32.partialorder %v443, 0.5
      %vm485 = vcmp.gt.f32.partialorder %v444, 0.5
      %vm486 = vcmp.gt.f32.partialorder %v445, 0.5
      %vm487 = vcmp.gt.f32.partialorder %v446, 0.5
      %vm488 = vcmp.gt.f32.partialorder %v447, 0.5
      %vm489 = vcmp.gt.f32.partialorder %v448, 0.5
      %vm490 = vcmp.gt.f32.partialorder %v449, 0.5
      %vm491 = vcmp.gt.f32.partialorder %v450, 0.5
      %vm492 = vcmp.gt.f32.partialorder %v451, 0.5
      %vm493 = vcmp.gt.f32.partialorder %v452, 0.5
      %vm494 = vcmp.gt.f32.partialorder %v453, 0.5
      %vm495 = vcmp.gt.f32.partialorder %v454, 0.5
      %vm496 = vcmp.gt.f32.partialorder %v455, 0.5
      %vm497 = vcmp.gt.f32.partialorder %v456, 0.5
      %vm498 = vcmp.gt.f32.partialorder %v457, 0.5
      %vm499 = vcmp.gt.f32.partialorder %v458, 0.5
      %vm500 = vcmp.gt.f32.partialorder %v459, 0.5
      %vm501 = vcmp.gt.f32.partialorder %v460, 0.5
      %vm502 = vcmp.gt.f32.partialorder %v461, 0.5
      %vm503 = vcmp.gt.f32.partialorder %v462, 0.5
      %vm504 = vcmp.gt.f32.partialorder %v463, 0.5
      %vm505 = vcmp.gt.f32.partialorder %v464, 0.5
      %vm506 = vcmp.gt.f32.partialorder %v465, 0.5
      %vm507 = vcmp.gt.f32.partialorder %v466, 0.5
      %vm508 = vcmp.gt.f32.partialorder %v467, 0.5
      %vm509 = vcmp.gt.f32.partialorder %v468, 0.5
      %vm510 = vcmp.gt.f32.partialorder %v469, 0.5
      %vm511 = vcmp.gt.f32.partialorder %v470, 0.5
      %vm512 = vcmp.gt.f32.partialorder %v471, 0.5
      %vm513 = vcmp.gt.f32.partialorder %v472, 0.5
      %vm514 = vcmp.gt.f32.partialorder %v473, 0.5
      %vm515 = vcmp.gt.f32.partialorder %v474, 0.5
      %vm516 = vcmp.gt.f32.partialorder %v475, 0.5
      %vm517 = vcmp.gt.f32.partialorder %v476, 0.5
      %vm518 = vcmp.gt.f32.partialorder %v477, 0.5
      %vm519 = vcmp.gt.f32.partialorder %v478, 0.5
      %vm520 = vcmp.gt.f32.partialorder %v479, 0.5
      %vm521 = vcmp.gt.f32.partialorder %v480, 0.5
      %vm522 = vcmp.gt.f32.partialorder %v481, 0.5
      %vm523 = vcmp.gt.f32.partialorder %v482, 0.5
      %vm524 = vcmask 519168
      %525 = vst.msk [vmem:[#allocation2] sm:$0xf] %vm524, 0
      %526 = vst.msk [vmem:[#allocation2 + $0x4] sm:$0xf] %vm524, 0
      %527 = vst.msk [vmem:[#allocation2 + $0x8] sm:$0xf] %vm524, 0
      %528 = vst.msk [vmem:[#allocation2 + $0xc] sm:$0xf] %vm524, 0
      %vm529 = vcmask 519170
      %530 = vst.msk [vmem:[#allocation2 + $0xb0] sm:$0xc] %vm529, 0
      %531 = vst.msk [vmem:[#allocation2 + $0xb4] sm:$0xf] %vm524, 0
      %532 = vst.msk [vmem:[#allocation2 + $0xb8] sm:$0xf] %vm524, 0
      %533 = vst.msk [vmem:[#allocation2 + $0xbc] sm:$0xf] %vm524, 0
      %vm534 = vcmask 517120
      %535 = vst.msk [vmem:[#allocation2 + $0xc0] sm:$0x3] %vm534, 0
      %v536 = vld [vmem:[%s435] sm:$0xf]
      %v537 = vld [vmem:[%s435 + $0x4] sm:$0xf]
      %v538 = vld [vmem:[%s435 + $0x8] sm:$0xf]
      %v539 = vld [vmem:[%s435 + $0xc] sm:$0xf]
      %v540 = vld [vmem:[%s435 + $0x10] sm:$0xf]
      %v541 = vld [vmem:[%s435 + $0x14] sm:$0xf]
      %v542 = vld [vmem:[%s435 + $0x18] sm:$0xf]
      %v543 = vld [vmem:[%s435 + $0x1c] sm:$0xf]
      %v544 = vld [vmem:[%s435 + $0x20] sm:$0xf]
      %v545 = vld [vmem:[%s435 + $0x24] sm:$0xf]
      %v546 = vld [vmem:[%s435 + $0x28] sm:$0xf]
      %v547 = vld [vmem:[%s435 + $0x2c] sm:$0xf]
      %v548 = vld [vmem:[%s435 + $0x30] sm:$0xf]
      %v549 = vld [vmem:[%s435 + $0x34] sm:$0xf]
      %v550 = vld [vmem:[%s435 + $0x38] sm:$0xf]
      %v551 = vld [vmem:[%s435 + $0x3c] sm:$0xf]
      %v552 = vld [vmem:[%s435 + $0x40] sm:$0xf]
      %v553 = vld [vmem:[%s435 + $0x44] sm:$0xf]
      %v554 = vld [vmem:[%s435 + $0x48] sm:$0xf]
      %v555 = vld [vmem:[%s435 + $0x4c] sm:$0xf]
      %v556 = vld [vmem:[%s435 + $0x50] sm:$0xf]
      %v557 = vld [vmem:[%s435 + $0x54] sm:$0xf]
      %v558 = vld [vmem:[%s435 + $0x58] sm:$0xf]
      %v559 = vld [vmem:[%s435 + $0x5c] sm:$0xf]
      %v560 = vld [vmem:[%s435 + $0x60] sm:$0xf]
      %v561 = vld [vmem:[%s435 + $0x64] sm:$0xf]
      %v562 = vld [vmem:[%s435 + $0x68] sm:$0xf]
      %v563 = vld [vmem:[%s435 + $0x6c] sm:$0xf]
      %v564 = vld [vmem:[%s435 + $0x70] sm:$0xf]
      %v565 = vld [vmem:[%s435 + $0x74] sm:$0xf]
      %v566 = vld [vmem:[%s435 + $0x78] sm:$0xf]
      %v567 = vld [vmem:[%s435 + $0x7c] sm:$0xf]
      %v568 = vld [vmem:[%s435 + $0x80] sm:$0xf]
      %v569 = vld [vmem:[%s435 + $0x84] sm:$0xf]
      %v570 = vld [vmem:[%s435 + $0x88] sm:$0xf]
      %v571 = vld [vmem:[%s435 + $0x8c] sm:$0xf]
      %v572 = vld [vmem:[%s435 + $0x90] sm:$0xf]
      %v573 = vld [vmem:[%s435 + $0x94] sm:$0xf]
      %v574 = vld [vmem:[%s435 + $0x98] sm:$0xf]
      %v575 = vld [vmem:[%s435 + $0x9c] sm:$0xf]
      %v576 = vld [vmem:[%s435 + $0xa0] sm:$0x3]
      %v577 = vld [vmem:[%s2] sm:$0xf]
      %v578 = vld [vmem:[%s2 + $0x4] sm:$0xf]
      %v579 = vld [vmem:[%s2 + $0x8] sm:$0xf]
      %v580 = vld [vmem:[%s2 + $0xc] sm:$0xf]
      %v581 = vld [vmem:[%s2 + $0x10] sm:$0x3]
      %v623 = vunpack.c.l.b16 %v536
      %v624 = vunpack.c.l.b16 %v537
      %v625 = vunpack.c.l.b16 %v538
      %v626 = vunpack.c.l.b16 %v539
      %v627 = vunpack.c.l.b16 %v540
      %v628 = vunpack.c.l.b16 %v541
      %v629 = vunpack.c.l.b16 %v542
      %v630 = vunpack.c.l.b16 %v543
      %v631 = vunpack.c.l.b16 %v544
      %v632 = vunpack.c.l.b16 %v545
      %v633 = vunpack.c.l.b16 %v546
      %v634 = vunpack.c.l.b16 %v547
      %v635 = vunpack.c.l.b16 %v548
      %v636 = vunpack.c.l.b16 %v549
      %v637 = vunpack.c.l.b16 %v550
      %v638 = vunpack.c.l.b16 %v551
      %v639 = vunpack.c.l.b16 %v552
      %v640 = vunpack.c.l.b16 %v553
      %v641 = vunpack.c.l.b16 %v554
      %v642 = vunpack.c.l.b16 %v555
      %v643 = vunpack.c.l.b16 %v556
      %v644 = vunpack.c.l.b16 %v557
      %v645 = vunpack.c.l.b16 %v558
      %v646 = vunpack.c.l.b16 %v559
      %v647 = vunpack.c.l.b16 %v560
      %v648 = vunpack.c.l.b16 %v561
      %v649 = vunpack.c.l.b16 %v562
      %v650 = vunpack.c.l.b16 %v563
      %v651 = vunpack.c.l.b16 %v564
      %v652 = vunpack.c.l.b16 %v565
      %v653 = vunpack.c.l.b16 %v566
      %v654 = vunpack.c.l.b16 %v567
      %v655 = vunpack.c.l.b16 %v568
      %v656 = vunpack.c.l.b16 %v569
      %v657 = vunpack.c.l.b16 %v570
      %v658 = vunpack.c.l.b16 %v571
      %v659 = vunpack.c.l.b16 %v572
      %v660 = vunpack.c.l.b16 %v573
      %v661 = vunpack.c.l.b16 %v574
      %v662 = vunpack.c.l.b16 %v575
      %v663 = vunpack.c.l.b16 %v576
      %v664 = vpack.c.b16 %v624, %v623
      %v665 = vpack.c.b16 %v626, %v625
      %v666 = vpack.c.b16 %v628, %v627
      %v667 = vpack.c.b16 %v630, %v629
      %v668 = vpack.c.b16 %v632, %v631
      %v669 = vpack.c.b16 %v634, %v633
      %v670 = vpack.c.b16 %v636, %v635
      %v671 = vpack.c.b16 %v638, %v637
      %v672 = vpack.c.b16 %v640, %v639
      %v673 = vpack.c.b16 %v642, %v641
      %v674 = vpack.c.b16 %v644, %v643
      %v675 = vpack.c.b16 %v646, %v645
      %v676 = vpack.c.b16 %v648, %v647
      %v677 = vpack.c.b16 %v650, %v649
      %v678 = vpack.c.b16 %v652, %v651
      %v679 = vpack.c.b16 %v654, %v653
      %v680 = vpack.c.b16 %v656, %v655
      %v681 = vpack.c.b16 %v658, %v657
      %v682 = vpack.c.b16 %v660, %v659
      %v683 = vpack.c.b16 %v662, %v661
      %v684 = vpack.c.b16 %v663, %v663
      %v690 = vunpack.c.l.b16 %v577
      %v691 = vunpack.c.l.b16 %v578
      %v692 = vunpack.c.l.b16 %v579
      %v693 = vunpack.c.l.b16 %v580
      %v694 = vunpack.c.l.b16 %v581
      %v695 = vpack.c.b16 %v691, %v690
      %v696 = vpack.c.b16 %v693, %v692
      %v697 = vpack.c.b16 %v694, %v694
      %vm700 = vcmask 293888
      %v702 = vsel %vm700, %v664, 0
      %v705 = vsel %vm700, %v665, 0
      %v708 = vsel %vm700, %v666, 0
      %v711 = vsel %vm700, %v667, 0
      %v714 = vsel %vm700, %v668, 0
      %v717 = vsel %vm700, %v669, 0
      %v720 = vsel %vm700, %v670, 0
      %v723 = vsel %vm700, %v671, 0
      %v726 = vsel %vm700, %v672, 0
      %v729 = vsel %vm700, %v673, 0
      %v732 = vsel %vm700, %v674, 0
      %v735 = vsel %vm700, %v675, 0
      %v738 = vsel %vm700, %v676, 0
      %v741 = vsel %vm700, %v677, 0
      %v744 = vsel %vm700, %v678, 0
      %v747 = vsel %vm700, %v679, 0
      %v750 = vsel %vm700, %v680, 0
      %v753 = vsel %vm700, %v681, 0
      %v756 = vsel %vm700, %v682, 0
      %v759 = vsel %vm700, %v683, 0
      %v762 = vsel %vm700, %v684, 0
      %vm764 = vcmask 1041408
      %v766 = vsel %vm764, %v697, 0
      %768 = vmatprep.subr.bf16.mxu0 0
      %769 = vmatpush1.bf16.msra.mxu0 0
      %770 = vmatprep.subr.bf16.mxu0 0
      %771 = vmatpush1.bf16.msra.mxu0 0
      %772 = vmatprep.subr.bf16.mxu0 0
      %773 = vmatpush1.bf16.msra.mxu0 0
      %774 = vmatprep.subr.bf16.mxu0 0
      %775 = vmatpush1.bf16.msra.mxu0 0
      %776 = vmatprep.subr.bf16.mxu0 0
      %777 = vmatpush1.bf16.msra.mxu0 0
      %778 = vmatprep.subr.bf16.mxu0 0
      %779 = vmatpush1.bf16.msra.mxu0 %v766
      %780 = vmatprep.subr.bf16.mxu0 0
      %781 = vmatpush1.bf16.msra.mxu0 %v696
      %782 = vmatprep.subr.bf16.mxu0 0
      %783 = vmatpush1.bf16.msra.mxu0 %v695
      %784 = vmatprep.subr.bf16.mxu0 0
      %785 = vmatpush2.bf16.msra.mxu0 0
      %786 = vmatprep.subr.bf16.mxu0 0
      %787 = vmatpush2.bf16.msra.mxu0 0
      %788 = vmatprep.subr.bf16.mxu0 0
      %789 = vmatpush2.bf16.msra.mxu0 0
      %790 = vmatprep.subr.bf16.mxu0 0
      %791 = vmatpush2.bf16.msra.mxu0 0
      %792 = vmatprep.subr.bf16.mxu0 0
      %793 = vmatpush2.bf16.msra.mxu0 0
      %794 = vmatprep.subr.bf16.mxu0 0
      %795 = vmatpush2.bf16.msra.mxu0 0
      %796 = vmatprep.subr.bf16.mxu0 0
      %797 = vmatpush2.bf16.msra.mxu0 0
      %798 = vmatprep.subr.bf16.mxu0 0
      %799 = vmatpush2.bf16.msra.mxu0 0
      %800 = vmatprep.mubr.bf16.mxu0 0
      %801 = vmatmul.mubr.bf16.gmra.mxu0 %v702
      %v802 = vpop.f32.mrf.mxu0
      %v803 = vadd.f32 0.0, %v802
      %v804 = vpop.f32.mrf.mxu0
      %v805 = vpop.f32.mrf.mxu0
      %v806 = vadd.f32 0.0, %v805
      %v807 = vpop.f32.mrf.mxu0
      %808 = vmatprep.mubr.bf16.mxu0 0
      %809 = vmatmul.mubr.bf16.gmra.mxu0 %v705
      %v810 = vpop.f32.mrf.mxu0
      %v811 = vadd.f32 0.0, %v810
      %v812 = vpop.f32.mrf.mxu0
      %v813 = vpop.f32.mrf.mxu0
      %v814 = vadd.f32 0.0, %v813
      %v815 = vpop.f32.mrf.mxu0
      %816 = vmatprep.mubr.bf16.mxu0 0
      %817 = vmatmul.mubr.bf16.gmra.mxu0 %v708
      %v818 = vpop.f32.mrf.mxu0
      %v819 = vadd.f32 0.0, %v818
      %v820 = vpop.f32.mrf.mxu0
      %v821 = vpop.f32.mrf.mxu0
      %v822 = vadd.f32 0.0, %v821
      %v823 = vpop.f32.mrf.mxu0
      %824 = vmatprep.mubr.bf16.mxu0 0
      %825 = vmatmul.mubr.bf16.gmra.mxu0 %v711
      %v826 = vpop.f32.mrf.mxu0
      %v827 = vadd.f32 0.0, %v826
      %v828 = vpop.f32.mrf.mxu0
      %v829 = vpop.f32.mrf.mxu0
      %v830 = vadd.f32 0.0, %v829
      %v831 = vpop.f32.mrf.mxu0
      %832 = vmatprep.mubr.bf16.mxu0 0
      %833 = vmatmul.mubr.bf16.gmra.mxu0 %v714
      %v834 = vpop.f32.mrf.mxu0
      %v835 = vadd.f32 0.0, %v834
      %v836 = vpop.f32.mrf.mxu0
      %v837 = vpop.f32.mrf.mxu0
      %v838 = vadd.f32 0.0, %v837
      %v839 = vpop.f32.mrf.mxu0
      %840 = vmatprep.mubr.bf16.mxu0 0
      %841 = vmatmul.mubr.bf16.gmra.mxu0 %v717
      %v842 = vpop.f32.mrf.mxu0
      %v843 = vadd.f32 0.0, %v842
      %v844 = vpop.f32.mrf.mxu0
      %v845 = vpop.f32.mrf.mxu0
      %v846 = vadd.f32 0.0, %v845
      %v847 = vpop.f32.mrf.mxu0
      %848 = vmatprep.mubr.bf16.mxu0 0
      %849 = vmatmul.mubr.bf16.gmra.mxu0 %v720
      %v850 = vpop.f32.mrf.mxu0
      %v851 = vadd.f32 0.0, %v850
      %v852 = vpop.f32.mrf.mxu0
      %v853 = vpop.f32.mrf.mxu0
      %v854 = vadd.f32 0.0, %v853
      %v855 = vpop.f32.mrf.mxu0
      %856 = vmatprep.mubr.bf16.mxu0 0
      %857 = vmatmul.mubr.bf16.gmra.mxu0 %v723
      %v858 = vpop.f32.mrf.mxu0
      %v859 = vadd.f32 0.0, %v858
      %v860 = vpop.f32.mrf.mxu0
      %v861 = vpop.f32.mrf.mxu0
      %v862 = vadd.f32 0.0, %v861
      %v863 = vpop.f32.mrf.mxu0
      %864 = vmatprep.mubr.bf16.mxu0 0
      %865 = vmatmul.mubr.bf16.gmra.mxu0 %v726
      %v866 = vpop.f32.mrf.mxu0
      %v867 = vadd.f32 0.0, %v866
      %v868 = vpop.f32.mrf.mxu0
      %v869 = vpop.f32.mrf.mxu0
      %v870 = vadd.f32 0.0, %v869
      %v871 = vpop.f32.mrf.mxu0
      %872 = vmatprep.mubr.bf16.mxu0 0
      %873 = vmatmul.mubr.bf16.gmra.mxu0 %v729
      %v874 = vpop.f32.mrf.mxu0
      %v875 = vadd.f32 0.0, %v874
      %v876 = vpop.f32.mrf.mxu0
      %v877 = vpop.f32.mrf.mxu0
      %v878 = vadd.f32 0.0, %v877
      %v879 = vpop.f32.mrf.mxu0
      %880 = vmatprep.mubr.bf16.mxu0 0
      %881 = vmatmul.mubr.bf16.gmra.mxu0 %v732
      %v882 = vpop.f32.mrf.mxu0
      %v883 = vadd.f32 0.0, %v882
      %v884 = vpop.f32.mrf.mxu0
      %v885 = vpop.f32.mrf.mxu0
      %v886 = vadd.f32 0.0, %v885
      %v887 = vpop.f32.mrf.mxu0
      %888 = vmatprep.mubr.bf16.mxu0 0
      %889 = vmatmul.mubr.bf16.gmra.mxu0 %v735
      %v890 = vpop.f32.mrf.mxu0
      %v891 = vadd.f32 0.0, %v890
      %v892 = vpop.f32.mrf.mxu0
      %v893 = vpop.f32.mrf.mxu0
      %v894 = vadd.f32 0.0, %v893
      %v895 = vpop.f32.mrf.mxu0
      %896 = vmatprep.mubr.bf16.mxu0 0
      %897 = vmatmul.mubr.bf16.gmra.mxu0 %v738
      %v898 = vpop.f32.mrf.mxu0
      %v899 = vadd.f32 0.0, %v898
      %v900 = vpop.f32.mrf.mxu0
      %v901 = vpop.f32.mrf.mxu0
      %v902 = vadd.f32 0.0, %v901
      %v903 = vpop.f32.mrf.mxu0
      %904 = vmatprep.mubr.bf16.mxu0 0
      %905 = vmatmul.mubr.bf16.gmra.mxu0 %v741
      %v906 = vpop.f32.mrf.mxu0
      %v907 = vadd.f32 0.0, %v906
      %v908 = vpop.f32.mrf.mxu0
      %v909 = vpop.f32.mrf.mxu0
      %v910 = vadd.f32 0.0, %v909
      %v911 = vpop.f32.mrf.mxu0
      %912 = vmatprep.mubr.bf16.mxu0 0
      %913 = vmatmul.mubr.bf16.gmra.mxu0 %v744
      %v914 = vpop.f32.mrf.mxu0
      %v915 = vadd.f32 0.0, %v914
      %v916 = vpop.f32.mrf.mxu0
      %v917 = vpop.f32.mrf.mxu0
      %v918 = vadd.f32 0.0, %v917
      %v919 = vpop.f32.mrf.mxu0
      %920 = vmatprep.mubr.bf16.mxu0 0
      %921 = vmatmul.mubr.bf16.gmra.mxu0 %v747
      %v922 = vpop.f32.mrf.mxu0
      %v923 = vadd.f32 0.0, %v922
      %v924 = vpop.f32.mrf.mxu0
      %v925 = vpop.f32.mrf.mxu0
      %v926 = vadd.f32 0.0, %v925
      %v927 = vpop.f32.mrf.mxu0
      %928 = vmatprep.mubr.bf16.mxu0 0
      %929 = vmatmul.mubr.bf16.gmra.mxu0 %v750
      %v930 = vpop.f32.mrf.mxu0
      %v931 = vadd.f32 0.0, %v930
      %v932 = vpop.f32.mrf.mxu0
      %v933 = vpop.f32.mrf.mxu0
      %v934 = vadd.f32 0.0, %v933
      %v935 = vpop.f32.mrf.mxu0
      %936 = vmatprep.mubr.bf16.mxu0 0
      %937 = vmatmul.mubr.bf16.gmra.mxu0 %v753
      %v938 = vpop.f32.mrf.mxu0
      %v939 = vadd.f32 0.0, %v938
      %v940 = vpop.f32.mrf.mxu0
      %v941 = vpop.f32.mrf.mxu0
      %v942 = vadd.f32 0.0, %v941
      %v943 = vpop.f32.mrf.mxu0
      %944 = vmatprep.mubr.bf16.mxu0 0
      %945 = vmatmul.mubr.bf16.gmra.mxu0 %v756
      %v946 = vpop.f32.mrf.mxu0
      %v947 = vadd.f32 0.0, %v946
      %v948 = vpop.f32.mrf.mxu0
      %v949 = vpop.f32.mrf.mxu0
      %v950 = vadd.f32 0.0, %v949
      %v951 = vpop.f32.mrf.mxu0
      %952 = vmatprep.mubr.bf16.mxu0 0
      %953 = vmatmul.mubr.bf16.gmra.mxu0 %v759
      %v954 = vpop.f32.mrf.mxu0
      %v955 = vadd.f32 0.0, %v954
      %v956 = vpop.f32.mrf.mxu0
      %v957 = vpop.f32.mrf.mxu0
      %v958 = vadd.f32 0.0, %v957
      %v959 = vpop.f32.mrf.mxu0
      %960 = vmatprep.mubr.bf16.mxu0 0
      %961 = vmatmul.mubr.bf16.gmra.mxu0 %v762
      %v962 = vpop.f32.mrf.mxu0
      %v963 = vadd.f32 0.0, %v962
      %v964 = vpop.f32.mrf.mxu0
      %v965 = vpop.f32.mrf.mxu0
      %v966 = vpop.f32.mrf.mxu0
      %967 = vdwg.mxu0
      %v968 = vld [vmem:[%s3] sm:$0x1]
      %v970 = vlaneseq
      %v971 = vshrl.u32 %v970, 7
      %v972 = vsub.s32 0, %v971
      %v973 = vrot.slane %v968, %v972
      %v975 = vmul.f32 %v803, %v973
      %v976 = vmul.f32 %v806, %v973
      %v977 = vmul.f32 %v811, %v973
      %v978 = vmul.f32 %v814, %v973
      %v979 = vmul.f32 %v819, %v973
      %v980 = vmul.f32 %v822, %v973
      %v981 = vmul.f32 %v827, %v973
      %v982 = vmul.f32 %v830, %v973
      %v983 = vmul.f32 %v835, %v973
      %v984 = vmul.f32 %v838, %v973
      %v985 = vmul.f32 %v843, %v973
      %v986 = vmul.f32 %v846, %v973
      %v987 = vmul.f32 %v851, %v973
      %v988 = vmul.f32 %v854, %v973
      %v989 = vmul.f32 %v859, %v973
      %v990 = vmul.f32 %v862, %v973
      %v991 = vmul.f32 %v867, %v973
      %v992 = vmul.f32 %v870, %v973
      %v993 = vmul.f32 %v875, %v973
      %v994 = vmul.f32 %v878, %v973
      %v995 = vmul.f32 %v883, %v973
      %v996 = vmul.f32 %v886, %v973
      %v997 = vmul.f32 %v891, %v973
      %v998 = vmul.f32 %v894, %v973
      %v999 = vmul.f32 %v899, %v973
      %v1000 = vmul.f32 %v902, %v973
      %v1001 = vmul.f32 %v907, %v973
      %v1002 = vmul.f32 %v910, %v973
      %v1003 = vmul.f32 %v915, %v973
      %v1004 = vmul.f32 %v918, %v973
      %v1005 = vmul.f32 %v923, %v973
      %v1006 = vmul.f32 %v926, %v973
      %v1007 = vmul.f32 %v931, %v973
      %v1008 = vmul.f32 %v934, %v973
      %v1009 = vmul.f32 %v939, %v973
      %v1010 = vmul.f32 %v942, %v973
      %v1011 = vmul.f32 %v947, %v973
      %v1012 = vmul.f32 %v950, %v973
      %v1013 = vmul.f32 %v955, %v973
      %v1014 = vmul.f32 %v958, %v973
      %v1015 = vmul.f32 %v963, %v973
      %v1016 = vld [vmem:[%s4] sm:$0x1]
      %v1018 = vlaneseq
      %v1019 = vshrl.u32 %v1018, 7
      %v1020 = vsub.s32 0, %v1019
      %v1021 = vrot.slane %v1016, %v1020
      %v1023 = vadd.f32 %v975, %v1021
      %v1024 = vadd.f32 %v976, %v1021
      %v1025 = vadd.f32 %v977, %v1021
      %v1026 = vadd.f32 %v978, %v1021
      %v1027 = vadd.f32 %v979, %v1021
      %v1028 = vadd.f32 %v980, %v1021
      %v1029 = vadd.f32 %v981, %v1021
      %v1030 = vadd.f32 %v982, %v1021
      %v1031 = vadd.f32 %v983, %v1021
      %v1032 = vadd.f32 %v984, %v1021
      %v1033 = vadd.f32 %v985, %v1021
      %v1034 = vadd.f32 %v986, %v1021
      %v1035 = vadd.f32 %v987, %v1021
      %v1036 = vadd.f32 %v988, %v1021
      %v1037 = vadd.f32 %v989, %v1021
      %v1038 = vadd.f32 %v990, %v1021
      %v1039 = vadd.f32 %v991, %v1021
      %v1040 = vadd.f32 %v992, %v1021
      %v1041 = vadd.f32 %v993, %v1021
      %v1042 = vadd.f32 %v994, %v1021
      %v1043 = vadd.f32 %v995, %v1021
      %v1044 = vadd.f32 %v996, %v1021
      %v1045 = vadd.f32 %v997, %v1021
      %v1046 = vadd.f32 %v998, %v1021
      %v1047 = vadd.f32 %v999, %v1021
      %v1048 = vadd.f32 %v1000, %v1021
      %v1049 = vadd.f32 %v1001, %v1021
      %v1050 = vadd.f32 %v1002, %v1021
      %v1051 = vadd.f32 %v1003, %v1021
      %v1052 = vadd.f32 %v1004, %v1021
      %v1053 = vadd.f32 %v1005, %v1021
      %v1054 = vadd.f32 %v1006, %v1021
      %v1055 = vadd.f32 %v1007, %v1021
      %v1056 = vadd.f32 %v1008, %v1021
      %v1057 = vadd.f32 %v1009, %v1021
      %v1058 = vadd.f32 %v1010, %v1021
      %v1059 = vadd.f32 %v1011, %v1021
      %v1060 = vadd.f32 %v1012, %v1021
      %v1061 = vadd.f32 %v1013, %v1021
      %v1062 = vadd.f32 %v1014, %v1021
      %v1063 = vadd.f32 %v1015, %v1021
      %v1064 = vmax.f32 %v1023, 0.0
      %v1065 = vmax.f32 %v1024, 0.0
      %v1066 = vmax.f32 %v1025, 0.0
      %v1067 = vmax.f32 %v1026, 0.0
      %v1068 = vmax.f32 %v1027, 0.0
      %v1069 = vmax.f32 %v1028, 0.0
      %v1070 = vmax.f32 %v1029, 0.0
      %v1071 = vmax.f32 %v1030, 0.0
      %v1072 = vmax.f32 %v1031, 0.0
      %v1073 = vmax.f32 %v1032, 0.0
      %v1074 = vmax.f32 %v1033, 0.0
      %v1075 = vmax.f32 %v1034, 0.0
      %v1076 = vmax.f32 %v1035, 0.0
      %v1077 = vmax.f32 %v1036, 0.0
      %v1078 = vmax.f32 %v1037, 0.0
      %v1079 = vmax.f32 %v1038, 0.0
      %v1080 = vmax.f32 %v1039, 0.0
      %v1081 = vmax.f32 %v1040, 0.0
      %v1082 = vmax.f32 %v1041, 0.0
      %v1083 = vmax.f32 %v1042, 0.0
      %v1084 = vmax.f32 %v1043, 0.0
      %v1085 = vmax.f32 %v1044, 0.0
      %v1086 = vmax.f32 %v1045, 0.0
      %v1087 = vmax.f32 %v1046, 0.0
      %v1088 = vmax.f32 %v1047, 0.0
      %v1089 = vmax.f32 %v1048, 0.0
      %v1090 = vmax.f32 %v1049, 0.0
      %v1091 = vmax.f32 %v1050, 0.0
      %v1092 = vmax.f32 %v1051, 0.0
      %v1093 = vmax.f32 %v1052, 0.0
      %v1094 = vmax.f32 %v1053, 0.0
      %v1095 = vmax.f32 %v1054, 0.0
      %v1096 = vmax.f32 %v1055, 0.0
      %v1097 = vmax.f32 %v1056, 0.0
      %v1098 = vmax.f32 %v1057, 0.0
      %v1099 = vmax.f32 %v1058, 0.0
      %v1100 = vmax.f32 %v1059, 0.0
      %v1101 = vmax.f32 %v1060, 0.0
      %v1102 = vmax.f32 %v1061, 0.0
      %v1103 = vmax.f32 %v1062, 0.0
      %v1104 = vmax.f32 %v1063, 0.0
      %v1105 = vsel %vm483, 1, 0
      %v1106 = vsel %vm484, 1, 0
      %v1107 = vsel %vm485, 1, 0
      %v1108 = vsel %vm486, 1, 0
      %v1109 = vsel %vm487, 1, 0
      %v1110 = vsel %vm488, 1, 0
      %v1111 = vsel %vm489, 1, 0
      %v1112 = vsel %vm490, 1, 0
      %v1113 = vsel %vm491, 1, 0
      %v1114 = vsel %vm492, 1, 0
      %v1115 = vsel %vm493, 1, 0
      %v1116 = vsel %vm494, 1, 0
      %v1117 = vsel %vm495, 1, 0
      %v1118 = vsel %vm496, 1, 0
      %v1119 = vsel %vm497, 1, 0
      %v1120 = vsel %vm498, 1, 0
      %v1121 = vsel %vm499, 1, 0
      %v1122 = vsel %vm500, 1, 0
      %v1123 = vsel %vm501, 1, 0
      %v1124 = vsel %vm502, 1, 0
      %v1125 = vsel %vm503, 1, 0
      %v1126 = vsel %vm504, 1, 0
      %v1127 = vsel %vm505, 1, 0
      %v1128 = vsel %vm506, 1, 0
      %v1129 = vsel %vm507, 1, 0
      %v1130 = vsel %vm508, 1, 0
      %v1131 = vsel %vm509, 1, 0
      %v1132 = vsel %vm510, 1, 0
      %v1133 = vsel %vm511, 1, 0
      %v1134 = vsel %vm512, 1, 0
      %v1135 = vsel %vm513, 1, 0
      %v1136 = vsel %vm514, 1, 0
      %v1137 = vsel %vm515, 1, 0
      %v1138 = vsel %vm516, 1, 0
      %v1139 = vsel %vm517, 1, 0
      %v1140 = vsel %vm518, 1, 0
      %v1141 = vsel %vm519, 1, 0
      %v1142 = vsel %vm520, 1, 0
      %v1143 = vsel %vm521, 1, 0
      %v1144 = vsel %vm522, 1, 0
      %v1145 = vsel %vm523, 1, 0
      %1146 = vset.pattern.permute.xlu0 0
      %1147 = vperm.xlu0 %1146, %v1105
      %v1148 = vpop.permute.xlu0 %1147
      %1149 = vset.pattern.permute.xlu0 0
      %1150 = vperm.xlu0 %1149, %v1106
      %v1151 = vpop.permute.xlu0 %1150
      %1152 = vset.pattern.permute.xlu0 0
      %1153 = vperm.xlu0 %1152, %v1107
      %v1154 = vpop.permute.xlu0 %1153
      %1155 = vset.pattern.permute.xlu0 0
      %1156 = vperm.xlu0 %1155, %v1108
      %v1157 = vpop.permute.xlu0 %1156
      %1158 = vset.pattern.permute.xlu0 0
      %1159 = vperm.xlu0 %1158, %v1109
      %v1160 = vpop.permute.xlu0 %1159
      %1161 = vset.pattern.permute.xlu0 0
      %1162 = vperm.xlu0 %1161, %v1110
      %v1163 = vpop.permute.xlu0 %1162
      %1164 = vset.pattern.permute.xlu0 0
      %1165 = vperm.xlu0 %1164, %v1111
      %v1166 = vpop.permute.xlu0 %1165
      %1167 = vset.pattern.permute.xlu0 0
      %1168 = vperm.xlu0 %1167, %v1112
      %v1169 = vpop.permute.xlu0 %1168
      %1170 = vset.pattern.permute.xlu0 0
      %1171 = vperm.xlu0 %1170, %v1113
      %v1172 = vpop.permute.xlu0 %1171
      %1173 = vset.pattern.permute.xlu0 0
      %1174 = vperm.xlu0 %1173, %v1114
      %v1175 = vpop.permute.xlu0 %1174
      %1176 = vset.pattern.permute.xlu0 0
      %1177 = vperm.xlu0 %1176, %v1115
      %v1178 = vpop.permute.xlu0 %1177
      %1179 = vset.pattern.permute.xlu0 0
      %1180 = vperm.xlu0 %1179, %v1116
      %v1181 = vpop.permute.xlu0 %1180
      %1182 = vset.pattern.permute.xlu0 0
      %1183 = vperm.xlu0 %1182, %v1117
      %v1184 = vpop.permute.xlu0 %1183
      %1185 = vset.pattern.permute.xlu0 0
      %1186 = vperm.xlu0 %1185, %v1118
      %v1187 = vpop.permute.xlu0 %1186
      %1188 = vset.pattern.permute.xlu0 0
      %1189 = vperm.xlu0 %1188, %v1119
      %v1190 = vpop.permute.xlu0 %1189
      %1191 = vset.pattern.permute.xlu0 0
      %1192 = vperm.xlu0 %1191, %v1120
      %v1193 = vpop.permute.xlu0 %1192
      %1194 = vset.pattern.permute.xlu0 0
      %1195 = vperm.xlu0 %1194, %v1121
      %v1196 = vpop.permute.xlu0 %1195
      %1197 = vset.pattern.permute.xlu0 0
      %1198 = vperm.xlu0 %1197, %v1122
      %v1199 = vpop.permute.xlu0 %1198
      %1200 = vset.pattern.permute.xlu0 0
      %1201 = vperm.xlu0 %1200, %v1123
      %v1202 = vpop.permute.xlu0 %1201
      %1203 = vset.pattern.permute.xlu0 0
      %1204 = vperm.xlu0 %1203, %v1124
      %v1205 = vpop.permute.xlu0 %1204
      %1206 = vset.pattern.permute.xlu0 0
      %1207 = vperm.xlu0 %1206, %v1125
      %v1208 = vpop.permute.xlu0 %1207
      %1209 = vset.pattern.permute.xlu0 0
      %1210 = vperm.xlu0 %1209, %v1126
      %v1211 = vpop.permute.xlu0 %1210
      %1212 = vset.pattern.permute.xlu0 0
      %1213 = vperm.xlu0 %1212, %v1127
      %v1214 = vpop.permute.xlu0 %1213
      %1215 = vset.pattern.permute.xlu0 0
      %1216 = vperm.xlu0 %1215, %v1128
      %v1217 = vpop.permute.xlu0 %1216
      %1218 = vset.pattern.permute.xlu0 0
      %1219 = vperm.xlu0 %1218, %v1129
      %v1220 = vpop.permute.xlu0 %1219
      %1221 = vset.pattern.permute.xlu0 0
      %1222 = vperm.xlu0 %1221, %v1130
      %v1223 = vpop.permute.xlu0 %1222
      %1224 = vset.pattern.permute.xlu0 0
      %1225 = vperm.xlu0 %1224, %v1131
      %v1226 = vpop.permute.xlu0 %1225
      %1227 = vset.pattern.permute.xlu0 0
      %1228 = vperm.xlu0 %1227, %v1132
      %v1229 = vpop.permute.xlu0 %1228
      %1230 = vset.pattern.permute.xlu0 0
      %1231 = vperm.xlu0 %1230, %v1133
      %v1232 = vpop.permute.xlu0 %1231
      %1233 = vset.pattern.permute.xlu0 0
      %1234 = vperm.xlu0 %1233, %v1134
      %v1235 = vpop.permute.xlu0 %1234
      %1236 = vset.pattern.permute.xlu0 0
      %1237 = vperm.xlu0 %1236, %v1135
      %v1238 = vpop.permute.xlu0 %1237
      %1239 = vset.pattern.permute.xlu0 0
      %1240 = vperm.xlu0 %1239, %v1136
      %v1241 = vpop.permute.xlu0 %1240
      %1242 = vset.pattern.permute.xlu0 0
      %1243 = vperm.xlu0 %1242, %v1137
      %v1244 = vpop.permute.xlu0 %1243
      %1245 = vset.pattern.permute.xlu0 0
      %1246 = vperm.xlu0 %1245, %v1138
      %v1247 = vpop.permute.xlu0 %1246
      %1248 = vset.pattern.permute.xlu0 0
      %1249 = vperm.xlu0 %1248, %v1139
      %v1250 = vpop.permute.xlu0 %1249
      %1251 = vset.pattern.permute.xlu0 0
      %1252 = vperm.xlu0 %1251, %v1140
      %v1253 = vpop.permute.xlu0 %1252
      %1254 = vset.pattern.permute.xlu0 0
      %1255 = vperm.xlu0 %1254, %v1141
      %v1256 = vpop.permute.xlu0 %1255
      %1257 = vset.pattern.permute.xlu0 0
      %1258 = vperm.xlu0 %1257, %v1142
      %v1259 = vpop.permute.xlu0 %1258
      %1260 = vset.pattern.permute.xlu0 0
      %1261 = vperm.xlu0 %1260, %v1143
      %v1262 = vpop.permute.xlu0 %1261
      %1263 = vset.pattern.permute.xlu0 0
      %1264 = vperm.xlu0 %1263, %v1144
      %v1265 = vpop.permute.xlu0 %1264
      %1266 = vset.pattern.permute.xlu0 0
      %1267 = vperm.xlu0 %1266, %v1145
      %v1268 = vpop.permute.xlu0 %1267
      %vm1269 = vcmp.eq.s32.totalorder %v1148, 1
      %vm1270 = vcmp.eq.s32.totalorder %v1151, 1
      %vm1271 = vcmp.eq.s32.totalorder %v1154, 1
      %vm1272 = vcmp.eq.s32.totalorder %v1157, 1
      %vm1273 = vcmp.eq.s32.totalorder %v1160, 1
      %vm1274 = vcmp.eq.s32.totalorder %v1163, 1
      %vm1275 = vcmp.eq.s32.totalorder %v1166, 1
      %vm1276 = vcmp.eq.s32.totalorder %v1169, 1
      %vm1277 = vcmp.eq.s32.totalorder %v1172, 1
      %vm1278 = vcmp.eq.s32.totalorder %v1175, 1
      %vm1279 = vcmp.eq.s32.totalorder %v1178, 1
      %vm1280 = vcmp.eq.s32.totalorder %v1181, 1
      %vm1281 = vcmp.eq.s32.totalorder %v1184, 1
      %vm1282 = vcmp.eq.s32.totalorder %v1187, 1
      %vm1283 = vcmp.eq.s32.totalorder %v1190, 1
      %vm1284 = vcmp.eq.s32.totalorder %v1193, 1
      %vm1285 = vcmp.eq.s32.totalorder %v1196, 1
      %vm1286 = vcmp.eq.s32.totalorder %v1199, 1
      %vm1287 = vcmp.eq.s32.totalorder %v1202, 1
      %vm1288 = vcmp.eq.s32.totalorder %v1205, 1
      %vm1289 = vcmp.eq.s32.totalorder %v1208, 1
      %vm1290 = vcmp.eq.s32.totalorder %v1211, 1
      %vm1291 = vcmp.eq.s32.totalorder %v1214, 1
      %vm1292 = vcmp.eq.s32.totalorder %v1217, 1
      %vm1293 = vcmp.eq.s32.totalorder %v1220, 1
      %vm1294 = vcmp.eq.s32.totalorder %v1223, 1
      %vm1295 = vcmp.eq.s32.totalorder %v1226, 1
      %vm1296 = vcmp.eq.s32.totalorder %v1229, 1
      %vm1297 = vcmp.eq.s32.totalorder %v1232, 1
      %vm1298 = vcmp.eq.s32.totalorder %v1235, 1
      %vm1299 = vcmp.eq.s32.totalorder %v1238, 1
      %vm1300 = vcmp.eq.s32.totalorder %v1241, 1
      %vm1301 = vcmp.eq.s32.totalorder %v1244, 1
      %vm1302 = vcmp.eq.s32.totalorder %v1247, 1
      %vm1303 = vcmp.eq.s32.totalorder %v1250, 1
      %vm1304 = vcmp.eq.s32.totalorder %v1253, 1
      %vm1305 = vcmp.eq.s32.totalorder %v1256, 1
      %vm1306 = vcmp.eq.s32.totalorder %v1259, 1
      %vm1307 = vcmp.eq.s32.totalorder %v1262, 1
      %vm1308 = vcmp.eq.s32.totalorder %v1265, 1
      %vm1309 = vcmp.eq.s32.totalorder %v1268, 1
      %v1310 = vsel %vm1269, %v1064, 0.0
      %v1311 = vsel %vm1270, %v1065, 0.0
      %v1312 = vsel %vm1271, %v1066, 0.0
      %v1313 = vsel %vm1272, %v1067, 0.0
      %v1314 = vsel %vm1273, %v1068, 0.0
      %v1315 = vsel %vm1274, %v1069, 0.0
      %v1316 = vsel %vm1275, %v1070, 0.0
      %v1317 = vsel %vm1276, %v1071, 0.0
      %v1318 = vsel %vm1277, %v1072, 0.0
      %v1319 = vsel %vm1278, %v1073, 0.0
      %v1320 = vsel %vm1279, %v1074, 0.0
      %v1321 = vsel %vm1280, %v1075, 0.0
      %v1322 = vsel %vm1281, %v1076, 0.0
      %v1323 = vsel %vm1282, %v1077, 0.0
      %v1324 = vsel %vm1283, %v1078, 0.0
      %v1325 = vsel %vm1284, %v1079, 0.0
      %v1326 = vsel %vm1285, %v1080, 0.0
      %v1327 = vsel %vm1286, %v1081, 0.0
      %v1328 = vsel %vm1287, %v1082, 0.0
      %v1329 = vsel %vm1288, %v1083, 0.0
      %v1330 = vsel %vm1289, %v1084, 0.0
      %v1331 = vsel %vm1290, %v1085, 0.0
      %v1332 = vsel %vm1291, %v1086, 0.0
      %v1333 = vsel %vm1292, %v1087, 0.0
      %v1334 = vsel %vm1293, %v1088, 0.0
      %v1335 = vsel %vm1294, %v1089, 0.0
      %v1336 = vsel %vm1295, %v1090, 0.0
      %v1337 = vsel %vm1296, %v1091, 0.0
      %v1338 = vsel %vm1297, %v1092, 0.0
      %v1339 = vsel %vm1298, %v1093, 0.0
      %v1340 = vsel %vm1299, %v1094, 0.0
      %v1341 = vsel %vm1300, %v1095, 0.0
      %v1342 = vsel %vm1301, %v1096, 0.0
      %v1343 = vsel %vm1302, %v1097, 0.0
      %v1344 = vsel %vm1303, %v1098, 0.0
      %v1345 = vsel %vm1304, %v1099, 0.0
      %v1346 = vsel %vm1305, %v1100, 0.0
      %v1347 = vsel %vm1306, %v1101, 0.0
      %v1348 = vsel %vm1307, %v1102, 0.0
      %v1349 = vsel %vm1308, %v1103, 0.0
      %v1350 = vsel %vm1309, %v1104, 0.0
      %v1351 = vpack.c.bf16 %v1311, %v1310
      %v1352 = vpack.c.bf16 %v1313, %v1312
      %v1353 = vpack.c.bf16 %v1315, %v1314
      %v1354 = vpack.c.bf16 %v1317, %v1316
      %v1355 = vpack.c.bf16 %v1319, %v1318
      %v1356 = vpack.c.bf16 %v1321, %v1320
      %v1357 = vpack.c.bf16 %v1323, %v1322
      %v1358 = vpack.c.bf16 %v1325, %v1324
      %v1359 = vpack.c.bf16 %v1327, %v1326
      %v1360 = vpack.c.bf16 %v1329, %v1328
      %v1361 = vpack.c.bf16 %v1331, %v1330
      %v1362 = vpack.c.bf16 %v1333, %v1332
      %v1363 = vpack.c.bf16 %v1335, %v1334
      %v1364 = vpack.c.bf16 %v1337, %v1336
      %v1365 = vpack.c.bf16 %v1339, %v1338
      %v1366 = vpack.c.bf16 %v1341, %v1340
      %v1367 = vpack.c.bf16 %v1343, %v1342
      %v1368 = vpack.c.bf16 %v1345, %v1344
      %v1369 = vpack.c.bf16 %v1347, %v1346
      %v1370 = vpack.c.bf16 %v1349, %v1348
      %v1371 = vpack.c.bf16 %v1350, %v1350
      %v1393 = vunpack.c.l.b16 %v1351
      %v1394 = vunpack.c.h.b16 %v1351
      %v1395 = vunpack.c.l.b16 %v1352
      %v1396 = vunpack.c.h.b16 %v1352
      %v1397 = vunpack.c.l.b16 %v1353
      %v1398 = vunpack.c.h.b16 %v1353
      %v1399 = vunpack.c.l.b16 %v1354
      %v1400 = vunpack.c.h.b16 %v1354
      %v1401 = vunpack.c.l.b16 %v1355
      %v1402 = vunpack.c.h.b16 %v1355
      %v1403 = vunpack.c.l.b16 %v1356
      %v1404 = vunpack.c.h.b16 %v1356
      %v1405 = vunpack.c.l.b16 %v1357
      %v1406 = vunpack.c.h.b16 %v1357
      %v1407 = vunpack.c.l.b16 %v1358
      %v1408 = vunpack.c.h.b16 %v1358
      %v1409 = vunpack.c.l.b16 %v1359
      %v1410 = vunpack.c.h.b16 %v1359
      %v1411 = vunpack.c.l.b16 %v1360
      %v1412 = vunpack.c.h.b16 %v1360
      %v1413 = vunpack.c.l.b16 %v1361
      %v1414 = vunpack.c.h.b16 %v1361
      %v1415 = vunpack.c.l.b16 %v1362
      %v1416 = vunpack.c.h.b16 %v1362
      %v1417 = vunpack.c.l.b16 %v1363
      %v1418 = vunpack.c.h.b16 %v1363
      %v1419 = vunpack.c.l.b16 %v1364
      %v1420 = vunpack.c.h.b16 %v1364
      %v1421 = vunpack.c.l.b16 %v1365
      %v1422 = vunpack.c.h.b16 %v1365
      %v1423 = vunpack.c.l.b16 %v1366
      %v1424 = vunpack.c.h.b16 %v1366
      %v1425 = vunpack.c.l.b16 %v1367
      %v1426 = vunpack.c.h.b16 %v1367
      %v1427 = vunpack.c.l.b16 %v1368
      %v1428 = vunpack.c.h.b16 %v1368
      %v1429 = vunpack.c.l.b16 %v1369
      %v1430 = vunpack.c.h.b16 %v1369
      %v1431 = vunpack.c.l.b16 %v1370
      %v1432 = vunpack.c.h.b16 %v1370
      %v1433 = vunpack.c.l.b16 %v1371
      %v1434 = vpack.c.b16 %v1393, %v1393
      %v1435 = vpack.c.b16 %v1394, %v1394
      %v1436 = vpack.c.b16 %v1395, %v1395
      %v1437 = vpack.c.b16 %v1396, %v1396
      %v1438 = vpack.c.b16 %v1397, %v1397
      %v1439 = vpack.c.b16 %v1398, %v1398
      %v1440 = vpack.c.b16 %v1399, %v1399
      %v1441 = vpack.c.b16 %v1400, %v1400
      %v1442 = vpack.c.b16 %v1401, %v1401
      %v1443 = vpack.c.b16 %v1402, %v1402
      %v1444 = vpack.c.b16 %v1403, %v1403
      %v1445 = vpack.c.b16 %v1404, %v1404
      %v1446 = vpack.c.b16 %v1405, %v1405
      %v1447 = vpack.c.b16 %v1406, %v1406
      %v1448 = vpack.c.b16 %v1407, %v1407
      %v1449 = vpack.c.b16 %v1408, %v1408
      %v1450 = vpack.c.b16 %v1409, %v1409
      %v1451 = vpack.c.b16 %v1410, %v1410
      %v1452 = vpack.c.b16 %v1411, %v1411
      %v1453 = vpack.c.b16 %v1412, %v1412
      %v1454 = vpack.c.b16 %v1413, %v1413
      %v1455 = vpack.c.b16 %v1414, %v1414
      %v1456 = vpack.c.b16 %v1415, %v1415
      %v1457 = vpack.c.b16 %v1416, %v1416
      %v1458 = vpack.c.b16 %v1417, %v1417
      %v1459 = vpack.c.b16 %v1418, %v1418
      %v1460 = vpack.c.b16 %v1419, %v1419
      %v1461 = vpack.c.b16 %v1420, %v1420
      %v1462 = vpack.c.b16 %v1421, %v1421
      %v1463 = vpack.c.b16 %v1422, %v1422
      %v1464 = vpack.c.b16 %v1423, %v1423
      %v1465 = vpack.c.b16 %v1424, %v1424
      %v1466 = vpack.c.b16 %v1425, %v1425
      %v1467 = vpack.c.b16 %v1426, %v1426
      %v1468 = vpack.c.b16 %v1427, %v1427
      %v1469 = vpack.c.b16 %v1428, %v1428
      %v1470 = vpack.c.b16 %v1429, %v1429
      %v1471 = vpack.c.b16 %v1430, %v1430
      %v1472 = vpack.c.b16 %v1431, %v1431
      %v1473 = vpack.c.b16 %v1432, %v1432
      %v1474 = vpack.c.b16 %v1433, %v1433
      %1516 = vst.msk [vmem:[#allocation2 + $0x10] sm:$0xf] %vm524, %v1434
      %1517 = vst.msk [vmem:[#allocation2 + $0x14] sm:$0xf] %vm524, %v1435
      %1518 = vst.msk [vmem:[#allocation2 + $0x18] sm:$0xf] %vm524, %v1436
      %1519 = vst.msk [vmem:[#allocation2 + $0x1c] sm:$0xf] %vm524, %v1437
      %1520 = vst.msk [vmem:[#allocation2 + $0x20] sm:$0xf] %vm524, %v1438
      %1521 = vst.msk [vmem:[#allocation2 + $0x24] sm:$0xf] %vm524, %v1439
      %1522 = vst.msk [vmem:[#allocation2 + $0x28] sm:$0xf] %vm524, %v1440
      %1523 = vst.msk [vmem:[#allocation2 + $0x2c] sm:$0xf] %vm524, %v1441
      %1524 = vst.msk [vmem:[#allocation2 + $0x30] sm:$0xf] %vm524, %v1442
      %1525 = vst.msk [vmem:[#allocation2 + $0x34] sm:$0xf] %vm524, %v1443
      %1526 = vst.msk [vmem:[#allocation2 + $0x38] sm:$0xf] %vm524, %v1444
      %1527 = vst.msk [vmem:[#allocation2 + $0x3c] sm:$0xf] %vm524, %v1445
      %1528 = vst.msk [vmem:[#allocation2 + $0x40] sm:$0xf] %vm524, %v1446
      %1529 = vst.msk [vmem:[#allocation2 + $0x44] sm:$0xf] %vm524, %v1447
      %1530 = vst.msk [vmem:[#allocation2 + $0x48] sm:$0xf] %vm524, %v1448
      %1531 = vst.msk [vmem:[#allocation2 + $0x4c] sm:$0xf] %vm524, %v1449
      %1532 = vst.msk [vmem:[#allocation2 + $0x50] sm:$0xf] %vm524, %v1450
      %1533 = vst.msk [vmem:[#allocation2 + $0x54] sm:$0xf] %vm524, %v1451
      %1534 = vst.msk [vmem:[#allocation2 + $0x58] sm:$0xf] %vm524, %v1452
      %1535 = vst.msk [vmem:[#allocation2 + $0x5c] sm:$0xf] %vm524, %v1453
      %1536 = vst.msk [vmem:[#allocation2 + $0x60] sm:$0xf] %vm524, %v1454
      %1537 = vst.msk [vmem:[#allocation2 + $0x64] sm:$0xf] %vm524, %v1455
      %1538 = vst.msk [vmem:[#allocation2 + $0x68] sm:$0xf] %vm524, %v1456
      %1539 = vst.msk [vmem:[#allocation2 + $0x6c] sm:$0xf] %vm524, %v1457
      %1540 = vst.msk [vmem:[#allocation2 + $0x70] sm:$0xf] %vm524, %v1458
      %1541 = vst.msk [vmem:[#allocation2 + $0x74] sm:$0xf] %vm524, %v1459
      %1542 = vst.msk [vmem:[#allocation2 + $0x78] sm:$0xf] %vm524, %v1460
      %1543 = vst.msk [vmem:[#allocation2 + $0x7c] sm:$0xf] %vm524, %v1461
      %1544 = vst.msk [vmem:[#allocation2 + $0x80] sm:$0xf] %vm524, %v1462
      %1545 = vst.msk [vmem:[#allocation2 + $0x84] sm:$0xf] %vm524, %v1463
      %1546 = vst.msk [vmem:[#allocation2 + $0x88] sm:$0xf] %vm524, %v1464
      %1547 = vst.msk [vmem:[#allocation2 + $0x8c] sm:$0xf] %vm524, %v1465
      %1548 = vst.msk [vmem:[#allocation2 + $0x90] sm:$0xf] %vm524, %v1466
      %1549 = vst.msk [vmem:[#allocation2 + $0x94] sm:$0xf] %vm524, %v1467
      %1550 = vst.msk [vmem:[#allocation2 + $0x98] sm:$0xf] %vm524, %v1468
      %1551 = vst.msk [vmem:[#allocation2 + $0x9c] sm:$0xf] %vm524, %v1469
      %1552 = vst.msk [vmem:[#allocation2 + $0xa0] sm:$0xf] %vm524, %v1470
      %1553 = vst.msk [vmem:[#allocation2 + $0xa4] sm:$0xf] %vm524, %v1471
      %1554 = vst.msk [vmem:[#allocation2 + $0xa8] sm:$0xf] %vm524, %v1472
      %1555 = vst.msk [vmem:[#allocation2 + $0xac] sm:$0xf] %vm524, %v1473
      %1556 = vst.msk [vmem:[#allocation2 + $0xb0] sm:$0x3] %vm534, %v1474
      %v1557 = vld [vmem:[#allocation2 + $0x4] sm:$0xc]
      %v1558 = vld [vmem:[#allocation2 + $0x8] sm:$0xf]
      %v1559 = vld [vmem:[#allocation2 + $0xc] sm:$0xf]
      %v1560 = vld [vmem:[#allocation2 + $0x10] sm:$0xf]
      %v1561 = vld [vmem:[#allocation2 + $0x14] sm:$0xf]
      %v1562 = vld [vmem:[#allocation2 + $0x18] sm:$0xf]
      %v1563 = vld [vmem:[#allocation2 + $0x1c] sm:$0xf]
      %v1564 = vld [vmem:[#allocation2 + $0x20] sm:$0xf]
      %v1565 = vld [vmem:[#allocation2 + $0x24] sm:$0xf]
      %v1566 = vld [vmem:[#allocation2 + $0x28] sm:$0xf]
      %v1567 = vld [vmem:[#allocation2 + $0x2c] sm:$0xf]
      %v1568 = vld [vmem:[#allocation2 + $0x30] sm:$0xf]
      %v1569 = vld [vmem:[#allocation2 + $0x34] sm:$0xf]
      %v1570 = vld [vmem:[#allocation2 + $0x38] sm:$0xf]
      %v1571 = vld [vmem:[#allocation2 + $0x3c] sm:$0xf]
      %v1572 = vld [vmem:[#allocation2 + $0x40] sm:$0xf]
      %v1573 = vld [vmem:[#allocation2 + $0x44] sm:$0xf]
      %v1574 = vld [vmem:[#allocation2 + $0x48] sm:$0xf]
      %v1575 = vld [vmem:[#allocation2 + $0x4c] sm:$0xf]
      %v1576 = vld [vmem:[#allocation2 + $0x50] sm:$0xf]
      %v1577 = vld [vmem:[#allocation2 + $0x54] sm:$0xf]
      %v1578 = vld [vmem:[#allocation2 + $0x58] sm:$0xf]
      %v1579 = vld [vmem:[#allocation2 + $0x5c] sm:$0xf]
      %v1580 = vld [vmem:[#allocation2 + $0x60] sm:$0xf]
      %v1581 = vld [vmem:[#allocation2 + $0x64] sm:$0xf]
      %v1582 = vld [vmem:[#allocation2 + $0x68] sm:$0xf]
      %v1583 = vld [vmem:[#allocation2 + $0x6c] sm:$0xf]
      %v1584 = vld [vmem:[#allocation2 + $0x70] sm:$0xf]
      %v1585 = vld [vmem:[#allocation2 + $0x74] sm:$0xf]
      %v1586 = vld [vmem:[#allocation2 + $0x78] sm:$0xf]
      %v1587 = vld [vmem:[#allocation2 + $0x7c] sm:$0xf]
      %v1588 = vld [vmem:[#allocation2 + $0x80] sm:$0xf]
      %v1589 = vld [vmem:[#allocation2 + $0x84] sm:$0xf]
      %v1590 = vld [vmem:[#allocation2 + $0x88] sm:$0xf]
      %v1591 = vld [vmem:[#allocation2 + $0x8c] sm:$0xf]
      %v1592 = vld [vmem:[#allocation2 + $0x90] sm:$0xf]
      %v1593 = vld [vmem:[#allocation2 + $0x94] sm:$0xf]
      %v1594 = vld [vmem:[#allocation2 + $0x98] sm:$0xf]
      %v1595 = vld [vmem:[#allocation2 + $0x9c] sm:$0xf]
      %v1596 = vld [vmem:[#allocation2 + $0xa0] sm:$0xf]
      %v1597 = vld [vmem:[#allocation2 + $0xa4] sm:$0xf]
      %v1598 = vld [vmem:[#allocation2 + $0xa8] sm:$0x1]
      %v1599 = vld [vmem:[%s5] sm:$0xf]
      %v1600 = vld [vmem:[%s5 + $0x4] sm:$0xf]
      %v1601 = vld [vmem:[%s5 + $0x8] sm:$0xf]
      %v1602 = vld [vmem:[%s5 + $0xc] sm:$0xf]
      %v1603 = vld [vmem:[%s5 + $0x10] sm:$0xf]
      %v1604 = vld [vmem:[%s5 + $0x14] sm:$0xf]
      %v1605 = vld [vmem:[%s5 + $0x18] sm:$0xf]
      %v1606 = vld [vmem:[%s5 + $0x1c] sm:$0xf]
      %v1607 = vld [vmem:[#allocation2 + $0x4] sm:$0x8]
      %s1608 = scalar_lea.vmem %s5, 32
      %v1609 = vld [vmem:[%s1608] sm:$0xf]
      %v1610 = vld [vmem:[%s1608 + $0x4] sm:$0xf]
      %v1611 = vld [vmem:[%s1608 + $0x8] sm:$0xf]
      %v1612 = vld [vmem:[%s1608 + $0xc] sm:$0xf]
      %v1613 = vld [vmem:[%s1608 + $0x10] sm:$0xf]
      %v1614 = vld [vmem:[%s1608 + $0x14] sm:$0xf]
      %v1615 = vld [vmem:[%s1608 + $0x18] sm:$0xf]
      %v1616 = vld [vmem:[%s1608 + $0x1c] sm:$0xf]
      %v1659 = vunpack.c.l.b16 %v1607
      %v1660 = vunpack.c.l.b16 %v1558
      %v1661 = vunpack.c.l.b16 %v1559
      %v1662 = vunpack.c.l.b16 %v1560
      %v1663 = vunpack.c.l.b16 %v1561
      %v1664 = vunpack.c.l.b16 %v1562
      %v1665 = vunpack.c.l.b16 %v1563
      %v1666 = vunpack.c.l.b16 %v1564
      %v1667 = vunpack.c.l.b16 %v1565
      %v1668 = vunpack.c.l.b16 %v1566
      %v1669 = vunpack.c.l.b16 %v1567
      %v1670 = vunpack.c.l.b16 %v1568
      %v1671 = vunpack.c.l.b16 %v1569
      %v1672 = vunpack.c.l.b16 %v1570
      %v1673 = vunpack.c.l.b16 %v1571
      %v1674 = vunpack.c.l.b16 %v1572
      %v1675 = vunpack.c.l.b16 %v1573
      %v1676 = vunpack.c.l.b16 %v1574
      %v1677 = vunpack.c.l.b16 %v1575
      %v1678 = vunpack.c.l.b16 %v1576
      %v1679 = vunpack.c.l.b16 %v1577
      %v1680 = vunpack.c.l.b16 %v1578
      %v1681 = vunpack.c.l.b16 %v1579
      %v1682 = vunpack.c.l.b16 %v1580
      %v1683 = vunpack.c.l.b16 %v1581
      %v1684 = vunpack.c.l.b16 %v1582
      %v1685 = vunpack.c.l.b16 %v1583
      %v1686 = vunpack.c.l.b16 %v1584
      %v1687 = vunpack.c.l.b16 %v1585
      %v1688 = vunpack.c.l.b16 %v1586
      %v1689 = vunpack.c.l.b16 %v1587
      %v1690 = vunpack.c.l.b16 %v1588
      %v1691 = vunpack.c.l.b16 %v1589
      %v1692 = vunpack.c.l.b16 %v1590
      %v1693 = vunpack.c.l.b16 %v1591
      %v1694 = vunpack.c.l.b16 %v1592
      %v1695 = vunpack.c.l.b16 %v1593
      %v1696 = vunpack.c.l.b16 %v1594
      %v1697 = vunpack.c.l.b16 %v1595
      %v1698 = vunpack.c.l.b16 %v1596
      %v1699 = vunpack.c.l.b16 %v1597
      %v1700 = vunpack.c.l.b16 %v1598
      %v1701 = vpack.c.b16 %v1660, %v1659
      %v1702 = vpack.c.b16 %v1662, %v1661
      %v1703 = vpack.c.b16 %v1664, %v1663
      %v1704 = vpack.c.b16 %v1666, %v1665
      %v1705 = vpack.c.b16 %v1668, %v1667
      %v1706 = vpack.c.b16 %v1670, %v1669
      %v1707 = vpack.c.b16 %v1672, %v1671
      %v1708 = vpack.c.b16 %v1674, %v1673
      %v1709 = vpack.c.b16 %v1676, %v1675
      %v1710 = vpack.c.b16 %v1678, %v1677
      %v1711 = vpack.c.b16 %v1680, %v1679
      %v1712 = vpack.c.b16 %v1682, %v1681
      %v1713 = vpack.c.b16 %v1684, %v1683
      %v1714 = vpack.c.b16 %v1686, %v1685
      %v1715 = vpack.c.b16 %v1688, %v1687
      %v1716 = vpack.c.b16 %v1690, %v1689
      %v1717 = vpack.c.b16 %v1692, %v1691
      %v1718 = vpack.c.b16 %v1694, %v1693
      %v1719 = vpack.c.b16 %v1696, %v1695
      %v1720 = vpack.c.b16 %v1698, %v1697
      %v1721 = vpack.c.b16 %v1700, %v1699
      %vm1722 = vcmask 1044480
      %v1723 = vrot.slane %v1701, 3
      %v1724 = vrot.slane %v1702, 3
      %v1725 = vsel %vm1722, %v1723, %v1724
      %v1726 = vrot.slane %v1703, 3
      %v1727 = vsel %vm1722, %v1724, %v1726
      %v1728 = vrot.slane %v1704, 3
      %v1729 = vsel %vm1722, %v1726, %v1728
      %v1730 = vrot.slane %v1705, 3
      %v1731 = vsel %vm1722, %v1728, %v1730
      %v1732 = vrot.slane %v1706, 3
      %v1733 = vsel %vm1722, %v1730, %v1732
      %v1734 = vrot.slane %v1707, 3
      %v1735 = vsel %vm1722, %v1732, %v1734
      %v1736 = vrot.slane %v1708, 3
      %v1737 = vsel %vm1722, %v1734, %v1736
      %v1738 = vrot.slane %v1709, 3
      %v1739 = vsel %vm1722, %v1736, %v1738
      %v1740 = vrot.slane %v1710, 3
      %v1741 = vsel %vm1722, %v1738, %v1740
      %v1742 = vrot.slane %v1711, 3
      %v1743 = vsel %vm1722, %v1740, %v1742
      %v1744 = vrot.slane %v1712, 3
      %v1745 = vsel %vm1722, %v1742, %v1744
      %v1746 = vrot.slane %v1713, 3
      %v1747 = vsel %vm1722, %v1744, %v1746
      %v1748 = vrot.slane %v1714, 3
      %v1749 = vsel %vm1722, %v1746, %v1748
      %v1750 = vrot.slane %v1715, 3
      %v1751 = vsel %vm1722, %v1748, %v1750
      %v1752 = vrot.slane %v1716, 3
      %v1753 = vsel %vm1722, %v1750, %v1752
      %v1754 = vrot.slane %v1717, 3
      %v1755 = vsel %vm1722, %v1752, %v1754
      %v1756 = vrot.slane %v1718, 3
      %v1757 = vsel %vm1722, %v1754, %v1756
      %v1758 = vrot.slane %v1719, 3
      %v1759 = vsel %vm1722, %v1756, %v1758
      %v1760 = vrot.slane %v1720, 3
      %v1761 = vsel %vm1722, %v1758, %v1760
      %v1762 = vrot.slane %v1721, 3
      %v1763 = vsel %vm1722, %v1760, %v1762
      %v1772 = vunpack.c.l.b16 %v1609
      %v1773 = vunpack.c.l.b16 %v1610
      %v1774 = vunpack.c.l.b16 %v1611
      %v1775 = vunpack.c.l.b16 %v1612
      %v1776 = vunpack.c.l.b16 %v1613
      %v1777 = vunpack.c.l.b16 %v1614
      %v1778 = vunpack.c.l.b16 %v1615
      %v1779 = vunpack.c.l.b16 %v1616
      %v1780 = vpack.c.b16 %v1773, %v1772
      %v1781 = vpack.c.b16 %v1775, %v1774
      %v1782 = vpack.c.b16 %v1777, %v1776
      %v1783 = vpack.c.b16 %v1779, %v1778
      %vm1788 = vcmask 523264
      %v1790 = vsel %vm1788, %v1725, 0
      %v1793 = vsel %vm1788, %v1727, 0
      %v1796 = vsel %vm1788, %v1729, 0
      %v1799 = vsel %vm1788, %v1731, 0
      %v1802 = vsel %vm1788, %v1733, 0
      %v1805 = vsel %vm1788, %v1735, 0
      %v1808 = vsel %vm1788, %v1737, 0
      %v1811 = vsel %vm1788, %v1739, 0
      %v1814 = vsel %vm1788, %v1741, 0
      %v1817 = vsel %vm1788, %v1743, 0
      %v1820 = vsel %vm1788, %v1745, 0
      %v1823 = vsel %vm1788, %v1747, 0
      %v1826 = vsel %vm1788, %v1749, 0
      %v1829 = vsel %vm1788, %v1751, 0
      %v1832 = vsel %vm1788, %v1753, 0
      %v1835 = vsel %vm1788, %v1755, 0
      %v1838 = vsel %vm1788, %v1757, 0
      %v1841 = vsel %vm1788, %v1759, 0
      %v1844 = vsel %vm1788, %v1761, 0
      %v1847 = vsel %vm1788, %v1763, 0
      %v1850 = vsel %vm1788, %v1762, 0
      %1852 = vmatprep.subr.bf16.mxu0 0
      %1853 = vmatpush1.bf16.msra.mxu0 0
      %1854 = vmatprep.subr.bf16.mxu0 0
      %1855 = vmatpush1.bf16.msra.mxu0 0
      %1856 = vmatprep.subr.bf16.mxu0 0
      %1857 = vmatpush1.bf16.msra.mxu0 0
      %1858 = vmatprep.subr.bf16.mxu0 0
      %1859 = vmatpush1.bf16.msra.mxu0 0
      %1860 = vmatprep.subr.bf16.mxu0 0
      %1861 = vmatpush1.bf16.msra.mxu0 %v1783
      %1862 = vmatprep.subr.bf16.mxu0 0
      %1863 = vmatpush1.bf16.msra.mxu0 %v1782
      %1864 = vmatprep.subr.bf16.mxu0 0
      %1865 = vmatpush1.bf16.msra.mxu0 %v1781
      %1866 = vmatprep.subr.bf16.mxu0 0
      %1867 = vmatpush1.bf16.msra.mxu0 %v1780
      %1868 = vmatprep.subr.bf16.mxu0 0
      %1869 = vmatpush2.bf16.msra.mxu0 0
      %1870 = vmatprep.subr.bf16.mxu0 0
      %1871 = vmatpush2.bf16.msra.mxu0 0
      %1872 = vmatprep.subr.bf16.mxu0 0
      %1873 = vmatpush2.bf16.msra.mxu0 0
      %1874 = vmatprep.subr.bf16.mxu0 0
      %1875 = vmatpush2.bf16.msra.mxu0 0
      %1876 = vmatprep.subr.bf16.mxu0 0
      %1877 = vmatpush2.bf16.msra.mxu0 0
      %1878 = vmatprep.subr.bf16.mxu0 0
      %1879 = vmatpush2.bf16.msra.mxu0 0
      %1880 = vmatprep.subr.bf16.mxu0 0
      %1881 = vmatpush2.bf16.msra.mxu0 0
      %1882 = vmatprep.subr.bf16.mxu0 0
      %1883 = vmatpush2.bf16.msra.mxu0 0
      %1884 = vmatprep.mubr.bf16.mxu0 0
      %1885 = vmatmul.mubr.bf16.gmra.mxu0 %v1790
      %v1886 = vpop.f32.mrf.mxu0
      %v1887 = vadd.f32 0.0, %v1886
      %v1888 = vpop.f32.mrf.mxu0
      %v1889 = vpop.f32.mrf.mxu0
      %v1890 = vadd.f32 0.0, %v1889
      %v1891 = vpop.f32.mrf.mxu0
      %1892 = vmatprep.mubr.bf16.mxu0 0
      %1893 = vmatmul.mubr.bf16.gmra.mxu0 %v1793
      %v1894 = vpop.f32.mrf.mxu0
      %v1895 = vadd.f32 0.0, %v1894
      %v1896 = vpop.f32.mrf.mxu0
      %v1897 = vpop.f32.mrf.mxu0
      %v1898 = vadd.f32 0.0, %v1897
      %v1899 = vpop.f32.mrf.mxu0
      %1900 = vmatprep.mubr.bf16.mxu0 0
      %1901 = vmatmul.mubr.bf16.gmra.mxu0 %v1796
      %v1902 = vpop.f32.mrf.mxu0
      %v1903 = vadd.f32 0.0, %v1902
      %v1904 = vpop.f32.mrf.mxu0
      %v1905 = vpop.f32.mrf.mxu0
      %v1906 = vadd.f32 0.0, %v1905
      %v1907 = vpop.f32.mrf.mxu0
      %1908 = vmatprep.mubr.bf16.mxu0 0
      %1909 = vmatmul.mubr.bf16.gmra.mxu0 %v1799
      %v1910 = vpop.f32.mrf.mxu0
      %v1911 = vadd.f32 0.0, %v1910
      %v1912 = vpop.f32.mrf.mxu0
      %v1913 = vpop.f32.mrf.mxu0
      %v1914 = vadd.f32 0.0, %v1913
      %v1915 = vpop.f32.mrf.mxu0
      %1916 = vmatprep.mubr.bf16.mxu0 0
      %1917 = vmatmul.mubr.bf16.gmra.mxu0 %v1802
      %v1918 = vpop.f32.mrf.mxu0
      %v1919 = vadd.f32 0.0, %v1918
      %v1920 = vpop.f32.mrf.mxu0
      %v1921 = vpop.f32.mrf.mxu0
      %v1922 = vadd.f32 0.0, %v1921
      %v1923 = vpop.f32.mrf.mxu0
      %1924 = vmatprep.mubr.bf16.mxu0 0
      %1925 = vmatmul.mubr.bf16.gmra.mxu0 %v1805
      %v1926 = vpop.f32.mrf.mxu0
      %v1927 = vadd.f32 0.0, %v1926
      %v1928 = vpop.f32.mrf.mxu0
      %v1929 = vpop.f32.mrf.mxu0
      %v1930 = vadd.f32 0.0, %v1929
      %v1931 = vpop.f32.mrf.mxu0
      %1932 = vmatprep.mubr.bf16.mxu0 0
      %1933 = vmatmul.mubr.bf16.gmra.mxu0 %v1808
      %v1934 = vpop.f32.mrf.mxu0
      %v1935 = vadd.f32 0.0, %v1934
      %v1936 = vpop.f32.mrf.mxu0
      %v1937 = vpop.f32.mrf.mxu0
      %v1938 = vadd.f32 0.0, %v1937
      %v1939 = vpop.f32.mrf.mxu0
      %1940 = vmatprep.mubr.bf16.mxu0 0
      %1941 = vmatmul.mubr.bf16.gmra.mxu0 %v1811
      %v1942 = vpop.f32.mrf.mxu0
      %v1943 = vadd.f32 0.0, %v1942
      %v1944 = vpop.f32.mrf.mxu0
      %v1945 = vpop.f32.mrf.mxu0
      %v1946 = vadd.f32 0.0, %v1945
      %v1947 = vpop.f32.mrf.mxu0
      %1948 = vmatprep.mubr.bf16.mxu0 0
      %1949 = vmatmul.mubr.bf16.gmra.mxu0 %v1814
      %v1950 = vpop.f32.mrf.mxu0
      %v1951 = vadd.f32 0.0, %v1950
      %v1952 = vpop.f32.mrf.mxu0
      %v1953 = vpop.f32.mrf.mxu0
      %v1954 = vadd.f32 0.0, %v1953
      %v1955 = vpop.f32.mrf.mxu0
      %1956 = vmatprep.mubr.bf16.mxu0 0
      %1957 = vmatmul.mubr.bf16.gmra.mxu0 %v1817
      %v1958 = vpop.f32.mrf.mxu0
      %v1959 = vadd.f32 0.0, %v1958
      %v1960 = vpop.f32.mrf.mxu0
      %v1961 = vpop.f32.mrf.mxu0
      %v1962 = vadd.f32 0.0, %v1961
      %v1963 = vpop.f32.mrf.mxu0
      %1964 = vmatprep.mubr.bf16.mxu0 0
      %1965 = vmatmul.mubr.bf16.gmra.mxu0 %v1820
      %v1966 = vpop.f32.mrf.mxu0
      %v1967 = vadd.f32 0.0, %v1966
      %v1968 = vpop.f32.mrf.mxu0
      %v1969 = vpop.f32.mrf.mxu0
      %v1970 = vadd.f32 0.0, %v1969
      %v1971 = vpop.f32.mrf.mxu0
      %1972 = vmatprep.mubr.bf16.mxu0 0
      %1973 = vmatmul.mubr.bf16.gmra.mxu0 %v1823
      %v1974 = vpop.f32.mrf.mxu0
      %v1975 = vadd.f32 0.0, %v1974
      %v1976 = vpop.f32.mrf.mxu0
      %v1977 = vpop.f32.mrf.mxu0
      %v1978 = vadd.f32 0.0, %v1977
      %v1979 = vpop.f32.mrf.mxu0
      %1980 = vmatprep.mubr.bf16.mxu0 0
      %1981 = vmatmul.mubr.bf16.gmra.mxu0 %v1826
      %v1982 = vpop.f32.mrf.mxu0
      %v1983 = vadd.f32 0.0, %v1982
      %v1984 = vpop.f32.mrf.mxu0
      %v1985 = vpop.f32.mrf.mxu0
      %v1986 = vadd.f32 0.0, %v1985
      %v1987 = vpop.f32.mrf.mxu0
      %1988 = vmatprep.mubr.bf16.mxu0 0
      %1989 = vmatmul.mubr.bf16.gmra.mxu0 %v1829
      %v1990 = vpop.f32.mrf.mxu0
      %v1991 = vadd.f32 0.0, %v1990
      %v1992 = vpop.f32.mrf.mxu0
      %v1993 = vpop.f32.mrf.mxu0
      %v1994 = vadd.f32 0.0, %v1993
      %v1995 = vpop.f32.mrf.mxu0
      %1996 = vmatprep.mubr.bf16.mxu0 0
      %1997 = vmatmul.mubr.bf16.gmra.mxu0 %v1832
      %v1998 = vpop.f32.mrf.mxu0
      %v1999 = vadd.f32 0.0, %v1998
      %v2000 = vpop.f32.mrf.mxu0
      %v2001 = vpop.f32.mrf.mxu0
      %v2002 = vadd.f32 0.0, %v2001
      %v2003 = vpop.f32.mrf.mxu0
      %2004 = vmatprep.mubr.bf16.mxu0 0
      %2005 = vmatmul.mubr.bf16.gmra.mxu0 %v1835
      %v2006 = vpop.f32.mrf.mxu0
      %v2007 = vadd.f32 0.0, %v2006
      %v2008 = vpop.f32.mrf.mxu0
      %v2009 = vpop.f32.mrf.mxu0
      %v2010 = vadd.f32 0.0, %v2009
      %v2011 = vpop.f32.mrf.mxu0
      %2012 = vmatprep.mubr.bf16.mxu0 0
      %2013 = vmatmul.mubr.bf16.gmra.mxu0 %v1838
      %v2014 = vpop.f32.mrf.mxu0
      %v2015 = vadd.f32 0.0, %v2014
      %v2016 = vpop.f32.mrf.mxu0
      %v2017 = vpop.f32.mrf.mxu0
      %v2018 = vadd.f32 0.0, %v2017
      %v2019 = vpop.f32.mrf.mxu0
      %2020 = vmatprep.mubr.bf16.mxu0 0
      %2021 = vmatmul.mubr.bf16.gmra.mxu0 %v1841
      %v2022 = vpop.f32.mrf.mxu0
      %v2023 = vadd.f32 0.0, %v2022
      %v2024 = vpop.f32.mrf.mxu0
      %v2025 = vpop.f32.mrf.mxu0
      %v2026 = vadd.f32 0.0, %v2025
      %v2027 = vpop.f32.mrf.mxu0
      %2028 = vmatprep.mubr.bf16.mxu0 0
      %2029 = vmatmul.mubr.bf16.gmra.mxu0 %v1844
      %v2030 = vpop.f32.mrf.mxu0
      %v2031 = vadd.f32 0.0, %v2030
      %v2032 = vpop.f32.mrf.mxu0
      %v2033 = vpop.f32.mrf.mxu0
      %v2034 = vadd.f32 0.0, %v2033
      %v2035 = vpop.f32.mrf.mxu0
      %2036 = vmatprep.mubr.bf16.mxu0 0
      %2037 = vmatmul.mubr.bf16.gmra.mxu0 %v1847
      %v2038 = vpop.f32.mrf.mxu0
      %v2039 = vadd.f32 0.0, %v2038
      %v2040 = vpop.f32.mrf.mxu0
      %v2041 = vpop.f32.mrf.mxu0
      %v2042 = vadd.f32 0.0, %v2041
      %v2043 = vpop.f32.mrf.mxu0
      %2044 = vmatprep.mubr.bf16.mxu0 0
      %2045 = vmatmul.mubr.bf16.gmra.mxu0 %v1850
      %v2046 = vpop.f32.mrf.mxu0
      %v2047 = vadd.f32 0.0, %v2046
      %v2048 = vpop.f32.mrf.mxu0
      %v2049 = vpop.f32.mrf.mxu0
      %v2050 = vpop.f32.mrf.mxu0
      %2051 = vdwg.mxu0
      %v2053 = vunpack.c.l.b16 %v1557
      %v2054 = vpack.c.b16 %v1660, %v2053
      %vm2055 = vsmask.f32 5376
      %v2057 = vshrl.u32 %v2054, 16
      %v2059 = vrot.slane %v2057, 2
      %v2060 = vshll.u32 %v2054, 16
      %v2062 = vrot.slane %v2060, 3
      %v2063 = vor.u32 %v2059, %v2062
      %v2065 = vshrl.u32 %v1702, 16
      %v2067 = vrot.slane %v2065, 2
      %v2068 = vshll.u32 %v1702, 16
      %v2070 = vrot.slane %v2068, 3
      %v2071 = vor.u32 %v2067, %v2070
      %v2072 = vsel %vm2055, %v2063, %v2071
      %v2074 = vshrl.u32 %v1703, 16
      %v2076 = vrot.slane %v2074, 2
      %v2077 = vshll.u32 %v1703, 16
      %v2079 = vrot.slane %v2077, 3
      %v2080 = vor.u32 %v2076, %v2079
      %v2081 = vsel %vm2055, %v2071, %v2080
      %v2083 = vshrl.u32 %v1704, 16
      %v2085 = vrot.slane %v2083, 2
      %v2086 = vshll.u32 %v1704, 16
      %v2088 = vrot.slane %v2086, 3
      %v2089 = vor.u32 %v2085, %v2088
      %v2090 = vsel %vm2055, %v2080, %v2089
      %v2092 = vshrl.u32 %v1705, 16
      %v2094 = vrot.slane %v2092, 2
      %v2095 = vshll.u32 %v1705, 16
      %v2097 = vrot.slane %v2095, 3
      %v2098 = vor.u32 %v2094, %v2097
      %v2099 = vsel %vm2055, %v2089, %v2098
      %v2101 = vshrl.u32 %v1706, 16
      %v2103 = vrot.slane %v2101, 2
      %v2104 = vshll.u32 %v1706, 16
      %v2106 = vrot.slane %v2104, 3
      %v2107 = vor.u32 %v2103, %v2106
      %v2108 = vsel %vm2055, %v2098, %v2107
      %v2110 = vshrl.u32 %v1707, 16
      %v2112 = vrot.slane %v2110, 2
      %v2113 = vshll.u32 %v1707, 16
      %v2115 = vrot.slane %v2113, 3
      %v2116 = vor.u32 %v2112, %v2115
      %v2117 = vsel %vm2055, %v2107, %v2116
      %v2119 = vshrl.u32 %v1708, 16
      %v2121 = vrot.slane %v2119, 2
      %v2122 = vshll.u32 %v1708, 16
      %v2124 = vrot.slane %v2122, 3
      %v2125 = vor.u32 %v2121, %v2124
      %v2126 = vsel %vm2055, %v2116, %v2125
      %v2128 = vshrl.u32 %v1709, 16
      %v2130 = vrot.slane %v2128, 2
      %v2131 = vshll.u32 %v1709, 16
      %v2133 = vrot.slane %v2131, 3
      %v2134 = vor.u32 %v2130, %v2133
      %v2135 = vsel %vm2055, %v2125, %v2134
      %v2137 = vshrl.u32 %v1710, 16
      %v2139 = vrot.slane %v2137, 2
      %v2140 = vshll.u32 %v1710, 16
      %v2142 = vrot.slane %v2140, 3
      %v2143 = vor.u32 %v2139, %v2142
      %v2144 = vsel %vm2055, %v2134, %v2143
      %v2146 = vshrl.u32 %v1711, 16
      %v2148 = vrot.slane %v2146, 2
      %v2149 = vshll.u32 %v1711, 16
      %v2151 = vrot.slane %v2149, 3
      %v2152 = vor.u32 %v2148, %v2151
      %v2153 = vsel %vm2055, %v2143, %v2152
      %v2155 = vshrl.u32 %v1712, 16
      %v2157 = vrot.slane %v2155, 2
      %v2158 = vshll.u32 %v1712, 16
      %v2160 = vrot.slane %v2158, 3
      %v2161 = vor.u32 %v2157, %v2160
      %v2162 = vsel %vm2055, %v2152, %v2161
      %v2164 = vshrl.u32 %v1713, 16
      %v2166 = vrot.slane %v2164, 2
      %v2167 = vshll.u32 %v1713, 16
      %v2169 = vrot.slane %v2167, 3
      %v2170 = vor.u32 %v2166, %v2169
      %v2171 = vsel %vm2055, %v2161, %v2170
      %v2173 = vshrl.u32 %v1714, 16
      %v2175 = vrot.slane %v2173, 2
      %v2176 = vshll.u32 %v1714, 16
      %v2178 = vrot.slane %v2176, 3
      %v2179 = vor.u32 %v2175, %v2178
      %v2180 = vsel %vm2055, %v2170, %v2179
      %v2182 = vshrl.u32 %v1715, 16
      %v2184 = vrot.slane %v2182, 2
      %v2185 = vshll.u32 %v1715, 16
      %v2187 = vrot.slane %v2185, 3
      %v2188 = vor.u32 %v2184, %v2187
      %v2189 = vsel %vm2055, %v2179, %v2188
      %v2191 = vshrl.u32 %v1716, 16
      %v2193 = vrot.slane %v2191, 2
      %v2194 = vshll.u32 %v1716, 16
      %v2196 = vrot.slane %v2194, 3
      %v2197 = vor.u32 %v2193, %v2196
      %v2198 = vsel %vm2055, %v2188, %v2197
      %v2200 = vshrl.u32 %v1717, 16
      %v2202 = vrot.slane %v2200, 2
      %v2203 = vshll.u32 %v1717, 16
      %v2205 = vrot.slane %v2203, 3
      %v2206 = vor.u32 %v2202, %v2205
      %v2207 = vsel %vm2055, %v2197, %v2206
      %v2209 = vshrl.u32 %v1718, 16
      %v2211 = vrot.slane %v2209, 2
      %v2212 = vshll.u32 %v1718, 16
      %v2214 = vrot.slane %v2212, 3
      %v2215 = vor.u32 %v2211, %v2214
      %v2216 = vsel %vm2055, %v2206, %v2215
      %v2218 = vshrl.u32 %v1719, 16
      %v2220 = vrot.slane %v2218, 2
      %v2221 = vshll.u32 %v1719, 16
      %v2223 = vrot.slane %v2221, 3
      %v2224 = vor.u32 %v2220, %v2223
      %v2225 = vsel %vm2055, %v2215, %v2224
      %v2227 = vshrl.u32 %v1720, 16
      %v2229 = vrot.slane %v2227, 2
      %v2230 = vshll.u32 %v1720, 16
      %v2232 = vrot.slane %v2230, 3
      %v2233 = vor.u32 %v2229, %v2232
      %v2234 = vsel %vm2055, %v2224, %v2233
      %v2236 = vshrl.u32 %v1721, 16
      %v2238 = vrot.slane %v2236, 2
      %v2239 = vshll.u32 %v1721, 16
      %v2241 = vrot.slane %v2239, 3
      %v2242 = vor.u32 %v2238, %v2241
      %v2243 = vsel %vm2055, %v2233, %v2242
      %v2252 = vunpack.c.l.b16 %v1599
      %v2253 = vunpack.c.l.b16 %v1600
      %v2254 = vunpack.c.l.b16 %v1601
      %v2255 = vunpack.c.l.b16 %v1602
      %v2256 = vunpack.c.l.b16 %v1603
      %v2257 = vunpack.c.l.b16 %v1604
      %v2258 = vunpack.c.l.b16 %v1605
      %v2259 = vunpack.c.l.b16 %v1606
      %v2260 = vpack.c.b16 %v2253, %v2252
      %v2261 = vpack.c.b16 %v2255, %v2254
      %v2262 = vpack.c.b16 %v2257, %v2256
      %v2263 = vpack.c.b16 %v2259, %v2258
      %v2269 = vsel %vm1788, %v2072, 0
      %v2272 = vsel %vm1788, %v2081, 0
      %v2275 = vsel %vm1788, %v2090, 0
      %v2278 = vsel %vm1788, %v2099, 0
      %v2281 = vsel %vm1788, %v2108, 0
      %v2284 = vsel %vm1788, %v2117, 0
      %v2287 = vsel %vm1788, %v2126, 0
      %v2290 = vsel %vm1788, %v2135, 0
      %v2293 = vsel %vm1788, %v2144, 0
      %v2296 = vsel %vm1788, %v2153, 0
      %v2299 = vsel %vm1788, %v2162, 0
      %v2302 = vsel %vm1788, %v2171, 0
      %v2305 = vsel %vm1788, %v2180, 0
      %v2308 = vsel %vm1788, %v2189, 0
      %v2311 = vsel %vm1788, %v2198, 0
      %v2314 = vsel %vm1788, %v2207, 0
      %v2317 = vsel %vm1788, %v2216, 0
      %v2320 = vsel %vm1788, %v2225, 0
      %v2323 = vsel %vm1788, %v2234, 0
      %v2326 = vsel %vm1788, %v2243, 0
      %v2329 = vsel %vm1788, %v2242, 0
      %2331 = vmatprep.subr.bf16.mxu0 0
      %2332 = vmatpush1.bf16.msra.mxu0 0
      %2333 = vmatprep.subr.bf16.mxu0 0
      %2334 = vmatpush1.bf16.msra.mxu0 0
      %2335 = vmatprep.subr.bf16.mxu0 0
      %2336 = vmatpush1.bf16.msra.mxu0 0
      %2337 = vmatprep.subr.bf16.mxu0 0
      %2338 = vmatpush1.bf16.msra.mxu0 0
      %2339 = vmatprep.subr.bf16.mxu0 0
      %2340 = vmatpush1.bf16.msra.mxu0 %v2263
      %2341 = vmatprep.subr.bf16.mxu0 0
      %2342 = vmatpush1.bf16.msra.mxu0 %v2262
      %2343 = vmatprep.subr.bf16.mxu0 0
      %2344 = vmatpush1.bf16.msra.mxu0 %v2261
      %2345 = vmatprep.subr.bf16.mxu0 0
      %2346 = vmatpush1.bf16.msra.mxu0 %v2260
      %2347 = vmatprep.subr.bf16.mxu0 0
      %2348 = vmatpush2.bf16.msra.mxu0 0
      %2349 = vmatprep.subr.bf16.mxu0 0
      %2350 = vmatpush2.bf16.msra.mxu0 0
      %2351 = vmatprep.subr.bf16.mxu0 0
      %2352 = vmatpush2.bf16.msra.mxu0 0
      %2353 = vmatprep.subr.bf16.mxu0 0
      %2354 = vmatpush2.bf16.msra.mxu0 0
      %2355 = vmatprep.subr.bf16.mxu0 0
      %2356 = vmatpush2.bf16.msra.mxu0 0
      %2357 = vmatprep.subr.bf16.mxu0 0
      %2358 = vmatpush2.bf16.msra.mxu0 0
      %2359 = vmatprep.subr.bf16.mxu0 0
      %2360 = vmatpush2.bf16.msra.mxu0 0
      %2361 = vmatprep.subr.bf16.mxu0 0
      %2362 = vmatpush2.bf16.msra.mxu0 0
      %2363 = vmatprep.mubr.bf16.mxu0 0
      %2364 = vmatmul.mubr.bf16.gmra.mxu0 %v2269
      %v2365 = vpop.f32.mrf.mxu0
      %v2366 = vadd.f32 %v1887, %v2365
      %v2367 = vpop.f32.mrf.mxu0
      %v2368 = vpop.f32.mrf.mxu0
      %v2369 = vadd.f32 %v1890, %v2368
      %v2370 = vpop.f32.mrf.mxu0
      %2371 = vmatprep.mubr.bf16.mxu0 0
      %2372 = vmatmul.mubr.bf16.gmra.mxu0 %v2272
      %v2373 = vpop.f32.mrf.mxu0
      %v2374 = vadd.f32 %v1895, %v2373
      %v2375 = vpop.f32.mrf.mxu0
      %v2376 = vpop.f32.mrf.mxu0
      %v2377 = vadd.f32 %v1898, %v2376
      %v2378 = vpop.f32.mrf.mxu0
      %2379 = vmatprep.mubr.bf16.mxu0 0
      %2380 = vmatmul.mubr.bf16.gmra.mxu0 %v2275
      %v2381 = vpop.f32.mrf.mxu0
      %v2382 = vadd.f32 %v1903, %v2381
      %v2383 = vpop.f32.mrf.mxu0
      %v2384 = vpop.f32.mrf.mxu0
      %v2385 = vadd.f32 %v1906, %v2384
      %v2386 = vpop.f32.mrf.mxu0
      %2387 = vmatprep.mubr.bf16.mxu0 0
      %2388 = vmatmul.mubr.bf16.gmra.mxu0 %v2278
      %v2389 = vpop.f32.mrf.mxu0
      %v2390 = vadd.f32 %v1911, %v2389
      %v2391 = vpop.f32.mrf.mxu0
      %v2392 = vpop.f32.mrf.mxu0
      %v2393 = vadd.f32 %v1914, %v2392
      %v2394 = vpop.f32.mrf.mxu0
      %2395 = vmatprep.mubr.bf16.mxu0 0
      %2396 = vmatmul.mubr.bf16.gmra.mxu0 %v2281
      %v2397 = vpop.f32.mrf.mxu0
      %v2398 = vadd.f32 %v1919, %v2397
      %v2399 = vpop.f32.mrf.mxu0
      %v2400 = vpop.f32.mrf.mxu0
      %v2401 = vadd.f32 %v1922, %v2400
      %v2402 = vpop.f32.mrf.mxu0
      %2403 = vmatprep.mubr.bf16.mxu0 0
      %2404 = vmatmul.mubr.bf16.gmra.mxu0 %v2284
      %v2405 = vpop.f32.mrf.mxu0
      %v2406 = vadd.f32 %v1927, %v2405
      %v2407 = vpop.f32.mrf.mxu0
      %v2408 = vpop.f32.mrf.mxu0
      %v2409 = vadd.f32 %v1930, %v2408
      %v2410 = vpop.f32.mrf.mxu0
      %2411 = vmatprep.mubr.bf16.mxu0 0
      %2412 = vmatmul.mubr.bf16.gmra.mxu0 %v2287
      %v2413 = vpop.f32.mrf.mxu0
      %v2414 = vadd.f32 %v1935, %v2413
      %v2415 = vpop.f32.mrf.mxu0
      %v2416 = vpop.f32.mrf.mxu0
      %v2417 = vadd.f32 %v1938, %v2416
      %v2418 = vpop.f32.mrf.mxu0
      %2419 = vmatprep.mubr.bf16.mxu0 0
      %2420 = vmatmul.mubr.bf16.gmra.mxu0 %v2290
      %v2421 = vpop.f32.mrf.mxu0
      %v2422 = vadd.f32 %v1943, %v2421
      %v2423 = vpop.f32.mrf.mxu0
      %v2424 = vpop.f32.mrf.mxu0
      %v2425 = vadd.f32 %v1946, %v2424
      %v2426 = vpop.f32.mrf.mxu0
      %2427 = vmatprep.mubr.bf16.mxu0 0
      %2428 = vmatmul.mubr.bf16.gmra.mxu0 %v2293
      %v2429 = vpop.f32.mrf.mxu0
      %v2430 = vadd.f32 %v1951, %v2429
      %v2431 = vpop.f32.mrf.mxu0
      %v2432 = vpop.f32.mrf.mxu0
      %v2433 = vadd.f32 %v1954, %v2432
      %v2434 = vpop.f32.mrf.mxu0
      %2435 = vmatprep.mubr.bf16.mxu0 0
      %2436 = vmatmul.mubr.bf16.gmra.mxu0 %v2296
      %v2437 = vpop.f32.mrf.mxu0
      %v2438 = vadd.f32 %v1959, %v2437
      %v2439 = vpop.f32.mrf.mxu0
      %v2440 = vpop.f32.mrf.mxu0
      %v2441 = vadd.f32 %v1962, %v2440
      %v2442 = vpop.f32.mrf.mxu0
      %2443 = vmatprep.mubr.bf16.mxu0 0
      %2444 = vmatmul.mubr.bf16.gmra.mxu0 %v2299
      %v2445 = vpop.f32.mrf.mxu0
      %v2446 = vadd.f32 %v1967, %v2445
      %v2447 = vpop.f32.mrf.mxu0
      %v2448 = vpop.f32.mrf.mxu0
      %v2449 = vadd.f32 %v1970, %v2448
      %v2450 = vpop.f32.mrf.mxu0
      %2451 = vmatprep.mubr.bf16.mxu0 0
      %2452 = vmatmul.mubr.bf16.gmra.mxu0 %v2302
      %v2453 = vpop.f32.mrf.mxu0
      %v2454 = vadd.f32 %v1975, %v2453
      %v2455 = vpop.f32.mrf.mxu0
      %v2456 = vpop.f32.mrf.mxu0
      %v2457 = vadd.f32 %v1978, %v2456
      %v2458 = vpop.f32.mrf.mxu0
      %2459 = vmatprep.mubr.bf16.mxu0 0
      %2460 = vmatmul.mubr.bf16.gmra.mxu0 %v2305
      %v2461 = vpop.f32.mrf.mxu0
      %v2462 = vadd.f32 %v1983, %v2461
      %v2463 = vpop.f32.mrf.mxu0
      %v2464 = vpop.f32.mrf.mxu0
      %v2465 = vadd.f32 %v1986, %v2464
      %v2466 = vpop.f32.mrf.mxu0
      %2467 = vmatprep.mubr.bf16.mxu0 0
      %2468 = vmatmul.mubr.bf16.gmra.mxu0 %v2308
      %v2469 = vpop.f32.mrf.mxu0
      %v2470 = vadd.f32 %v1991, %v2469
      %v2471 = vpop.f32.mrf.mxu0
      %v2472 = vpop.f32.mrf.mxu0
      %v2473 = vadd.f32 %v1994, %v2472
      %v2474 = vpop.f32.mrf.mxu0
      %2475 = vmatprep.mubr.bf16.mxu0 0
      %2476 = vmatmul.mubr.bf16.gmra.mxu0 %v2311
      %v2477 = vpop.f32.mrf.mxu0
      %v2478 = vadd.f32 %v1999, %v2477
      %v2479 = vpop.f32.mrf.mxu0
      %v2480 = vpop.f32.mrf.mxu0
      %v2481 = vadd.f32 %v2002, %v2480
      %v2482 = vpop.f32.mrf.mxu0
      %2483 = vmatprep.mubr.bf16.mxu0 0
      %2484 = vmatmul.mubr.bf16.gmra.mxu0 %v2314
      %v2485 = vpop.f32.mrf.mxu0
      %v2486 = vadd.f32 %v2007, %v2485
      %v2487 = vpop.f32.mrf.mxu0
      %v2488 = vpop.f32.mrf.mxu0
      %v2489 = vadd.f32 %v2010, %v2488
      %v2490 = vpop.f32.mrf.mxu0
      %2491 = vmatprep.mubr.bf16.mxu0 0
      %2492 = vmatmul.mubr.bf16.gmra.mxu0 %v2317
      %v2493 = vpop.f32.mrf.mxu0
      %v2494 = vadd.f32 %v2015, %v2493
      %v2495 = vpop.f32.mrf.mxu0
      %v2496 = vpop.f32.mrf.mxu0
      %v2497 = vadd.f32 %v2018, %v2496
      %v2498 = vpop.f32.mrf.mxu0
      %2499 = vmatprep.mubr.bf16.mxu0 0
      %2500 = vmatmul.mubr.bf16.gmra.mxu0 %v2320
      %v2501 = vpop.f32.mrf.mxu0
      %v2502 = vadd.f32 %v2023, %v2501
      %v2503 = vpop.f32.mrf.mxu0
      %v2504 = vpop.f32.mrf.mxu0
      %v2505 = vadd.f32 %v2026, %v2504
      %v2506 = vpop.f32.mrf.mxu0
      %2507 = vmatprep.mubr.bf16.mxu0 0
      %2508 = vmatmul.mubr.bf16.gmra.mxu0 %v2323
      %v2509 = vpop.f32.mrf.mxu0
      %v2510 = vadd.f32 %v2031, %v2509
      %v2511 = vpop.f32.mrf.mxu0
      %v2512 = vpop.f32.mrf.mxu0
      %v2513 = vadd.f32 %v2034, %v2512
      %v2514 = vpop.f32.mrf.mxu0
      %2515 = vmatprep.mubr.bf16.mxu0 0
      %2516 = vmatmul.mubr.bf16.gmra.mxu0 %v2326
      %v2517 = vpop.f32.mrf.mxu0
      %v2518 = vadd.f32 %v2039, %v2517
      %v2519 = vpop.f32.mrf.mxu0
      %v2520 = vpop.f32.mrf.mxu0
      %v2521 = vadd.f32 %v2042, %v2520
      %v2522 = vpop.f32.mrf.mxu0
      %2523 = vmatprep.mubr.bf16.mxu0 0
      %2524 = vmatmul.mubr.bf16.gmra.mxu0 %v2329
      %v2525 = vpop.f32.mrf.mxu0
      %v2526 = vadd.f32 %v2047, %v2525
      %v2527 = vpop.f32.mrf.mxu0
      %v2528 = vpop.f32.mrf.mxu0
      %v2529 = vpop.f32.mrf.mxu0
      %2530 = vdwg.mxu0
      %v2531 = vld [vmem:[#allocation2 + $0xa8] sm:$0x3]
      %s2532 = scalar_lea.vmem %s5, 64
      %v2533 = vld [vmem:[%s2532] sm:$0xf]
      %v2534 = vld [vmem:[%s2532 + $0x4] sm:$0xf]
      %v2535 = vld [vmem:[%s2532 + $0x8] sm:$0xf]
      %v2536 = vld [vmem:[%s2532 + $0xc] sm:$0xf]
      %v2537 = vld [vmem:[%s2532 + $0x10] sm:$0xf]
      %v2538 = vld [vmem:[%s2532 + $0x14] sm:$0xf]
      %v2539 = vld [vmem:[%s2532 + $0x18] sm:$0xf]
      %v2540 = vld [vmem:[%s2532 + $0x1c] sm:$0xf]
      %v2542 = vunpack.c.l.b16 %v2531
      %v2543 = vpack.c.b16 %v2542, %v1699
      %vm2544 = vsmask.f32 4352
      %v2546 = vshrl.u32 %v1701, 16
      %v2548 = vrot.slane %v2546, 3
      %v2549 = vshll.u32 %v1701, 16
      %v2551 = vrot.slane %v2549, 4
      %v2552 = vor.u32 %v2548, %v2551
      %v2553 = vrot.slane %v2065, 3
      %v2554 = vrot.slane %v2068, 4
      %v2555 = vor.u32 %v2553, %v2554
      %v2556 = vsel %vm2544, %v2552, %v2555
      %v2557 = vrot.slane %v2074, 3
      %v2558 = vrot.slane %v2077, 4
      %v2559 = vor.u32 %v2557, %v2558
      %v2560 = vsel %vm2544, %v2555, %v2559
      %v2561 = vrot.slane %v2083, 3
      %v2562 = vrot.slane %v2086, 4
      %v2563 = vor.u32 %v2561, %v2562
      %v2564 = vsel %vm2544, %v2559, %v2563
      %v2565 = vrot.slane %v2092, 3
      %v2566 = vrot.slane %v2095, 4
      %v2567 = vor.u32 %v2565, %v2566
      %v2568 = vsel %vm2544, %v2563, %v2567
      %v2569 = vrot.slane %v2101, 3
      %v2570 = vrot.slane %v2104, 4
      %v2571 = vor.u32 %v2569, %v2570
      %v2572 = vsel %vm2544, %v2567, %v2571
      %v2573 = vrot.slane %v2110, 3
      %v2574 = vrot.slane %v2113, 4
      %v2575 = vor.u32 %v2573, %v2574
      %v2576 = vsel %vm2544, %v2571, %v2575
      %v2577 = vrot.slane %v2119, 3
      %v2578 = vrot.slane %v2122, 4
      %v2579 = vor.u32 %v2577, %v2578
      %v2580 = vsel %vm2544, %v2575, %v2579
      %v2581 = vrot.slane %v2128, 3
      %v2582 = vrot.slane %v2131, 4
      %v2583 = vor.u32 %v2581, %v2582
      %v2584 = vsel %vm2544, %v2579, %v2583
      %v2585 = vrot.slane %v2137, 3
      %v2586 = vrot.slane %v2140, 4
      %v2587 = vor.u32 %v2585, %v2586
      %v2588 = vsel %vm2544, %v2583, %v2587
      %v2589 = vrot.slane %v2146, 3
      %v2590 = vrot.slane %v2149, 4
      %v2591 = vor.u32 %v2589, %v2590
      %v2592 = vsel %vm2544, %v2587, %v2591
      %v2593 = vrot.slane %v2155, 3
      %v2594 = vrot.slane %v2158, 4
      %v2595 = vor.u32 %v2593, %v2594
      %v2596 = vsel %vm2544, %v2591, %v2595
      %v2597 = vrot.slane %v2164, 3
      %v2598 = vrot.slane %v2167, 4
      %v2599 = vor.u32 %v2597, %v2598
      %v2600 = vsel %vm2544, %v2595, %v2599
      %v2601 = vrot.slane %v2173, 3
      %v2602 = vrot.slane %v2176, 4
      %v2603 = vor.u32 %v2601, %v2602
      %v2604 = vsel %vm2544, %v2599, %v2603
      %v2605 = vrot.slane %v2182, 3
      %v2606 = vrot.slane %v2185, 4
      %v2607 = vor.u32 %v2605, %v2606
      %v2608 = vsel %vm2544, %v2603, %v2607
      %v2609 = vrot.slane %v2191, 3
      %v2610 = vrot.slane %v2194, 4
      %v2611 = vor.u32 %v2609, %v2610
      %v2612 = vsel %vm2544, %v2607, %v2611
      %v2613 = vrot.slane %v2200, 3
      %v2614 = vrot.slane %v2203, 4
      %v2615 = vor.u32 %v2613, %v2614
      %v2616 = vsel %vm2544, %v2611, %v2615
      %v2617 = vrot.slane %v2209, 3
      %v2618 = vrot.slane %v2212, 4
      %v2619 = vor.u32 %v2617, %v2618
      %v2620 = vsel %vm2544, %v2615, %v2619
      %v2621 = vrot.slane %v2218, 3
      %v2622 = vrot.slane %v2221, 4
      %v2623 = vor.u32 %v2621, %v2622
      %v2624 = vsel %vm2544, %v2619, %v2623
      %v2625 = vrot.slane %v2227, 3
      %v2626 = vrot.slane %v2230, 4
      %v2627 = vor.u32 %v2625, %v2626
      %v2628 = vsel %vm2544, %v2623, %v2627
      %v2630 = vshrl.u32 %v2543, 16
      %v2632 = vrot.slane %v2630, 3
      %v2633 = vshll.u32 %v2543, 16
      %v2635 = vrot.slane %v2633, 4
      %v2636 = vor.u32 %v2632, %v2635
      %v2637 = vsel %vm2544, %v2627, %v2636
      %v2646 = vunpack.c.l.b16 %v2533
      %v2647 = vunpack.c.l.b16 %v2534
      %v2648 = vunpack.c.l.b16 %v2535
      %v2649 = vunpack.c.l.b16 %v2536
      %v2650 = vunpack.c.l.b16 %v2537
      %v2651 = vunpack.c.l.b16 %v2538
      %v2652 = vunpack.c.l.b16 %v2539
      %v2653 = vunpack.c.l.b16 %v2540
      %v2654 = vpack.c.b16 %v2647, %v2646
      %v2655 = vpack.c.b16 %v2649, %v2648
      %v2656 = vpack.c.b16 %v2651, %v2650
      %v2657 = vpack.c.b16 %v2653, %v2652
      %v2663 = vsel %vm1788, %v2556, 0
      %v2666 = vsel %vm1788, %v2560, 0
      %v2669 = vsel %vm1788, %v2564, 0
      %v2672 = vsel %vm1788, %v2568, 0
      %v2675 = vsel %vm1788, %v2572, 0
      %v2678 = vsel %vm1788, %v2576, 0
      %v2681 = vsel %vm1788, %v2580, 0
      %v2684 = vsel %vm1788, %v2584, 0
      %v2687 = vsel %vm1788, %v2588, 0
      %v2690 = vsel %vm1788, %v2592, 0
      %v2693 = vsel %vm1788, %v2596, 0
      %v2696 = vsel %vm1788, %v2600, 0
      %v2699 = vsel %vm1788, %v2604, 0
      %v2702 = vsel %vm1788, %v2608, 0
      %v2705 = vsel %vm1788, %v2612, 0
      %v2708 = vsel %vm1788, %v2616, 0
      %v2711 = vsel %vm1788, %v2620, 0
      %v2714 = vsel %vm1788, %v2624, 0
      %v2717 = vsel %vm1788, %v2628, 0
      %v2720 = vsel %vm1788, %v2637, 0
      %v2723 = vsel %vm1788, %v2636, 0
      %2725 = vmatprep.subr.bf16.mxu0 0
      %2726 = vmatpush1.bf16.msra.mxu0 0
      %2727 = vmatprep.subr.bf16.mxu0 0
      %2728 = vmatpush1.bf16.msra.mxu0 0
      %2729 = vmatprep.subr.bf16.mxu0 0
      %2730 = vmatpush1.bf16.msra.mxu0 0
      %2731 = vmatprep.subr.bf16.mxu0 0
      %2732 = vmatpush1.bf16.msra.mxu0 0
      %2733 = vmatprep.subr.bf16.mxu0 0
      %2734 = vmatpush1.bf16.msra.mxu0 %v2657
      %2735 = vmatprep.subr.bf16.mxu0 0
      %2736 = vmatpush1.bf16.msra.mxu0 %v2656
      %2737 = vmatprep.subr.bf16.mxu0 0
      %2738 = vmatpush1.bf16.msra.mxu0 %v2655
      %2739 = vmatprep.subr.bf16.mxu0 0
      %2740 = vmatpush1.bf16.msra.mxu0 %v2654
      %2741 = vmatprep.subr.bf16.mxu0 0
      %2742 = vmatpush2.bf16.msra.mxu0 0
      %2743 = vmatprep.subr.bf16.mxu0 0
      %2744 = vmatpush2.bf16.msra.mxu0 0
      %2745 = vmatprep.subr.bf16.mxu0 0
      %2746 = vmatpush2.bf16.msra.mxu0 0
      %2747 = vmatprep.subr.bf16.mxu0 0
      %2748 = vmatpush2.bf16.msra.mxu0 0
      %2749 = vmatprep.subr.bf16.mxu0 0
      %2750 = vmatpush2.bf16.msra.mxu0 0
      %2751 = vmatprep.subr.bf16.mxu0 0
      %2752 = vmatpush2.bf16.msra.mxu0 0
      %2753 = vmatprep.subr.bf16.mxu0 0
      %2754 = vmatpush2.bf16.msra.mxu0 0
      %2755 = vmatprep.subr.bf16.mxu0 0
      %2756 = vmatpush2.bf16.msra.mxu0 0
      %2757 = vmatprep.mubr.bf16.mxu0 0
      %2758 = vmatmul.mubr.bf16.gmra.mxu0 %v2663
      %v2759 = vpop.f32.mrf.mxu0
      %v2760 = vadd.f32 0.0, %v2759
      %v2761 = vpop.f32.mrf.mxu0
      %v2762 = vpop.f32.mrf.mxu0
      %v2763 = vadd.f32 0.0, %v2762
      %v2764 = vpop.f32.mrf.mxu0
      %2765 = vmatprep.mubr.bf16.mxu0 0
      %2766 = vmatmul.mubr.bf16.gmra.mxu0 %v2666
      %v2767 = vpop.f32.mrf.mxu0
      %v2768 = vadd.f32 0.0, %v2767
      %v2769 = vpop.f32.mrf.mxu0
      %v2770 = vpop.f32.mrf.mxu0
      %v2771 = vadd.f32 0.0, %v2770
      %v2772 = vpop.f32.mrf.mxu0
      %2773 = vmatprep.mubr.bf16.mxu0 0
      %2774 = vmatmul.mubr.bf16.gmra.mxu0 %v2669
      %v2775 = vpop.f32.mrf.mxu0
      %v2776 = vadd.f32 0.0, %v2775
      %v2777 = vpop.f32.mrf.mxu0
      %v2778 = vpop.f32.mrf.mxu0
      %v2779 = vadd.f32 0.0, %v2778
      %v2780 = vpop.f32.mrf.mxu0
      %2781 = vmatprep.mubr.bf16.mxu0 0
      %2782 = vmatmul.mubr.bf16.gmra.mxu0 %v2672
      %v2783 = vpop.f32.mrf.mxu0
      %v2784 = vadd.f32 0.0, %v2783
      %v2785 = vpop.f32.mrf.mxu0
      %v2786 = vpop.f32.mrf.mxu0
      %v2787 = vadd.f32 0.0, %v2786
      %v2788 = vpop.f32.mrf.mxu0
      %2789 = vmatprep.mubr.bf16.mxu0 0
      %2790 = vmatmul.mubr.bf16.gmra.mxu0 %v2675
      %v2791 = vpop.f32.mrf.mxu0
      %v2792 = vadd.f32 0.0, %v2791
      %v2793 = vpop.f32.mrf.mxu0
      %v2794 = vpop.f32.mrf.mxu0
      %v2795 = vadd.f32 0.0, %v2794
      %v2796 = vpop.f32.mrf.mxu0
      %2797 = vmatprep.mubr.bf16.mxu0 0
      %2798 = vmatmul.mubr.bf16.gmra.mxu0 %v2678
      %v2799 = vpop.f32.mrf.mxu0
      %v2800 = vadd.f32 0.0, %v2799
      %v2801 = vpop.f32.mrf.mxu0
      %v2802 = vpop.f32.mrf.mxu0
      %v2803 = vadd.f32 0.0, %v2802
      %v2804 = vpop.f32.mrf.mxu0
      %2805 = vmatprep.mubr.bf16.mxu0 0
      %2806 = vmatmul.mubr.bf16.gmra.mxu0 %v2681
      %v2807 = vpop.f32.mrf.mxu0
      %v2808 = vadd.f32 0.0, %v2807
      %v2809 = vpop.f32.mrf.mxu0
      %v2810 = vpop.f32.mrf.mxu0
      %v2811 = vadd.f32 0.0, %v2810
      %v2812 = vpop.f32.mrf.mxu0
      %2813 = vmatprep.mubr.bf16.mxu0 0
      %2814 = vmatmul.mubr.bf16.gmra.mxu0 %v2684
      %v2815 = vpop.f32.mrf.mxu0
      %v2816 = vadd.f32 0.0, %v2815
      %v2817 = vpop.f32.mrf.mxu0
      %v2818 = vpop.f32.mrf.mxu0
      %v2819 = vadd.f32 0.0, %v2818
      %v2820 = vpop.f32.mrf.mxu0
      %2821 = vmatprep.mubr.bf16.mxu0 0
      %2822 = vmatmul.mubr.bf16.gmra.mxu0 %v2687
      %v2823 = vpop.f32.mrf.mxu0
      %v2824 = vadd.f32 0.0, %v2823
      %v2825 = vpop.f32.mrf.mxu0
      %v2826 = vpop.f32.mrf.mxu0
      %v2827 = vadd.f32 0.0, %v2826
      %v2828 = vpop.f32.mrf.mxu0
      %2829 = vmatprep.mubr.bf16.mxu0 0
      %2830 = vmatmul.mubr.bf16.gmra.mxu0 %v2690
      %v2831 = vpop.f32.mrf.mxu0
      %v2832 = vadd.f32 0.0, %v2831
      %v2833 = vpop.f32.mrf.mxu0
      %v2834 = vpop.f32.mrf.mxu0
      %v2835 = vadd.f32 0.0, %v2834
      %v2836 = vpop.f32.mrf.mxu0
      %2837 = vmatprep.mubr.bf16.mxu0 0
      %2838 = vmatmul.mubr.bf16.gmra.mxu0 %v2693
      %v2839 = vpop.f32.mrf.mxu0
      %v2840 = vadd.f32 0.0, %v2839
      %v2841 = vpop.f32.mrf.mxu0
      %v2842 = vpop.f32.mrf.mxu0
      %v2843 = vadd.f32 0.0, %v2842
      %v2844 = vpop.f32.mrf.mxu0
      %2845 = vmatprep.mubr.bf16.mxu0 0
      %2846 = vmatmul.mubr.bf16.gmra.mxu0 %v2696
      %v2847 = vpop.f32.mrf.mxu0
      %v2848 = vadd.f32 0.0, %v2847
      %v2849 = vpop.f32.mrf.mxu0
      %v2850 = vpop.f32.mrf.mxu0
      %v2851 = vadd.f32 0.0, %v2850
      %v2852 = vpop.f32.mrf.mxu0
      %2853 = vmatprep.mubr.bf16.mxu0 0
      %2854 = vmatmul.mubr.bf16.gmra.mxu0 %v2699
      %v2855 = vpop.f32.mrf.mxu0
      %v2856 = vadd.f32 0.0, %v2855
      %v2857 = vpop.f32.mrf.mxu0
      %v2858 = vpop.f32.mrf.mxu0
      %v2859 = vadd.f32 0.0, %v2858
      %v2860 = vpop.f32.mrf.mxu0
      %2861 = vmatprep.mubr.bf16.mxu0 0
      %2862 = vmatmul.mubr.bf16.gmra.mxu0 %v2702
      %v2863 = vpop.f32.mrf.mxu0
      %v2864 = vadd.f32 0.0, %v2863
      %v2865 = vpop.f32.mrf.mxu0
      %v2866 = vpop.f32.mrf.mxu0
      %v2867 = vadd.f32 0.0, %v2866
      %v2868 = vpop.f32.mrf.mxu0
      %2869 = vmatprep.mubr.bf16.mxu0 0
      %2870 = vmatmul.mubr.bf16.gmra.mxu0 %v2705
      %v2871 = vpop.f32.mrf.mxu0
      %v2872 = vadd.f32 0.0, %v2871
      %v2873 = vpop.f32.mrf.mxu0
      %v2874 = vpop.f32.mrf.mxu0
      %v2875 = vadd.f32 0.0, %v2874
      %v2876 = vpop.f32.mrf.mxu0
      %2877 = vmatprep.mubr.bf16.mxu0 0
      %2878 = vmatmul.mubr.bf16.gmra.mxu0 %v2708
      %v2879 = vpop.f32.mrf.mxu0
      %v2880 = vadd.f32 0.0, %v2879
      %v2881 = vpop.f32.mrf.mxu0
      %v2882 = vpop.f32.mrf.mxu0
      %v2883 = vadd.f32 0.0, %v2882
      %v2884 = vpop.f32.mrf.mxu0
      %2885 = vmatprep.mubr.bf16.mxu0 0
      %2886 = vmatmul.mubr.bf16.gmra.mxu0 %v2711
      %v2887 = vpop.f32.mrf.mxu0
      %v2888 = vadd.f32 0.0, %v2887
      %v2889 = vpop.f32.mrf.mxu0
      %v2890 = vpop.f32.mrf.mxu0
      %v2891 = vadd.f32 0.0, %v2890
      %v2892 = vpop.f32.mrf.mxu0
      %2893 = vmatprep.mubr.bf16.mxu0 0
      %2894 = vmatmul.mubr.bf16.gmra.mxu0 %v2714
      %v2895 = vpop.f32.mrf.mxu0
      %v2896 = vadd.f32 0.0, %v2895
      %v2897 = vpop.f32.mrf.mxu0
      %v2898 = vpop.f32.mrf.mxu0
      %v2899 = vadd.f32 0.0, %v2898
      %v2900 = vpop.f32.mrf.mxu0
      %2901 = vmatprep.mubr.bf16.mxu0 0
      %2902 = vmatmul.mubr.bf16.gmra.mxu0 %v2717
      %v2903 = vpop.f32.mrf.mxu0
      %v2904 = vadd.f32 0.0, %v2903
      %v2905 = vpop.f32.mrf.mxu0
      %v2906 = vpop.f32.mrf.mxu0
      %v2907 = vadd.f32 0.0, %v2906
      %v2908 = vpop.f32.mrf.mxu0
      %2909 = vmatprep.mubr.bf16.mxu0 0
      %2910 = vmatmul.mubr.bf16.gmra.mxu0 %v2720
      %v2911 = vpop.f32.mrf.mxu0
      %v2912 = vadd.f32 0.0, %v2911
      %v2913 = vpop.f32.mrf.mxu0
      %v2914 = vpop.f32.mrf.mxu0
      %v2915 = vadd.f32 0.0, %v2914
      %v2916 = vpop.f32.mrf.mxu0
      %2917 = vmatprep.mubr.bf16.mxu0 0
      %2918 = vmatmul.mubr.bf16.gmra.mxu0 %v2723
      %v2919 = vpop.f32.mrf.mxu0
      %v2920 = vadd.f32 0.0, %v2919
      %v2921 = vpop.f32.mrf.mxu0
      %v2922 = vpop.f32.mrf.mxu0
      %v2923 = vpop.f32.mrf.mxu0
      %2924 = vdwg.mxu0
      %v2925 = vadd.f32 %v2366, %v2760
      %v2926 = vadd.f32 %v2369, %v2763
      %v2927 = vadd.f32 %v2374, %v2768
      %v2928 = vadd.f32 %v2377, %v2771
      %v2929 = vadd.f32 %v2382, %v2776
      %v2930 = vadd.f32 %v2385, %v2779
      %v2931 = vadd.f32 %v2390, %v2784
      %v2932 = vadd.f32 %v2393, %v2787
      %v2933 = vadd.f32 %v2398, %v2792
      %v2934 = vadd.f32 %v2401, %v2795
      %v2935 = vadd.f32 %v2406, %v2800
      %v2936 = vadd.f32 %v2409, %v2803
      %v2937 = vadd.f32 %v2414, %v2808
      %v2938 = vadd.f32 %v2417, %v2811
      %v2939 = vadd.f32 %v2422, %v2816
      %v2940 = vadd.f32 %v2425, %v2819
      %v2941 = vadd.f32 %v2430, %v2824
      %v2942 = vadd.f32 %v2433, %v2827
      %v2943 = vadd.f32 %v2438, %v2832
      %v2944 = vadd.f32 %v2441, %v2835
      %v2945 = vadd.f32 %v2446, %v2840
      %v2946 = vadd.f32 %v2449, %v2843
      %v2947 = vadd.f32 %v2454, %v2848
      %v2948 = vadd.f32 %v2457, %v2851
      %v2949 = vadd.f32 %v2462, %v2856
      %v2950 = vadd.f32 %v2465, %v2859
      %v2951 = vadd.f32 %v2470, %v2864
      %v2952 = vadd.f32 %v2473, %v2867
      %v2953 = vadd.f32 %v2478, %v2872
      %v2954 = vadd.f32 %v2481, %v2875
      %v2955 = vadd.f32 %v2486, %v2880
      %v2956 = vadd.f32 %v2489, %v2883
      %v2957 = vadd.f32 %v2494, %v2888
      %v2958 = vadd.f32 %v2497, %v2891
      %v2959 = vadd.f32 %v2502, %v2896
      %v2960 = vadd.f32 %v2505, %v2899
      %v2961 = vadd.f32 %v2510, %v2904
      %v2962 = vadd.f32 %v2513, %v2907
      %v2963 = vadd.f32 %v2518, %v2912
      %v2964 = vadd.f32 %v2521, %v2915
      %v2965 = vadd.f32 %v2526, %v2920
      %v2966 = vld [vmem:[#allocation2 + $0xc] sm:$0x8]
      %v2967 = vld [vmem:[#allocation2 + $0x10] sm:$0xf]
      %v2968 = vld [vmem:[#allocation2 + $0x14] sm:$0xf]
      %v2969 = vld [vmem:[#allocation2 + $0x18] sm:$0xf]
      %v2970 = vld [vmem:[#allocation2 + $0x1c] sm:$0xf]
      %v2971 = vld [vmem:[#allocation2 + $0x20] sm:$0xf]
      %v2972 = vld [vmem:[#allocation2 + $0x24] sm:$0xf]
      %v2973 = vld [vmem:[#allocation2 + $0x28] sm:$0xf]
      %v2974 = vld [vmem:[#allocation2 + $0x2c] sm:$0xf]
      %v2975 = vld [vmem:[#allocation2 + $0x30] sm:$0xf]
      %v2976 = vld [vmem:[#allocation2 + $0x34] sm:$0xf]
      %v2977 = vld [vmem:[#allocation2 + $0x38] sm:$0xf]
      %v2978 = vld [vmem:[#allocation2 + $0x3c] sm:$0xf]
      %v2979 = vld [vmem:[#allocation2 + $0x40] sm:$0xf]
      %v2980 = vld [vmem:[#allocation2 + $0x44] sm:$0xf]
      %v2981 = vld [vmem:[#allocation2 + $0x48] sm:$0xf]
      %v2982 = vld [vmem:[#allocation2 + $0x4c] sm:$0xf]
      %v2983 = vld [vmem:[#allocation2 + $0x50] sm:$0xf]
      %v2984 = vld [vmem:[#allocation2 + $0x54] sm:$0xf]
      %v2985 = vld [vmem:[#allocation2 + $0x58] sm:$0xf]
      %v2986 = vld [vmem:[#allocation2 + $0x5c] sm:$0xf]
      %v2987 = vld [vmem:[#allocation2 + $0x60] sm:$0xf]
      %v2988 = vld [vmem:[#allocation2 + $0x64] sm:$0xf]
      %v2989 = vld [vmem:[#allocation2 + $0x68] sm:$0xf]
      %v2990 = vld [vmem:[#allocation2 + $0x6c] sm:$0xf]
      %v2991 = vld [vmem:[#allocation2 + $0x70] sm:$0xf]
      %v2992 = vld [vmem:[#allocation2 + $0x74] sm:$0xf]
      %v2993 = vld [vmem:[#allocation2 + $0x78] sm:$0xf]
      %v2994 = vld [vmem:[#allocation2 + $0x7c] sm:$0xf]
      %v2995 = vld [vmem:[#allocation2 + $0x80] sm:$0xf]
      %v2996 = vld [vmem:[#allocation2 + $0x84] sm:$0xf]
      %v2997 = vld [vmem:[#allocation2 + $0x88] sm:$0xf]
      %v2998 = vld [vmem:[#allocation2 + $0x8c] sm:$0xf]
      %v2999 = vld [vmem:[#allocation2 + $0x90] sm:$0xf]
      %v3000 = vld [vmem:[#allocation2 + $0x94] sm:$0xf]
      %v3001 = vld [vmem:[#allocation2 + $0x98] sm:$0xf]
      %v3002 = vld [vmem:[#allocation2 + $0x9c] sm:$0xf]
      %v3003 = vld [vmem:[#allocation2 + $0xa0] sm:$0xf]
      %v3004 = vld [vmem:[#allocation2 + $0xa4] sm:$0xf]
      %v3005 = vld [vmem:[#allocation2 + $0xa8] sm:$0xf]
      %v3006 = vld [vmem:[#allocation2 + $0xac] sm:$0xf]
      %v3007 = vld [vmem:[#allocation2 + $0xb0] sm:$0x3]
      %s3008 = scalar_lea.vmem %s5, 96
      %v3009 = vld [vmem:[%s3008] sm:$0xf]
      %v3010 = vld [vmem:[%s3008 + $0x4] sm:$0xf]
      %v3011 = vld [vmem:[%s3008 + $0x8] sm:$0xf]
      %v3012 = vld [vmem:[%s3008 + $0xc] sm:$0xf]
      %v3013 = vld [vmem:[%s3008 + $0x10] sm:$0xf]
      %v3014 = vld [vmem:[%s3008 + $0x14] sm:$0xf]
      %v3015 = vld [vmem:[%s3008 + $0x18] sm:$0xf]
      %v3016 = vld [vmem:[%s3008 + $0x1c] sm:$0xf]
      %v3059 = vunpack.c.l.b16 %v2966
      %v3060 = vunpack.c.l.b16 %v2967
      %v3061 = vunpack.c.l.b16 %v2968
      %v3062 = vunpack.c.l.b16 %v2969
      %v3063 = vunpack.c.l.b16 %v2970
      %v3064 = vunpack.c.l.b16 %v2971
      %v3065 = vunpack.c.l.b16 %v2972
      %v3066 = vunpack.c.l.b16 %v2973
      %v3067 = vunpack.c.l.b16 %v2974
      %v3068 = vunpack.c.l.b16 %v2975
      %v3069 = vunpack.c.l.b16 %v2976
      %v3070 = vunpack.c.l.b16 %v2977
      %v3071 = vunpack.c.l.b16 %v2978
      %v3072 = vunpack.c.l.b16 %v2979
      %v3073 = vunpack.c.l.b16 %v2980
      %v3074 = vunpack.c.l.b16 %v2981
      %v3075 = vunpack.c.l.b16 %v2982
      %v3076 = vunpack.c.l.b16 %v2983
      %v3077 = vunpack.c.l.b16 %v2984
      %v3078 = vunpack.c.l.b16 %v2985
      %v3079 = vunpack.c.l.b16 %v2986
      %v3080 = vunpack.c.l.b16 %v2987
      %v3081 = vunpack.c.l.b16 %v2988
      %v3082 = vunpack.c.l.b16 %v2989
      %v3083 = vunpack.c.l.b16 %v2990
      %v3084 = vunpack.c.l.b16 %v2991
      %v3085 = vunpack.c.l.b16 %v2992
      %v3086 = vunpack.c.l.b16 %v2993
      %v3087 = vunpack.c.l.b16 %v2994
      %v3088 = vunpack.c.l.b16 %v2995
      %v3089 = vunpack.c.l.b16 %v2996
      %v3090 = vunpack.c.l.b16 %v2997
      %v3091 = vunpack.c.l.b16 %v2998
      %v3092 = vunpack.c.l.b16 %v2999
      %v3093 = vunpack.c.l.b16 %v3000
      %v3094 = vunpack.c.l.b16 %v3001
      %v3095 = vunpack.c.l.b16 %v3002
      %v3096 = vunpack.c.l.b16 %v3003
      %v3097 = vunpack.c.l.b16 %v3004
      %v3098 = vunpack.c.l.b16 %v3005
      %v3099 = vunpack.c.l.b16 %v3006
      %v3100 = vunpack.c.l.b16 %v3007
      %v3101 = vpack.c.b16 %v3060, %v3059
      %v3102 = vpack.c.b16 %v3062, %v3061
      %v3103 = vpack.c.b16 %v3064, %v3063
      %v3104 = vpack.c.b16 %v3066, %v3065
      %v3105 = vpack.c.b16 %v3068, %v3067
      %v3106 = vpack.c.b16 %v3070, %v3069
      %v3107 = vpack.c.b16 %v3072, %v3071
      %v3108 = vpack.c.b16 %v3074, %v3073
      %v3109 = vpack.c.b16 %v3076, %v3075
      %v3110 = vpack.c.b16 %v3078, %v3077
      %v3111 = vpack.c.b16 %v3080, %v3079
      %v3112 = vpack.c.b16 %v3082, %v3081
      %v3113 = vpack.c.b16 %v3084, %v3083
      %v3114 = vpack.c.b16 %v3086, %v3085
      %v3115 = vpack.c.b16 %v3088, %v3087
      %v3116 = vpack.c.b16 %v3090, %v3089
      %v3117 = vpack.c.b16 %v3092, %v3091
      %v3118 = vpack.c.b16 %v3094, %v3093
      %v3119 = vpack.c.b16 %v3096, %v3095
      %v3120 = vpack.c.b16 %v3098, %v3097
      %v3121 = vpack.c.b16 %v3100, %v3099
      %v3123 = vshrl.u32 %v3101, 16
      %v3125 = vrot.slane %v3123, 3
      %v3126 = vshll.u32 %v3101, 16
      %v3128 = vrot.slane %v3126, 4
      %v3129 = vor.u32 %v3125, %v3128
      %v3131 = vshrl.u32 %v3102, 16
      %v3133 = vrot.slane %v3131, 3
      %v3134 = vshll.u32 %v3102, 16
      %v3136 = vrot.slane %v3134, 4
      %v3137 = vor.u32 %v3133, %v3136
      %v3138 = vsel %vm2544, %v3129, %v3137
      %v3140 = vshrl.u32 %v3103, 16
      %v3142 = vrot.slane %v3140, 3
      %v3143 = vshll.u32 %v3103, 16
      %v3145 = vrot.slane %v3143, 4
      %v3146 = vor.u32 %v3142, %v3145
      %v3147 = vsel %vm2544, %v3137, %v3146
      %v3149 = vshrl.u32 %v3104, 16
      %v3151 = vrot.slane %v3149, 3
      %v3152 = vshll.u32 %v3104, 16
      %v3154 = vrot.slane %v3152, 4
      %v3155 = vor.u32 %v3151, %v3154
      %v3156 = vsel %vm2544, %v3146, %v3155
      %v3158 = vshrl.u32 %v3105, 16
      %v3160 = vrot.slane %v3158, 3
      %v3161 = vshll.u32 %v3105, 16
      %v3163 = vrot.slane %v3161, 4
      %v3164 = vor.u32 %v3160, %v3163
      %v3165 = vsel %vm2544, %v3155, %v3164
      %v3167 = vshrl.u32 %v3106, 16
      %v3169 = vrot.slane %v3167, 3
      %v3170 = vshll.u32 %v3106, 16
      %v3172 = vrot.slane %v3170, 4
      %v3173 = vor.u32 %v3169, %v3172
      %v3174 = vsel %vm2544, %v3164, %v3173
      %v3176 = vshrl.u32 %v3107, 16
      %v3178 = vrot.slane %v3176, 3
      %v3179 = vshll.u32 %v3107, 16
      %v3181 = vrot.slane %v3179, 4
      %v3182 = vor.u32 %v3178, %v3181
      %v3183 = vsel %vm2544, %v3173, %v3182
      %v3185 = vshrl.u32 %v3108, 16
      %v3187 = vrot.slane %v3185, 3
      %v3188 = vshll.u32 %v3108, 16
      %v3190 = vrot.slane %v3188, 4
      %v3191 = vor.u32 %v3187, %v3190
      %v3192 = vsel %vm2544, %v3182, %v3191
      %v3194 = vshrl.u32 %v3109, 16
      %v3196 = vrot.slane %v3194, 3
      %v3197 = vshll.u32 %v3109, 16
      %v3199 = vrot.slane %v3197, 4
      %v3200 = vor.u32 %v3196, %v3199
      %v3201 = vsel %vm2544, %v3191, %v3200
      %v3203 = vshrl.u32 %v3110, 16
      %v3205 = vrot.slane %v3203, 3
      %v3206 = vshll.u32 %v3110, 16
      %v3208 = vrot.slane %v3206, 4
      %v3209 = vor.u32 %v3205, %v3208
      %v3210 = vsel %vm2544, %v3200, %v3209
      %v3212 = vshrl.u32 %v3111, 16
      %v3214 = vrot.slane %v3212, 3
      %v3215 = vshll.u32 %v3111, 16
      %v3217 = vrot.slane %v3215, 4
      %v3218 = vor.u32 %v3214, %v3217
      %v3219 = vsel %vm2544, %v3209, %v3218
      %v3221 = vshrl.u32 %v3112, 16
      %v3223 = vrot.slane %v3221, 3
      %v3224 = vshll.u32 %v3112, 16
      %v3226 = vrot.slane %v3224, 4
      %v3227 = vor.u32 %v3223, %v3226
      %v3228 = vsel %vm2544, %v3218, %v3227
      %v3230 = vshrl.u32 %v3113, 16
      %v3232 = vrot.slane %v3230, 3
      %v3233 = vshll.u32 %v3113, 16
      %v3235 = vrot.slane %v3233, 4
      %v3236 = vor.u32 %v3232, %v3235
      %v3237 = vsel %vm2544, %v3227, %v3236
      %v3239 = vshrl.u32 %v3114, 16
      %v3241 = vrot.slane %v3239, 3
      %v3242 = vshll.u32 %v3114, 16
      %v3244 = vrot.slane %v3242, 4
      %v3245 = vor.u32 %v3241, %v3244
      %v3246 = vsel %vm2544, %v3236, %v3245
      %v3248 = vshrl.u32 %v3115, 16
      %v3250 = vrot.slane %v3248, 3
      %v3251 = vshll.u32 %v3115, 16
      %v3253 = vrot.slane %v3251, 4
      %v3254 = vor.u32 %v3250, %v3253
      %v3255 = vsel %vm2544, %v3245, %v3254
      %v3257 = vshrl.u32 %v3116, 16
      %v3259 = vrot.slane %v3257, 3
      %v3260 = vshll.u32 %v3116, 16
      %v3262 = vrot.slane %v3260, 4
      %v3263 = vor.u32 %v3259, %v3262
      %v3264 = vsel %vm2544, %v3254, %v3263
      %v3266 = vshrl.u32 %v3117, 16
      %v3268 = vrot.slane %v3266, 3
      %v3269 = vshll.u32 %v3117, 16
      %v3271 = vrot.slane %v3269, 4
      %v3272 = vor.u32 %v3268, %v3271
      %v3273 = vsel %vm2544, %v3263, %v3272
      %v3275 = vshrl.u32 %v3118, 16
      %v3277 = vrot.slane %v3275, 3
      %v3278 = vshll.u32 %v3118, 16
      %v3280 = vrot.slane %v3278, 4
      %v3281 = vor.u32 %v3277, %v3280
      %v3282 = vsel %vm2544, %v3272, %v3281
      %v3284 = vshrl.u32 %v3119, 16
      %v3286 = vrot.slane %v3284, 3
      %v3287 = vshll.u32 %v3119, 16
      %v3289 = vrot.slane %v3287, 4
      %v3290 = vor.u32 %v3286, %v3289
      %v3291 = vsel %vm2544, %v3281, %v3290
      %v3293 = vshrl.u32 %v3120, 16
      %v3295 = vrot.slane %v3293, 3
      %v3296 = vshll.u32 %v3120, 16
      %v3298 = vrot.slane %v3296, 4
      %v3299 = vor.u32 %v3295, %v3298
      %v3300 = vsel %vm2544, %v3290, %v3299
      %v3302 = vshrl.u32 %v3121, 16
      %v3304 = vrot.slane %v3302, 3
      %v3305 = vshll.u32 %v3121, 16
      %v3307 = vrot.slane %v3305, 4
      %v3308 = vor.u32 %v3304, %v3307
      %v3309 = vsel %vm2544, %v3299, %v3308
      %v3318 = vunpack.c.l.b16 %v3009
      %v3319 = vunpack.c.l.b16 %v3010
      %v3320 = vunpack.c.l.b16 %v3011
      %v3321 = vunpack.c.l.b16 %v3012
      %v3322 = vunpack.c.l.b16 %v3013
      %v3323 = vunpack.c.l.b16 %v3014
      %v3324 = vunpack.c.l.b16 %v3015
      %v3325 = vunpack.c.l.b16 %v3016
      %v3326 = vpack.c.b16 %v3319, %v3318
      %v3327 = vpack.c.b16 %v3321, %v3320
      %v3328 = vpack.c.b16 %v3323, %v3322
      %v3329 = vpack.c.b16 %v3325, %v3324
      %v3335 = vsel %vm1788, %v3138, 0
      %v3338 = vsel %vm1788, %v3147, 0
      %v3341 = vsel %vm1788, %v3156, 0
      %v3344 = vsel %vm1788, %v3165, 0
      %v3347 = vsel %vm1788, %v3174, 0
      %v3350 = vsel %vm1788, %v3183, 0
      %v3353 = vsel %vm1788, %v3192, 0
      %v3356 = vsel %vm1788, %v3201, 0
      %v3359 = vsel %vm1788, %v3210, 0
      %v3362 = vsel %vm1788, %v3219, 0
      %v3365 = vsel %vm1788, %v3228, 0
      %v3368 = vsel %vm1788, %v3237, 0
      %v3371 = vsel %vm1788, %v3246, 0
      %v3374 = vsel %vm1788, %v3255, 0
      %v3377 = vsel %vm1788, %v3264, 0
      %v3380 = vsel %vm1788, %v3273, 0
      %v3383 = vsel %vm1788, %v3282, 0
      %v3386 = vsel %vm1788, %v3291, 0
      %v3389 = vsel %vm1788, %v3300, 0
      %v3392 = vsel %vm1788, %v3309, 0
      %v3395 = vsel %vm1788, %v3308, 0
      %3397 = vmatprep.subr.bf16.mxu0 0
      %3398 = vmatpush1.bf16.msra.mxu0 0
      %3399 = vmatprep.subr.bf16.mxu0 0
      %3400 = vmatpush1.bf16.msra.mxu0 0
      %3401 = vmatprep.subr.bf16.mxu0 0
      %3402 = vmatpush1.bf16.msra.mxu0 0
      %3403 = vmatprep.subr.bf16.mxu0 0
      %3404 = vmatpush1.bf16.msra.mxu0 0
      %3405 = vmatprep.subr.bf16.mxu0 0
      %3406 = vmatpush1.bf16.msra.mxu0 %v3329
      %3407 = vmatprep.subr.bf16.mxu0 0
      %3408 = vmatpush1.bf16.msra.mxu0 %v3328
      %3409 = vmatprep.subr.bf16.mxu0 0
      %3410 = vmatpush1.bf16.msra.mxu0 %v3327
      %3411 = vmatprep.subr.bf16.mxu0 0
      %3412 = vmatpush1.bf16.msra.mxu0 %v3326
      %3413 = vmatprep.subr.bf16.mxu0 0
      %3414 = vmatpush2.bf16.msra.mxu0 0
      %3415 = vmatprep.subr.bf16.mxu0 0
      %3416 = vmatpush2.bf16.msra.mxu0 0
      %3417 = vmatprep.subr.bf16.mxu0 0
      %3418 = vmatpush2.bf16.msra.mxu0 0
      %3419 = vmatprep.subr.bf16.mxu0 0
      %3420 = vmatpush2.bf16.msra.mxu0 0
      %3421 = vmatprep.subr.bf16.mxu0 0
      %3422 = vmatpush2.bf16.msra.mxu0 0
      %3423 = vmatprep.subr.bf16.mxu0 0
      %3424 = vmatpush2.bf16.msra.mxu0 0
      %3425 = vmatprep.subr.bf16.mxu0 0
      %3426 = vmatpush2.bf16.msra.mxu0 0
      %3427 = vmatprep.subr.bf16.mxu0 0
      %3428 = vmatpush2.bf16.msra.mxu0 0
      %3429 = vmatprep.mubr.bf16.mxu0 0
      %3430 = vmatmul.mubr.bf16.gmra.mxu0 %v3335
      %v3431 = vpop.f32.mrf.mxu0
      %v3432 = vadd.f32 0.0, %v3431
      %v3433 = vpop.f32.mrf.mxu0
      %v3434 = vpop.f32.mrf.mxu0
      %v3435 = vadd.f32 0.0, %v3434
      %v3436 = vpop.f32.mrf.mxu0
      %3437 = vmatprep.mubr.bf16.mxu0 0
      %3438 = vmatmul.mubr.bf16.gmra.mxu0 %v3338
      %v3439 = vpop.f32.mrf.mxu0
      %v3440 = vadd.f32 0.0, %v3439
      %v3441 = vpop.f32.mrf.mxu0
      %v3442 = vpop.f32.mrf.mxu0
      %v3443 = vadd.f32 0.0, %v3442
      %v3444 = vpop.f32.mrf.mxu0
      %3445 = vmatprep.mubr.bf16.mxu0 0
      %3446 = vmatmul.mubr.bf16.gmra.mxu0 %v3341
      %v3447 = vpop.f32.mrf.mxu0
      %v3448 = vadd.f32 0.0, %v3447
      %v3449 = vpop.f32.mrf.mxu0
      %v3450 = vpop.f32.mrf.mxu0
      %v3451 = vadd.f32 0.0, %v3450
      %v3452 = vpop.f32.mrf.mxu0
      %3453 = vmatprep.mubr.bf16.mxu0 0
      %3454 = vmatmul.mubr.bf16.gmra.mxu0 %v3344
      %v3455 = vpop.f32.mrf.mxu0
      %v3456 = vadd.f32 0.0, %v3455
      %v3457 = vpop.f32.mrf.mxu0
      %v3458 = vpop.f32.mrf.mxu0
      %v3459 = vadd.f32 0.0, %v3458
      %v3460 = vpop.f32.mrf.mxu0
      %3461 = vmatprep.mubr.bf16.mxu0 0
      %3462 = vmatmul.mubr.bf16.gmra.mxu0 %v3347
      %v3463 = vpop.f32.mrf.mxu0
      %v3464 = vadd.f32 0.0, %v3463
      %v3465 = vpop.f32.mrf.mxu0
      %v3466 = vpop.f32.mrf.mxu0
      %v3467 = vadd.f32 0.0, %v3466
      %v3468 = vpop.f32.mrf.mxu0
      %3469 = vmatprep.mubr.bf16.mxu0 0
      %3470 = vmatmul.mubr.bf16.gmra.mxu0 %v3350
      %v3471 = vpop.f32.mrf.mxu0
      %v3472 = vadd.f32 0.0, %v3471
      %v3473 = vpop.f32.mrf.mxu0
      %v3474 = vpop.f32.mrf.mxu0
      %v3475 = vadd.f32 0.0, %v3474
      %v3476 = vpop.f32.mrf.mxu0
      %3477 = vmatprep.mubr.bf16.mxu0 0
      %3478 = vmatmul.mubr.bf16.gmra.mxu0 %v3353
      %v3479 = vpop.f32.mrf.mxu0
      %v3480 = vadd.f32 0.0, %v3479
      %v3481 = vpop.f32.mrf.mxu0
      %v3482 = vpop.f32.mrf.mxu0
      %v3483 = vadd.f32 0.0, %v3482
      %v3484 = vpop.f32.mrf.mxu0
      %3485 = vmatprep.mubr.bf16.mxu0 0
      %3486 = vmatmul.mubr.bf16.gmra.mxu0 %v3356
      %v3487 = vpop.f32.mrf.mxu0
      %v3488 = vadd.f32 0.0, %v3487
      %v3489 = vpop.f32.mrf.mxu0
      %v3490 = vpop.f32.mrf.mxu0
      %v3491 = vadd.f32 0.0, %v3490
      %v3492 = vpop.f32.mrf.mxu0
      %3493 = vmatprep.mubr.bf16.mxu0 0
      %3494 = vmatmul.mubr.bf16.gmra.mxu0 %v3359
      %v3495 = vpop.f32.mrf.mxu0
      %v3496 = vadd.f32 0.0, %v3495
      %v3497 = vpop.f32.mrf.mxu0
      %v3498 = vpop.f32.mrf.mxu0
      %v3499 = vadd.f32 0.0, %v3498
      %v3500 = vpop.f32.mrf.mxu0
      %3501 = vmatprep.mubr.bf16.mxu0 0
      %3502 = vmatmul.mubr.bf16.gmra.mxu0 %v3362
      %v3503 = vpop.f32.mrf.mxu0
      %v3504 = vadd.f32 0.0, %v3503
      %v3505 = vpop.f32.mrf.mxu0
      %v3506 = vpop.f32.mrf.mxu0
      %v3507 = vadd.f32 0.0, %v3506
      %v3508 = vpop.f32.mrf.mxu0
      %3509 = vmatprep.mubr.bf16.mxu0 0
      %3510 = vmatmul.mubr.bf16.gmra.mxu0 %v3365
      %v3511 = vpop.f32.mrf.mxu0
      %v3512 = vadd.f32 0.0, %v3511
      %v3513 = vpop.f32.mrf.mxu0
      %v3514 = vpop.f32.mrf.mxu0
      %v3515 = vadd.f32 0.0, %v3514
      %v3516 = vpop.f32.mrf.mxu0
      %3517 = vmatprep.mubr.bf16.mxu0 0
      %3518 = vmatmul.mubr.bf16.gmra.mxu0 %v3368
      %v3519 = vpop.f32.mrf.mxu0
      %v3520 = vadd.f32 0.0, %v3519
      %v3521 = vpop.f32.mrf.mxu0
      %v3522 = vpop.f32.mrf.mxu0
      %v3523 = vadd.f32 0.0, %v3522
      %v3524 = vpop.f32.mrf.mxu0
      %3525 = vmatprep.mubr.bf16.mxu0 0
      %3526 = vmatmul.mubr.bf16.gmra.mxu0 %v3371
      %v3527 = vpop.f32.mrf.mxu0
      %v3528 = vadd.f32 0.0, %v3527
      %v3529 = vpop.f32.mrf.mxu0
      %v3530 = vpop.f32.mrf.mxu0
      %v3531 = vadd.f32 0.0, %v3530
      %v3532 = vpop.f32.mrf.mxu0
      %3533 = vmatprep.mubr.bf16.mxu0 0
      %3534 = vmatmul.mubr.bf16.gmra.mxu0 %v3374
      %v3535 = vpop.f32.mrf.mxu0
      %v3536 = vadd.f32 0.0, %v3535
      %v3537 = vpop.f32.mrf.mxu0
      %v3538 = vpop.f32.mrf.mxu0
      %v3539 = vadd.f32 0.0, %v3538
      %v3540 = vpop.f32.mrf.mxu0
      %3541 = vmatprep.mubr.bf16.mxu0 0
      %3542 = vmatmul.mubr.bf16.gmra.mxu0 %v3377
      %v3543 = vpop.f32.mrf.mxu0
      %v3544 = vadd.f32 0.0, %v3543
      %v3545 = vpop.f32.mrf.mxu0
      %v3546 = vpop.f32.mrf.mxu0
      %v3547 = vadd.f32 0.0, %v3546
      %v3548 = vpop.f32.mrf.mxu0
      %3549 = vmatprep.mubr.bf16.mxu0 0
      %3550 = vmatmul.mubr.bf16.gmra.mxu0 %v3380
      %v3551 = vpop.f32.mrf.mxu0
      %v3552 = vadd.f32 0.0, %v3551
      %v3553 = vpop.f32.mrf.mxu0
      %v3554 = vpop.f32.mrf.mxu0
      %v3555 = vadd.f32 0.0, %v3554
      %v3556 = vpop.f32.mrf.mxu0
      %3557 = vmatprep.mubr.bf16.mxu0 0
      %3558 = vmatmul.mubr.bf16.gmra.mxu0 %v3383
      %v3559 = vpop.f32.mrf.mxu0
      %v3560 = vadd.f32 0.0, %v3559
      %v3561 = vpop.f32.mrf.mxu0
      %v3562 = vpop.f32.mrf.mxu0
      %v3563 = vadd.f32 0.0, %v3562
      %v3564 = vpop.f32.mrf.mxu0
      %3565 = vmatprep.mubr.bf16.mxu0 0
      %3566 = vmatmul.mubr.bf16.gmra.mxu0 %v3386
      %v3567 = vpop.f32.mrf.mxu0
      %v3568 = vadd.f32 0.0, %v3567
      %v3569 = vpop.f32.mrf.mxu0
      %v3570 = vpop.f32.mrf.mxu0
      %v3571 = vadd.f32 0.0, %v3570
      %v3572 = vpop.f32.mrf.mxu0
      %3573 = vmatprep.mubr.bf16.mxu0 0
      %3574 = vmatmul.mubr.bf16.gmra.mxu0 %v3389
      %v3575 = vpop.f32.mrf.mxu0
      %v3576 = vadd.f32 0.0, %v3575
      %v3577 = vpop.f32.mrf.mxu0
      %v3578 = vpop.f32.mrf.mxu0
      %v3579 = vadd.f32 0.0, %v3578
      %v3580 = vpop.f32.mrf.mxu0
      %3581 = vmatprep.mubr.bf16.mxu0 0
      %3582 = vmatmul.mubr.bf16.gmra.mxu0 %v3392
      %v3583 = vpop.f32.mrf.mxu0
      %v3584 = vadd.f32 0.0, %v3583
      %v3585 = vpop.f32.mrf.mxu0
      %v3586 = vpop.f32.mrf.mxu0
      %v3587 = vadd.f32 0.0, %v3586
      %v3588 = vpop.f32.mrf.mxu0
      %3589 = vmatprep.mubr.bf16.mxu0 0
      %3590 = vmatmul.mubr.bf16.gmra.mxu0 %v3395
      %v3591 = vpop.f32.mrf.mxu0
      %v3592 = vadd.f32 0.0, %v3591
      %v3593 = vpop.f32.mrf.mxu0
      %v3594 = vpop.f32.mrf.mxu0
      %v3595 = vpop.f32.mrf.mxu0
      %3596 = vdwg.mxu0
      %v3597 = vadd.f32 %v2925, %v3432
      %v3598 = vadd.f32 %v2926, %v3435
      %v3599 = vadd.f32 %v2927, %v3440
      %v3600 = vadd.f32 %v2928, %v3443
      %v3601 = vadd.f32 %v2929, %v3448
      %v3602 = vadd.f32 %v2930, %v3451
      %v3603 = vadd.f32 %v2931, %v3456
      %v3604 = vadd.f32 %v2932, %v3459
      %v3605 = vadd.f32 %v2933, %v3464
      %v3606 = vadd.f32 %v2934, %v3467
      %v3607 = vadd.f32 %v2935, %v3472
      %v3608 = vadd.f32 %v2936, %v3475
      %v3609 = vadd.f32 %v2937, %v3480
      %v3610 = vadd.f32 %v2938, %v3483
      %v3611 = vadd.f32 %v2939, %v3488
      %v3612 = vadd.f32 %v2940, %v3491
      %v3613 = vadd.f32 %v2941, %v3496
      %v3614 = vadd.f32 %v2942, %v3499
      %v3615 = vadd.f32 %v2943, %v3504
      %v3616 = vadd.f32 %v2944, %v3507
      %v3617 = vadd.f32 %v2945, %v3512
      %v3618 = vadd.f32 %v2946, %v3515
      %v3619 = vadd.f32 %v2947, %v3520
      %v3620 = vadd.f32 %v2948, %v3523
      %v3621 = vadd.f32 %v2949, %v3528
      %v3622 = vadd.f32 %v2950, %v3531
      %v3623 = vadd.f32 %v2951, %v3536
      %v3624 = vadd.f32 %v2952, %v3539
      %v3625 = vadd.f32 %v2953, %v3544
      %v3626 = vadd.f32 %v2954, %v3547
      %v3627 = vadd.f32 %v2955, %v3552
      %v3628 = vadd.f32 %v2956, %v3555
      %v3629 = vadd.f32 %v2957, %v3560
      %v3630 = vadd.f32 %v2958, %v3563
      %v3631 = vadd.f32 %v2959, %v3568
      %v3632 = vadd.f32 %v2960, %v3571
      %v3633 = vadd.f32 %v2961, %v3576
      %v3634 = vadd.f32 %v2962, %v3579
      %v3635 = vadd.f32 %v2963, %v3584
      %v3636 = vadd.f32 %v2964, %v3587
      %v3637 = vadd.f32 %v2965, %v3592
      %s3638 = scalar_lea.vmem %s5, 128
      %v3639 = vld [vmem:[%s3638] sm:$0xf]
      %v3640 = vld [vmem:[%s3638 + $0x4] sm:$0xf]
      %v3641 = vld [vmem:[%s3638 + $0x8] sm:$0xf]
      %v3642 = vld [vmem:[%s3638 + $0xc] sm:$0xf]
      %v3643 = vld [vmem:[%s3638 + $0x10] sm:$0xf]
      %v3644 = vld [vmem:[%s3638 + $0x14] sm:$0xf]
      %v3645 = vld [vmem:[%s3638 + $0x18] sm:$0xf]
      %v3646 = vld [vmem:[%s3638 + $0x1c] sm:$0xf]
      %v3647 = vpack.c.b16 %v3061, %v3060
      %v3648 = vpack.c.b16 %v3063, %v3062
      %v3649 = vpack.c.b16 %v3065, %v3064
      %v3650 = vpack.c.b16 %v3067, %v3066
      %v3651 = vpack.c.b16 %v3069, %v3068
      %v3652 = vpack.c.b16 %v3071, %v3070
      %v3653 = vpack.c.b16 %v3073, %v3072
      %v3654 = vpack.c.b16 %v3075, %v3074
      %v3655 = vpack.c.b16 %v3077, %v3076
      %v3656 = vpack.c.b16 %v3079, %v3078
      %v3657 = vpack.c.b16 %v3081, %v3080
      %v3658 = vpack.c.b16 %v3083, %v3082
      %v3659 = vpack.c.b16 %v3085, %v3084
      %v3660 = vpack.c.b16 %v3087, %v3086
      %v3661 = vpack.c.b16 %v3089, %v3088
      %v3662 = vpack.c.b16 %v3091, %v3090
      %v3663 = vpack.c.b16 %v3093, %v3092
      %v3664 = vpack.c.b16 %v3095, %v3094
      %v3665 = vpack.c.b16 %v3097, %v3096
      %v3666 = vpack.c.b16 %v3099, %v3098
      %v3667 = vpack.c.b16 %v3100, %v3100
      %v3676 = vunpack.c.l.b16 %v3639
      %v3677 = vunpack.c.l.b16 %v3640
      %v3678 = vunpack.c.l.b16 %v3641
      %v3679 = vunpack.c.l.b16 %v3642
      %v3680 = vunpack.c.l.b16 %v3643
      %v3681 = vunpack.c.l.b16 %v3644
      %v3682 = vunpack.c.l.b16 %v3645
      %v3683 = vunpack.c.l.b16 %v3646
      %v3684 = vpack.c.b16 %v3677, %v3676
      %v3685 = vpack.c.b16 %v3679, %v3678
      %v3686 = vpack.c.b16 %v3681, %v3680
      %v3687 = vpack.c.b16 %v3683, %v3682
      %v3693 = vsel %vm1788, %v3647, 0
      %v3696 = vsel %vm1788, %v3648, 0
      %v3699 = vsel %vm1788, %v3649, 0
      %v3702 = vsel %vm1788, %v3650, 0
      %v3705 = vsel %vm1788, %v3651, 0
      %v3708 = vsel %vm1788, %v3652, 0
      %v3711 = vsel %vm1788, %v3653, 0
      %v3714 = vsel %vm1788, %v3654, 0
      %v3717 = vsel %vm1788, %v3655, 0
      %v3720 = vsel %vm1788, %v3656, 0
      %v3723 = vsel %vm1788, %v3657, 0
      %v3726 = vsel %vm1788, %v3658, 0
      %v3729 = vsel %vm1788, %v3659, 0
      %v3732 = vsel %vm1788, %v3660, 0
      %v3735 = vsel %vm1788, %v3661, 0
      %v3738 = vsel %vm1788, %v3662, 0
      %v3741 = vsel %vm1788, %v3663, 0
      %v3744 = vsel %vm1788, %v3664, 0
      %v3747 = vsel %vm1788, %v3665, 0
      %v3750 = vsel %vm1788, %v3666, 0
      %v3753 = vsel %vm1788, %v3667, 0
      %3755 = vmatprep.subr.bf16.mxu0 0
      %3756 = vmatpush1.bf16.msra.mxu0 0
      %3757 = vmatprep.subr.bf16.mxu0 0
      %3758 = vmatpush1.bf16.msra.mxu0 0
      %3759 = vmatprep.subr.bf16.mxu0 0
      %3760 = vmatpush1.bf16.msra.mxu0 0
      %3761 = vmatprep.subr.bf16.mxu0 0
      %3762 = vmatpush1.bf16.msra.mxu0 0
      %3763 = vmatprep.subr.bf16.mxu0 0
      %3764 = vmatpush1.bf16.msra.mxu0 %v3687
      %3765 = vmatprep.subr.bf16.mxu0 0
      %3766 = vmatpush1.bf16.msra.mxu0 %v3686
      %3767 = vmatprep.subr.bf16.mxu0 0
      %3768 = vmatpush1.bf16.msra.mxu0 %v3685
      %3769 = vmatprep.subr.bf16.mxu0 0
      %3770 = vmatpush1.bf16.msra.mxu0 %v3684
      %3771 = vmatprep.subr.bf16.mxu0 0
      %3772 = vmatpush2.bf16.msra.mxu0 0
      %3773 = vmatprep.subr.bf16.mxu0 0
      %3774 = vmatpush2.bf16.msra.mxu0 0
      %3775 = vmatprep.subr.bf16.mxu0 0
      %3776 = vmatpush2.bf16.msra.mxu0 0
      %3777 = vmatprep.subr.bf16.mxu0 0
      %3778 = vmatpush2.bf16.msra.mxu0 0
      %3779 = vmatprep.subr.bf16.mxu0 0
      %3780 = vmatpush2.bf16.msra.mxu0 0
      %3781 = vmatprep.subr.bf16.mxu0 0
      %3782 = vmatpush2.bf16.msra.mxu0 0
      %3783 = vmatprep.subr.bf16.mxu0 0
      %3784 = vmatpush2.bf16.msra.mxu0 0
      %3785 = vmatprep.subr.bf16.mxu0 0
      %3786 = vmatpush2.bf16.msra.mxu0 0
      %3787 = vmatprep.mubr.bf16.mxu0 0
      %3788 = vmatmul.mubr.bf16.gmra.mxu0 %v3693
      %v3789 = vpop.f32.mrf.mxu0
      %v3790 = vadd.f32 0.0, %v3789
      %v3791 = vpop.f32.mrf.mxu0
      %v3792 = vpop.f32.mrf.mxu0
      %v3793 = vadd.f32 0.0, %v3792
      %v3794 = vpop.f32.mrf.mxu0
      %3795 = vmatprep.mubr.bf16.mxu0 0
      %3796 = vmatmul.mubr.bf16.gmra.mxu0 %v3696
      %v3797 = vpop.f32.mrf.mxu0
      %v3798 = vadd.f32 0.0, %v3797
      %v3799 = vpop.f32.mrf.mxu0
      %v3800 = vpop.f32.mrf.mxu0
      %v3801 = vadd.f32 0.0, %v3800
      %v3802 = vpop.f32.mrf.mxu0
      %3803 = vmatprep.mubr.bf16.mxu0 0
      %3804 = vmatmul.mubr.bf16.gmra.mxu0 %v3699
      %v3805 = vpop.f32.mrf.mxu0
      %v3806 = vadd.f32 0.0, %v3805
      %v3807 = vpop.f32.mrf.mxu0
      %v3808 = vpop.f32.mrf.mxu0
      %v3809 = vadd.f32 0.0, %v3808
      %v3810 = vpop.f32.mrf.mxu0
      %3811 = vmatprep.mubr.bf16.mxu0 0
      %3812 = vmatmul.mubr.bf16.gmra.mxu0 %v3702
      %v3813 = vpop.f32.mrf.mxu0
      %v3814 = vadd.f32 0.0, %v3813
      %v3815 = vpop.f32.mrf.mxu0
      %v3816 = vpop.f32.mrf.mxu0
      %v3817 = vadd.f32 0.0, %v3816
      %v3818 = vpop.f32.mrf.mxu0
      %3819 = vmatprep.mubr.bf16.mxu0 0
      %3820 = vmatmul.mubr.bf16.gmra.mxu0 %v3705
      %v3821 = vpop.f32.mrf.mxu0
      %v3822 = vadd.f32 0.0, %v3821
      %v3823 = vpop.f32.mrf.mxu0
      %v3824 = vpop.f32.mrf.mxu0
      %v3825 = vadd.f32 0.0, %v3824
      %v3826 = vpop.f32.mrf.mxu0
      %3827 = vmatprep.mubr.bf16.mxu0 0
      %3828 = vmatmul.mubr.bf16.gmra.mxu0 %v3708
      %v3829 = vpop.f32.mrf.mxu0
      %v3830 = vadd.f32 0.0, %v3829
      %v3831 = vpop.f32.mrf.mxu0
      %v3832 = vpop.f32.mrf.mxu0
      %v3833 = vadd.f32 0.0, %v3832
      %v3834 = vpop.f32.mrf.mxu0
      %3835 = vmatprep.mubr.bf16.mxu0 0
      %3836 = vmatmul.mubr.bf16.gmra.mxu0 %v3711
      %v3837 = vpop.f32.mrf.mxu0
      %v3838 = vadd.f32 0.0, %v3837
      %v3839 = vpop.f32.mrf.mxu0
      %v3840 = vpop.f32.mrf.mxu0
      %v3841 = vadd.f32 0.0, %v3840
      %v3842 = vpop.f32.mrf.mxu0
      %3843 = vmatprep.mubr.bf16.mxu0 0
      %3844 = vmatmul.mubr.bf16.gmra.mxu0 %v3714
      %v3845 = vpop.f32.mrf.mxu0
      %v3846 = vadd.f32 0.0, %v3845
      %v3847 = vpop.f32.mrf.mxu0
      %v3848 = vpop.f32.mrf.mxu0
      %v3849 = vadd.f32 0.0, %v3848
      %v3850 = vpop.f32.mrf.mxu0
      %3851 = vmatprep.mubr.bf16.mxu0 0
      %3852 = vmatmul.mubr.bf16.gmra.mxu0 %v3717
      %v3853 = vpop.f32.mrf.mxu0
      %v3854 = vadd.f32 0.0, %v3853
      %v3855 = vpop.f32.mrf.mxu0
      %v3856 = vpop.f32.mrf.mxu0
      %v3857 = vadd.f32 0.0, %v3856
      %v3858 = vpop.f32.mrf.mxu0
      %3859 = vmatprep.mubr.bf16.mxu0 0
      %3860 = vmatmul.mubr.bf16.gmra.mxu0 %v3720
      %v3861 = vpop.f32.mrf.mxu0
      %v3862 = vadd.f32 0.0, %v3861
      %v3863 = vpop.f32.mrf.mxu0
      %v3864 = vpop.f32.mrf.mxu0
      %v3865 = vadd.f32 0.0, %v3864
      %v3866 = vpop.f32.mrf.mxu0
      %3867 = vmatprep.mubr.bf16.mxu0 0
      %3868 = vmatmul.mubr.bf16.gmra.mxu0 %v3723
      %v3869 = vpop.f32.mrf.mxu0
      %v3870 = vadd.f32 0.0, %v3869
      %v3871 = vpop.f32.mrf.mxu0
      %v3872 = vpop.f32.mrf.mxu0
      %v3873 = vadd.f32 0.0, %v3872
      %v3874 = vpop.f32.mrf.mxu0
      %3875 = vmatprep.mubr.bf16.mxu0 0
      %3876 = vmatmul.mubr.bf16.gmra.mxu0 %v3726
      %v3877 = vpop.f32.mrf.mxu0
      %v3878 = vadd.f32 0.0, %v3877
      %v3879 = vpop.f32.mrf.mxu0
      %v3880 = vpop.f32.mrf.mxu0
      %v3881 = vadd.f32 0.0, %v3880
      %v3882 = vpop.f32.mrf.mxu0
      %3883 = vmatprep.mubr.bf16.mxu0 0
      %3884 = vmatmul.mubr.bf16.gmra.mxu0 %v3729
      %v3885 = vpop.f32.mrf.mxu0
      %v3886 = vadd.f32 0.0, %v3885
      %v3887 = vpop.f32.mrf.mxu0
      %v3888 = vpop.f32.mrf.mxu0
      %v3889 = vadd.f32 0.0, %v3888
      %v3890 = vpop.f32.mrf.mxu0
      %3891 = vmatprep.mubr.bf16.mxu0 0
      %3892 = vmatmul.mubr.bf16.gmra.mxu0 %v3732
      %v3893 = vpop.f32.mrf.mxu0
      %v3894 = vadd.f32 0.0, %v3893
      %v3895 = vpop.f32.mrf.mxu0
      %v3896 = vpop.f32.mrf.mxu0
      %v3897 = vadd.f32 0.0, %v3896
      %v3898 = vpop.f32.mrf.mxu0
      %3899 = vmatprep.mubr.bf16.mxu0 0
      %3900 = vmatmul.mubr.bf16.gmra.mxu0 %v3735
      %v3901 = vpop.f32.mrf.mxu0
      %v3902 = vadd.f32 0.0, %v3901
      %v3903 = vpop.f32.mrf.mxu0
      %v3904 = vpop.f32.mrf.mxu0
      %v3905 = vadd.f32 0.0, %v3904
      %v3906 = vpop.f32.mrf.mxu0
      %3907 = vmatprep.mubr.bf16.mxu0 0
      %3908 = vmatmul.mubr.bf16.gmra.mxu0 %v3738
      %v3909 = vpop.f32.mrf.mxu0
      %v3910 = vadd.f32 0.0, %v3909
      %v3911 = vpop.f32.mrf.mxu0
      %v3912 = vpop.f32.mrf.mxu0
      %v3913 = vadd.f32 0.0, %v3912
      %v3914 = vpop.f32.mrf.mxu0
      %3915 = vmatprep.mubr.bf16.mxu0 0
      %3916 = vmatmul.mubr.bf16.gmra.mxu0 %v3741
      %v3917 = vpop.f32.mrf.mxu0
      %v3918 = vadd.f32 0.0, %v3917
      %v3919 = vpop.f32.mrf.mxu0
      %v3920 = vpop.f32.mrf.mxu0
      %v3921 = vadd.f32 0.0, %v3920
      %v3922 = vpop.f32.mrf.mxu0
      %3923 = vmatprep.mubr.bf16.mxu0 0
      %3924 = vmatmul.mubr.bf16.gmra.mxu0 %v3744
      %v3925 = vpop.f32.mrf.mxu0
      %v3926 = vadd.f32 0.0, %v3925
      %v3927 = vpop.f32.mrf.mxu0
      %v3928 = vpop.f32.mrf.mxu0
      %v3929 = vadd.f32 0.0, %v3928
      %v3930 = vpop.f32.mrf.mxu0
      %3931 = vmatprep.mubr.bf16.mxu0 0
      %3932 = vmatmul.mubr.bf16.gmra.mxu0 %v3747
      %v3933 = vpop.f32.mrf.mxu0
      %v3934 = vadd.f32 0.0, %v3933
      %v3935 = vpop.f32.mrf.mxu0
      %v3936 = vpop.f32.mrf.mxu0
      %v3937 = vadd.f32 0.0, %v3936
      %v3938 = vpop.f32.mrf.mxu0
      %3939 = vmatprep.mubr.bf16.mxu0 0
      %3940 = vmatmul.mubr.bf16.gmra.mxu0 %v3750
      %v3941 = vpop.f32.mrf.mxu0
      %v3942 = vadd.f32 0.0, %v3941
      %v3943 = vpop.f32.mrf.mxu0
      %v3944 = vpop.f32.mrf.mxu0
      %v3945 = vadd.f32 0.0, %v3944
      %v3946 = vpop.f32.mrf.mxu0
      %3947 = vmatprep.mubr.bf16.mxu0 0
      %3948 = vmatmul.mubr.bf16.gmra.mxu0 %v3753
      %v3949 = vpop.f32.mrf.mxu0
      %v3950 = vadd.f32 0.0, %v3949
      %v3951 = vpop.f32.mrf.mxu0
      %v3952 = vpop.f32.mrf.mxu0
      %v3953 = vpop.f32.mrf.mxu0
      %3954 = vdwg.mxu0
      %v3955 = vadd.f32 %v3597, %v3790
      %v3956 = vadd.f32 %v3598, %v3793
      %v3957 = vadd.f32 %v3599, %v3798
      %v3958 = vadd.f32 %v3600, %v3801
      %v3959 = vadd.f32 %v3601, %v3806
      %v3960 = vadd.f32 %v3602, %v3809
      %v3961 = vadd.f32 %v3603, %v3814
      %v3962 = vadd.f32 %v3604, %v3817
      %v3963 = vadd.f32 %v3605, %v3822
      %v3964 = vadd.f32 %v3606, %v3825
      %v3965 = vadd.f32 %v3607, %v3830
      %v3966 = vadd.f32 %v3608, %v3833
      %v3967 = vadd.f32 %v3609, %v3838
      %v3968 = vadd.f32 %v3610, %v3841
      %v3969 = vadd.f32 %v3611, %v3846
      %v3970 = vadd.f32 %v3612, %v3849
      %v3971 = vadd.f32 %v3613, %v3854
      %v3972 = vadd.f32 %v3614, %v3857
      %v3973 = vadd.f32 %v3615, %v3862
      %v3974 = vadd.f32 %v3616, %v3865
      %v3975 = vadd.f32 %v3617, %v3870
      %v3976 = vadd.f32 %v3618, %v3873
      %v3977 = vadd.f32 %v3619, %v3878
      %v3978 = vadd.f32 %v3620, %v3881
      %v3979 = vadd.f32 %v3621, %v3886
      %v3980 = vadd.f32 %v3622, %v3889
      %v3981 = vadd.f32 %v3623, %v3894
      %v3982 = vadd.f32 %v3624, %v3897
      %v3983 = vadd.f32 %v3625, %v3902
      %v3984 = vadd.f32 %v3626, %v3905
      %v3985 = vadd.f32 %v3627, %v3910
      %v3986 = vadd.f32 %v3628, %v3913
      %v3987 = vadd.f32 %v3629, %v3918
      %v3988 = vadd.f32 %v3630, %v3921
      %v3989 = vadd.f32 %v3631, %v3926
      %v3990 = vadd.f32 %v3632, %v3929
      %v3991 = vadd.f32 %v3633, %v3934
      %v3992 = vadd.f32 %v3634, %v3937
      %v3993 = vadd.f32 %v3635, %v3942
      %v3994 = vadd.f32 %v3636, %v3945
      %v3995 = vadd.f32 %v3637, %v3950
      %v3996 = vld [vmem:[#allocation2 + $0xb0] sm:$0x7]
      %s3997 = scalar_lea.vmem %s5, 160
      %v3998 = vld [vmem:[%s3997] sm:$0xf]
      %v3999 = vld [vmem:[%s3997 + $0x4] sm:$0xf]
      %v4000 = vld [vmem:[%s3997 + $0x8] sm:$0xf]
      %v4001 = vld [vmem:[%s3997 + $0xc] sm:$0xf]
      %v4002 = vld [vmem:[%s3997 + $0x10] sm:$0xf]
      %v4003 = vld [vmem:[%s3997 + $0x14] sm:$0xf]
      %v4004 = vld [vmem:[%s3997 + $0x18] sm:$0xf]
      %v4005 = vld [vmem:[%s3997 + $0x1c] sm:$0xf]
      %v4007 = vunpack.c.l.b16 %v3996
      %v4008 = vpack.c.b16 %v4007, %v4007
      %vm4009 = vsmask.f32 7424
      %v4010 = vshrl.u32 %v3647, 16
      %v4012 = vshll.u32 %v3647, 16
      %v4014 = vrot.slane %v4012, 1
      %v4015 = vor.u32 %v4010, %v4014
      %v4016 = vshll.u32 %v3648, 16
      %v4018 = vrot.slane %v4016, 1
      %v4019 = vsel %vm4009, %v4015, %v4018
      %v4020 = vshrl.u32 %v3648, 16
      %v4022 = vor.u32 %v4020, %v4018
      %v4023 = vshll.u32 %v3649, 16
      %v4025 = vrot.slane %v4023, 1
      %v4026 = vsel %vm4009, %v4022, %v4025
      %v4027 = vshrl.u32 %v3649, 16
      %v4029 = vor.u32 %v4027, %v4025
      %v4030 = vshll.u32 %v3650, 16
      %v4032 = vrot.slane %v4030, 1
      %v4033 = vsel %vm4009, %v4029, %v4032
      %v4034 = vshrl.u32 %v3650, 16
      %v4036 = vor.u32 %v4034, %v4032
      %v4037 = vshll.u32 %v3651, 16
      %v4039 = vrot.slane %v4037, 1
      %v4040 = vsel %vm4009, %v4036, %v4039
      %v4041 = vshrl.u32 %v3651, 16
      %v4043 = vor.u32 %v4041, %v4039
      %v4044 = vshll.u32 %v3652, 16
      %v4046 = vrot.slane %v4044, 1
      %v4047 = vsel %vm4009, %v4043, %v4046
      %v4048 = vshrl.u32 %v3652, 16
      %v4050 = vor.u32 %v4048, %v4046
      %v4051 = vshll.u32 %v3653, 16
      %v4053 = vrot.slane %v4051, 1
      %v4054 = vsel %vm4009, %v4050, %v4053
      %v4055 = vshrl.u32 %v3653, 16
      %v4057 = vor.u32 %v4055, %v4053
      %v4058 = vshll.u32 %v3654, 16
      %v4060 = vrot.slane %v4058, 1
      %v4061 = vsel %vm4009, %v4057, %v4060
      %v4062 = vshrl.u32 %v3654, 16
      %v4064 = vor.u32 %v4062, %v4060
      %v4065 = vshll.u32 %v3655, 16
      %v4067 = vrot.slane %v4065, 1
      %v4068 = vsel %vm4009, %v4064, %v4067
      %v4069 = vshrl.u32 %v3655, 16
      %v4071 = vor.u32 %v4069, %v4067
      %v4072 = vshll.u32 %v3656, 16
      %v4074 = vrot.slane %v4072, 1
      %v4075 = vsel %vm4009, %v4071, %v4074
      %v4076 = vshrl.u32 %v3656, 16
      %v4078 = vor.u32 %v4076, %v4074
      %v4079 = vshll.u32 %v3657, 16
      %v4081 = vrot.slane %v4079, 1
      %v4082 = vsel %vm4009, %v4078, %v4081
      %v4083 = vshrl.u32 %v3657, 16
      %v4085 = vor.u32 %v4083, %v4081
      %v4086 = vshll.u32 %v3658, 16
      %v4088 = vrot.slane %v4086, 1
      %v4089 = vsel %vm4009, %v4085, %v4088
      %v4090 = vshrl.u32 %v3658, 16
      %v4092 = vor.u32 %v4090, %v4088
      %v4093 = vshll.u32 %v3659, 16
      %v4095 = vrot.slane %v4093, 1
      %v4096 = vsel %vm4009, %v4092, %v4095
      %v4097 = vshrl.u32 %v3659, 16
      %v4099 = vor.u32 %v4097, %v4095
      %v4100 = vshll.u32 %v3660, 16
      %v4102 = vrot.slane %v4100, 1
      %v4103 = vsel %vm4009, %v4099, %v4102
      %v4104 = vshrl.u32 %v3660, 16
      %v4106 = vor.u32 %v4104, %v4102
      %v4107 = vshll.u32 %v3661, 16
      %v4109 = vrot.slane %v4107, 1
      %v4110 = vsel %vm4009, %v4106, %v4109
      %v4111 = vshrl.u32 %v3661, 16
      %v4113 = vor.u32 %v4111, %v4109
      %v4114 = vshll.u32 %v3662, 16
      %v4116 = vrot.slane %v4114, 1
      %v4117 = vsel %vm4009, %v4113, %v4116
      %v4118 = vshrl.u32 %v3662, 16
      %v4120 = vor.u32 %v4118, %v4116
      %v4121 = vshll.u32 %v3663, 16
      %v4123 = vrot.slane %v4121, 1
      %v4124 = vsel %vm4009, %v4120, %v4123
      %v4125 = vshrl.u32 %v3663, 16
      %v4127 = vor.u32 %v4125, %v4123
      %v4128 = vshll.u32 %v3664, 16
      %v4130 = vrot.slane %v4128, 1
      %v4131 = vsel %vm4009, %v4127, %v4130
      %v4132 = vshrl.u32 %v3664, 16
      %v4134 = vor.u32 %v4132, %v4130
      %v4135 = vshll.u32 %v3665, 16
      %v4137 = vrot.slane %v4135, 1
      %v4138 = vsel %vm4009, %v4134, %v4137
      %v4139 = vshrl.u32 %v3665, 16
      %v4141 = vor.u32 %v4139, %v4137
      %v4142 = vshll.u32 %v3666, 16
      %v4144 = vrot.slane %v4142, 1
      %v4145 = vsel %vm4009, %v4141, %v4144
      %v4146 = vshrl.u32 %v3666, 16
      %v4148 = vor.u32 %v4146, %v4144
      %v4150 = vshll.u32 %v4008, 16
      %v4152 = vrot.slane %v4150, 1
      %v4153 = vsel %vm4009, %v4148, %v4152
      %v4154 = vshrl.u32 %v4008, 16
      %v4156 = vor.u32 %v4154, %v4152
      %v4165 = vunpack.c.l.b16 %v3998
      %v4166 = vunpack.c.l.b16 %v3999
      %v4167 = vunpack.c.l.b16 %v4000
      %v4168 = vunpack.c.l.b16 %v4001
      %v4169 = vunpack.c.l.b16 %v4002
      %v4170 = vunpack.c.l.b16 %v4003
      %v4171 = vunpack.c.l.b16 %v4004
      %v4172 = vunpack.c.l.b16 %v4005
      %v4173 = vpack.c.b16 %v4166, %v4165
      %v4174 = vpack.c.b16 %v4168, %v4167
      %v4175 = vpack.c.b16 %v4170, %v4169
      %v4176 = vpack.c.b16 %v4172, %v4171
      %v4182 = vsel %vm1788, %v4019, 0
      %v4185 = vsel %vm1788, %v4026, 0
      %v4188 = vsel %vm1788, %v4033, 0
      %v4191 = vsel %vm1788, %v4040, 0
      %v4194 = vsel %vm1788, %v4047, 0
      %v4197 = vsel %vm1788, %v4054, 0
      %v4200 = vsel %vm1788, %v4061, 0
      %v4203 = vsel %vm1788, %v4068, 0
      %v4206 = vsel %vm1788, %v4075, 0
      %v4209 = vsel %vm1788, %v4082, 0
      %v4212 = vsel %vm1788, %v4089, 0
      %v4215 = vsel %vm1788, %v4096, 0
      %v4218 = vsel %vm1788, %v4103, 0
      %v4221 = vsel %vm1788, %v4110, 0
      %v4224 = vsel %vm1788, %v4117, 0
      %v4227 = vsel %vm1788, %v4124, 0
      %v4230 = vsel %vm1788, %v4131, 0
      %v4233 = vsel %vm1788, %v4138, 0
      %v4236 = vsel %vm1788, %v4145, 0
      %v4239 = vsel %vm1788, %v4153, 0
      %v4242 = vsel %vm1788, %v4156, 0
      %4244 = vmatprep.subr.bf16.mxu0 0
      %4245 = vmatpush1.bf16.msra.mxu0 0
      %4246 = vmatprep.subr.bf16.mxu0 0
      %4247 = vmatpush1.bf16.msra.mxu0 0
      %4248 = vmatprep.subr.bf16.mxu0 0
      %4249 = vmatpush1.bf16.msra.mxu0 0
      %4250 = vmatprep.subr.bf16.mxu0 0
      %4251 = vmatpush1.bf16.msra.mxu0 0
      %4252 = vmatprep.subr.bf16.mxu0 0
      %4253 = vmatpush1.bf16.msra.mxu0 %v4176
      %4254 = vmatprep.subr.bf16.mxu0 0
      %4255 = vmatpush1.bf16.msra.mxu0 %v4175
      %4256 = vmatprep.subr.bf16.mxu0 0
      %4257 = vmatpush1.bf16.msra.mxu0 %v4174
      %4258 = vmatprep.subr.bf16.mxu0 0
      %4259 = vmatpush1.bf16.msra.mxu0 %v4173
      %4260 = vmatprep.subr.bf16.mxu0 0
      %4261 = vmatpush2.bf16.msra.mxu0 0
      %4262 = vmatprep.subr.bf16.mxu0 0
      %4263 = vmatpush2.bf16.msra.mxu0 0
      %4264 = vmatprep.subr.bf16.mxu0 0
      %4265 = vmatpush2.bf16.msra.mxu0 0
      %4266 = vmatprep.subr.bf16.mxu0 0
      %4267 = vmatpush2.bf16.msra.mxu0 0
      %4268 = vmatprep.subr.bf16.mxu0 0
      %4269 = vmatpush2.bf16.msra.mxu0 0
      %4270 = vmatprep.subr.bf16.mxu0 0
      %4271 = vmatpush2.bf16.msra.mxu0 0
      %4272 = vmatprep.subr.bf16.mxu0 0
      %4273 = vmatpush2.bf16.msra.mxu0 0
      %4274 = vmatprep.subr.bf16.mxu0 0
      %4275 = vmatpush2.bf16.msra.mxu0 0
      %4276 = vmatprep.mubr.bf16.mxu0 0
      %4277 = vmatmul.mubr.bf16.gmra.mxu0 %v4182
      %v4278 = vpop.f32.mrf.mxu0
      %v4279 = vadd.f32 0.0, %v4278
      %v4280 = vpop.f32.mrf.mxu0
      %v4281 = vpop.f32.mrf.mxu0
      %v4282 = vadd.f32 0.0, %v4281
      %v4283 = vpop.f32.mrf.mxu0
      %4284 = vmatprep.mubr.bf16.mxu0 0
      %4285 = vmatmul.mubr.bf16.gmra.mxu0 %v4185
      %v4286 = vpop.f32.mrf.mxu0
      %v4287 = vadd.f32 0.0, %v4286
      %v4288 = vpop.f32.mrf.mxu0
      %v4289 = vpop.f32.mrf.mxu0
      %v4290 = vadd.f32 0.0, %v4289
      %v4291 = vpop.f32.mrf.mxu0
      %4292 = vmatprep.mubr.bf16.mxu0 0
      %4293 = vmatmul.mubr.bf16.gmra.mxu0 %v4188
      %v4294 = vpop.f32.mrf.mxu0
      %v4295 = vadd.f32 0.0, %v4294
      %v4296 = vpop.f32.mrf.mxu0
      %v4297 = vpop.f32.mrf.mxu0
      %v4298 = vadd.f32 0.0, %v4297
      %v4299 = vpop.f32.mrf.mxu0
      %4300 = vmatprep.mubr.bf16.mxu0 0
      %4301 = vmatmul.mubr.bf16.gmra.mxu0 %v4191
      %v4302 = vpop.f32.mrf.mxu0
      %v4303 = vadd.f32 0.0, %v4302
      %v4304 = vpop.f32.mrf.mxu0
      %v4305 = vpop.f32.mrf.mxu0
      %v4306 = vadd.f32 0.0, %v4305
      %v4307 = vpop.f32.mrf.mxu0
      %4308 = vmatprep.mubr.bf16.mxu0 0
      %4309 = vmatmul.mubr.bf16.gmra.mxu0 %v4194
      %v4310 = vpop.f32.mrf.mxu0
      %v4311 = vadd.f32 0.0, %v4310
      %v4312 = vpop.f32.mrf.mxu0
      %v4313 = vpop.f32.mrf.mxu0
      %v4314 = vadd.f32 0.0, %v4313
      %v4315 = vpop.f32.mrf.mxu0
      %4316 = vmatprep.mubr.bf16.mxu0 0
      %4317 = vmatmul.mubr.bf16.gmra.mxu0 %v4197
      %v4318 = vpop.f32.mrf.mxu0
      %v4319 = vadd.f32 0.0, %v4318
      %v4320 = vpop.f32.mrf.mxu0
      %v4321 = vpop.f32.mrf.mxu0
      %v4322 = vadd.f32 0.0, %v4321
      %v4323 = vpop.f32.mrf.mxu0
      %4324 = vmatprep.mubr.bf16.mxu0 0
      %4325 = vmatmul.mubr.bf16.gmra.mxu0 %v4200
      %v4326 = vpop.f32.mrf.mxu0
      %v4327 = vadd.f32 0.0, %v4326
      %v4328 = vpop.f32.mrf.mxu0
      %v4329 = vpop.f32.mrf.mxu0
      %v4330 = vadd.f32 0.0, %v4329
      %v4331 = vpop.f32.mrf.mxu0
      %4332 = vmatprep.mubr.bf16.mxu0 0
      %4333 = vmatmul.mubr.bf16.gmra.mxu0 %v4203
      %v4334 = vpop.f32.mrf.mxu0
      %v4335 = vadd.f32 0.0, %v4334
      %v4336 = vpop.f32.mrf.mxu0
      %v4337 = vpop.f32.mrf.mxu0
      %v4338 = vadd.f32 0.0, %v4337
      %v4339 = vpop.f32.mrf.mxu0
      %4340 = vmatprep.mubr.bf16.mxu0 0
      %4341 = vmatmul.mubr.bf16.gmra.mxu0 %v4206
      %v4342 = vpop.f32.mrf.mxu0
      %v4343 = vadd.f32 0.0, %v4342
      %v4344 = vpop.f32.mrf.mxu0
      %v4345 = vpop.f32.mrf.mxu0
      %v4346 = vadd.f32 0.0, %v4345
      %v4347 = vpop.f32.mrf.mxu0
      %4348 = vmatprep.mubr.bf16.mxu0 0
      %4349 = vmatmul.mubr.bf16.gmra.mxu0 %v4209
      %v4350 = vpop.f32.mrf.mxu0
      %v4351 = vadd.f32 0.0, %v4350
      %v4352 = vpop.f32.mrf.mxu0
      %v4353 = vpop.f32.mrf.mxu0
      %v4354 = vadd.f32 0.0, %v4353
      %v4355 = vpop.f32.mrf.mxu0
      %4356 = vmatprep.mubr.bf16.mxu0 0
      %4357 = vmatmul.mubr.bf16.gmra.mxu0 %v4212
      %v4358 = vpop.f32.mrf.mxu0
      %v4359 = vadd.f32 0.0, %v4358
      %v4360 = vpop.f32.mrf.mxu0
      %v4361 = vpop.f32.mrf.mxu0
      %v4362 = vadd.f32 0.0, %v4361
      %v4363 = vpop.f32.mrf.mxu0
      %4364 = vmatprep.mubr.bf16.mxu0 0
      %4365 = vmatmul.mubr.bf16.gmra.mxu0 %v4215
      %v4366 = vpop.f32.mrf.mxu0
      %v4367 = vadd.f32 0.0, %v4366
      %v4368 = vpop.f32.mrf.mxu0
      %v4369 = vpop.f32.mrf.mxu0
      %v4370 = vadd.f32 0.0, %v4369
      %v4371 = vpop.f32.mrf.mxu0
      %4372 = vmatprep.mubr.bf16.mxu0 0
      %4373 = vmatmul.mubr.bf16.gmra.mxu0 %v4218
      %v4374 = vpop.f32.mrf.mxu0
      %v4375 = vadd.f32 0.0, %v4374
      %v4376 = vpop.f32.mrf.mxu0
      %v4377 = vpop.f32.mrf.mxu0
      %v4378 = vadd.f32 0.0, %v4377
      %v4379 = vpop.f32.mrf.mxu0
      %4380 = vmatprep.mubr.bf16.mxu0 0
      %4381 = vmatmul.mubr.bf16.gmra.mxu0 %v4221
      %v4382 = vpop.f32.mrf.mxu0
      %v4383 = vadd.f32 0.0, %v4382
      %v4384 = vpop.f32.mrf.mxu0
      %v4385 = vpop.f32.mrf.mxu0
      %v4386 = vadd.f32 0.0, %v4385
      %v4387 = vpop.f32.mrf.mxu0
      %4388 = vmatprep.mubr.bf16.mxu0 0
      %4389 = vmatmul.mubr.bf16.gmra.mxu0 %v4224
      %v4390 = vpop.f32.mrf.mxu0
      %v4391 = vadd.f32 0.0, %v4390
      %v4392 = vpop.f32.mrf.mxu0
      %v4393 = vpop.f32.mrf.mxu0
      %v4394 = vadd.f32 0.0, %v4393
      %v4395 = vpop.f32.mrf.mxu0
      %4396 = vmatprep.mubr.bf16.mxu0 0
      %4397 = vmatmul.mubr.bf16.gmra.mxu0 %v4227
      %v4398 = vpop.f32.mrf.mxu0
      %v4399 = vadd.f32 0.0, %v4398
      %v4400 = vpop.f32.mrf.mxu0
      %v4401 = vpop.f32.mrf.mxu0
      %v4402 = vadd.f32 0.0, %v4401
      %v4403 = vpop.f32.mrf.mxu0
      %4404 = vmatprep.mubr.bf16.mxu0 0
      %4405 = vmatmul.mubr.bf16.gmra.mxu0 %v4230
      %v4406 = vpop.f32.mrf.mxu0
      %v4407 = vadd.f32 0.0, %v4406
      %v4408 = vpop.f32.mrf.mxu0
      %v4409 = vpop.f32.mrf.mxu0
      %v4410 = vadd.f32 0.0, %v4409
      %v4411 = vpop.f32.mrf.mxu0
      %4412 = vmatprep.mubr.bf16.mxu0 0
      %4413 = vmatmul.mubr.bf16.gmra.mxu0 %v4233
      %v4414 = vpop.f32.mrf.mxu0
      %v4415 = vadd.f32 0.0, %v4414
      %v4416 = vpop.f32.mrf.mxu0
      %v4417 = vpop.f32.mrf.mxu0
      %v4418 = vadd.f32 0.0, %v4417
      %v4419 = vpop.f32.mrf.mxu0
      %4420 = vmatprep.mubr.bf16.mxu0 0
      %4421 = vmatmul.mubr.bf16.gmra.mxu0 %v4236
      %v4422 = vpop.f32.mrf.mxu0
      %v4423 = vadd.f32 0.0, %v4422
      %v4424 = vpop.f32.mrf.mxu0
      %v4425 = vpop.f32.mrf.mxu0
      %v4426 = vadd.f32 0.0, %v4425
      %v4427 = vpop.f32.mrf.mxu0
      %4428 = vmatprep.mubr.bf16.mxu0 0
      %4429 = vmatmul.mubr.bf16.gmra.mxu0 %v4239
      %v4430 = vpop.f32.mrf.mxu0
      %v4431 = vadd.f32 0.0, %v4430
      %v4432 = vpop.f32.mrf.mxu0
      %v4433 = vpop.f32.mrf.mxu0
      %v4434 = vadd.f32 0.0, %v4433
      %v4435 = vpop.f32.mrf.mxu0
      %4436 = vmatprep.mubr.bf16.mxu0 0
      %4437 = vmatmul.mubr.bf16.gmra.mxu0 %v4242
      %v4438 = vpop.f32.mrf.mxu0
      %v4439 = vadd.f32 0.0, %v4438
      %v4440 = vpop.f32.mrf.mxu0
      %v4441 = vpop.f32.mrf.mxu0
      %v4442 = vpop.f32.mrf.mxu0
      %4443 = vdwg.mxu0
      %v4444 = vadd.f32 %v3955, %v4279
      %v4445 = vadd.f32 %v3956, %v4282
      %v4446 = vadd.f32 %v3957, %v4287
      %v4447 = vadd.f32 %v3958, %v4290
      %v4448 = vadd.f32 %v3959, %v4295
      %v4449 = vadd.f32 %v3960, %v4298
      %v4450 = vadd.f32 %v3961, %v4303
      %v4451 = vadd.f32 %v3962, %v4306
      %v4452 = vadd.f32 %v3963, %v4311
      %v4453 = vadd.f32 %v3964, %v4314
      %v4454 = vadd.f32 %v3965, %v4319
      %v4455 = vadd.f32 %v3966, %v4322
      %v4456 = vadd.f32 %v3967, %v4327
      %v4457 = vadd.f32 %v3968, %v4330
      %v4458 = vadd.f32 %v3969, %v4335
      %v4459 = vadd.f32 %v3970, %v4338
      %v4460 = vadd.f32 %v3971, %v4343
      %v4461 = vadd.f32 %v3972, %v4346
      %v4462 = vadd.f32 %v3973, %v4351
      %v4463 = vadd.f32 %v3974, %v4354
      %v4464 = vadd.f32 %v3975, %v4359
      %v4465 = vadd.f32 %v3976, %v4362
      %v4466 = vadd.f32 %v3977, %v4367
      %v4467 = vadd.f32 %v3978, %v4370
      %v4468 = vadd.f32 %v3979, %v4375
      %v4469 = vadd.f32 %v3980, %v4378
      %v4470 = vadd.f32 %v3981, %v4383
      %v4471 = vadd.f32 %v3982, %v4386
      %v4472 = vadd.f32 %v3983, %v4391
      %v4473 = vadd.f32 %v3984, %v4394
      %v4474 = vadd.f32 %v3985, %v4399
      %v4475 = vadd.f32 %v3986, %v4402
      %v4476 = vadd.f32 %v3987, %v4407
      %v4477 = vadd.f32 %v3988, %v4410
      %v4478 = vadd.f32 %v3989, %v4415
      %v4479 = vadd.f32 %v3990, %v4418
      %v4480 = vadd.f32 %v3991, %v4423
      %v4481 = vadd.f32 %v3992, %v4426
      %v4482 = vadd.f32 %v3993, %v4431
      %v4483 = vadd.f32 %v3994, %v4434
      %v4484 = vadd.f32 %v3995, %v4439
      %v4485 = vld [vmem:[#allocation2 + $0x18] sm:$0xf]
      %v4486 = vld [vmem:[#allocation2 + $0x1c] sm:$0xf]
      %v4487 = vld [vmem:[#allocation2 + $0x20] sm:$0xf]
      %v4488 = vld [vmem:[#allocation2 + $0x24] sm:$0xf]
      %v4489 = vld [vmem:[#allocation2 + $0x28] sm:$0xf]
      %v4490 = vld [vmem:[#allocation2 + $0x2c] sm:$0xf]
      %v4491 = vld [vmem:[#allocation2 + $0x30] sm:$0xf]
      %v4492 = vld [vmem:[#allocation2 + $0x34] sm:$0xf]
      %v4493 = vld [vmem:[#allocation2 + $0x38] sm:$0xf]
      %v4494 = vld [vmem:[#allocation2 + $0x3c] sm:$0xf]
      %v4495 = vld [vmem:[#allocation2 + $0x40] sm:$0xf]
      %v4496 = vld [vmem:[#allocation2 + $0x44] sm:$0xf]
      %v4497 = vld [vmem:[#allocation2 + $0x48] sm:$0xf]
      %v4498 = vld [vmem:[#allocation2 + $0x4c] sm:$0xf]
      %v4499 = vld [vmem:[#allocation2 + $0x50] sm:$0xf]
      %v4500 = vld [vmem:[#allocation2 + $0x54] sm:$0xf]
      %v4501 = vld [vmem:[#allocation2 + $0x58] sm:$0xf]
      %v4502 = vld [vmem:[#allocation2 + $0x5c] sm:$0xf]
      %v4503 = vld [vmem:[#allocation2 + $0x60] sm:$0xf]
      %v4504 = vld [vmem:[#allocation2 + $0x64] sm:$0xf]
      %v4505 = vld [vmem:[#allocation2 + $0x68] sm:$0xf]
      %v4506 = vld [vmem:[#allocation2 + $0x6c] sm:$0xf]
      %v4507 = vld [vmem:[#allocation2 + $0x70] sm:$0xf]
      %v4508 = vld [vmem:[#allocation2 + $0x74] sm:$0xf]
      %v4509 = vld [vmem:[#allocation2 + $0x78] sm:$0xf]
      %v4510 = vld [vmem:[#allocation2 + $0x7c] sm:$0xf]
      %v4511 = vld [vmem:[#allocation2 + $0x80] sm:$0xf]
      %v4512 = vld [vmem:[#allocation2 + $0x84] sm:$0xf]
      %v4513 = vld [vmem:[#allocation2 + $0x88] sm:$0xf]
      %v4514 = vld [vmem:[#allocation2 + $0x8c] sm:$0xf]
      %v4515 = vld [vmem:[#allocation2 + $0x90] sm:$0xf]
      %v4516 = vld [vmem:[#allocation2 + $0x94] sm:$0xf]
      %v4517 = vld [vmem:[#allocation2 + $0x98] sm:$0xf]
      %v4518 = vld [vmem:[#allocation2 + $0x9c] sm:$0xf]
      %v4519 = vld [vmem:[#allocation2 + $0xa0] sm:$0xf]
      %v4520 = vld [vmem:[#allocation2 + $0xa4] sm:$0xf]
      %v4521 = vld [vmem:[#allocation2 + $0xa8] sm:$0xf]
      %v4522 = vld [vmem:[#allocation2 + $0xac] sm:$0xf]
      %v4523 = vld [vmem:[#allocation2 + $0xb0] sm:$0xf]
      %v4524 = vld [vmem:[#allocation2 + $0xb4] sm:$0xf]
      %v4525 = vld [vmem:[#allocation2 + $0xb8] sm:$0x7]
      %s4526 = scalar_lea.vmem %s5, 192
      %v4527 = vld [vmem:[%s4526] sm:$0xf]
      %v4528 = vld [vmem:[%s4526 + $0x4] sm:$0xf]
      %v4529 = vld [vmem:[%s4526 + $0x8] sm:$0xf]
      %v4530 = vld [vmem:[%s4526 + $0xc] sm:$0xf]
      %v4531 = vld [vmem:[%s4526 + $0x10] sm:$0xf]
      %v4532 = vld [vmem:[%s4526 + $0x14] sm:$0xf]
      %v4533 = vld [vmem:[%s4526 + $0x18] sm:$0xf]
      %v4534 = vld [vmem:[%s4526 + $0x1c] sm:$0xf]
      %v4576 = vunpack.c.l.b16 %v4485
      %v4577 = vunpack.c.l.b16 %v4486
      %v4578 = vunpack.c.l.b16 %v4487
      %v4579 = vunpack.c.l.b16 %v4488
      %v4580 = vunpack.c.l.b16 %v4489
      %v4581 = vunpack.c.l.b16 %v4490
      %v4582 = vunpack.c.l.b16 %v4491
      %v4583 = vunpack.c.l.b16 %v4492
      %v4584 = vunpack.c.l.b16 %v4493
      %v4585 = vunpack.c.l.b16 %v4494
      %v4586 = vunpack.c.l.b16 %v4495
      %v4587 = vunpack.c.l.b16 %v4496
      %v4588 = vunpack.c.l.b16 %v4497
      %v4589 = vunpack.c.l.b16 %v4498
      %v4590 = vunpack.c.l.b16 %v4499
      %v4591 = vunpack.c.l.b16 %v4500
      %v4592 = vunpack.c.l.b16 %v4501
      %v4593 = vunpack.c.l.b16 %v4502
      %v4594 = vunpack.c.l.b16 %v4503
      %v4595 = vunpack.c.l.b16 %v4504
      %v4596 = vunpack.c.l.b16 %v4505
      %v4597 = vunpack.c.l.b16 %v4506
      %v4598 = vunpack.c.l.b16 %v4507
      %v4599 = vunpack.c.l.b16 %v4508
      %v4600 = vunpack.c.l.b16 %v4509
      %v4601 = vunpack.c.l.b16 %v4510
      %v4602 = vunpack.c.l.b16 %v4511
      %v4603 = vunpack.c.l.b16 %v4512
      %v4604 = vunpack.c.l.b16 %v4513
      %v4605 = vunpack.c.l.b16 %v4514
      %v4606 = vunpack.c.l.b16 %v4515
      %v4607 = vunpack.c.l.b16 %v4516
      %v4608 = vunpack.c.l.b16 %v4517
      %v4609 = vunpack.c.l.b16 %v4518
      %v4610 = vunpack.c.l.b16 %v4519
      %v4611 = vunpack.c.l.b16 %v4520
      %v4612 = vunpack.c.l.b16 %v4521
      %v4613 = vunpack.c.l.b16 %v4522
      %v4614 = vunpack.c.l.b16 %v4523
      %v4615 = vunpack.c.l.b16 %v4524
      %v4616 = vunpack.c.l.b16 %v4525
      %v4617 = vpack.c.b16 %v4577, %v4576
      %v4618 = vpack.c.b16 %v4579, %v4578
      %v4619 = vpack.c.b16 %v4581, %v4580
      %v4620 = vpack.c.b16 %v4583, %v4582
      %v4621 = vpack.c.b16 %v4585, %v4584
      %v4622 = vpack.c.b16 %v4587, %v4586
      %v4623 = vpack.c.b16 %v4589, %v4588
      %v4624 = vpack.c.b16 %v4591, %v4590
      %v4625 = vpack.c.b16 %v4593, %v4592
      %v4626 = vpack.c.b16 %v4595, %v4594
      %v4627 = vpack.c.b16 %v4597, %v4596
      %v4628 = vpack.c.b16 %v4599, %v4598
      %v4629 = vpack.c.b16 %v4601, %v4600
      %v4630 = vpack.c.b16 %v4603, %v4602
      %v4631 = vpack.c.b16 %v4605, %v4604
      %v4632 = vpack.c.b16 %v4607, %v4606
      %v4633 = vpack.c.b16 %v4609, %v4608
      %v4634 = vpack.c.b16 %v4611, %v4610
      %v4635 = vpack.c.b16 %v4613, %v4612
      %v4636 = vpack.c.b16 %v4615, %v4614
      %v4637 = vpack.c.b16 %v4616, %v4616
      %v4639 = vshrl.u32 %v4617, 16
      %v4641 = vshll.u32 %v4617, 16
      %v4643 = vrot.slane %v4641, 1
      %v4644 = vor.u32 %v4639, %v4643
      %v4646 = vshll.u32 %v4618, 16
      %v4648 = vrot.slane %v4646, 1
      %v4649 = vsel %vm4009, %v4644, %v4648
      %v4650 = vshrl.u32 %v4618, 16
      %v4652 = vor.u32 %v4650, %v4648
      %v4654 = vshll.u32 %v4619, 16
      %v4656 = vrot.slane %v4654, 1
      %v4657 = vsel %vm4009, %v4652, %v4656
      %v4658 = vshrl.u32 %v4619, 16
      %v4660 = vor.u32 %v4658, %v4656
      %v4662 = vshll.u32 %v4620, 16
      %v4664 = vrot.slane %v4662, 1
      %v4665 = vsel %vm4009, %v4660, %v4664
      %v4666 = vshrl.u32 %v4620, 16
      %v4668 = vor.u32 %v4666, %v4664
      %v4670 = vshll.u32 %v4621, 16
      %v4672 = vrot.slane %v4670, 1
      %v4673 = vsel %vm4009, %v4668, %v4672
      %v4674 = vshrl.u32 %v4621, 16
      %v4676 = vor.u32 %v4674, %v4672
      %v4678 = vshll.u32 %v4622, 16
      %v4680 = vrot.slane %v4678, 1
      %v4681 = vsel %vm4009, %v4676, %v4680
      %v4682 = vshrl.u32 %v4622, 16
      %v4684 = vor.u32 %v4682, %v4680
      %v4686 = vshll.u32 %v4623, 16
      %v4688 = vrot.slane %v4686, 1
      %v4689 = vsel %vm4009, %v4684, %v4688
      %v4690 = vshrl.u32 %v4623, 16
      %v4692 = vor.u32 %v4690, %v4688
      %v4694 = vshll.u32 %v4624, 16
      %v4696 = vrot.slane %v4694, 1
      %v4697 = vsel %vm4009, %v4692, %v4696
      %v4698 = vshrl.u32 %v4624, 16
      %v4700 = vor.u32 %v4698, %v4696
      %v4702 = vshll.u32 %v4625, 16
      %v4704 = vrot.slane %v4702, 1
      %v4705 = vsel %vm4009, %v4700, %v4704
      %v4706 = vshrl.u32 %v4625, 16
      %v4708 = vor.u32 %v4706, %v4704
      %v4710 = vshll.u32 %v4626, 16
      %v4712 = vrot.slane %v4710, 1
      %v4713 = vsel %vm4009, %v4708, %v4712
      %v4714 = vshrl.u32 %v4626, 16
      %v4716 = vor.u32 %v4714, %v4712
      %v4718 = vshll.u32 %v4627, 16
      %v4720 = vrot.slane %v4718, 1
      %v4721 = vsel %vm4009, %v4716, %v4720
      %v4722 = vshrl.u32 %v4627, 16
      %v4724 = vor.u32 %v4722, %v4720
      %v4726 = vshll.u32 %v4628, 16
      %v4728 = vrot.slane %v4726, 1
      %v4729 = vsel %vm4009, %v4724, %v4728
      %v4730 = vshrl.u32 %v4628, 16
      %v4732 = vor.u32 %v4730, %v4728
      %v4734 = vshll.u32 %v4629, 16
      %v4736 = vrot.slane %v4734, 1
      %v4737 = vsel %vm4009, %v4732, %v4736
      %v4738 = vshrl.u32 %v4629, 16
      %v4740 = vor.u32 %v4738, %v4736
      %v4742 = vshll.u32 %v4630, 16
      %v4744 = vrot.slane %v4742, 1
      %v4745 = vsel %vm4009, %v4740, %v4744
      %v4746 = vshrl.u32 %v4630, 16
      %v4748 = vor.u32 %v4746, %v4744
      %v4750 = vshll.u32 %v4631, 16
      %v4752 = vrot.slane %v4750, 1
      %v4753 = vsel %vm4009, %v4748, %v4752
      %v4754 = vshrl.u32 %v4631, 16
      %v4756 = vor.u32 %v4754, %v4752
      %v4758 = vshll.u32 %v4632, 16
      %v4760 = vrot.slane %v4758, 1
      %v4761 = vsel %vm4009, %v4756, %v4760
      %v4762 = vshrl.u32 %v4632, 16
      %v4764 = vor.u32 %v4762, %v4760
      %v4766 = vshll.u32 %v4633, 16
      %v4768 = vrot.slane %v4766, 1
      %v4769 = vsel %vm4009, %v4764, %v4768
      %v4770 = vshrl.u32 %v4633, 16
      %v4772 = vor.u32 %v4770, %v4768
      %v4774 = vshll.u32 %v4634, 16
      %v4776 = vrot.slane %v4774, 1
      %v4777 = vsel %vm4009, %v4772, %v4776
      %v4778 = vshrl.u32 %v4634, 16
      %v4780 = vor.u32 %v4778, %v4776
      %v4782 = vshll.u32 %v4635, 16
      %v4784 = vrot.slane %v4782, 1
      %v4785 = vsel %vm4009, %v4780, %v4784
      %v4786 = vshrl.u32 %v4635, 16
      %v4788 = vor.u32 %v4786, %v4784
      %v4790 = vshll.u32 %v4636, 16
      %v4792 = vrot.slane %v4790, 1
      %v4793 = vsel %vm4009, %v4788, %v4792
      %v4794 = vshrl.u32 %v4636, 16
      %v4796 = vor.u32 %v4794, %v4792
      %v4798 = vshll.u32 %v4637, 16
      %v4800 = vrot.slane %v4798, 1
      %v4801 = vsel %vm4009, %v4796, %v4800
      %v4802 = vshrl.u32 %v4637, 16
      %v4804 = vor.u32 %v4802, %v4800
      %v4813 = vunpack.c.l.b16 %v4527
      %v4814 = vunpack.c.l.b16 %v4528
      %v4815 = vunpack.c.l.b16 %v4529
      %v4816 = vunpack.c.l.b16 %v4530
      %v4817 = vunpack.c.l.b16 %v4531
      %v4818 = vunpack.c.l.b16 %v4532
      %v4819 = vunpack.c.l.b16 %v4533
      %v4820 = vunpack.c.l.b16 %v4534
      %v4821 = vpack.c.b16 %v4814, %v4813
      %v4822 = vpack.c.b16 %v4816, %v4815
      %v4823 = vpack.c.b16 %v4818, %v4817
      %v4824 = vpack.c.b16 %v4820, %v4819
      %v4830 = vsel %vm1788, %v4649, 0
      %v4833 = vsel %vm1788, %v4657, 0
      %v4836 = vsel %vm1788, %v4665, 0
      %v4839 = vsel %vm1788, %v4673, 0
      %v4842 = vsel %vm1788, %v4681, 0
      %v4845 = vsel %vm1788, %v4689, 0
      %v4848 = vsel %vm1788, %v4697, 0
      %v4851 = vsel %vm1788, %v4705, 0
      %v4854 = vsel %vm1788, %v4713, 0
      %v4857 = vsel %vm1788, %v4721, 0
      %v4860 = vsel %vm1788, %v4729, 0
      %v4863 = vsel %vm1788, %v4737, 0
      %v4866 = vsel %vm1788, %v4745, 0
      %v4869 = vsel %vm1788, %v4753, 0
      %v4872 = vsel %vm1788, %v4761, 0
      %v4875 = vsel %vm1788, %v4769, 0
      %v4878 = vsel %vm1788, %v4777, 0
      %v4881 = vsel %vm1788, %v4785, 0
      %v4884 = vsel %vm1788, %v4793, 0
      %v4887 = vsel %vm1788, %v4801, 0
      %v4890 = vsel %vm1788, %v4804, 0
      %4892 = vmatprep.subr.bf16.mxu0 0
      %4893 = vmatpush1.bf16.msra.mxu0 0
      %4894 = vmatprep.subr.bf16.mxu0 0
      %4895 = vmatpush1.bf16.msra.mxu0 0
      %4896 = vmatprep.subr.bf16.mxu0 0
      %4897 = vmatpush1.bf16.msra.mxu0 0
      %4898 = vmatprep.subr.bf16.mxu0 0
      %4899 = vmatpush1.bf16.msra.mxu0 0
      %4900 = vmatprep.subr.bf16.mxu0 0
      %4901 = vmatpush1.bf16.msra.mxu0 %v4824
      %4902 = vmatprep.subr.bf16.mxu0 0
      %4903 = vmatpush1.bf16.msra.mxu0 %v4823
      %4904 = vmatprep.subr.bf16.mxu0 0
      %4905 = vmatpush1.bf16.msra.mxu0 %v4822
      %4906 = vmatprep.subr.bf16.mxu0 0
      %4907 = vmatpush1.bf16.msra.mxu0 %v4821
      %4908 = vmatprep.subr.bf16.mxu0 0
      %4909 = vmatpush2.bf16.msra.mxu0 0
      %4910 = vmatprep.subr.bf16.mxu0 0
      %4911 = vmatpush2.bf16.msra.mxu0 0
      %4912 = vmatprep.subr.bf16.mxu0 0
      %4913 = vmatpush2.bf16.msra.mxu0 0
      %4914 = vmatprep.subr.bf16.mxu0 0
      %4915 = vmatpush2.bf16.msra.mxu0 0
      %4916 = vmatprep.subr.bf16.mxu0 0
      %4917 = vmatpush2.bf16.msra.mxu0 0
      %4918 = vmatprep.subr.bf16.mxu0 0
      %4919 = vmatpush2.bf16.msra.mxu0 0
      %4920 = vmatprep.subr.bf16.mxu0 0
      %4921 = vmatpush2.bf16.msra.mxu0 0
      %4922 = vmatprep.subr.bf16.mxu0 0
      %4923 = vmatpush2.bf16.msra.mxu0 0
      %4924 = vmatprep.mubr.bf16.mxu0 0
      %4925 = vmatmul.mubr.bf16.gmra.mxu0 %v4830
      %v4926 = vpop.f32.mrf.mxu0
      %v4927 = vadd.f32 0.0, %v4926
      %v4928 = vpop.f32.mrf.mxu0
      %v4929 = vpop.f32.mrf.mxu0
      %v4930 = vadd.f32 0.0, %v4929
      %v4931 = vpop.f32.mrf.mxu0
      %4932 = vmatprep.mubr.bf16.mxu0 0
      %4933 = vmatmul.mubr.bf16.gmra.mxu0 %v4833
      %v4934 = vpop.f32.mrf.mxu0
      %v4935 = vadd.f32 0.0, %v4934
      %v4936 = vpop.f32.mrf.mxu0
      %v4937 = vpop.f32.mrf.mxu0
      %v4938 = vadd.f32 0.0, %v4937
      %v4939 = vpop.f32.mrf.mxu0
      %4940 = vmatprep.mubr.bf16.mxu0 0
      %4941 = vmatmul.mubr.bf16.gmra.mxu0 %v4836
      %v4942 = vpop.f32.mrf.mxu0
      %v4943 = vadd.f32 0.0, %v4942
      %v4944 = vpop.f32.mrf.mxu0
      %v4945 = vpop.f32.mrf.mxu0
      %v4946 = vadd.f32 0.0, %v4945
      %v4947 = vpop.f32.mrf.mxu0
      %4948 = vmatprep.mubr.bf16.mxu0 0
      %4949 = vmatmul.mubr.bf16.gmra.mxu0 %v4839
      %v4950 = vpop.f32.mrf.mxu0
      %v4951 = vadd.f32 0.0, %v4950
      %v4952 = vpop.f32.mrf.mxu0
      %v4953 = vpop.f32.mrf.mxu0
      %v4954 = vadd.f32 0.0, %v4953
      %v4955 = vpop.f32.mrf.mxu0
      %4956 = vmatprep.mubr.bf16.mxu0 0
      %4957 = vmatmul.mubr.bf16.gmra.mxu0 %v4842
      %v4958 = vpop.f32.mrf.mxu0
      %v4959 = vadd.f32 0.0, %v4958
      %v4960 = vpop.f32.mrf.mxu0
      %v4961 = vpop.f32.mrf.mxu0
      %v4962 = vadd.f32 0.0, %v4961
      %v4963 = vpop.f32.mrf.mxu0
      %4964 = vmatprep.mubr.bf16.mxu0 0
      %4965 = vmatmul.mubr.bf16.gmra.mxu0 %v4845
      %v4966 = vpop.f32.mrf.mxu0
      %v4967 = vadd.f32 0.0, %v4966
      %v4968 = vpop.f32.mrf.mxu0
      %v4969 = vpop.f32.mrf.mxu0
      %v4970 = vadd.f32 0.0, %v4969
      %v4971 = vpop.f32.mrf.mxu0
      %4972 = vmatprep.mubr.bf16.mxu0 0
      %4973 = vmatmul.mubr.bf16.gmra.mxu0 %v4848
      %v4974 = vpop.f32.mrf.mxu0
      %v4975 = vadd.f32 0.0, %v4974
      %v4976 = vpop.f32.mrf.mxu0
      %v4977 = vpop.f32.mrf.mxu0
      %v4978 = vadd.f32 0.0, %v4977
      %v4979 = vpop.f32.mrf.mxu0
      %4980 = vmatprep.mubr.bf16.mxu0 0
      %4981 = vmatmul.mubr.bf16.gmra.mxu0 %v4851
      %v4982 = vpop.f32.mrf.mxu0
      %v4983 = vadd.f32 0.0, %v4982
      %v4984 = vpop.f32.mrf.mxu0
      %v4985 = vpop.f32.mrf.mxu0
      %v4986 = vadd.f32 0.0, %v4985
      %v4987 = vpop.f32.mrf.mxu0
      %4988 = vmatprep.mubr.bf16.mxu0 0
      %4989 = vmatmul.mubr.bf16.gmra.mxu0 %v4854
      %v4990 = vpop.f32.mrf.mxu0
      %v4991 = vadd.f32 0.0, %v4990
      %v4992 = vpop.f32.mrf.mxu0
      %v4993 = vpop.f32.mrf.mxu0
      %v4994 = vadd.f32 0.0, %v4993
      %v4995 = vpop.f32.mrf.mxu0
      %4996 = vmatprep.mubr.bf16.mxu0 0
      %4997 = vmatmul.mubr.bf16.gmra.mxu0 %v4857
      %v4998 = vpop.f32.mrf.mxu0
      %v4999 = vadd.f32 0.0, %v4998
      %v5000 = vpop.f32.mrf.mxu0
      %v5001 = vpop.f32.mrf.mxu0
      %v5002 = vadd.f32 0.0, %v5001
      %v5003 = vpop.f32.mrf.mxu0
      %5004 = vmatprep.mubr.bf16.mxu0 0
      %5005 = vmatmul.mubr.bf16.gmra.mxu0 %v4860
      %v5006 = vpop.f32.mrf.mxu0
      %v5007 = vadd.f32 0.0, %v5006
      %v5008 = vpop.f32.mrf.mxu0
      %v5009 = vpop.f32.mrf.mxu0
      %v5010 = vadd.f32 0.0, %v5009
      %v5011 = vpop.f32.mrf.mxu0
      %5012 = vmatprep.mubr.bf16.mxu0 0
      %5013 = vmatmul.mubr.bf16.gmra.mxu0 %v4863
      %v5014 = vpop.f32.mrf.mxu0
      %v5015 = vadd.f32 0.0, %v5014
      %v5016 = vpop.f32.mrf.mxu0
      %v5017 = vpop.f32.mrf.mxu0
      %v5018 = vadd.f32 0.0, %v5017
      %v5019 = vpop.f32.mrf.mxu0
      %5020 = vmatprep.mubr.bf16.mxu0 0
      %5021 = vmatmul.mubr.bf16.gmra.mxu0 %v4866
      %v5022 = vpop.f32.mrf.mxu0
      %v5023 = vadd.f32 0.0, %v5022
      %v5024 = vpop.f32.mrf.mxu0
      %v5025 = vpop.f32.mrf.mxu0
      %v5026 = vadd.f32 0.0, %v5025
      %v5027 = vpop.f32.mrf.mxu0
      %5028 = vmatprep.mubr.bf16.mxu0 0
      %5029 = vmatmul.mubr.bf16.gmra.mxu0 %v4869
      %v5030 = vpop.f32.mrf.mxu0
      %v5031 = vadd.f32 0.0, %v5030
      %v5032 = vpop.f32.mrf.mxu0
      %v5033 = vpop.f32.mrf.mxu0
      %v5034 = vadd.f32 0.0, %v5033
      %v5035 = vpop.f32.mrf.mxu0
      %5036 = vmatprep.mubr.bf16.mxu0 0
      %5037 = vmatmul.mubr.bf16.gmra.mxu0 %v4872
      %v5038 = vpop.f32.mrf.mxu0
      %v5039 = vadd.f32 0.0, %v5038
      %v5040 = vpop.f32.mrf.mxu0
      %v5041 = vpop.f32.mrf.mxu0
      %v5042 = vadd.f32 0.0, %v5041
      %v5043 = vpop.f32.mrf.mxu0
      %5044 = vmatprep.mubr.bf16.mxu0 0
      %5045 = vmatmul.mubr.bf16.gmra.mxu0 %v4875
      %v5046 = vpop.f32.mrf.mxu0
      %v5047 = vadd.f32 0.0, %v5046
      %v5048 = vpop.f32.mrf.mxu0
      %v5049 = vpop.f32.mrf.mxu0
      %v5050 = vadd.f32 0.0, %v5049
      %v5051 = vpop.f32.mrf.mxu0
      %5052 = vmatprep.mubr.bf16.mxu0 0
      %5053 = vmatmul.mubr.bf16.gmra.mxu0 %v4878
      %v5054 = vpop.f32.mrf.mxu0
      %v5055 = vadd.f32 0.0, %v5054
      %v5056 = vpop.f32.mrf.mxu0
      %v5057 = vpop.f32.mrf.mxu0
      %v5058 = vadd.f32 0.0, %v5057
      %v5059 = vpop.f32.mrf.mxu0
      %5060 = vmatprep.mubr.bf16.mxu0 0
      %5061 = vmatmul.mubr.bf16.gmra.mxu0 %v4881
      %v5062 = vpop.f32.mrf.mxu0
      %v5063 = vadd.f32 0.0, %v5062
      %v5064 = vpop.f32.mrf.mxu0
      %v5065 = vpop.f32.mrf.mxu0
      %v5066 = vadd.f32 0.0, %v5065
      %v5067 = vpop.f32.mrf.mxu0
      %5068 = vmatprep.mubr.bf16.mxu0 0
      %5069 = vmatmul.mubr.bf16.gmra.mxu0 %v4884
      %v5070 = vpop.f32.mrf.mxu0
      %v5071 = vadd.f32 0.0, %v5070
      %v5072 = vpop.f32.mrf.mxu0
      %v5073 = vpop.f32.mrf.mxu0
      %v5074 = vadd.f32 0.0, %v5073
      %v5075 = vpop.f32.mrf.mxu0
      %5076 = vmatprep.mubr.bf16.mxu0 0
      %5077 = vmatmul.mubr.bf16.gmra.mxu0 %v4887
      %v5078 = vpop.f32.mrf.mxu0
      %v5079 = vadd.f32 0.0, %v5078
      %v5080 = vpop.f32.mrf.mxu0
      %v5081 = vpop.f32.mrf.mxu0
      %v5082 = vadd.f32 0.0, %v5081
      %v5083 = vpop.f32.mrf.mxu0
      %5084 = vmatprep.mubr.bf16.mxu0 0
      %5085 = vmatmul.mubr.bf16.gmra.mxu0 %v4890
      %v5086 = vpop.f32.mrf.mxu0
      %v5087 = vadd.f32 0.0, %v5086
      %v5088 = vpop.f32.mrf.mxu0
      %v5089 = vpop.f32.mrf.mxu0
      %v5090 = vpop.f32.mrf.mxu0
      %5091 = vdwg.mxu0
      %v5092 = vadd.f32 %v4444, %v4927
      %v5093 = vadd.f32 %v4445, %v4930
      %v5094 = vadd.f32 %v4446, %v4935
      %v5095 = vadd.f32 %v4447, %v4938
      %v5096 = vadd.f32 %v4448, %v4943
      %v5097 = vadd.f32 %v4449, %v4946
      %v5098 = vadd.f32 %v4450, %v4951
      %v5099 = vadd.f32 %v4451, %v4954
      %v5100 = vadd.f32 %v4452, %v4959
      %v5101 = vadd.f32 %v4453, %v4962
      %v5102 = vadd.f32 %v4454, %v4967
      %v5103 = vadd.f32 %v4455, %v4970
      %v5104 = vadd.f32 %v4456, %v4975
      %v5105 = vadd.f32 %v4457, %v4978
      %v5106 = vadd.f32 %v4458, %v4983
      %v5107 = vadd.f32 %v4459, %v4986
      %v5108 = vadd.f32 %v4460, %v4991
      %v5109 = vadd.f32 %v4461, %v4994
      %v5110 = vadd.f32 %v4462, %v4999
      %v5111 = vadd.f32 %v4463, %v5002
      %v5112 = vadd.f32 %v4464, %v5007
      %v5113 = vadd.f32 %v4465, %v5010
      %v5114 = vadd.f32 %v4466, %v5015
      %v5115 = vadd.f32 %v4467, %v5018
      %v5116 = vadd.f32 %v4468, %v5023
      %v5117 = vadd.f32 %v4469, %v5026
      %v5118 = vadd.f32 %v4470, %v5031
      %v5119 = vadd.f32 %v4471, %v5034
      %v5120 = vadd.f32 %v4472, %v5039
      %v5121 = vadd.f32 %v4473, %v5042
      %v5122 = vadd.f32 %v4474, %v5047
      %v5123 = vadd.f32 %v4475, %v5050
      %v5124 = vadd.f32 %v4476, %v5055
      %v5125 = vadd.f32 %v4477, %v5058
      %v5126 = vadd.f32 %v4478, %v5063
      %v5127 = vadd.f32 %v4479, %v5066
      %v5128 = vadd.f32 %v4480, %v5071
      %v5129 = vadd.f32 %v4481, %v5074
      %v5130 = vadd.f32 %v4482, %v5079
      %v5131 = vadd.f32 %v4483, %v5082
      %v5132 = vadd.f32 %v4484, %v5087
      %v5133 = vld [vmem:[#allocation2 + $0x18] sm:$0xe]
      %s5134 = scalar_lea.vmem %s5, 224
      %v5135 = vld [vmem:[%s5134] sm:$0xf]
      %v5136 = vld [vmem:[%s5134 + $0x4] sm:$0xf]
      %v5137 = vld [vmem:[%s5134 + $0x8] sm:$0xf]
      %v5138 = vld [vmem:[%s5134 + $0xc] sm:$0xf]
      %v5139 = vld [vmem:[%s5134 + $0x10] sm:$0xf]
      %v5140 = vld [vmem:[%s5134 + $0x14] sm:$0xf]
      %v5141 = vld [vmem:[%s5134 + $0x18] sm:$0xf]
      %v5142 = vld [vmem:[%s5134 + $0x1c] sm:$0xf]
      %v5144 = vunpack.c.l.b16 %v5133
      %v5145 = vpack.c.b16 %v4577, %v5144
      %vm5146 = vcmask 1046528
      %v5147 = vrot.slane %v5145, 1
      %v5148 = vrot.slane %v4618, 1
      %v5149 = vsel %vm5146, %v5147, %v5148
      %v5150 = vrot.slane %v4619, 1
      %v5151 = vsel %vm5146, %v5148, %v5150
      %v5152 = vrot.slane %v4620, 1
      %v5153 = vsel %vm5146, %v5150, %v5152
      %v5154 = vrot.slane %v4621, 1
      %v5155 = vsel %vm5146, %v5152, %v5154
      %v5156 = vrot.slane %v4622, 1
      %v5157 = vsel %vm5146, %v5154, %v5156
      %v5158 = vrot.slane %v4623, 1
      %v5159 = vsel %vm5146, %v5156, %v5158
      %v5160 = vrot.slane %v4624, 1
      %v5161 = vsel %vm5146, %v5158, %v5160
      %v5162 = vrot.slane %v4625, 1
      %v5163 = vsel %vm5146, %v5160, %v5162
      %v5164 = vrot.slane %v4626, 1
      %v5165 = vsel %vm5146, %v5162, %v5164
      %v5166 = vrot.slane %v4627, 1
      %v5167 = vsel %vm5146, %v5164, %v5166
      %v5168 = vrot.slane %v4628, 1
      %v5169 = vsel %vm5146, %v5166, %v5168
      %v5170 = vrot.slane %v4629, 1
      %v5171 = vsel %vm5146, %v5168, %v5170
      %v5172 = vrot.slane %v4630, 1
      %v5173 = vsel %vm5146, %v5170, %v5172
      %v5174 = vrot.slane %v4631, 1
      %v5175 = vsel %vm5146, %v5172, %v5174
      %v5176 = vrot.slane %v4632, 1
      %v5177 = vsel %vm5146, %v5174, %v5176
      %v5178 = vrot.slane %v4633, 1
      %v5179 = vsel %vm5146, %v5176, %v5178
      %v5180 = vrot.slane %v4634, 1
      %v5181 = vsel %vm5146, %v5178, %v5180
      %v5182 = vrot.slane %v4635, 1
      %v5183 = vsel %vm5146, %v5180, %v5182
      %v5184 = vrot.slane %v4636, 1
      %v5185 = vsel %vm5146, %v5182, %v5184
      %v5186 = vrot.slane %v4637, 1
      %v5187 = vsel %vm5146, %v5184, %v5186
      %v5196 = vunpack.c.l.b16 %v5135
      %v5197 = vunpack.c.l.b16 %v5136
      %v5198 = vunpack.c.l.b16 %v5137
      %v5199 = vunpack.c.l.b16 %v5138
      %v5200 = vunpack.c.l.b16 %v5139
      %v5201 = vunpack.c.l.b16 %v5140
      %v5202 = vunpack.c.l.b16 %v5141
      %v5203 = vunpack.c.l.b16 %v5142
      %v5204 = vpack.c.b16 %v5197, %v5196
      %v5205 = vpack.c.b16 %v5199, %v5198
      %v5206 = vpack.c.b16 %v5201, %v5200
      %v5207 = vpack.c.b16 %v5203, %v5202
      %v5213 = vsel %vm1788, %v5149, 0
      %v5216 = vsel %vm1788, %v5151, 0
      %v5219 = vsel %vm1788, %v5153, 0
      %v5222 = vsel %vm1788, %v5155, 0
      %v5225 = vsel %vm1788, %v5157, 0
      %v5228 = vsel %vm1788, %v5159, 0
      %v5231 = vsel %vm1788, %v5161, 0
      %v5234 = vsel %vm1788, %v5163, 0
      %v5237 = vsel %vm1788, %v5165, 0
      %v5240 = vsel %vm1788, %v5167, 0
      %v5243 = vsel %vm1788, %v5169, 0
      %v5246 = vsel %vm1788, %v5171, 0
      %v5249 = vsel %vm1788, %v5173, 0
      %v5252 = vsel %vm1788, %v5175, 0
      %v5255 = vsel %vm1788, %v5177, 0
      %v5258 = vsel %vm1788, %v5179, 0
      %v5261 = vsel %vm1788, %v5181, 0
      %v5264 = vsel %vm1788, %v5183, 0
      %v5267 = vsel %vm1788, %v5185, 0
      %v5270 = vsel %vm1788, %v5187, 0
      %v5273 = vsel %vm1788, %v5186, 0
      %5275 = vmatprep.subr.bf16.mxu0 0
      %5276 = vmatpush1.bf16.msra.mxu0 0
      %5277 = vmatprep.subr.bf16.mxu0 0
      %5278 = vmatpush1.bf16.msra.mxu0 0
      %5279 = vmatprep.subr.bf16.mxu0 0
      %5280 = vmatpush1.bf16.msra.mxu0 0
      %5281 = vmatprep.subr.bf16.mxu0 0
      %5282 = vmatpush1.bf16.msra.mxu0 0
      %5283 = vmatprep.subr.bf16.mxu0 0
      %5284 = vmatpush1.bf16.msra.mxu0 %v5207
      %5285 = vmatprep.subr.bf16.mxu0 0
      %5286 = vmatpush1.bf16.msra.mxu0 %v5206
      %5287 = vmatprep.subr.bf16.mxu0 0
      %5288 = vmatpush1.bf16.msra.mxu0 %v5205
      %5289 = vmatprep.subr.bf16.mxu0 0
      %5290 = vmatpush1.bf16.msra.mxu0 %v5204
      %5291 = vmatprep.subr.bf16.mxu0 0
      %5292 = vmatpush2.bf16.msra.mxu0 0
      %5293 = vmatprep.subr.bf16.mxu0 0
      %5294 = vmatpush2.bf16.msra.mxu0 0
      %5295 = vmatprep.subr.bf16.mxu0 0
      %5296 = vmatpush2.bf16.msra.mxu0 0
      %5297 = vmatprep.subr.bf16.mxu0 0
      %5298 = vmatpush2.bf16.msra.mxu0 0
      %5299 = vmatprep.subr.bf16.mxu0 0
      %5300 = vmatpush2.bf16.msra.mxu0 0
      %5301 = vmatprep.subr.bf16.mxu0 0
      %5302 = vmatpush2.bf16.msra.mxu0 0
      %5303 = vmatprep.subr.bf16.mxu0 0
      %5304 = vmatpush2.bf16.msra.mxu0 0
      %5305 = vmatprep.subr.bf16.mxu0 0
      %5306 = vmatpush2.bf16.msra.mxu0 0
      %5307 = vmatprep.mubr.bf16.mxu0 0
      %5308 = vmatmul.mubr.bf16.gmra.mxu0 %v5213
      %v5309 = vpop.f32.mrf.mxu0
      %v5310 = vadd.f32 0.0, %v5309
      %v5311 = vpop.f32.mrf.mxu0
      %v5312 = vpop.f32.mrf.mxu0
      %v5313 = vadd.f32 0.0, %v5312
      %v5314 = vpop.f32.mrf.mxu0
      %5315 = vmatprep.mubr.bf16.mxu0 0
      %5316 = vmatmul.mubr.bf16.gmra.mxu0 %v5216
      %v5317 = vpop.f32.mrf.mxu0
      %v5318 = vadd.f32 0.0, %v5317
      %v5319 = vpop.f32.mrf.mxu0
      %v5320 = vpop.f32.mrf.mxu0
      %v5321 = vadd.f32 0.0, %v5320
      %v5322 = vpop.f32.mrf.mxu0
      %5323 = vmatprep.mubr.bf16.mxu0 0
      %5324 = vmatmul.mubr.bf16.gmra.mxu0 %v5219
      %v5325 = vpop.f32.mrf.mxu0
      %v5326 = vadd.f32 0.0, %v5325
      %v5327 = vpop.f32.mrf.mxu0
      %v5328 = vpop.f32.mrf.mxu0
      %v5329 = vadd.f32 0.0, %v5328
      %v5330 = vpop.f32.mrf.mxu0
      %5331 = vmatprep.mubr.bf16.mxu0 0
      %5332 = vmatmul.mubr.bf16.gmra.mxu0 %v5222
      %v5333 = vpop.f32.mrf.mxu0
      %v5334 = vadd.f32 0.0, %v5333
      %v5335 = vpop.f32.mrf.mxu0
      %v5336 = vpop.f32.mrf.mxu0
      %v5337 = vadd.f32 0.0, %v5336
      %v5338 = vpop.f32.mrf.mxu0
      %5339 = vmatprep.mubr.bf16.mxu0 0
      %5340 = vmatmul.mubr.bf16.gmra.mxu0 %v5225
      %v5341 = vpop.f32.mrf.mxu0
      %v5342 = vadd.f32 0.0, %v5341
      %v5343 = vpop.f32.mrf.mxu0
      %v5344 = vpop.f32.mrf.mxu0
      %v5345 = vadd.f32 0.0, %v5344
      %v5346 = vpop.f32.mrf.mxu0
      %5347 = vmatprep.mubr.bf16.mxu0 0
      %5348 = vmatmul.mubr.bf16.gmra.mxu0 %v5228
      %v5349 = vpop.f32.mrf.mxu0
      %v5350 = vadd.f32 0.0, %v5349
      %v5351 = vpop.f32.mrf.mxu0
      %v5352 = vpop.f32.mrf.mxu0
      %v5353 = vadd.f32 0.0, %v5352
      %v5354 = vpop.f32.mrf.mxu0
      %5355 = vmatprep.mubr.bf16.mxu0 0
      %5356 = vmatmul.mubr.bf16.gmra.mxu0 %v5231
      %v5357 = vpop.f32.mrf.mxu0
      %v5358 = vadd.f32 0.0, %v5357
      %v5359 = vpop.f32.mrf.mxu0
      %v5360 = vpop.f32.mrf.mxu0
      %v5361 = vadd.f32 0.0, %v5360
      %v5362 = vpop.f32.mrf.mxu0
      %5363 = vmatprep.mubr.bf16.mxu0 0
      %5364 = vmatmul.mubr.bf16.gmra.mxu0 %v5234
      %v5365 = vpop.f32.mrf.mxu0
      %v5366 = vadd.f32 0.0, %v5365
      %v5367 = vpop.f32.mrf.mxu0
      %v5368 = vpop.f32.mrf.mxu0
      %v5369 = vadd.f32 0.0, %v5368
      %v5370 = vpop.f32.mrf.mxu0
      %5371 = vmatprep.mubr.bf16.mxu0 0
      %5372 = vmatmul.mubr.bf16.gmra.mxu0 %v5237
      %v5373 = vpop.f32.mrf.mxu0
      %v5374 = vadd.f32 0.0, %v5373
      %v5375 = vpop.f32.mrf.mxu0
      %v5376 = vpop.f32.mrf.mxu0
      %v5377 = vadd.f32 0.0, %v5376
      %v5378 = vpop.f32.mrf.mxu0
      %5379 = vmatprep.mubr.bf16.mxu0 0
      %5380 = vmatmul.mubr.bf16.gmra.mxu0 %v5240
      %v5381 = vpop.f32.mrf.mxu0
      %v5382 = vadd.f32 0.0, %v5381
      %v5383 = vpop.f32.mrf.mxu0
      %v5384 = vpop.f32.mrf.mxu0
      %v5385 = vadd.f32 0.0, %v5384
      %v5386 = vpop.f32.mrf.mxu0
      %5387 = vmatprep.mubr.bf16.mxu0 0
      %5388 = vmatmul.mubr.bf16.gmra.mxu0 %v5243
      %v5389 = vpop.f32.mrf.mxu0
      %v5390 = vadd.f32 0.0, %v5389
      %v5391 = vpop.f32.mrf.mxu0
      %v5392 = vpop.f32.mrf.mxu0
      %v5393 = vadd.f32 0.0, %v5392
      %v5394 = vpop.f32.mrf.mxu0
      %5395 = vmatprep.mubr.bf16.mxu0 0
      %5396 = vmatmul.mubr.bf16.gmra.mxu0 %v5246
      %v5397 = vpop.f32.mrf.mxu0
      %v5398 = vadd.f32 0.0, %v5397
      %v5399 = vpop.f32.mrf.mxu0
      %v5400 = vpop.f32.mrf.mxu0
      %v5401 = vadd.f32 0.0, %v5400
      %v5402 = vpop.f32.mrf.mxu0
      %5403 = vmatprep.mubr.bf16.mxu0 0
      %5404 = vmatmul.mubr.bf16.gmra.mxu0 %v5249
      %v5405 = vpop.f32.mrf.mxu0
      %v5406 = vadd.f32 0.0, %v5405
      %v5407 = vpop.f32.mrf.mxu0
      %v5408 = vpop.f32.mrf.mxu0
      %v5409 = vadd.f32 0.0, %v5408
      %v5410 = vpop.f32.mrf.mxu0
      %5411 = vmatprep.mubr.bf16.mxu0 0
      %5412 = vmatmul.mubr.bf16.gmra.mxu0 %v5252
      %v5413 = vpop.f32.mrf.mxu0
      %v5414 = vadd.f32 0.0, %v5413
      %v5415 = vpop.f32.mrf.mxu0
      %v5416 = vpop.f32.mrf.mxu0
      %v5417 = vadd.f32 0.0, %v5416
      %v5418 = vpop.f32.mrf.mxu0
      %5419 = vmatprep.mubr.bf16.mxu0 0
      %5420 = vmatmul.mubr.bf16.gmra.mxu0 %v5255
      %v5421 = vpop.f32.mrf.mxu0
      %v5422 = vadd.f32 0.0, %v5421
      %v5423 = vpop.f32.mrf.mxu0
      %v5424 = vpop.f32.mrf.mxu0
      %v5425 = vadd.f32 0.0, %v5424
      %v5426 = vpop.f32.mrf.mxu0
      %5427 = vmatprep.mubr.bf16.mxu0 0
      %5428 = vmatmul.mubr.bf16.gmra.mxu0 %v5258
      %v5429 = vpop.f32.mrf.mxu0
      %v5430 = vadd.f32 0.0, %v5429
      %v5431 = vpop.f32.mrf.mxu0
      %v5432 = vpop.f32.mrf.mxu0
      %v5433 = vadd.f32 0.0, %v5432
      %v5434 = vpop.f32.mrf.mxu0
      %5435 = vmatprep.mubr.bf16.mxu0 0
      %5436 = vmatmul.mubr.bf16.gmra.mxu0 %v5261
      %v5437 = vpop.f32.mrf.mxu0
      %v5438 = vadd.f32 0.0, %v5437
      %v5439 = vpop.f32.mrf.mxu0
      %v5440 = vpop.f32.mrf.mxu0
      %v5441 = vadd.f32 0.0, %v5440
      %v5442 = vpop.f32.mrf.mxu0
      %5443 = vmatprep.mubr.bf16.mxu0 0
      %5444 = vmatmul.mubr.bf16.gmra.mxu0 %v5264
      %v5445 = vpop.f32.mrf.mxu0
      %v5446 = vadd.f32 0.0, %v5445
      %v5447 = vpop.f32.mrf.mxu0
      %v5448 = vpop.f32.mrf.mxu0
      %v5449 = vadd.f32 0.0, %v5448
      %v5450 = vpop.f32.mrf.mxu0
      %5451 = vmatprep.mubr.bf16.mxu0 0
      %5452 = vmatmul.mubr.bf16.gmra.mxu0 %v5267
      %v5453 = vpop.f32.mrf.mxu0
      %v5454 = vadd.f32 0.0, %v5453
      %v5455 = vpop.f32.mrf.mxu0
      %v5456 = vpop.f32.mrf.mxu0
      %v5457 = vadd.f32 0.0, %v5456
      %v5458 = vpop.f32.mrf.mxu0
      %5459 = vmatprep.mubr.bf16.mxu0 0
      %5460 = vmatmul.mubr.bf16.gmra.mxu0 %v5270
      %v5461 = vpop.f32.mrf.mxu0
      %v5462 = vadd.f32 0.0, %v5461
      %v5463 = vpop.f32.mrf.mxu0
      %v5464 = vpop.f32.mrf.mxu0
      %v5465 = vadd.f32 0.0, %v5464
      %v5466 = vpop.f32.mrf.mxu0
      %5467 = vmatprep.mubr.bf16.mxu0 0
      %5468 = vmatmul.mubr.bf16.gmra.mxu0 %v5273
      %v5469 = vpop.f32.mrf.mxu0
      %v5470 = vadd.f32 0.0, %v5469
      %v5471 = vpop.f32.mrf.mxu0
      %v5472 = vpop.f32.mrf.mxu0
      %v5473 = vpop.f32.mrf.mxu0
      %5474 = vdwg.mxu0
      %v5475 = vadd.f32 %v5092, %v5310
      %v5476 = vadd.f32 %v5093, %v5313
      %v5477 = vadd.f32 %v5094, %v5318
      %v5478 = vadd.f32 %v5095, %v5321
      %v5479 = vadd.f32 %v5096, %v5326
      %v5480 = vadd.f32 %v5097, %v5329
      %v5481 = vadd.f32 %v5098, %v5334
      %v5482 = vadd.f32 %v5099, %v5337
      %v5483 = vadd.f32 %v5100, %v5342
      %v5484 = vadd.f32 %v5101, %v5345
      %v5485 = vadd.f32 %v5102, %v5350
      %v5486 = vadd.f32 %v5103, %v5353
      %v5487 = vadd.f32 %v5104, %v5358
      %v5488 = vadd.f32 %v5105, %v5361
      %v5489 = vadd.f32 %v5106, %v5366
      %v5490 = vadd.f32 %v5107, %v5369
      %v5491 = vadd.f32 %v5108, %v5374
      %v5492 = vadd.f32 %v5109, %v5377
      %v5493 = vadd.f32 %v5110, %v5382
      %v5494 = vadd.f32 %v5111, %v5385
      %v5495 = vadd.f32 %v5112, %v5390
      %v5496 = vadd.f32 %v5113, %v5393
      %v5497 = vadd.f32 %v5114, %v5398
      %v5498 = vadd.f32 %v5115, %v5401
      %v5499 = vadd.f32 %v5116, %v5406
      %v5500 = vadd.f32 %v5117, %v5409
      %v5501 = vadd.f32 %v5118, %v5414
      %v5502 = vadd.f32 %v5119, %v5417
      %v5503 = vadd.f32 %v5120, %v5422
      %v5504 = vadd.f32 %v5121, %v5425
      %v5505 = vadd.f32 %v5122, %v5430
      %v5506 = vadd.f32 %v5123, %v5433
      %v5507 = vadd.f32 %v5124, %v5438
      %v5508 = vadd.f32 %v5125, %v5441
      %v5509 = vadd.f32 %v5126, %v5446
      %v5510 = vadd.f32 %v5127, %v5449
      %v5511 = vadd.f32 %v5128, %v5454
      %v5512 = vadd.f32 %v5129, %v5457
      %v5513 = vadd.f32 %v5130, %v5462
      %v5514 = vadd.f32 %v5131, %v5465
      %v5515 = vadd.f32 %v5132, %v5470
      %v5516 = vld [vmem:[#allocation2 + $0xb8] sm:$0xf]
      %s5517 = scalar_lea.vmem %s5, 256
      %v5518 = vld [vmem:[%s5517] sm:$0xf]
      %v5519 = vld [vmem:[%s5517 + $0x4] sm:$0xf]
      %v5520 = vld [vmem:[%s5517 + $0x8] sm:$0xf]
      %v5521 = vld [vmem:[%s5517 + $0xc] sm:$0xf]
      %v5522 = vld [vmem:[%s5517 + $0x10] sm:$0xf]
      %v5523 = vld [vmem:[%s5517 + $0x14] sm:$0xf]
      %v5524 = vld [vmem:[%s5517 + $0x18] sm:$0xf]
      %v5525 = vld [vmem:[%s5517 + $0x1c] sm:$0xf]
      %v5527 = vunpack.c.l.b16 %v5516
      %v5528 = vpack.c.b16 %v5527, %v5527
      %vm5529 = vsmask.f32 6400
      %v5531 = vshrl.u32 %v5145, 16
      %v5533 = vrot.slane %v5531, 1
      %v5534 = vshll.u32 %v5145, 16
      %v5536 = vrot.slane %v5534, 2
      %v5537 = vor.u32 %v5533, %v5536
      %v5538 = vrot.slane %v4650, 1
      %v5539 = vrot.slane %v4646, 2
      %v5540 = vor.u32 %v5538, %v5539
      %v5541 = vsel %vm5529, %v5537, %v5540
      %v5542 = vrot.slane %v4658, 1
      %v5543 = vrot.slane %v4654, 2
      %v5544 = vor.u32 %v5542, %v5543
      %v5545 = vsel %vm5529, %v5540, %v5544
      %v5546 = vrot.slane %v4666, 1
      %v5547 = vrot.slane %v4662, 2
      %v5548 = vor.u32 %v5546, %v5547
      %v5549 = vsel %vm5529, %v5544, %v5548
      %v5550 = vrot.slane %v4674, 1
      %v5551 = vrot.slane %v4670, 2
      %v5552 = vor.u32 %v5550, %v5551
      %v5553 = vsel %vm5529, %v5548, %v5552
      %v5554 = vrot.slane %v4682, 1
      %v5555 = vrot.slane %v4678, 2
      %v5556 = vor.u32 %v5554, %v5555
      %v5557 = vsel %vm5529, %v5552, %v5556
      %v5558 = vrot.slane %v4690, 1
      %v5559 = vrot.slane %v4686, 2
      %v5560 = vor.u32 %v5558, %v5559
      %v5561 = vsel %vm5529, %v5556, %v5560
      %v5562 = vrot.slane %v4698, 1
      %v5563 = vrot.slane %v4694, 2
      %v5564 = vor.u32 %v5562, %v5563
      %v5565 = vsel %vm5529, %v5560, %v5564
      %v5566 = vrot.slane %v4706, 1
      %v5567 = vrot.slane %v4702, 2
      %v5568 = vor.u32 %v5566, %v5567
      %v5569 = vsel %vm5529, %v5564, %v5568
      %v5570 = vrot.slane %v4714, 1
      %v5571 = vrot.slane %v4710, 2
      %v5572 = vor.u32 %v5570, %v5571
      %v5573 = vsel %vm5529, %v5568, %v5572
      %v5574 = vrot.slane %v4722, 1
      %v5575 = vrot.slane %v4718, 2
      %v5576 = vor.u32 %v5574, %v5575
      %v5577 = vsel %vm5529, %v5572, %v5576
      %v5578 = vrot.slane %v4730, 1
      %v5579 = vrot.slane %v4726, 2
      %v5580 = vor.u32 %v5578, %v5579
      %v5581 = vsel %vm5529, %v5576, %v5580
      %v5582 = vrot.slane %v4738, 1
      %v5583 = vrot.slane %v4734, 2
      %v5584 = vor.u32 %v5582, %v5583
      %v5585 = vsel %vm5529, %v5580, %v5584
      %v5586 = vrot.slane %v4746, 1
      %v5587 = vrot.slane %v4742, 2
      %v5588 = vor.u32 %v5586, %v5587
      %v5589 = vsel %vm5529, %v5584, %v5588
      %v5590 = vrot.slane %v4754, 1
      %v5591 = vrot.slane %v4750, 2
      %v5592 = vor.u32 %v5590, %v5591
      %v5593 = vsel %vm5529, %v5588, %v5592
      %v5594 = vrot.slane %v4762, 1
      %v5595 = vrot.slane %v4758, 2
      %v5596 = vor.u32 %v5594, %v5595
      %v5597 = vsel %vm5529, %v5592, %v5596
      %v5598 = vrot.slane %v4770, 1
      %v5599 = vrot.slane %v4766, 2
      %v5600 = vor.u32 %v5598, %v5599
      %v5601 = vsel %vm5529, %v5596, %v5600
      %v5602 = vrot.slane %v4778, 1
      %v5603 = vrot.slane %v4774, 2
      %v5604 = vor.u32 %v5602, %v5603
      %v5605 = vsel %vm5529, %v5600, %v5604
      %v5606 = vrot.slane %v4786, 1
      %v5607 = vrot.slane %v4782, 2
      %v5608 = vor.u32 %v5606, %v5607
      %v5609 = vsel %vm5529, %v5604, %v5608
      %v5610 = vrot.slane %v4794, 1
      %v5611 = vrot.slane %v4790, 2
      %v5612 = vor.u32 %v5610, %v5611
      %v5613 = vsel %vm5529, %v5608, %v5612
      %v5615 = vshrl.u32 %v5528, 16
      %v5617 = vrot.slane %v5615, 1
      %v5618 = vshll.u32 %v5528, 16
      %v5620 = vrot.slane %v5618, 2
      %v5621 = vor.u32 %v5617, %v5620
      %v5622 = vsel %vm5529, %v5612, %v5621
      %v5631 = vunpack.c.l.b16 %v5518
      %v5632 = vunpack.c.l.b16 %v5519
      %v5633 = vunpack.c.l.b16 %v5520
      %v5634 = vunpack.c.l.b16 %v5521
      %v5635 = vunpack.c.l.b16 %v5522
      %v5636 = vunpack.c.l.b16 %v5523
      %v5637 = vunpack.c.l.b16 %v5524
      %v5638 = vunpack.c.l.b16 %v5525
      %v5639 = vpack.c.b16 %v5632, %v5631
      %v5640 = vpack.c.b16 %v5634, %v5633
      %v5641 = vpack.c.b16 %v5636, %v5635
      %v5642 = vpack.c.b16 %v5638, %v5637
      %v5648 = vsel %vm1788, %v5541, 0
      %v5651 = vsel %vm1788, %v5545, 0
      %v5654 = vsel %vm1788, %v5549, 0
      %v5657 = vsel %vm1788, %v5553, 0
      %v5660 = vsel %vm1788, %v5557, 0
      %v5663 = vsel %vm1788, %v5561, 0
      %v5666 = vsel %vm1788, %v5565, 0
      %v5669 = vsel %vm1788, %v5569, 0
      %v5672 = vsel %vm1788, %v5573, 0
      %v5675 = vsel %vm1788, %v5577, 0
      %v5678 = vsel %vm1788, %v5581, 0
      %v5681 = vsel %vm1788, %v5585, 0
      %v5684 = vsel %vm1788, %v5589, 0
      %v5687 = vsel %vm1788, %v5593, 0
      %v5690 = vsel %vm1788, %v5597, 0
      %v5693 = vsel %vm1788, %v5601, 0
      %v5696 = vsel %vm1788, %v5605, 0
      %v5699 = vsel %vm1788, %v5609, 0
      %v5702 = vsel %vm1788, %v5613, 0
      %v5705 = vsel %vm1788, %v5622, 0
      %v5708 = vsel %vm1788, %v5621, 0
      %5710 = vmatprep.subr.bf16.mxu0 0
      %5711 = vmatpush1.bf16.msra.mxu0 0
      %5712 = vmatprep.subr.bf16.mxu0 0
      %5713 = vmatpush1.bf16.msra.mxu0 0
      %5714 = vmatprep.subr.bf16.mxu0 0
      %5715 = vmatpush1.bf16.msra.mxu0 0
      %5716 = vmatprep.subr.bf16.mxu0 0
      %5717 = vmatpush1.bf16.msra.mxu0 0
      %5718 = vmatprep.subr.bf16.mxu0 0
      %5719 = vmatpush1.bf16.msra.mxu0 %v5642
      %5720 = vmatprep.subr.bf16.mxu0 0
      %5721 = vmatpush1.bf16.msra.mxu0 %v5641
      %5722 = vmatprep.subr.bf16.mxu0 0
      %5723 = vmatpush1.bf16.msra.mxu0 %v5640
      %5724 = vmatprep.subr.bf16.mxu0 0
      %5725 = vmatpush1.bf16.msra.mxu0 %v5639
      %5726 = vmatprep.subr.bf16.mxu0 0
      %5727 = vmatpush2.bf16.msra.mxu0 0
      %5728 = vmatprep.subr.bf16.mxu0 0
      %5729 = vmatpush2.bf16.msra.mxu0 0
      %5730 = vmatprep.subr.bf16.mxu0 0
      %5731 = vmatpush2.bf16.msra.mxu0 0
      %5732 = vmatprep.subr.bf16.mxu0 0
      %5733 = vmatpush2.bf16.msra.mxu0 0
      %5734 = vmatprep.subr.bf16.mxu0 0
      %5735 = vmatpush2.bf16.msra.mxu0 0
      %5736 = vmatprep.subr.bf16.mxu0 0
      %5737 = vmatpush2.bf16.msra.mxu0 0
      %5738 = vmatprep.subr.bf16.mxu0 0
      %5739 = vmatpush2.bf16.msra.mxu0 0
      %5740 = vmatprep.subr.bf16.mxu0 0
      %5741 = vmatpush2.bf16.msra.mxu0 0
      %5742 = vmatprep.mubr.bf16.mxu0 0
      %5743 = vmatmul.mubr.bf16.gmra.mxu0 %v5648
      %v5744 = vpop.f32.mrf.mxu0
      %v5745 = vadd.f32 0.0, %v5744
      %v5746 = vpop.f32.mrf.mxu0
      %v5747 = vpop.f32.mrf.mxu0
      %v5748 = vadd.f32 0.0, %v5747
      %v5749 = vpop.f32.mrf.mxu0
      %5750 = vmatprep.mubr.bf16.mxu0 0
      %5751 = vmatmul.mubr.bf16.gmra.mxu0 %v5651
      %v5752 = vpop.f32.mrf.mxu0
      %v5753 = vadd.f32 0.0, %v5752
      %v5754 = vpop.f32.mrf.mxu0
      %v5755 = vpop.f32.mrf.mxu0
      %v5756 = vadd.f32 0.0, %v5755
      %v5757 = vpop.f32.mrf.mxu0
      %5758 = vmatprep.mubr.bf16.mxu0 0
      %5759 = vmatmul.mubr.bf16.gmra.mxu0 %v5654
      %v5760 = vpop.f32.mrf.mxu0
      %v5761 = vadd.f32 0.0, %v5760
      %v5762 = vpop.f32.mrf.mxu0
      %v5763 = vpop.f32.mrf.mxu0
      %v5764 = vadd.f32 0.0, %v5763
      %v5765 = vpop.f32.mrf.mxu0
      %5766 = vmatprep.mubr.bf16.mxu0 0
      %5767 = vmatmul.mubr.bf16.gmra.mxu0 %v5657
      %v5768 = vpop.f32.mrf.mxu0
      %v5769 = vadd.f32 0.0, %v5768
      %v5770 = vpop.f32.mrf.mxu0
      %v5771 = vpop.f32.mrf.mxu0
      %v5772 = vadd.f32 0.0, %v5771
      %v5773 = vpop.f32.mrf.mxu0
      %5774 = vmatprep.mubr.bf16.mxu0 0
      %5775 = vmatmul.mubr.bf16.gmra.mxu0 %v5660
      %v5776 = vpop.f32.mrf.mxu0
      %v5777 = vadd.f32 0.0, %v5776
      %v5778 = vpop.f32.mrf.mxu0
      %v5779 = vpop.f32.mrf.mxu0
      %v5780 = vadd.f32 0.0, %v5779
      %v5781 = vpop.f32.mrf.mxu0
      %5782 = vmatprep.mubr.bf16.mxu0 0
      %5783 = vmatmul.mubr.bf16.gmra.mxu0 %v5663
      %v5784 = vpop.f32.mrf.mxu0
      %v5785 = vadd.f32 0.0, %v5784
      %v5786 = vpop.f32.mrf.mxu0
      %v5787 = vpop.f32.mrf.mxu0
      %v5788 = vadd.f32 0.0, %v5787
      %v5789 = vpop.f32.mrf.mxu0
      %5790 = vmatprep.mubr.bf16.mxu0 0
      %5791 = vmatmul.mubr.bf16.gmra.mxu0 %v5666
      %v5792 = vpop.f32.mrf.mxu0
      %v5793 = vadd.f32 0.0, %v5792
      %v5794 = vpop.f32.mrf.mxu0
      %v5795 = vpop.f32.mrf.mxu0
      %v5796 = vadd.f32 0.0, %v5795
      %v5797 = vpop.f32.mrf.mxu0
      %5798 = vmatprep.mubr.bf16.mxu0 0
      %5799 = vmatmul.mubr.bf16.gmra.mxu0 %v5669
      %v5800 = vpop.f32.mrf.mxu0
      %v5801 = vadd.f32 0.0, %v5800
      %v5802 = vpop.f32.mrf.mxu0
      %v5803 = vpop.f32.mrf.mxu0
      %v5804 = vadd.f32 0.0, %v5803
      %v5805 = vpop.f32.mrf.mxu0
      %5806 = vmatprep.mubr.bf16.mxu0 0
      %5807 = vmatmul.mubr.bf16.gmra.mxu0 %v5672
      %v5808 = vpop.f32.mrf.mxu0
      %v5809 = vadd.f32 0.0, %v5808
      %v5810 = vpop.f32.mrf.mxu0
      %v5811 = vpop.f32.mrf.mxu0
      %v5812 = vadd.f32 0.0, %v5811
      %v5813 = vpop.f32.mrf.mxu0
      %5814 = vmatprep.mubr.bf16.mxu0 0
      %5815 = vmatmul.mubr.bf16.gmra.mxu0 %v5675
      %v5816 = vpop.f32.mrf.mxu0
      %v5817 = vadd.f32 0.0, %v5816
      %v5818 = vpop.f32.mrf.mxu0
      %v5819 = vpop.f32.mrf.mxu0
      %v5820 = vadd.f32 0.0, %v5819
      %v5821 = vpop.f32.mrf.mxu0
      %5822 = vmatprep.mubr.bf16.mxu0 0
      %5823 = vmatmul.mubr.bf16.gmra.mxu0 %v5678
      %v5824 = vpop.f32.mrf.mxu0
      %v5825 = vadd.f32 0.0, %v5824
      %v5826 = vpop.f32.mrf.mxu0
      %v5827 = vpop.f32.mrf.mxu0
      %v5828 = vadd.f32 0.0, %v5827
      %v5829 = vpop.f32.mrf.mxu0
      %5830 = vmatprep.mubr.bf16.mxu0 0
      %5831 = vmatmul.mubr.bf16.gmra.mxu0 %v5681
      %v5832 = vpop.f32.mrf.mxu0
      %v5833 = vadd.f32 0.0, %v5832
      %v5834 = vpop.f32.mrf.mxu0
      %v5835 = vpop.f32.mrf.mxu0
      %v5836 = vadd.f32 0.0, %v5835
      %v5837 = vpop.f32.mrf.mxu0
      %5838 = vmatprep.mubr.bf16.mxu0 0
      %5839 = vmatmul.mubr.bf16.gmra.mxu0 %v5684
      %v5840 = vpop.f32.mrf.mxu0
      %v5841 = vadd.f32 0.0, %v5840
      %v5842 = vpop.f32.mrf.mxu0
      %v5843 = vpop.f32.mrf.mxu0
      %v5844 = vadd.f32 0.0, %v5843
      %v5845 = vpop.f32.mrf.mxu0
      %5846 = vmatprep.mubr.bf16.mxu0 0
      %5847 = vmatmul.mubr.bf16.gmra.mxu0 %v5687
      %v5848 = vpop.f32.mrf.mxu0
      %v5849 = vadd.f32 0.0, %v5848
      %v5850 = vpop.f32.mrf.mxu0
      %v5851 = vpop.f32.mrf.mxu0
      %v5852 = vadd.f32 0.0, %v5851
      %v5853 = vpop.f32.mrf.mxu0
      %5854 = vmatprep.mubr.bf16.mxu0 0
      %5855 = vmatmul.mubr.bf16.gmra.mxu0 %v5690
      %v5856 = vpop.f32.mrf.mxu0
      %v5857 = vadd.f32 0.0, %v5856
      %v5858 = vpop.f32.mrf.mxu0
      %v5859 = vpop.f32.mrf.mxu0
      %v5860 = vadd.f32 0.0, %v5859
      %v5861 = vpop.f32.mrf.mxu0
      %5862 = vmatprep.mubr.bf16.mxu0 0
      %5863 = vmatmul.mubr.bf16.gmra.mxu0 %v5693
      %v5864 = vpop.f32.mrf.mxu0
      %v5865 = vadd.f32 0.0, %v5864
      %v5866 = vpop.f32.mrf.mxu0
      %v5867 = vpop.f32.mrf.mxu0
      %v5868 = vadd.f32 0.0, %v5867
      %v5869 = vpop.f32.mrf.mxu0
      %5870 = vmatprep.mubr.bf16.mxu0 0
      %5871 = vmatmul.mubr.bf16.gmra.mxu0 %v5696
      %v5872 = vpop.f32.mrf.mxu0
      %v5873 = vadd.f32 0.0, %v5872
      %v5874 = vpop.f32.mrf.mxu0
      %v5875 = vpop.f32.mrf.mxu0
      %v5876 = vadd.f32 0.0, %v5875
      %v5877 = vpop.f32.mrf.mxu0
      %5878 = vmatprep.mubr.bf16.mxu0 0
      %5879 = vmatmul.mubr.bf16.gmra.mxu0 %v5699
      %v5880 = vpop.f32.mrf.mxu0
      %v5881 = vadd.f32 0.0, %v5880
      %v5882 = vpop.f32.mrf.mxu0
      %v5883 = vpop.f32.mrf.mxu0
      %v5884 = vadd.f32 0.0, %v5883
      %v5885 = vpop.f32.mrf.mxu0
      %5886 = vmatprep.mubr.bf16.mxu0 0
      %5887 = vmatmul.mubr.bf16.gmra.mxu0 %v5702
      %v5888 = vpop.f32.mrf.mxu0
      %v5889 = vadd.f32 0.0, %v5888
      %v5890 = vpop.f32.mrf.mxu0
      %v5891 = vpop.f32.mrf.mxu0
      %v5892 = vadd.f32 0.0, %v5891
      %v5893 = vpop.f32.mrf.mxu0
      %5894 = vmatprep.mubr.bf16.mxu0 0
      %5895 = vmatmul.mubr.bf16.gmra.mxu0 %v5705
      %v5896 = vpop.f32.mrf.mxu0
      %v5897 = vadd.f32 0.0, %v5896
      %v5898 = vpop.f32.mrf.mxu0
      %v5899 = vpop.f32.mrf.mxu0
      %v5900 = vadd.f32 0.0, %v5899
      %v5901 = vpop.f32.mrf.mxu0
      %5902 = vmatprep.mubr.bf16.mxu0 0
      %5903 = vmatmul.mubr.bf16.gmra.mxu0 %v5708
      %v5904 = vpop.f32.mrf.mxu0
      %v5905 = vadd.f32 0.0, %v5904
      %v5906 = vpop.f32.mrf.mxu0
      %v5907 = vpop.f32.mrf.mxu0
      %v5908 = vpop.f32.mrf.mxu0
      %5909 = vdwg.mxu0
      %v5910 = vadd.f32 %v5475, %v5745
      %v5911 = vadd.f32 %v5476, %v5748
      %v5912 = vadd.f32 %v5477, %v5753
      %v5913 = vadd.f32 %v5478, %v5756
      %v5914 = vadd.f32 %v5479, %v5761
      %v5915 = vadd.f32 %v5480, %v5764
      %v5916 = vadd.f32 %v5481, %v5769
      %v5917 = vadd.f32 %v5482, %v5772
      %v5918 = vadd.f32 %v5483, %v5777
      %v5919 = vadd.f32 %v5484, %v5780
      %v5920 = vadd.f32 %v5485, %v5785
      %v5921 = vadd.f32 %v5486, %v5788
      %v5922 = vadd.f32 %v5487, %v5793
      %v5923 = vadd.f32 %v5488, %v5796
      %v5924 = vadd.f32 %v5489, %v5801
      %v5925 = vadd.f32 %v5490, %v5804
      %v5926 = vadd.f32 %v5491, %v5809
      %v5927 = vadd.f32 %v5492, %v5812
      %v5928 = vadd.f32 %v5493, %v5817
      %v5929 = vadd.f32 %v5494, %v5820
      %v5930 = vadd.f32 %v5495, %v5825
      %v5931 = vadd.f32 %v5496, %v5828
      %v5932 = vadd.f32 %v5497, %v5833
      %v5933 = vadd.f32 %v5498, %v5836
      %v5934 = vadd.f32 %v5499, %v5841
      %v5935 = vadd.f32 %v5500, %v5844
      %v5936 = vadd.f32 %v5501, %v5849
      %v5937 = vadd.f32 %v5502, %v5852
      %v5938 = vadd.f32 %v5503, %v5857
      %v5939 = vadd.f32 %v5504, %v5860
      %v5940 = vadd.f32 %v5505, %v5865
      %v5941 = vadd.f32 %v5506, %v5868
      %v5942 = vadd.f32 %v5507, %v5873
      %v5943 = vadd.f32 %v5508, %v5876
      %v5944 = vadd.f32 %v5509, %v5881
      %v5945 = vadd.f32 %v5510, %v5884
      %v5946 = vadd.f32 %v5511, %v5889
      %v5947 = vadd.f32 %v5512, %v5892
      %v5948 = vadd.f32 %v5513, %v5897
      %v5949 = vadd.f32 %v5514, %v5900
      %v5950 = vadd.f32 %v5515, %v5905
      %v5951 = vld [vmem:[%s6] sm:$0x1]
      %v5953 = vlaneseq
      %v5954 = vshrl.u32 %v5953, 7
      %v5955 = vsub.s32 0, %v5954
      %v5956 = vrot.slane %v5951, %v5955
      %v5958 = vmul.f32 %v5910, %v5956
      %v5959 = vmul.f32 %v5911, %v5956
      %v5960 = vmul.f32 %v5912, %v5956
      %v5961 = vmul.f32 %v5913, %v5956
      %v5962 = vmul.f32 %v5914, %v5956
      %v5963 = vmul.f32 %v5915, %v5956
      %v5964 = vmul.f32 %v5916, %v5956
      %v5965 = vmul.f32 %v5917, %v5956
      %v5966 = vmul.f32 %v5918, %v5956
      %v5967 = vmul.f32 %v5919, %v5956
      %v5968 = vmul.f32 %v5920, %v5956
      %v5969 = vmul.f32 %v5921, %v5956
      %v5970 = vmul.f32 %v5922, %v5956
      %v5971 = vmul.f32 %v5923, %v5956
      %v5972 = vmul.f32 %v5924, %v5956
      %v5973 = vmul.f32 %v5925, %v5956
      %v5974 = vmul.f32 %v5926, %v5956
      %v5975 = vmul.f32 %v5927, %v5956
      %v5976 = vmul.f32 %v5928, %v5956
      %v5977 = vmul.f32 %v5929, %v5956
      %v5978 = vmul.f32 %v5930, %v5956
      %v5979 = vmul.f32 %v5931, %v5956
      %v5980 = vmul.f32 %v5932, %v5956
      %v5981 = vmul.f32 %v5933, %v5956
      %v5982 = vmul.f32 %v5934, %v5956
      %v5983 = vmul.f32 %v5935, %v5956
      %v5984 = vmul.f32 %v5936, %v5956
      %v5985 = vmul.f32 %v5937, %v5956
      %v5986 = vmul.f32 %v5938, %v5956
      %v5987 = vmul.f32 %v5939, %v5956
      %v5988 = vmul.f32 %v5940, %v5956
      %v5989 = vmul.f32 %v5941, %v5956
      %v5990 = vmul.f32 %v5942, %v5956
      %v5991 = vmul.f32 %v5943, %v5956
      %v5992 = vmul.f32 %v5944, %v5956
      %v5993 = vmul.f32 %v5945, %v5956
      %v5994 = vmul.f32 %v5946, %v5956
      %v5995 = vmul.f32 %v5947, %v5956
      %v5996 = vmul.f32 %v5948, %v5956
      %v5997 = vmul.f32 %v5949, %v5956
      %v5998 = vmul.f32 %v5950, %v5956
      %v5999 = vld [vmem:[%s7] sm:$0x1]
      %v6001 = vlaneseq
      %v6002 = vshrl.u32 %v6001, 7
      %v6003 = vsub.s32 0, %v6002
      %v6004 = vrot.slane %v5999, %v6003
      %v6006 = vadd.f32 %v5958, %v6004
      %v6007 = vadd.f32 %v5959, %v6004
      %v6008 = vadd.f32 %v5960, %v6004
      %v6009 = vadd.f32 %v5961, %v6004
      %v6010 = vadd.f32 %v5962, %v6004
      %v6011 = vadd.f32 %v5963, %v6004
      %v6012 = vadd.f32 %v5964, %v6004
      %v6013 = vadd.f32 %v5965, %v6004
      %v6014 = vadd.f32 %v5966, %v6004
      %v6015 = vadd.f32 %v5967, %v6004
      %v6016 = vadd.f32 %v5968, %v6004
      %v6017 = vadd.f32 %v5969, %v6004
      %v6018 = vadd.f32 %v5970, %v6004
      %v6019 = vadd.f32 %v5971, %v6004
      %v6020 = vadd.f32 %v5972, %v6004
      %v6021 = vadd.f32 %v5973, %v6004
      %v6022 = vadd.f32 %v5974, %v6004
      %v6023 = vadd.f32 %v5975, %v6004
      %v6024 = vadd.f32 %v5976, %v6004
      %v6025 = vadd.f32 %v5977, %v6004
      %v6026 = vadd.f32 %v5978, %v6004
      %v6027 = vadd.f32 %v5979, %v6004
      %v6028 = vadd.f32 %v5980, %v6004
      %v6029 = vadd.f32 %v5981, %v6004
      %v6030 = vadd.f32 %v5982, %v6004
      %v6031 = vadd.f32 %v5983, %v6004
      %v6032 = vadd.f32 %v5984, %v6004
      %v6033 = vadd.f32 %v5985, %v6004
      %v6034 = vadd.f32 %v5986, %v6004
      %v6035 = vadd.f32 %v5987, %v6004
      %v6036 = vadd.f32 %v5988, %v6004
      %v6037 = vadd.f32 %v5989, %v6004
      %v6038 = vadd.f32 %v5990, %v6004
      %v6039 = vadd.f32 %v5991, %v6004
      %v6040 = vadd.f32 %v5992, %v6004
      %v6041 = vadd.f32 %v5993, %v6004
      %v6042 = vadd.f32 %v5994, %v6004
      %v6043 = vadd.f32 %v5995, %v6004
      %v6044 = vadd.f32 %v5996, %v6004
      %v6045 = vadd.f32 %v5997, %v6004
      %v6046 = vadd.f32 %v5998, %v6004
      %v6047 = vmax.f32 %v6006, 0.0
      %v6048 = vmax.f32 %v6007, 0.0
      %v6049 = vmax.f32 %v6008, 0.0
      %v6050 = vmax.f32 %v6009, 0.0
      %v6051 = vmax.f32 %v6010, 0.0
      %v6052 = vmax.f32 %v6011, 0.0
      %v6053 = vmax.f32 %v6012, 0.0
      %v6054 = vmax.f32 %v6013, 0.0
      %v6055 = vmax.f32 %v6014, 0.0
      %v6056 = vmax.f32 %v6015, 0.0
      %v6057 = vmax.f32 %v6016, 0.0
      %v6058 = vmax.f32 %v6017, 0.0
      %v6059 = vmax.f32 %v6018, 0.0
      %v6060 = vmax.f32 %v6019, 0.0
      %v6061 = vmax.f32 %v6020, 0.0
      %v6062 = vmax.f32 %v6021, 0.0
      %v6063 = vmax.f32 %v6022, 0.0
      %v6064 = vmax.f32 %v6023, 0.0
      %v6065 = vmax.f32 %v6024, 0.0
      %v6066 = vmax.f32 %v6025, 0.0
      %v6067 = vmax.f32 %v6026, 0.0
      %v6068 = vmax.f32 %v6027, 0.0
      %v6069 = vmax.f32 %v6028, 0.0
      %v6070 = vmax.f32 %v6029, 0.0
      %v6071 = vmax.f32 %v6030, 0.0
      %v6072 = vmax.f32 %v6031, 0.0
      %v6073 = vmax.f32 %v6032, 0.0
      %v6074 = vmax.f32 %v6033, 0.0
      %v6075 = vmax.f32 %v6034, 0.0
      %v6076 = vmax.f32 %v6035, 0.0
      %v6077 = vmax.f32 %v6036, 0.0
      %v6078 = vmax.f32 %v6037, 0.0
      %v6079 = vmax.f32 %v6038, 0.0
      %v6080 = vmax.f32 %v6039, 0.0
      %v6081 = vmax.f32 %v6040, 0.0
      %v6082 = vmax.f32 %v6041, 0.0
      %v6083 = vmax.f32 %v6042, 0.0
      %v6084 = vmax.f32 %v6043, 0.0
      %v6085 = vmax.f32 %v6044, 0.0
      %v6086 = vmax.f32 %v6045, 0.0
      %v6087 = vmax.f32 %v6046, 0.0
      %v6088 = vsel %vm1269, %v6047, 0.0
      %v6089 = vsel %vm1270, %v6048, 0.0
      %v6090 = vsel %vm1271, %v6049, 0.0
      %v6091 = vsel %vm1272, %v6050, 0.0
      %v6092 = vsel %vm1273, %v6051, 0.0
      %v6093 = vsel %vm1274, %v6052, 0.0
      %v6094 = vsel %vm1275, %v6053, 0.0
      %v6095 = vsel %vm1276, %v6054, 0.0
      %v6096 = vsel %vm1277, %v6055, 0.0
      %v6097 = vsel %vm1278, %v6056, 0.0
      %v6098 = vsel %vm1279, %v6057, 0.0
      %v6099 = vsel %vm1280, %v6058, 0.0
      %v6100 = vsel %vm1281, %v6059, 0.0
      %v6101 = vsel %vm1282, %v6060, 0.0
      %v6102 = vsel %vm1283, %v6061, 0.0
      %v6103 = vsel %vm1284, %v6062, 0.0
      %v6104 = vsel %vm1285, %v6063, 0.0
      %v6105 = vsel %vm1286, %v6064, 0.0
      %v6106 = vsel %vm1287, %v6065, 0.0
      %v6107 = vsel %vm1288, %v6066, 0.0
      %v6108 = vsel %vm1289, %v6067, 0.0
      %v6109 = vsel %vm1290, %v6068, 0.0
      %v6110 = vsel %vm1291, %v6069, 0.0
      %v6111 = vsel %vm1292, %v6070, 0.0
      %v6112 = vsel %vm1293, %v6071, 0.0
      %v6113 = vsel %vm1294, %v6072, 0.0
      %v6114 = vsel %vm1295, %v6073, 0.0
      %v6115 = vsel %vm1296, %v6074, 0.0
      %v6116 = vsel %vm1297, %v6075, 0.0
      %v6117 = vsel %vm1298, %v6076, 0.0
      %v6118 = vsel %vm1299, %v6077, 0.0
      %v6119 = vsel %vm1300, %v6078, 0.0
      %v6120 = vsel %vm1301, %v6079, 0.0
      %v6121 = vsel %vm1302, %v6080, 0.0
      %v6122 = vsel %vm1303, %v6081, 0.0
      %v6123 = vsel %vm1304, %v6082, 0.0
      %v6124 = vsel %vm1305, %v6083, 0.0
      %v6125 = vsel %vm1306, %v6084, 0.0
      %v6126 = vsel %vm1307, %v6085, 0.0
      %v6127 = vsel %vm1308, %v6086, 0.0
      %v6128 = vsel %vm1309, %v6087, 0.0
      %v6129 = vpack.c.bf16 %v6089, %v6088
      %v6130 = vpack.c.bf16 %v6091, %v6090
      %v6131 = vpack.c.bf16 %v6093, %v6092
      %v6132 = vpack.c.bf16 %v6095, %v6094
      %v6133 = vpack.c.bf16 %v6097, %v6096
      %v6134 = vpack.c.bf16 %v6099, %v6098
      %v6135 = vpack.c.bf16 %v6101, %v6100
      %v6136 = vpack.c.bf16 %v6103, %v6102
      %v6137 = vpack.c.bf16 %v6105, %v6104
      %v6138 = vpack.c.bf16 %v6107, %v6106
      %v6139 = vpack.c.bf16 %v6109, %v6108
      %v6140 = vpack.c.bf16 %v6111, %v6110
      %v6141 = vpack.c.bf16 %v6113, %v6112
      %v6142 = vpack.c.bf16 %v6115, %v6114
      %v6143 = vpack.c.bf16 %v6117, %v6116
      %v6144 = vpack.c.bf16 %v6119, %v6118
      %v6145 = vpack.c.bf16 %v6121, %v6120
      %v6146 = vpack.c.bf16 %v6123, %v6122
      %v6147 = vpack.c.bf16 %v6125, %v6124
      %v6148 = vpack.c.bf16 %v6127, %v6126
      %v6149 = vpack.c.bf16 %v6128, %v6128
      %v6171 = vunpack.c.l.b16 %v6129
      %v6172 = vunpack.c.h.b16 %v6129
      %v6173 = vunpack.c.l.b16 %v6130
      %v6174 = vunpack.c.h.b16 %v6130
      %v6175 = vunpack.c.l.b16 %v6131
      %v6176 = vunpack.c.h.b16 %v6131
      %v6177 = vunpack.c.l.b16 %v6132
      %v6178 = vunpack.c.h.b16 %v6132
      %v6179 = vunpack.c.l.b16 %v6133
      %v6180 = vunpack.c.h.b16 %v6133
      %v6181 = vunpack.c.l.b16 %v6134
      %v6182 = vunpack.c.h.b16 %v6134
      %v6183 = vunpack.c.l.b16 %v6135
      %v6184 = vunpack.c.h.b16 %v6135
      %v6185 = vunpack.c.l.b16 %v6136
      %v6186 = vunpack.c.h.b16 %v6136
      %v6187 = vunpack.c.l.b16 %v6137
      %v6188 = vunpack.c.h.b16 %v6137
      %v6189 = vunpack.c.l.b16 %v6138
      %v6190 = vunpack.c.h.b16 %v6138
      %v6191 = vunpack.c.l.b16 %v6139
      %v6192 = vunpack.c.h.b16 %v6139
      %v6193 = vunpack.c.l.b16 %v6140
      %v6194 = vunpack.c.h.b16 %v6140
      %v6195 = vunpack.c.l.b16 %v6141
      %v6196 = vunpack.c.h.b16 %v6141
      %v6197 = vunpack.c.l.b16 %v6142
      %v6198 = vunpack.c.h.b16 %v6142
      %v6199 = vunpack.c.l.b16 %v6143
      %v6200 = vunpack.c.h.b16 %v6143
      %v6201 = vunpack.c.l.b16 %v6144
      %v6202 = vunpack.c.h.b16 %v6144
      %v6203 = vunpack.c.l.b16 %v6145
      %v6204 = vunpack.c.h.b16 %v6145
      %v6205 = vunpack.c.l.b16 %v6146
      %v6206 = vunpack.c.h.b16 %v6146
      %v6207 = vunpack.c.l.b16 %v6147
      %v6208 = vunpack.c.h.b16 %v6147
      %v6209 = vunpack.c.l.b16 %v6148
      %v6210 = vunpack.c.h.b16 %v6148
      %v6211 = vunpack.c.l.b16 %v6149
      %v6212 = vpack.c.b16 %v6171, %v6171
      %v6213 = vpack.c.b16 %v6172, %v6172
      %v6214 = vpack.c.b16 %v6173, %v6173
      %v6215 = vpack.c.b16 %v6174, %v6174
      %v6216 = vpack.c.b16 %v6175, %v6175
      %v6217 = vpack.c.b16 %v6176, %v6176
      %v6218 = vpack.c.b16 %v6177, %v6177
      %v6219 = vpack.c.b16 %v6178, %v6178
      %v6220 = vpack.c.b16 %v6179, %v6179
      %v6221 = vpack.c.b16 %v6180, %v6180
      %v6222 = vpack.c.b16 %v6181, %v6181
      %v6223 = vpack.c.b16 %v6182, %v6182
      %v6224 = vpack.c.b16 %v6183, %v6183
      %v6225 = vpack.c.b16 %v6184, %v6184
      %v6226 = vpack.c.b16 %v6185, %v6185
      %v6227 = vpack.c.b16 %v6186, %v6186
      %v6228 = vpack.c.b16 %v6187, %v6187
      %v6229 = vpack.c.b16 %v6188, %v6188
      %v6230 = vpack.c.b16 %v6189, %v6189
      %v6231 = vpack.c.b16 %v6190, %v6190
      %v6232 = vpack.c.b16 %v6191, %v6191
      %v6233 = vpack.c.b16 %v6192, %v6192
      %v6234 = vpack.c.b16 %v6193, %v6193
      %v6235 = vpack.c.b16 %v6194, %v6194
      %v6236 = vpack.c.b16 %v6195, %v6195
      %v6237 = vpack.c.b16 %v6196, %v6196
      %v6238 = vpack.c.b16 %v6197, %v6197
      %v6239 = vpack.c.b16 %v6198, %v6198
      %v6240 = vpack.c.b16 %v6199, %v6199
      %v6241 = vpack.c.b16 %v6200, %v6200
      %v6242 = vpack.c.b16 %v6201, %v6201
      %v6243 = vpack.c.b16 %v6202, %v6202
      %v6244 = vpack.c.b16 %v6203, %v6203
      %v6245 = vpack.c.b16 %v6204, %v6204
      %v6246 = vpack.c.b16 %v6205, %v6205
      %v6247 = vpack.c.b16 %v6206, %v6206
      %v6248 = vpack.c.b16 %v6207, %v6207
      %v6249 = vpack.c.b16 %v6208, %v6208
      %v6250 = vpack.c.b16 %v6209, %v6209
      %v6251 = vpack.c.b16 %v6210, %v6210
      %v6252 = vpack.c.b16 %v6211, %v6211
      %6294 = vst.msk [vmem:[#allocation2 + $0x10] sm:$0xf] %vm524, %v6212
      %6295 = vst.msk [vmem:[#allocation2 + $0x14] sm:$0xf] %vm524, %v6213
      %6296 = vst.msk [vmem:[#allocation2 + $0x18] sm:$0xf] %vm524, %v6214
      %6297 = vst.msk [vmem:[#allocation2 + $0x1c] sm:$0xf] %vm524, %v6215
      %6298 = vst.msk [vmem:[#allocation2 + $0x20] sm:$0xf] %vm524, %v6216
      %6299 = vst.msk [vmem:[#allocation2 + $0x24] sm:$0xf] %vm524, %v6217
      %6300 = vst.msk [vmem:[#allocation2 + $0x28] sm:$0xf] %vm524, %v6218
      %6301 = vst.msk [vmem:[#allocation2 + $0x2c] sm:$0xf] %vm524, %v6219
      %6302 = vst.msk [vmem:[#allocation2 + $0x30] sm:$0xf] %vm524, %v6220
      %6303 = vst.msk [vmem:[#allocation2 + $0x34] sm:$0xf] %vm524, %v6221
      %6304 = vst.msk [vmem:[#allocation2 + $0x38] sm:$0xf] %vm524, %v6222
      %6305 = vst.msk [vmem:[#allocation2 + $0x3c] sm:$0xf] %vm524, %v6223
      %6306 = vst.msk [vmem:[#allocation2 + $0x40] sm:$0xf] %vm524, %v6224
      %6307 = vst.msk [vmem:[#allocation2 + $0x44] sm:$0xf] %vm524, %v6225
      %6308 = vst.msk [vmem:[#allocation2 + $0x48] sm:$0xf] %vm524, %v6226
      %6309 = vst.msk [vmem:[#allocation2 + $0x4c] sm:$0xf] %vm524, %v6227
      %6310 = vst.msk [vmem:[#allocation2 + $0x50] sm:$0xf] %vm524, %v6228
      %6311 = vst.msk [vmem:[#allocation2 + $0x54] sm:$0xf] %vm524, %v6229
      %6312 = vst.msk [vmem:[#allocation2 + $0x58] sm:$0xf] %vm524, %v6230
      %6313 = vst.msk [vmem:[#allocation2 + $0x5c] sm:$0xf] %vm524, %v6231
      %6314 = vst.msk [vmem:[#allocation2 + $0x60] sm:$0xf] %vm524, %v6232
      %6315 = vst.msk [vmem:[#allocation2 + $0x64] sm:$0xf] %vm524, %v6233
      %6316 = vst.msk [vmem:[#allocation2 + $0x68] sm:$0xf] %vm524, %v6234
      %6317 = vst.msk [vmem:[#allocation2 + $0x6c] sm:$0xf] %vm524, %v6235
      %6318 = vst.msk [vmem:[#allocation2 + $0x70] sm:$0xf] %vm524, %v6236
      %6319 = vst.msk [vmem:[#allocation2 + $0x74] sm:$0xf] %vm524, %v6237
      %6320 = vst.msk [vmem:[#allocation2 + $0x78] sm:$0xf] %vm524, %v6238
      %6321 = vst.msk [vmem:[#allocation2 + $0x7c] sm:$0xf] %vm524, %v6239
      %6322 = vst.msk [vmem:[#allocation2 + $0x80] sm:$0xf] %vm524, %v6240
      %6323 = vst.msk [vmem:[#allocation2 + $0x84] sm:$0xf] %vm524, %v6241
      %6324 = vst.msk [vmem:[#allocation2 + $0x88] sm:$0xf] %vm524, %v6242
      %6325 = vst.msk [vmem:[#allocation2 + $0x8c] sm:$0xf] %vm524, %v6243
      %6326 = vst.msk [vmem:[#allocation2 + $0x90] sm:$0xf] %vm524, %v6244
      %6327 = vst.msk [vmem:[#allocation2 + $0x94] sm:$0xf] %vm524, %v6245
      %6328 = vst.msk [vmem:[#allocation2 + $0x98] sm:$0xf] %vm524, %v6246
      %6329 = vst.msk [vmem:[#allocation2 + $0x9c] sm:$0xf] %vm524, %v6247
      %6330 = vst.msk [vmem:[#allocation2 + $0xa0] sm:$0xf] %vm524, %v6248
      %6331 = vst.msk [vmem:[#allocation2 + $0xa4] sm:$0xf] %vm524, %v6249
      %6332 = vst.msk [vmem:[#allocation2 + $0xa8] sm:$0xf] %vm524, %v6250
      %6333 = vst.msk [vmem:[#allocation2 + $0xac] sm:$0xf] %vm524, %v6251
      %6334 = vst.msk [vmem:[#allocation2 + $0xb0] sm:$0x3] %vm534, %v6252
      %v6335 = vld [vmem:[#allocation2 + $0x4] sm:$0xc]
      %v6336 = vld [vmem:[#allocation2 + $0x8] sm:$0xf]
      %v6337 = vld [vmem:[#allocation2 + $0xc] sm:$0xf]
      %v6338 = vld [vmem:[#allocation2 + $0x10] sm:$0xf]
      %v6339 = vld [vmem:[#allocation2 + $0x14] sm:$0xf]
      %v6340 = vld [vmem:[#allocation2 + $0x18] sm:$0xf]
      %v6341 = vld [vmem:[#allocation2 + $0x1c] sm:$0xf]
      %v6342 = vld [vmem:[#allocation2 + $0x20] sm:$0xf]
      %v6343 = vld [vmem:[#allocation2 + $0x24] sm:$0xf]
      %v6344 = vld [vmem:[#allocation2 + $0x28] sm:$0xf]
      %v6345 = vld [vmem:[#allocation2 + $0x2c] sm:$0xf]
      %v6346 = vld [vmem:[#allocation2 + $0x30] sm:$0xf]
      %v6347 = vld [vmem:[#allocation2 + $0x34] sm:$0xf]
      %v6348 = vld [vmem:[#allocation2 + $0x38] sm:$0xf]
      %v6349 = vld [vmem:[#allocation2 + $0x3c] sm:$0xf]
      %v6350 = vld [vmem:[#allocation2 + $0x40] sm:$0xf]
      %v6351 = vld [vmem:[#allocation2 + $0x44] sm:$0xf]
      %v6352 = vld [vmem:[#allocation2 + $0x48] sm:$0xf]
      %v6353 = vld [vmem:[#allocation2 + $0x4c] sm:$0xf]
      %v6354 = vld [vmem:[#allocation2 + $0x50] sm:$0xf]
      %v6355 = vld [vmem:[#allocation2 + $0x54] sm:$0xf]
      %v6356 = vld [vmem:[#allocation2 + $0x58] sm:$0xf]
      %v6357 = vld [vmem:[#allocation2 + $0x5c] sm:$0xf]
      %v6358 = vld [vmem:[#allocation2 + $0x60] sm:$0xf]
      %v6359 = vld [vmem:[#allocation2 + $0x64] sm:$0xf]
      %v6360 = vld [vmem:[#allocation2 + $0x68] sm:$0xf]
      %v6361 = vld [vmem:[#allocation2 + $0x6c] sm:$0xf]
      %v6362 = vld [vmem:[#allocation2 + $0x70] sm:$0xf]
      %v6363 = vld [vmem:[#allocation2 + $0x74] sm:$0xf]
      %v6364 = vld [vmem:[#allocation2 + $0x78] sm:$0xf]
      %v6365 = vld [vmem:[#allocation2 + $0x7c] sm:$0xf]
      %v6366 = vld [vmem:[#allocation2 + $0x80] sm:$0xf]
      %v6367 = vld [vmem:[#allocation2 + $0x84] sm:$0xf]
      %v6368 = vld [vmem:[#allocation2 + $0x88] sm:$0xf]
      %v6369 = vld [vmem:[#allocation2 + $0x8c] sm:$0xf]
      %v6370 = vld [vmem:[#allocation2 + $0x90] sm:$0xf]
      %v6371 = vld [vmem:[#allocation2 + $0x94] sm:$0xf]
      %v6372 = vld [vmem:[#allocation2 + $0x98] sm:$0xf]
      %v6373 = vld [vmem:[#allocation2 + $0x9c] sm:$0xf]
      %v6374 = vld [vmem:[#allocation2 + $0xa0] sm:$0xf]
      %v6375 = vld [vmem:[#allocation2 + $0xa4] sm:$0xf]
      %v6376 = vld [vmem:[#allocation2 + $0xa8] sm:$0x1]
      %v6377 = vld [vmem:[%s8] sm:$0xf]
      %v6378 = vld [vmem:[%s8 + $0x4] sm:$0xf]
      %v6379 = vld [vmem:[%s8 + $0x8] sm:$0xf]
      %v6380 = vld [vmem:[%s8 + $0xc] sm:$0xf]
      %v6381 = vld [vmem:[%s8 + $0x10] sm:$0xf]
      %v6382 = vld [vmem:[%s8 + $0x14] sm:$0xf]
      %v6383 = vld [vmem:[%s8 + $0x18] sm:$0xf]
      %v6384 = vld [vmem:[%s8 + $0x1c] sm:$0xf]
      %v6385 = vld [vmem:[#allocation2 + $0x4] sm:$0x8]
      %s6386 = scalar_lea.vmem %s8, 32
      %v6387 = vld [vmem:[%s6386] sm:$0xf]
      %v6388 = vld [vmem:[%s6386 + $0x4] sm:$0xf]
      %v6389 = vld [vmem:[%s6386 + $0x8] sm:$0xf]
      %v6390 = vld [vmem:[%s6386 + $0xc] sm:$0xf]
      %v6391 = vld [vmem:[%s6386 + $0x10] sm:$0xf]
      %v6392 = vld [vmem:[%s6386 + $0x14] sm:$0xf]
      %v6393 = vld [vmem:[%s6386 + $0x18] sm:$0xf]
      %v6394 = vld [vmem:[%s6386 + $0x1c] sm:$0xf]
      %v6437 = vunpack.c.l.b16 %v6385
      %v6438 = vunpack.c.l.b16 %v6336
      %v6439 = vunpack.c.l.b16 %v6337
      %v6440 = vunpack.c.l.b16 %v6338
      %v6441 = vunpack.c.l.b16 %v6339
      %v6442 = vunpack.c.l.b16 %v6340
      %v6443 = vunpack.c.l.b16 %v6341
      %v6444 = vunpack.c.l.b16 %v6342
      %v6445 = vunpack.c.l.b16 %v6343
      %v6446 = vunpack.c.l.b16 %v6344
      %v6447 = vunpack.c.l.b16 %v6345
      %v6448 = vunpack.c.l.b16 %v6346
      %v6449 = vunpack.c.l.b16 %v6347
      %v6450 = vunpack.c.l.b16 %v6348
      %v6451 = vunpack.c.l.b16 %v6349
      %v6452 = vunpack.c.l.b16 %v6350
      %v6453 = vunpack.c.l.b16 %v6351
      %v6454 = vunpack.c.l.b16 %v6352
      %v6455 = vunpack.c.l.b16 %v6353
      %v6456 = vunpack.c.l.b16 %v6354
      %v6457 = vunpack.c.l.b16 %v6355
      %v6458 = vunpack.c.l.b16 %v6356
      %v6459 = vunpack.c.l.b16 %v6357
      %v6460 = vunpack.c.l.b16 %v6358
      %v6461 = vunpack.c.l.b16 %v6359
      %v6462 = vunpack.c.l.b16 %v6360
      %v6463 = vunpack.c.l.b16 %v6361
      %v6464 = vunpack.c.l.b16 %v6362
      %v6465 = vunpack.c.l.b16 %v6363
      %v6466 = vunpack.c.l.b16 %v6364
      %v6467 = vunpack.c.l.b16 %v6365
      %v6468 = vunpack.c.l.b16 %v6366
      %v6469 = vunpack.c.l.b16 %v6367
      %v6470 = vunpack.c.l.b16 %v6368
      %v6471 = vunpack.c.l.b16 %v6369
      %v6472 = vunpack.c.l.b16 %v6370
      %v6473 = vunpack.c.l.b16 %v6371
      %v6474 = vunpack.c.l.b16 %v6372
      %v6475 = vunpack.c.l.b16 %v6373
      %v6476 = vunpack.c.l.b16 %v6374
      %v6477 = vunpack.c.l.b16 %v6375
      %v6478 = vunpack.c.l.b16 %v6376
      %v6479 = vpack.c.b16 %v6438, %v6437
      %v6480 = vpack.c.b16 %v6440, %v6439
      %v6481 = vpack.c.b16 %v6442, %v6441
      %v6482 = vpack.c.b16 %v6444, %v6443
      %v6483 = vpack.c.b16 %v6446, %v6445
      %v6484 = vpack.c.b16 %v6448, %v6447
      %v6485 = vpack.c.b16 %v6450, %v6449
      %v6486 = vpack.c.b16 %v6452, %v6451
      %v6487 = vpack.c.b16 %v6454, %v6453
      %v6488 = vpack.c.b16 %v6456, %v6455
      %v6489 = vpack.c.b16 %v6458, %v6457
      %v6490 = vpack.c.b16 %v6460, %v6459
      %v6491 = vpack.c.b16 %v6462, %v6461
      %v6492 = vpack.c.b16 %v6464, %v6463
      %v6493 = vpack.c.b16 %v6466, %v6465
      %v6494 = vpack.c.b16 %v6468, %v6467
      %v6495 = vpack.c.b16 %v6470, %v6469
      %v6496 = vpack.c.b16 %v6472, %v6471
      %v6497 = vpack.c.b16 %v6474, %v6473
      %v6498 = vpack.c.b16 %v6476, %v6475
      %v6499 = vpack.c.b16 %v6478, %v6477
      %v6500 = vrot.slane %v6479, 3
      %v6501 = vrot.slane %v6480, 3
      %v6502 = vsel %vm1722, %v6500, %v6501
      %v6503 = vrot.slane %v6481, 3
      %v6504 = vsel %vm1722, %v6501, %v6503
      %v6505 = vrot.slane %v6482, 3
      %v6506 = vsel %vm1722, %v6503, %v6505
      %v6507 = vrot.slane %v6483, 3
      %v6508 = vsel %vm1722, %v6505, %v6507
      %v6509 = vrot.slane %v6484, 3
      %v6510 = vsel %vm1722, %v6507, %v6509
      %v6511 = vrot.slane %v6485, 3
      %v6512 = vsel %vm1722, %v6509, %v6511
      %v6513 = vrot.slane %v6486, 3
      %v6514 = vsel %vm1722, %v6511, %v6513
      %v6515 = vrot.slane %v6487, 3
      %v6516 = vsel %vm1722, %v6513, %v6515
      %v6517 = vrot.slane %v6488, 3
      %v6518 = vsel %vm1722, %v6515, %v6517
      %v6519 = vrot.slane %v6489, 3
      %v6520 = vsel %vm1722, %v6517, %v6519
      %v6521 = vrot.slane %v6490, 3
      %v6522 = vsel %vm1722, %v6519, %v6521
      %v6523 = vrot.slane %v6491, 3
      %v6524 = vsel %vm1722, %v6521, %v6523
      %v6525 = vrot.slane %v6492, 3
      %v6526 = vsel %vm1722, %v6523, %v6525
      %v6527 = vrot.slane %v6493, 3
      %v6528 = vsel %vm1722, %v6525, %v6527
      %v6529 = vrot.slane %v6494, 3
      %v6530 = vsel %vm1722, %v6527, %v6529
      %v6531 = vrot.slane %v6495, 3
      %v6532 = vsel %vm1722, %v6529, %v6531
      %v6533 = vrot.slane %v6496, 3
      %v6534 = vsel %vm1722, %v6531, %v6533
      %v6535 = vrot.slane %v6497, 3
      %v6536 = vsel %vm1722, %v6533, %v6535
      %v6537 = vrot.slane %v6498, 3
      %v6538 = vsel %vm1722, %v6535, %v6537
      %v6539 = vrot.slane %v6499, 3
      %v6540 = vsel %vm1722, %v6537, %v6539
      %v6549 = vunpack.c.l.b16 %v6387
      %v6550 = vunpack.c.l.b16 %v6388
      %v6551 = vunpack.c.l.b16 %v6389
      %v6552 = vunpack.c.l.b16 %v6390
      %v6553 = vunpack.c.l.b16 %v6391
      %v6554 = vunpack.c.l.b16 %v6392
      %v6555 = vunpack.c.l.b16 %v6393
      %v6556 = vunpack.c.l.b16 %v6394
      %v6557 = vpack.c.b16 %v6550, %v6549
      %v6558 = vpack.c.b16 %v6552, %v6551
      %v6559 = vpack.c.b16 %v6554, %v6553
      %v6560 = vpack.c.b16 %v6556, %v6555
      %v6566 = vsel %vm1788, %v6502, 0
      %v6569 = vsel %vm1788, %v6504, 0
      %v6572 = vsel %vm1788, %v6506, 0
      %v6575 = vsel %vm1788, %v6508, 0
      %v6578 = vsel %vm1788, %v6510, 0
      %v6581 = vsel %vm1788, %v6512, 0
      %v6584 = vsel %vm1788, %v6514, 0
      %v6587 = vsel %vm1788, %v6516, 0
      %v6590 = vsel %vm1788, %v6518, 0
      %v6593 = vsel %vm1788, %v6520, 0
      %v6596 = vsel %vm1788, %v6522, 0
      %v6599 = vsel %vm1788, %v6524, 0
      %v6602 = vsel %vm1788, %v6526, 0
      %v6605 = vsel %vm1788, %v6528, 0
      %v6608 = vsel %vm1788, %v6530, 0
      %v6611 = vsel %vm1788, %v6532, 0
      %v6614 = vsel %vm1788, %v6534, 0
      %v6617 = vsel %vm1788, %v6536, 0
      %v6620 = vsel %vm1788, %v6538, 0
      %v6623 = vsel %vm1788, %v6540, 0
      %v6626 = vsel %vm1788, %v6539, 0
      %6628 = vmatprep.subr.bf16.mxu0 0
      %6629 = vmatpush1.bf16.msra.mxu0 0
      %6630 = vmatprep.subr.bf16.mxu0 0
      %6631 = vmatpush1.bf16.msra.mxu0 0
      %6632 = vmatprep.subr.bf16.mxu0 0
      %6633 = vmatpush1.bf16.msra.mxu0 0
      %6634 = vmatprep.subr.bf16.mxu0 0
      %6635 = vmatpush1.bf16.msra.mxu0 0
      %6636 = vmatprep.subr.bf16.mxu0 0
      %6637 = vmatpush1.bf16.msra.mxu0 %v6560
      %6638 = vmatprep.subr.bf16.mxu0 0
      %6639 = vmatpush1.bf16.msra.mxu0 %v6559
      %6640 = vmatprep.subr.bf16.mxu0 0
      %6641 = vmatpush1.bf16.msra.mxu0 %v6558
      %6642 = vmatprep.subr.bf16.mxu0 0
      %6643 = vmatpush1.bf16.msra.mxu0 %v6557
      %6644 = vmatprep.subr.bf16.mxu0 0
      %6645 = vmatpush2.bf16.msra.mxu0 0
      %6646 = vmatprep.subr.bf16.mxu0 0
      %6647 = vmatpush2.bf16.msra.mxu0 0
      %6648 = vmatprep.subr.bf16.mxu0 0
      %6649 = vmatpush2.bf16.msra.mxu0 0
      %6650 = vmatprep.subr.bf16.mxu0 0
      %6651 = vmatpush2.bf16.msra.mxu0 0
      %6652 = vmatprep.subr.bf16.mxu0 0
      %6653 = vmatpush2.bf16.msra.mxu0 0
      %6654 = vmatprep.subr.bf16.mxu0 0
      %6655 = vmatpush2.bf16.msra.mxu0 0
      %6656 = vmatprep.subr.bf16.mxu0 0
      %6657 = vmatpush2.bf16.msra.mxu0 0
      %6658 = vmatprep.subr.bf16.mxu0 0
      %6659 = vmatpush2.bf16.msra.mxu0 0
      %6660 = vmatprep.mubr.bf16.mxu0 0
      %6661 = vmatmul.mubr.bf16.gmra.mxu0 %v6566
      %v6662 = vpop.f32.mrf.mxu0
      %v6663 = vadd.f32 0.0, %v6662
      %v6664 = vpop.f32.mrf.mxu0
      %v6665 = vpop.f32.mrf.mxu0
      %v6666 = vadd.f32 0.0, %v6665
      %v6667 = vpop.f32.mrf.mxu0
      %6668 = vmatprep.mubr.bf16.mxu0 0
      %6669 = vmatmul.mubr.bf16.gmra.mxu0 %v6569
      %v6670 = vpop.f32.mrf.mxu0
      %v6671 = vadd.f32 0.0, %v6670
      %v6672 = vpop.f32.mrf.mxu0
      %v6673 = vpop.f32.mrf.mxu0
      %v6674 = vadd.f32 0.0, %v6673
      %v6675 = vpop.f32.mrf.mxu0
      %6676 = vmatprep.mubr.bf16.mxu0 0
      %6677 = vmatmul.mubr.bf16.gmra.mxu0 %v6572
      %v6678 = vpop.f32.mrf.mxu0
      %v6679 = vadd.f32 0.0, %v6678
      %v6680 = vpop.f32.mrf.mxu0
      %v6681 = vpop.f32.mrf.mxu0
      %v6682 = vadd.f32 0.0, %v6681
      %v6683 = vpop.f32.mrf.mxu0
      %6684 = vmatprep.mubr.bf16.mxu0 0
      %6685 = vmatmul.mubr.bf16.gmra.mxu0 %v6575
      %v6686 = vpop.f32.mrf.mxu0
      %v6687 = vadd.f32 0.0, %v6686
      %v6688 = vpop.f32.mrf.mxu0
      %v6689 = vpop.f32.mrf.mxu0
      %v6690 = vadd.f32 0.0, %v6689
      %v6691 = vpop.f32.mrf.mxu0
      %6692 = vmatprep.mubr.bf16.mxu0 0
      %6693 = vmatmul.mubr.bf16.gmra.mxu0 %v6578
      %v6694 = vpop.f32.mrf.mxu0
      %v6695 = vadd.f32 0.0, %v6694
      %v6696 = vpop.f32.mrf.mxu0
      %v6697 = vpop.f32.mrf.mxu0
      %v6698 = vadd.f32 0.0, %v6697
      %v6699 = vpop.f32.mrf.mxu0
      %6700 = vmatprep.mubr.bf16.mxu0 0
      %6701 = vmatmul.mubr.bf16.gmra.mxu0 %v6581
      %v6702 = vpop.f32.mrf.mxu0
      %v6703 = vadd.f32 0.0, %v6702
      %v6704 = vpop.f32.mrf.mxu0
      %v6705 = vpop.f32.mrf.mxu0
      %v6706 = vadd.f32 0.0, %v6705
      %v6707 = vpop.f32.mrf.mxu0
      %6708 = vmatprep.mubr.bf16.mxu0 0
      %6709 = vmatmul.mubr.bf16.gmra.mxu0 %v6584
      %v6710 = vpop.f32.mrf.mxu0
      %v6711 = vadd.f32 0.0, %v6710
      %v6712 = vpop.f32.mrf.mxu0
      %v6713 = vpop.f32.mrf.mxu0
      %v6714 = vadd.f32 0.0, %v6713
      %v6715 = vpop.f32.mrf.mxu0
      %6716 = vmatprep.mubr.bf16.mxu0 0
      %6717 = vmatmul.mubr.bf16.gmra.mxu0 %v6587
      %v6718 = vpop.f32.mrf.mxu0
      %v6719 = vadd.f32 0.0, %v6718
      %v6720 = vpop.f32.mrf.mxu0
      %v6721 = vpop.f32.mrf.mxu0
      %v6722 = vadd.f32 0.0, %v6721
      %v6723 = vpop.f32.mrf.mxu0
      %6724 = vmatprep.mubr.bf16.mxu0 0
      %6725 = vmatmul.mubr.bf16.gmra.mxu0 %v6590
      %v6726 = vpop.f32.mrf.mxu0
      %v6727 = vadd.f32 0.0, %v6726
      %v6728 = vpop.f32.mrf.mxu0
      %v6729 = vpop.f32.mrf.mxu0
      %v6730 = vadd.f32 0.0, %v6729
      %v6731 = vpop.f32.mrf.mxu0
      %6732 = vmatprep.mubr.bf16.mxu0 0
      %6733 = vmatmul.mubr.bf16.gmra.mxu0 %v6593
      %v6734 = vpop.f32.mrf.mxu0
      %v6735 = vadd.f32 0.0, %v6734
      %v6736 = vpop.f32.mrf.mxu0
      %v6737 = vpop.f32.mrf.mxu0
      %v6738 = vadd.f32 0.0, %v6737
      %v6739 = vpop.f32.mrf.mxu0
      %6740 = vmatprep.mubr.bf16.mxu0 0
      %6741 = vmatmul.mubr.bf16.gmra.mxu0 %v6596
      %v6742 = vpop.f32.mrf.mxu0
      %v6743 = vadd.f32 0.0, %v6742
      %v6744 = vpop.f32.mrf.mxu0
      %v6745 = vpop.f32.mrf.mxu0
      %v6746 = vadd.f32 0.0, %v6745
      %v6747 = vpop.f32.mrf.mxu0
      %6748 = vmatprep.mubr.bf16.mxu0 0
      %6749 = vmatmul.mubr.bf16.gmra.mxu0 %v6599
      %v6750 = vpop.f32.mrf.mxu0
      %v6751 = vadd.f32 0.0, %v6750
      %v6752 = vpop.f32.mrf.mxu0
      %v6753 = vpop.f32.mrf.mxu0
      %v6754 = vadd.f32 0.0, %v6753
      %v6755 = vpop.f32.mrf.mxu0
      %6756 = vmatprep.mubr.bf16.mxu0 0
      %6757 = vmatmul.mubr.bf16.gmra.mxu0 %v6602
      %v6758 = vpop.f32.mrf.mxu0
      %v6759 = vadd.f32 0.0, %v6758
      %v6760 = vpop.f32.mrf.mxu0
      %v6761 = vpop.f32.mrf.mxu0
      %v6762 = vadd.f32 0.0, %v6761
      %v6763 = vpop.f32.mrf.mxu0
      %6764 = vmatprep.mubr.bf16.mxu0 0
      %6765 = vmatmul.mubr.bf16.gmra.mxu0 %v6605
      %v6766 = vpop.f32.mrf.mxu0
      %v6767 = vadd.f32 0.0, %v6766
      %v6768 = vpop.f32.mrf.mxu0
      %v6769 = vpop.f32.mrf.mxu0
      %v6770 = vadd.f32 0.0, %v6769
      %v6771 = vpop.f32.mrf.mxu0
      %6772 = vmatprep.mubr.bf16.mxu0 0
      %6773 = vmatmul.mubr.bf16.gmra.mxu0 %v6608
      %v6774 = vpop.f32.mrf.mxu0
      %v6775 = vadd.f32 0.0, %v6774
      %v6776 = vpop.f32.mrf.mxu0
      %v6777 = vpop.f32.mrf.mxu0
      %v6778 = vadd.f32 0.0, %v6777
      %v6779 = vpop.f32.mrf.mxu0
      %6780 = vmatprep.mubr.bf16.mxu0 0
      %6781 = vmatmul.mubr.bf16.gmra.mxu0 %v6611
      %v6782 = vpop.f32.mrf.mxu0
      %v6783 = vadd.f32 0.0, %v6782
      %v6784 = vpop.f32.mrf.mxu0
      %v6785 = vpop.f32.mrf.mxu0
      %v6786 = vadd.f32 0.0, %v6785
      %v6787 = vpop.f32.mrf.mxu0
      %6788 = vmatprep.mubr.bf16.mxu0 0
      %6789 = vmatmul.mubr.bf16.gmra.mxu0 %v6614
      %v6790 = vpop.f32.mrf.mxu0
      %v6791 = vadd.f32 0.0, %v6790
      %v6792 = vpop.f32.mrf.mxu0
      %v6793 = vpop.f32.mrf.mxu0
      %v6794 = vadd.f32 0.0, %v6793
      %v6795 = vpop.f32.mrf.mxu0
      %6796 = vmatprep.mubr.bf16.mxu0 0
      %6797 = vmatmul.mubr.bf16.gmra.mxu0 %v6617
      %v6798 = vpop.f32.mrf.mxu0
      %v6799 = vadd.f32 0.0, %v6798
      %v6800 = vpop.f32.mrf.mxu0
      %v6801 = vpop.f32.mrf.mxu0
      %v6802 = vadd.f32 0.0, %v6801
      %v6803 = vpop.f32.mrf.mxu0
      %6804 = vmatprep.mubr.bf16.mxu0 0
      %6805 = vmatmul.mubr.bf16.gmra.mxu0 %v6620
      %v6806 = vpop.f32.mrf.mxu0
      %v6807 = vadd.f32 0.0, %v6806
      %v6808 = vpop.f32.mrf.mxu0
      %v6809 = vpop.f32.mrf.mxu0
      %v6810 = vadd.f32 0.0, %v6809
      %v6811 = vpop.f32.mrf.mxu0
      %6812 = vmatprep.mubr.bf16.mxu0 0
      %6813 = vmatmul.mubr.bf16.gmra.mxu0 %v6623
      %v6814 = vpop.f32.mrf.mxu0
      %v6815 = vadd.f32 0.0, %v6814
      %v6816 = vpop.f32.mrf.mxu0
      %v6817 = vpop.f32.mrf.mxu0
      %v6818 = vadd.f32 0.0, %v6817
      %v6819 = vpop.f32.mrf.mxu0
      %6820 = vmatprep.mubr.bf16.mxu0 0
      %6821 = vmatmul.mubr.bf16.gmra.mxu0 %v6626
      %v6822 = vpop.f32.mrf.mxu0
      %v6823 = vadd.f32 0.0, %v6822
      %v6824 = vpop.f32.mrf.mxu0
      %v6825 = vpop.f32.mrf.mxu0
      %v6826 = vpop.f32.mrf.mxu0
      %6827 = vdwg.mxu0
      %v6829 = vunpack.c.l.b16 %v6335
      %v6830 = vpack.c.b16 %v6438, %v6829
      %v6832 = vshrl.u32 %v6830, 16
      %v6834 = vrot.slane %v6832, 2
      %v6835 = vshll.u32 %v6830, 16
      %v6837 = vrot.slane %v6835, 3
      %v6838 = vor.u32 %v6834, %v6837
      %v6840 = vshrl.u32 %v6480, 16
      %v6842 = vrot.slane %v6840, 2
      %v6843 = vshll.u32 %v6480, 16
      %v6845 = vrot.slane %v6843, 3
      %v6846 = vor.u32 %v6842, %v6845
      %v6847 = vsel %vm2055, %v6838, %v6846
      %v6849 = vshrl.u32 %v6481, 16
      %v6851 = vrot.slane %v6849, 2
      %v6852 = vshll.u32 %v6481, 16
      %v6854 = vrot.slane %v6852, 3
      %v6855 = vor.u32 %v6851, %v6854
      %v6856 = vsel %vm2055, %v6846, %v6855
      %v6858 = vshrl.u32 %v6482, 16
      %v6860 = vrot.slane %v6858, 2
      %v6861 = vshll.u32 %v6482, 16
      %v6863 = vrot.slane %v6861, 3
      %v6864 = vor.u32 %v6860, %v6863
      %v6865 = vsel %vm2055, %v6855, %v6864
      %v6867 = vshrl.u32 %v6483, 16
      %v6869 = vrot.slane %v6867, 2
      %v6870 = vshll.u32 %v6483, 16
      %v6872 = vrot.slane %v6870, 3
      %v6873 = vor.u32 %v6869, %v6872
      %v6874 = vsel %vm2055, %v6864, %v6873
      %v6876 = vshrl.u32 %v6484, 16
      %v6878 = vrot.slane %v6876, 2
      %v6879 = vshll.u32 %v6484, 16
      %v6881 = vrot.slane %v6879, 3
      %v6882 = vor.u32 %v6878, %v6881
      %v6883 = vsel %vm2055, %v6873, %v6882
      %v6885 = vshrl.u32 %v6485, 16
      %v6887 = vrot.slane %v6885, 2
      %v6888 = vshll.u32 %v6485, 16
      %v6890 = vrot.slane %v6888, 3
      %v6891 = vor.u32 %v6887, %v6890
      %v6892 = vsel %vm2055, %v6882, %v6891
      %v6894 = vshrl.u32 %v6486, 16
      %v6896 = vrot.slane %v6894, 2
      %v6897 = vshll.u32 %v6486, 16
      %v6899 = vrot.slane %v6897, 3
      %v6900 = vor.u32 %v6896, %v6899
      %v6901 = vsel %vm2055, %v6891, %v6900
      %v6903 = vshrl.u32 %v6487, 16
      %v6905 = vrot.slane %v6903, 2
      %v6906 = vshll.u32 %v6487, 16
      %v6908 = vrot.slane %v6906, 3
      %v6909 = vor.u32 %v6905, %v6908
      %v6910 = vsel %vm2055, %v6900, %v6909
      %v6912 = vshrl.u32 %v6488, 16
      %v6914 = vrot.slane %v6912, 2
      %v6915 = vshll.u32 %v6488, 16
      %v6917 = vrot.slane %v6915, 3
      %v6918 = vor.u32 %v6914, %v6917
      %v6919 = vsel %vm2055, %v6909, %v6918
      %v6921 = vshrl.u32 %v6489, 16
      %v6923 = vrot.slane %v6921, 2
      %v6924 = vshll.u32 %v6489, 16
      %v6926 = vrot.slane %v6924, 3
      %v6927 = vor.u32 %v6923, %v6926
      %v6928 = vsel %vm2055, %v6918, %v6927
      %v6930 = vshrl.u32 %v6490, 16
      %v6932 = vrot.slane %v6930, 2
      %v6933 = vshll.u32 %v6490, 16
      %v6935 = vrot.slane %v6933, 3
      %v6936 = vor.u32 %v6932, %v6935
      %v6937 = vsel %vm2055, %v6927, %v6936
      %v6939 = vshrl.u32 %v6491, 16
      %v6941 = vrot.slane %v6939, 2
      %v6942 = vshll.u32 %v6491, 16
      %v6944 = vrot.slane %v6942, 3
      %v6945 = vor.u32 %v6941, %v6944
      %v6946 = vsel %vm2055, %v6936, %v6945
      %v6948 = vshrl.u32 %v6492, 16
      %v6950 = vrot.slane %v6948, 2
      %v6951 = vshll.u32 %v6492, 16
      %v6953 = vrot.slane %v6951, 3
      %v6954 = vor.u32 %v6950, %v6953
      %v6955 = vsel %vm2055, %v6945, %v6954
      %v6957 = vshrl.u32 %v6493, 16
      %v6959 = vrot.slane %v6957, 2
      %v6960 = vshll.u32 %v6493, 16
      %v6962 = vrot.slane %v6960, 3
      %v6963 = vor.u32 %v6959, %v6962
      %v6964 = vsel %vm2055, %v6954, %v6963
      %v6966 = vshrl.u32 %v6494, 16
      %v6968 = vrot.slane %v6966, 2
      %v6969 = vshll.u32 %v6494, 16
      %v6971 = vrot.slane %v6969, 3
      %v6972 = vor.u32 %v6968, %v6971
      %v6973 = vsel %vm2055, %v6963, %v6972
      %v6975 = vshrl.u32 %v6495, 16
      %v6977 = vrot.slane %v6975, 2
      %v6978 = vshll.u32 %v6495, 16
      %v6980 = vrot.slane %v6978, 3
      %v6981 = vor.u32 %v6977, %v6980
      %v6982 = vsel %vm2055, %v6972, %v6981
      %v6984 = vshrl.u32 %v6496, 16
      %v6986 = vrot.slane %v6984, 2
      %v6987 = vshll.u32 %v6496, 16
      %v6989 = vrot.slane %v6987, 3
      %v6990 = vor.u32 %v6986, %v6989
      %v6991 = vsel %vm2055, %v6981, %v6990
      %v6993 = vshrl.u32 %v6497, 16
      %v6995 = vrot.slane %v6993, 2
      %v6996 = vshll.u32 %v6497, 16
      %v6998 = vrot.slane %v6996, 3
      %v6999 = vor.u32 %v6995, %v6998
      %v7000 = vsel %vm2055, %v6990, %v6999
      %v7002 = vshrl.u32 %v6498, 16
      %v7004 = vrot.slane %v7002, 2
      %v7005 = vshll.u32 %v6498, 16
      %v7007 = vrot.slane %v7005, 3
      %v7008 = vor.u32 %v7004, %v7007
      %v7009 = vsel %vm2055, %v6999, %v7008
      %v7011 = vshrl.u32 %v6499, 16
      %v7013 = vrot.slane %v7011, 2
      %v7014 = vshll.u32 %v6499, 16
      %v7016 = vrot.slane %v7014, 3
      %v7017 = vor.u32 %v7013, %v7016
      %v7018 = vsel %vm2055, %v7008, %v7017
      %v7027 = vunpack.c.l.b16 %v6377
      %v7028 = vunpack.c.l.b16 %v6378
      %v7029 = vunpack.c.l.b16 %v6379
      %v7030 = vunpack.c.l.b16 %v6380
      %v7031 = vunpack.c.l.b16 %v6381
      %v7032 = vunpack.c.l.b16 %v6382
      %v7033 = vunpack.c.l.b16 %v6383
      %v7034 = vunpack.c.l.b16 %v6384
      %v7035 = vpack.c.b16 %v7028, %v7027
      %v7036 = vpack.c.b16 %v7030, %v7029
      %v7037 = vpack.c.b16 %v7032, %v7031
      %v7038 = vpack.c.b16 %v7034, %v7033
      %v7044 = vsel %vm1788, %v6847, 0
      %v7047 = vsel %vm1788, %v6856, 0
      %v7050 = vsel %vm1788, %v6865, 0
      %v7053 = vsel %vm1788, %v6874, 0
      %v7056 = vsel %vm1788, %v6883, 0
      %v7059 = vsel %vm1788, %v6892, 0
      %v7062 = vsel %vm1788, %v6901, 0
      %v7065 = vsel %vm1788, %v6910, 0
      %v7068 = vsel %vm1788, %v6919, 0
      %v7071 = vsel %vm1788, %v6928, 0
      %v7074 = vsel %vm1788, %v6937, 0
      %v7077 = vsel %vm1788, %v6946, 0
      %v7080 = vsel %vm1788, %v6955, 0
      %v7083 = vsel %vm1788, %v6964, 0
      %v7086 = vsel %vm1788, %v6973, 0
      %v7089 = vsel %vm1788, %v6982, 0
      %v7092 = vsel %vm1788, %v6991, 0
      %v7095 = vsel %vm1788, %v7000, 0
      %v7098 = vsel %vm1788, %v7009, 0
      %v7101 = vsel %vm1788, %v7018, 0
      %v7104 = vsel %vm1788, %v7017, 0
      %7106 = vmatprep.subr.bf16.mxu0 0
      %7107 = vmatpush1.bf16.msra.mxu0 0
      %7108 = vmatprep.subr.bf16.mxu0 0
      %7109 = vmatpush1.bf16.msra.mxu0 0
      %7110 = vmatprep.subr.bf16.mxu0 0
      %7111 = vmatpush1.bf16.msra.mxu0 0
      %7112 = vmatprep.subr.bf16.mxu0 0
      %7113 = vmatpush1.bf16.msra.mxu0 0
      %7114 = vmatprep.subr.bf16.mxu0 0
      %7115 = vmatpush1.bf16.msra.mxu0 %v7038
      %7116 = vmatprep.subr.bf16.mxu0 0
      %7117 = vmatpush1.bf16.msra.mxu0 %v7037
      %7118 = vmatprep.subr.bf16.mxu0 0
      %7119 = vmatpush1.bf16.msra.mxu0 %v7036
      %7120 = vmatprep.subr.bf16.mxu0 0
      %7121 = vmatpush1.bf16.msra.mxu0 %v7035
      %7122 = vmatprep.subr.bf16.mxu0 0
      %7123 = vmatpush2.bf16.msra.mxu0 0
      %7124 = vmatprep.subr.bf16.mxu0 0
      %7125 = vmatpush2.bf16.msra.mxu0 0
      %7126 = vmatprep.subr.bf16.mxu0 0
      %7127 = vmatpush2.bf16.msra.mxu0 0
      %7128 = vmatprep.subr.bf16.mxu0 0
      %7129 = vmatpush2.bf16.msra.mxu0 0
      %7130 = vmatprep.subr.bf16.mxu0 0
      %7131 = vmatpush2.bf16.msra.mxu0 0
      %7132 = vmatprep.subr.bf16.mxu0 0
      %7133 = vmatpush2.bf16.msra.mxu0 0
      %7134 = vmatprep.subr.bf16.mxu0 0
      %7135 = vmatpush2.bf16.msra.mxu0 0
      %7136 = vmatprep.subr.bf16.mxu0 0
      %7137 = vmatpush2.bf16.msra.mxu0 0
      %7138 = vmatprep.mubr.bf16.mxu0 0
      %7139 = vmatmul.mubr.bf16.gmra.mxu0 %v7044
      %v7140 = vpop.f32.mrf.mxu0
      %v7141 = vadd.f32 %v6663, %v7140
      %v7142 = vpop.f32.mrf.mxu0
      %v7143 = vpop.f32.mrf.mxu0
      %v7144 = vadd.f32 %v6666, %v7143
      %v7145 = vpop.f32.mrf.mxu0
      %7146 = vmatprep.mubr.bf16.mxu0 0
      %7147 = vmatmul.mubr.bf16.gmra.mxu0 %v7047
      %v7148 = vpop.f32.mrf.mxu0
      %v7149 = vadd.f32 %v6671, %v7148
      %v7150 = vpop.f32.mrf.mxu0
      %v7151 = vpop.f32.mrf.mxu0
      %v7152 = vadd.f32 %v6674, %v7151
      %v7153 = vpop.f32.mrf.mxu0
      %7154 = vmatprep.mubr.bf16.mxu0 0
      %7155 = vmatmul.mubr.bf16.gmra.mxu0 %v7050
      %v7156 = vpop.f32.mrf.mxu0
      %v7157 = vadd.f32 %v6679, %v7156
      %v7158 = vpop.f32.mrf.mxu0
      %v7159 = vpop.f32.mrf.mxu0
      %v7160 = vadd.f32 %v6682, %v7159
      %v7161 = vpop.f32.mrf.mxu0
      %7162 = vmatprep.mubr.bf16.mxu0 0
      %7163 = vmatmul.mubr.bf16.gmra.mxu0 %v7053
      %v7164 = vpop.f32.mrf.mxu0
      %v7165 = vadd.f32 %v6687, %v7164
      %v7166 = vpop.f32.mrf.mxu0
      %v7167 = vpop.f32.mrf.mxu0
      %v7168 = vadd.f32 %v6690, %v7167
      %v7169 = vpop.f32.mrf.mxu0
      %7170 = vmatprep.mubr.bf16.mxu0 0
      %7171 = vmatmul.mubr.bf16.gmra.mxu0 %v7056
      %v7172 = vpop.f32.mrf.mxu0
      %v7173 = vadd.f32 %v6695, %v7172
      %v7174 = vpop.f32.mrf.mxu0
      %v7175 = vpop.f32.mrf.mxu0
      %v7176 = vadd.f32 %v6698, %v7175
      %v7177 = vpop.f32.mrf.mxu0
      %7178 = vmatprep.mubr.bf16.mxu0 0
      %7179 = vmatmul.mubr.bf16.gmra.mxu0 %v7059
      %v7180 = vpop.f32.mrf.mxu0
      %v7181 = vadd.f32 %v6703, %v7180
      %v7182 = vpop.f32.mrf.mxu0
      %v7183 = vpop.f32.mrf.mxu0
      %v7184 = vadd.f32 %v6706, %v7183
      %v7185 = vpop.f32.mrf.mxu0
      %7186 = vmatprep.mubr.bf16.mxu0 0
      %7187 = vmatmul.mubr.bf16.gmra.mxu0 %v7062
      %v7188 = vpop.f32.mrf.mxu0
      %v7189 = vadd.f32 %v6711, %v7188
      %v7190 = vpop.f32.mrf.mxu0
      %v7191 = vpop.f32.mrf.mxu0
      %v7192 = vadd.f32 %v6714, %v7191
      %v7193 = vpop.f32.mrf.mxu0
      %7194 = vmatprep.mubr.bf16.mxu0 0
      %7195 = vmatmul.mubr.bf16.gmra.mxu0 %v7065
      %v7196 = vpop.f32.mrf.mxu0
      %v7197 = vadd.f32 %v6719, %v7196
      %v7198 = vpop.f32.mrf.mxu0
      %v7199 = vpop.f32.mrf.mxu0
      %v7200 = vadd.f32 %v6722, %v7199
      %v7201 = vpop.f32.mrf.mxu0
      %7202 = vmatprep.mubr.bf16.mxu0 0
      %7203 = vmatmul.mubr.bf16.gmra.mxu0 %v7068
      %v7204 = vpop.f32.mrf.mxu0
      %v7205 = vadd.f32 %v6727, %v7204
      %v7206 = vpop.f32.mrf.mxu0
      %v7207 = vpop.f32.mrf.mxu0
      %v7208 = vadd.f32 %v6730, %v7207
      %v7209 = vpop.f32.mrf.mxu0
      %7210 = vmatprep.mubr.bf16.mxu0 0
      %7211 = vmatmul.mubr.bf16.gmra.mxu0 %v7071
      %v7212 = vpop.f32.mrf.mxu0
      %v7213 = vadd.f32 %v6735, %v7212
      %v7214 = vpop.f32.mrf.mxu0
      %v7215 = vpop.f32.mrf.mxu0
      %v7216 = vadd.f32 %v6738, %v7215
      %v7217 = vpop.f32.mrf.mxu0
      %7218 = vmatprep.mubr.bf16.mxu0 0
      %7219 = vmatmul.mubr.bf16.gmra.mxu0 %v7074
      %v7220 = vpop.f32.mrf.mxu0
      %v7221 = vadd.f32 %v6743, %v7220
      %v7222 = vpop.f32.mrf.mxu0
      %v7223 = vpop.f32.mrf.mxu0
      %v7224 = vadd.f32 %v6746, %v7223
      %v7225 = vpop.f32.mrf.mxu0
      %7226 = vmatprep.mubr.bf16.mxu0 0
      %7227 = vmatmul.mubr.bf16.gmra.mxu0 %v7077
      %v7228 = vpop.f32.mrf.mxu0
      %v7229 = vadd.f32 %v6751, %v7228
      %v7230 = vpop.f32.mrf.mxu0
      %v7231 = vpop.f32.mrf.mxu0
      %v7232 = vadd.f32 %v6754, %v7231
      %v7233 = vpop.f32.mrf.mxu0
      %7234 = vmatprep.mubr.bf16.mxu0 0
      %7235 = vmatmul.mubr.bf16.gmra.mxu0 %v7080
      %v7236 = vpop.f32.mrf.mxu0
      %v7237 = vadd.f32 %v6759, %v7236
      %v7238 = vpop.f32.mrf.mxu0
      %v7239 = vpop.f32.mrf.mxu0
      %v7240 = vadd.f32 %v6762, %v7239
      %v7241 = vpop.f32.mrf.mxu0
      %7242 = vmatprep.mubr.bf16.mxu0 0
      %7243 = vmatmul.mubr.bf16.gmra.mxu0 %v7083
      %v7244 = vpop.f32.mrf.mxu0
      %v7245 = vadd.f32 %v6767, %v7244
      %v7246 = vpop.f32.mrf.mxu0
      %v7247 = vpop.f32.mrf.mxu0
      %v7248 = vadd.f32 %v6770, %v7247
      %v7249 = vpop.f32.mrf.mxu0
      %7250 = vmatprep.mubr.bf16.mxu0 0
      %7251 = vmatmul.mubr.bf16.gmra.mxu0 %v7086
      %v7252 = vpop.f32.mrf.mxu0
      %v7253 = vadd.f32 %v6775, %v7252
      %v7254 = vpop.f32.mrf.mxu0
      %v7255 = vpop.f32.mrf.mxu0
      %v7256 = vadd.f32 %v6778, %v7255
      %v7257 = vpop.f32.mrf.mxu0
      %7258 = vmatprep.mubr.bf16.mxu0 0
      %7259 = vmatmul.mubr.bf16.gmra.mxu0 %v7089
      %v7260 = vpop.f32.mrf.mxu0
      %v7261 = vadd.f32 %v6783, %v7260
      %v7262 = vpop.f32.mrf.mxu0
      %v7263 = vpop.f32.mrf.mxu0
      %v7264 = vadd.f32 %v6786, %v7263
      %v7265 = vpop.f32.mrf.mxu0
      %7266 = vmatprep.mubr.bf16.mxu0 0
      %7267 = vmatmul.mubr.bf16.gmra.mxu0 %v7092
      %v7268 = vpop.f32.mrf.mxu0
      %v7269 = vadd.f32 %v6791, %v7268
      %v7270 = vpop.f32.mrf.mxu0
      %v7271 = vpop.f32.mrf.mxu0
      %v7272 = vadd.f32 %v6794, %v7271
      %v7273 = vpop.f32.mrf.mxu0
      %7274 = vmatprep.mubr.bf16.mxu0 0
      %7275 = vmatmul.mubr.bf16.gmra.mxu0 %v7095
      %v7276 = vpop.f32.mrf.mxu0
      %v7277 = vadd.f32 %v6799, %v7276
      %v7278 = vpop.f32.mrf.mxu0
      %v7279 = vpop.f32.mrf.mxu0
      %v7280 = vadd.f32 %v6802, %v7279
      %v7281 = vpop.f32.mrf.mxu0
      %7282 = vmatprep.mubr.bf16.mxu0 0
      %7283 = vmatmul.mubr.bf16.gmra.mxu0 %v7098
      %v7284 = vpop.f32.mrf.mxu0
      %v7285 = vadd.f32 %v6807, %v7284
      %v7286 = vpop.f32.mrf.mxu0
      %v7287 = vpop.f32.mrf.mxu0
      %v7288 = vadd.f32 %v6810, %v7287
      %v7289 = vpop.f32.mrf.mxu0
      %7290 = vmatprep.mubr.bf16.mxu0 0
      %7291 = vmatmul.mubr.bf16.gmra.mxu0 %v7101
      %v7292 = vpop.f32.mrf.mxu0
      %v7293 = vadd.f32 %v6815, %v7292
      %v7294 = vpop.f32.mrf.mxu0
      %v7295 = vpop.f32.mrf.mxu0
      %v7296 = vadd.f32 %v6818, %v7295
      %v7297 = vpop.f32.mrf.mxu0
      %7298 = vmatprep.mubr.bf16.mxu0 0
      %7299 = vmatmul.mubr.bf16.gmra.mxu0 %v7104
      %v7300 = vpop.f32.mrf.mxu0
      %v7301 = vadd.f32 %v6823, %v7300
      %v7302 = vpop.f32.mrf.mxu0
      %v7303 = vpop.f32.mrf.mxu0
      %v7304 = vpop.f32.mrf.mxu0
      %7305 = vdwg.mxu0
      %v7306 = vld [vmem:[#allocation2 + $0xa8] sm:$0x3]
      %s7307 = scalar_lea.vmem %s8, 64
      %v7308 = vld [vmem:[%s7307] sm:$0xf]
      %v7309 = vld [vmem:[%s7307 + $0x4] sm:$0xf]
      %v7310 = vld [vmem:[%s7307 + $0x8] sm:$0xf]
      %v7311 = vld [vmem:[%s7307 + $0xc] sm:$0xf]
      %v7312 = vld [vmem:[%s7307 + $0x10] sm:$0xf]
      %v7313 = vld [vmem:[%s7307 + $0x14] sm:$0xf]
      %v7314 = vld [vmem:[%s7307 + $0x18] sm:$0xf]
      %v7315 = vld [vmem:[%s7307 + $0x1c] sm:$0xf]
      %v7317 = vunpack.c.l.b16 %v7306
      %v7318 = vpack.c.b16 %v7317, %v6477
      %v7320 = vshrl.u32 %v6479, 16
      %v7322 = vrot.slane %v7320, 3
      %v7323 = vshll.u32 %v6479, 16
      %v7325 = vrot.slane %v7323, 4
      %v7326 = vor.u32 %v7322, %v7325
      %v7327 = vrot.slane %v6840, 3
      %v7328 = vrot.slane %v6843, 4
      %v7329 = vor.u32 %v7327, %v7328
      %v7330 = vsel %vm2544, %v7326, %v7329
      %v7331 = vrot.slane %v6849, 3
      %v7332 = vrot.slane %v6852, 4
      %v7333 = vor.u32 %v7331, %v7332
      %v7334 = vsel %vm2544, %v7329, %v7333
      %v7335 = vrot.slane %v6858, 3
      %v7336 = vrot.slane %v6861, 4
      %v7337 = vor.u32 %v7335, %v7336
      %v7338 = vsel %vm2544, %v7333, %v7337
      %v7339 = vrot.slane %v6867, 3
      %v7340 = vrot.slane %v6870, 4
      %v7341 = vor.u32 %v7339, %v7340
      %v7342 = vsel %vm2544, %v7337, %v7341
      %v7343 = vrot.slane %v6876, 3
      %v7344 = vrot.slane %v6879, 4
      %v7345 = vor.u32 %v7343, %v7344
      %v7346 = vsel %vm2544, %v7341, %v7345
      %v7347 = vrot.slane %v6885, 3
      %v7348 = vrot.slane %v6888, 4
      %v7349 = vor.u32 %v7347, %v7348
      %v7350 = vsel %vm2544, %v7345, %v7349
      %v7351 = vrot.slane %v6894, 3
      %v7352 = vrot.slane %v6897, 4
      %v7353 = vor.u32 %v7351, %v7352
      %v7354 = vsel %vm2544, %v7349, %v7353
      %v7355 = vrot.slane %v6903, 3
      %v7356 = vrot.slane %v6906, 4
      %v7357 = vor.u32 %v7355, %v7356
      %v7358 = vsel %vm2544, %v7353, %v7357
      %v7359 = vrot.slane %v6912, 3
      %v7360 = vrot.slane %v6915, 4
      %v7361 = vor.u32 %v7359, %v7360
      %v7362 = vsel %vm2544, %v7357, %v7361
      %v7363 = vrot.slane %v6921, 3
      %v7364 = vrot.slane %v6924, 4
      %v7365 = vor.u32 %v7363, %v7364
      %v7366 = vsel %vm2544, %v7361, %v7365
      %v7367 = vrot.slane %v6930, 3
      %v7368 = vrot.slane %v6933, 4
      %v7369 = vor.u32 %v7367, %v7368
      %v7370 = vsel %vm2544, %v7365, %v7369
      %v7371 = vrot.slane %v6939, 3
      %v7372 = vrot.slane %v6942, 4
      %v7373 = vor.u32 %v7371, %v7372
      %v7374 = vsel %vm2544, %v7369, %v7373
      %v7375 = vrot.slane %v6948, 3
      %v7376 = vrot.slane %v6951, 4
      %v7377 = vor.u32 %v7375, %v7376
      %v7378 = vsel %vm2544, %v7373, %v7377
      %v7379 = vrot.slane %v6957, 3
      %v7380 = vrot.slane %v6960, 4
      %v7381 = vor.u32 %v7379, %v7380
      %v7382 = vsel %vm2544, %v7377, %v7381
      %v7383 = vrot.slane %v6966, 3
      %v7384 = vrot.slane %v6969, 4
      %v7385 = vor.u32 %v7383, %v7384
      %v7386 = vsel %vm2544, %v7381, %v7385
      %v7387 = vrot.slane %v6975, 3
      %v7388 = vrot.slane %v6978, 4
      %v7389 = vor.u32 %v7387, %v7388
      %v7390 = vsel %vm2544, %v7385, %v7389
      %v7391 = vrot.slane %v6984, 3
      %v7392 = vrot.slane %v6987, 4
      %v7393 = vor.u32 %v7391, %v7392
      %v7394 = vsel %vm2544, %v7389, %v7393
      %v7395 = vrot.slane %v6993, 3
      %v7396 = vrot.slane %v6996, 4
      %v7397 = vor.u32 %v7395, %v7396
      %v7398 = vsel %vm2544, %v7393, %v7397
      %v7399 = vrot.slane %v7002, 3
      %v7400 = vrot.slane %v7005, 4
      %v7401 = vor.u32 %v7399, %v7400
      %v7402 = vsel %vm2544, %v7397, %v7401
      %v7404 = vshrl.u32 %v7318, 16
      %v7406 = vrot.slane %v7404, 3
      %v7407 = vshll.u32 %v7318, 16
      %v7409 = vrot.slane %v7407, 4
      %v7410 = vor.u32 %v7406, %v7409
      %v7411 = vsel %vm2544, %v7401, %v7410
      %v7420 = vunpack.c.l.b16 %v7308
      %v7421 = vunpack.c.l.b16 %v7309
      %v7422 = vunpack.c.l.b16 %v7310
      %v7423 = vunpack.c.l.b16 %v7311
      %v7424 = vunpack.c.l.b16 %v7312
      %v7425 = vunpack.c.l.b16 %v7313
      %v7426 = vunpack.c.l.b16 %v7314
      %v7427 = vunpack.c.l.b16 %v7315
      %v7428 = vpack.c.b16 %v7421, %v7420
      %v7429 = vpack.c.b16 %v7423, %v7422
      %v7430 = vpack.c.b16 %v7425, %v7424
      %v7431 = vpack.c.b16 %v7427, %v7426
      %v7437 = vsel %vm1788, %v7330, 0
      %v7440 = vsel %vm1788, %v7334, 0
      %v7443 = vsel %vm1788, %v7338, 0
      %v7446 = vsel %vm1788, %v7342, 0
      %v7449 = vsel %vm1788, %v7346, 0
      %v7452 = vsel %vm1788, %v7350, 0
      %v7455 = vsel %vm1788, %v7354, 0
      %v7458 = vsel %vm1788, %v7358, 0
      %v7461 = vsel %vm1788, %v7362, 0
      %v7464 = vsel %vm1788, %v7366, 0
      %v7467 = vsel %vm1788, %v7370, 0
      %v7470 = vsel %vm1788, %v7374, 0
      %v7473 = vsel %vm1788, %v7378, 0
      %v7476 = vsel %vm1788, %v7382, 0
      %v7479 = vsel %vm1788, %v7386, 0
      %v7482 = vsel %vm1788, %v7390, 0
      %v7485 = vsel %vm1788, %v7394, 0
      %v7488 = vsel %vm1788, %v7398, 0
      %v7491 = vsel %vm1788, %v7402, 0
      %v7494 = vsel %vm1788, %v7411, 0
      %v7497 = vsel %vm1788, %v7410, 0
      %7499 = vmatprep.subr.bf16.mxu0 0
      %7500 = vmatpush1.bf16.msra.mxu0 0
      %7501 = vmatprep.subr.bf16.mxu0 0
      %7502 = vmatpush1.bf16.msra.mxu0 0
      %7503 = vmatprep.subr.bf16.mxu0 0
      %7504 = vmatpush1.bf16.msra.mxu0 0
      %7505 = vmatprep.subr.bf16.mxu0 0
      %7506 = vmatpush1.bf16.msra.mxu0 0
      %7507 = vmatprep.subr.bf16.mxu0 0
      %7508 = vmatpush1.bf16.msra.mxu0 %v7431
      %7509 = vmatprep.subr.bf16.mxu0 0
      %7510 = vmatpush1.bf16.msra.mxu0 %v7430
      %7511 = vmatprep.subr.bf16.mxu0 0
      %7512 = vmatpush1.bf16.msra.mxu0 %v7429
      %7513 = vmatprep.subr.bf16.mxu0 0
      %7514 = vmatpush1.bf16.msra.mxu0 %v7428
      %7515 = vmatprep.subr.bf16.mxu0 0
      %7516 = vmatpush2.bf16.msra.mxu0 0
      %7517 = vmatprep.subr.bf16.mxu0 0
      %7518 = vmatpush2.bf16.msra.mxu0 0
      %7519 = vmatprep.subr.bf16.mxu0 0
      %7520 = vmatpush2.bf16.msra.mxu0 0
      %7521 = vmatprep.subr.bf16.mxu0 0
      %7522 = vmatpush2.bf16.msra.mxu0 0
      %7523 = vmatprep.subr.bf16.mxu0 0
      %7524 = vmatpush2.bf16.msra.mxu0 0
      %7525 = vmatprep.subr.bf16.mxu0 0
      %7526 = vmatpush2.bf16.msra.mxu0 0
      %7527 = vmatprep.subr.bf16.mxu0 0
      %7528 = vmatpush2.bf16.msra.mxu0 0
      %7529 = vmatprep.subr.bf16.mxu0 0
      %7530 = vmatpush2.bf16.msra.mxu0 0
      %7531 = vmatprep.mubr.bf16.mxu0 0
      %7532 = vmatmul.mubr.bf16.gmra.mxu0 %v7437
      %v7533 = vpop.f32.mrf.mxu0
      %v7534 = vadd.f32 0.0, %v7533
      %v7535 = vpop.f32.mrf.mxu0
      %v7536 = vpop.f32.mrf.mxu0
      %v7537 = vadd.f32 0.0, %v7536
      %v7538 = vpop.f32.mrf.mxu0
      %7539 = vmatprep.mubr.bf16.mxu0 0
      %7540 = vmatmul.mubr.bf16.gmra.mxu0 %v7440
      %v7541 = vpop.f32.mrf.mxu0
      %v7542 = vadd.f32 0.0, %v7541
      %v7543 = vpop.f32.mrf.mxu0
      %v7544 = vpop.f32.mrf.mxu0
      %v7545 = vadd.f32 0.0, %v7544
      %v7546 = vpop.f32.mrf.mxu0
      %7547 = vmatprep.mubr.bf16.mxu0 0
      %7548 = vmatmul.mubr.bf16.gmra.mxu0 %v7443
      %v7549 = vpop.f32.mrf.mxu0
      %v7550 = vadd.f32 0.0, %v7549
      %v7551 = vpop.f32.mrf.mxu0
      %v7552 = vpop.f32.mrf.mxu0
      %v7553 = vadd.f32 0.0, %v7552
      %v7554 = vpop.f32.mrf.mxu0
      %7555 = vmatprep.mubr.bf16.mxu0 0
      %7556 = vmatmul.mubr.bf16.gmra.mxu0 %v7446
      %v7557 = vpop.f32.mrf.mxu0
      %v7558 = vadd.f32 0.0, %v7557
      %v7559 = vpop.f32.mrf.mxu0
      %v7560 = vpop.f32.mrf.mxu0
      %v7561 = vadd.f32 0.0, %v7560
      %v7562 = vpop.f32.mrf.mxu0
      %7563 = vmatprep.mubr.bf16.mxu0 0
      %7564 = vmatmul.mubr.bf16.gmra.mxu0 %v7449
      %v7565 = vpop.f32.mrf.mxu0
      %v7566 = vadd.f32 0.0, %v7565
      %v7567 = vpop.f32.mrf.mxu0
      %v7568 = vpop.f32.mrf.mxu0
      %v7569 = vadd.f32 0.0, %v7568
      %v7570 = vpop.f32.mrf.mxu0
      %7571 = vmatprep.mubr.bf16.mxu0 0
      %7572 = vmatmul.mubr.bf16.gmra.mxu0 %v7452
      %v7573 = vpop.f32.mrf.mxu0
      %v7574 = vadd.f32 0.0, %v7573
      %v7575 = vpop.f32.mrf.mxu0
      %v7576 = vpop.f32.mrf.mxu0
      %v7577 = vadd.f32 0.0, %v7576
      %v7578 = vpop.f32.mrf.mxu0
      %7579 = vmatprep.mubr.bf16.mxu0 0
      %7580 = vmatmul.mubr.bf16.gmra.mxu0 %v7455
      %v7581 = vpop.f32.mrf.mxu0
      %v7582 = vadd.f32 0.0, %v7581
      %v7583 = vpop.f32.mrf.mxu0
      %v7584 = vpop.f32.mrf.mxu0
      %v7585 = vadd.f32 0.0, %v7584
      %v7586 = vpop.f32.mrf.mxu0
      %7587 = vmatprep.mubr.bf16.mxu0 0
      %7588 = vmatmul.mubr.bf16.gmra.mxu0 %v7458
      %v7589 = vpop.f32.mrf.mxu0
      %v7590 = vadd.f32 0.0, %v7589
      %v7591 = vpop.f32.mrf.mxu0
      %v7592 = vpop.f32.mrf.mxu0
      %v7593 = vadd.f32 0.0, %v7592
      %v7594 = vpop.f32.mrf.mxu0
      %7595 = vmatprep.mubr.bf16.mxu0 0
      %7596 = vmatmul.mubr.bf16.gmra.mxu0 %v7461
      %v7597 = vpop.f32.mrf.mxu0
      %v7598 = vadd.f32 0.0, %v7597
      %v7599 = vpop.f32.mrf.mxu0
      %v7600 = vpop.f32.mrf.mxu0
      %v7601 = vadd.f32 0.0, %v7600
      %v7602 = vpop.f32.mrf.mxu0
      %7603 = vmatprep.mubr.bf16.mxu0 0
      %7604 = vmatmul.mubr.bf16.gmra.mxu0 %v7464
      %v7605 = vpop.f32.mrf.mxu0
      %v7606 = vadd.f32 0.0, %v7605
      %v7607 = vpop.f32.mrf.mxu0
      %v7608 = vpop.f32.mrf.mxu0
      %v7609 = vadd.f32 0.0, %v7608
      %v7610 = vpop.f32.mrf.mxu0
      %7611 = vmatprep.mubr.bf16.mxu0 0
      %7612 = vmatmul.mubr.bf16.gmra.mxu0 %v7467
      %v7613 = vpop.f32.mrf.mxu0
      %v7614 = vadd.f32 0.0, %v7613
      %v7615 = vpop.f32.mrf.mxu0
      %v7616 = vpop.f32.mrf.mxu0
      %v7617 = vadd.f32 0.0, %v7616
      %v7618 = vpop.f32.mrf.mxu0
      %7619 = vmatprep.mubr.bf16.mxu0 0
      %7620 = vmatmul.mubr.bf16.gmra.mxu0 %v7470
      %v7621 = vpop.f32.mrf.mxu0
      %v7622 = vadd.f32 0.0, %v7621
      %v7623 = vpop.f32.mrf.mxu0
      %v7624 = vpop.f32.mrf.mxu0
      %v7625 = vadd.f32 0.0, %v7624
      %v7626 = vpop.f32.mrf.mxu0
      %7627 = vmatprep.mubr.bf16.mxu0 0
      %7628 = vmatmul.mubr.bf16.gmra.mxu0 %v7473
      %v7629 = vpop.f32.mrf.mxu0
      %v7630 = vadd.f32 0.0, %v7629
      %v7631 = vpop.f32.mrf.mxu0
      %v7632 = vpop.f32.mrf.mxu0
      %v7633 = vadd.f32 0.0, %v7632
      %v7634 = vpop.f32.mrf.mxu0
      %7635 = vmatprep.mubr.bf16.mxu0 0
      %7636 = vmatmul.mubr.bf16.gmra.mxu0 %v7476
      %v7637 = vpop.f32.mrf.mxu0
      %v7638 = vadd.f32 0.0, %v7637
      %v7639 = vpop.f32.mrf.mxu0
      %v7640 = vpop.f32.mrf.mxu0
      %v7641 = vadd.f32 0.0, %v7640
      %v7642 = vpop.f32.mrf.mxu0
      %7643 = vmatprep.mubr.bf16.mxu0 0
      %7644 = vmatmul.mubr.bf16.gmra.mxu0 %v7479
      %v7645 = vpop.f32.mrf.mxu0
      %v7646 = vadd.f32 0.0, %v7645
      %v7647 = vpop.f32.mrf.mxu0
      %v7648 = vpop.f32.mrf.mxu0
      %v7649 = vadd.f32 0.0, %v7648
      %v7650 = vpop.f32.mrf.mxu0
      %7651 = vmatprep.mubr.bf16.mxu0 0
      %7652 = vmatmul.mubr.bf16.gmra.mxu0 %v7482
      %v7653 = vpop.f32.mrf.mxu0
      %v7654 = vadd.f32 0.0, %v7653
      %v7655 = vpop.f32.mrf.mxu0
      %v7656 = vpop.f32.mrf.mxu0
      %v7657 = vadd.f32 0.0, %v7656
      %v7658 = vpop.f32.mrf.mxu0
      %7659 = vmatprep.mubr.bf16.mxu0 0
      %7660 = vmatmul.mubr.bf16.gmra.mxu0 %v7485
      %v7661 = vpop.f32.mrf.mxu0
      %v7662 = vadd.f32 0.0, %v7661
      %v7663 = vpop.f32.mrf.mxu0
      %v7664 = vpop.f32.mrf.mxu0
      %v7665 = vadd.f32 0.0, %v7664
      %v7666 = vpop.f32.mrf.mxu0
      %7667 = vmatprep.mubr.bf16.mxu0 0
      %7668 = vmatmul.mubr.bf16.gmra.mxu0 %v7488
      %v7669 = vpop.f32.mrf.mxu0
      %v7670 = vadd.f32 0.0, %v7669
      %v7671 = vpop.f32.mrf.mxu0
      %v7672 = vpop.f32.mrf.mxu0
      %v7673 = vadd.f32 0.0, %v7672
      %v7674 = vpop.f32.mrf.mxu0
      %7675 = vmatprep.mubr.bf16.mxu0 0
      %7676 = vmatmul.mubr.bf16.gmra.mxu0 %v7491
      %v7677 = vpop.f32.mrf.mxu0
      %v7678 = vadd.f32 0.0, %v7677
      %v7679 = vpop.f32.mrf.mxu0
      %v7680 = vpop.f32.mrf.mxu0
      %v7681 = vadd.f32 0.0, %v7680
      %v7682 = vpop.f32.mrf.mxu0
      %7683 = vmatprep.mubr.bf16.mxu0 0
      %7684 = vmatmul.mubr.bf16.gmra.mxu0 %v7494
      %v7685 = vpop.f32.mrf.mxu0
      %v7686 = vadd.f32 0.0, %v7685
      %v7687 = vpop.f32.mrf.mxu0
      %v7688 = vpop.f32.mrf.mxu0
      %v7689 = vadd.f32 0.0, %v7688
      %v7690 = vpop.f32.mrf.mxu0
      %7691 = vmatprep.mubr.bf16.mxu0 0
      %7692 = vmatmul.mubr.bf16.gmra.mxu0 %v7497
      %v7693 = vpop.f32.mrf.mxu0
      %v7694 = vadd.f32 0.0, %v7693
      %v7695 = vpop.f32.mrf.mxu0
      %v7696 = vpop.f32.mrf.mxu0
      %v7697 = vpop.f32.mrf.mxu0
      %7698 = vdwg.mxu0
      %v7699 = vadd.f32 %v7141, %v7534
      %v7700 = vadd.f32 %v7144, %v7537
      %v7701 = vadd.f32 %v7149, %v7542
      %v7702 = vadd.f32 %v7152, %v7545
      %v7703 = vadd.f32 %v7157, %v7550
      %v7704 = vadd.f32 %v7160, %v7553
      %v7705 = vadd.f32 %v7165, %v7558
      %v7706 = vadd.f32 %v7168, %v7561
      %v7707 = vadd.f32 %v7173, %v7566
      %v7708 = vadd.f32 %v7176, %v7569
      %v7709 = vadd.f32 %v7181, %v7574
      %v7710 = vadd.f32 %v7184, %v7577
      %v7711 = vadd.f32 %v7189, %v7582
      %v7712 = vadd.f32 %v7192, %v7585
      %v7713 = vadd.f32 %v7197, %v7590
      %v7714 = vadd.f32 %v7200, %v7593
      %v7715 = vadd.f32 %v7205, %v7598
      %v7716 = vadd.f32 %v7208, %v7601
      %v7717 = vadd.f32 %v7213, %v7606
      %v7718 = vadd.f32 %v7216, %v7609
      %v7719 = vadd.f32 %v7221, %v7614
      %v7720 = vadd.f32 %v7224, %v7617
      %v7721 = vadd.f32 %v7229, %v7622
      %v7722 = vadd.f32 %v7232, %v7625
      %v7723 = vadd.f32 %v7237, %v7630
      %v7724 = vadd.f32 %v7240, %v7633
      %v7725 = vadd.f32 %v7245, %v7638
      %v7726 = vadd.f32 %v7248, %v7641
      %v7727 = vadd.f32 %v7253, %v7646
      %v7728 = vadd.f32 %v7256, %v7649
      %v7729 = vadd.f32 %v7261, %v7654
      %v7730 = vadd.f32 %v7264, %v7657
      %v7731 = vadd.f32 %v7269, %v7662
      %v7732 = vadd.f32 %v7272, %v7665
      %v7733 = vadd.f32 %v7277, %v7670
      %v7734 = vadd.f32 %v7280, %v7673
      %v7735 = vadd.f32 %v7285, %v7678
      %v7736 = vadd.f32 %v7288, %v7681
      %v7737 = vadd.f32 %v7293, %v7686
      %v7738 = vadd.f32 %v7296, %v7689
      %v7739 = vadd.f32 %v7301, %v7694
      %v7740 = vld [vmem:[#allocation2 + $0xc] sm:$0x8]
      %v7741 = vld [vmem:[#allocation2 + $0x10] sm:$0xf]
      %v7742 = vld [vmem:[#allocation2 + $0x14] sm:$0xf]
      %v7743 = vld [vmem:[#allocation2 + $0x18] sm:$0xf]
      %v7744 = vld [vmem:[#allocation2 + $0x1c] sm:$0xf]
      %v7745 = vld [vmem:[#allocation2 + $0x20] sm:$0xf]
      %v7746 = vld [vmem:[#allocation2 + $0x24] sm:$0xf]
      %v7747 = vld [vmem:[#allocation2 + $0x28] sm:$0xf]
      %v7748 = vld [vmem:[#allocation2 + $0x2c] sm:$0xf]
      %v7749 = vld [vmem:[#allocation2 + $0x30] sm:$0xf]
      %v7750 = vld [vmem:[#allocation2 + $0x34] sm:$0xf]
      %v7751 = vld [vmem:[#allocation2 + $0x38] sm:$0xf]
      %v7752 = vld [vmem:[#allocation2 + $0x3c] sm:$0xf]
      %v7753 = vld [vmem:[#allocation2 + $0x40] sm:$0xf]
      %v7754 = vld [vmem:[#allocation2 + $0x44] sm:$0xf]
      %v7755 = vld [vmem:[#allocation2 + $0x48] sm:$0xf]
      %v7756 = vld [vmem:[#allocation2 + $0x4c] sm:$0xf]
      %v7757 = vld [vmem:[#allocation2 + $0x50] sm:$0xf]
      %v7758 = vld [vmem:[#allocation2 + $0x54] sm:$0xf]
      %v7759 = vld [vmem:[#allocation2 + $0x58] sm:$0xf]
      %v7760 = vld [vmem:[#allocation2 + $0x5c] sm:$0xf]
      %v7761 = vld [vmem:[#allocation2 + $0x60] sm:$0xf]
      %v7762 = vld [vmem:[#allocation2 + $0x64] sm:$0xf]
      %v7763 = vld [vmem:[#allocation2 + $0x68] sm:$0xf]
      %v7764 = vld [vmem:[#allocation2 + $0x6c] sm:$0xf]
      %v7765 = vld [vmem:[#allocation2 + $0x70] sm:$0xf]
      %v7766 = vld [vmem:[#allocation2 + $0x74] sm:$0xf]
      %v7767 = vld [vmem:[#allocation2 + $0x78] sm:$0xf]
      %v7768 = vld [vmem:[#allocation2 + $0x7c] sm:$0xf]
      %v7769 = vld [vmem:[#allocation2 + $0x80] sm:$0xf]
      %v7770 = vld [vmem:[#allocation2 + $0x84] sm:$0xf]
      %v7771 = vld [vmem:[#allocation2 + $0x88] sm:$0xf]
      %v7772 = vld [vmem:[#allocation2 + $0x8c] sm:$0xf]
      %v7773 = vld [vmem:[#allocation2 + $0x90] sm:$0xf]
      %v7774 = vld [vmem:[#allocation2 + $0x94] sm:$0xf]
      %v7775 = vld [vmem:[#allocation2 + $0x98] sm:$0xf]
      %v7776 = vld [vmem:[#allocation2 + $0x9c] sm:$0xf]
      %v7777 = vld [vmem:[#allocation2 + $0xa0] sm:$0xf]
      %v7778 = vld [vmem:[#allocation2 + $0xa4] sm:$0xf]
      %v7779 = vld [vmem:[#allocation2 + $0xa8] sm:$0xf]
      %v7780 = vld [vmem:[#allocation2 + $0xac] sm:$0xf]
      %v7781 = vld [vmem:[#allocation2 + $0xb0] sm:$0x3]
      %s7782 = scalar_lea.vmem %s8, 96
      %v7783 = vld [vmem:[%s7782] sm:$0xf]
      %v7784 = vld [vmem:[%s7782 + $0x4] sm:$0xf]
      %v7785 = vld [vmem:[%s7782 + $0x8] sm:$0xf]
      %v7786 = vld [vmem:[%s7782 + $0xc] sm:$0xf]
      %v7787 = vld [vmem:[%s7782 + $0x10] sm:$0xf]
      %v7788 = vld [vmem:[%s7782 + $0x14] sm:$0xf]
      %v7789 = vld [vmem:[%s7782 + $0x18] sm:$0xf]
      %v7790 = vld [vmem:[%s7782 + $0x1c] sm:$0xf]
      %v7833 = vunpack.c.l.b16 %v7740
      %v7834 = vunpack.c.l.b16 %v7741
      %v7835 = vunpack.c.l.b16 %v7742
      %v7836 = vunpack.c.l.b16 %v7743
      %v7837 = vunpack.c.l.b16 %v7744
      %v7838 = vunpack.c.l.b16 %v7745
      %v7839 = vunpack.c.l.b16 %v7746
      %v7840 = vunpack.c.l.b16 %v7747
      %v7841 = vunpack.c.l.b16 %v7748
      %v7842 = vunpack.c.l.b16 %v7749
      %v7843 = vunpack.c.l.b16 %v7750
      %v7844 = vunpack.c.l.b16 %v7751
      %v7845 = vunpack.c.l.b16 %v7752
      %v7846 = vunpack.c.l.b16 %v7753
      %v7847 = vunpack.c.l.b16 %v7754
      %v7848 = vunpack.c.l.b16 %v7755
      %v7849 = vunpack.c.l.b16 %v7756
      %v7850 = vunpack.c.l.b16 %v7757
      %v7851 = vunpack.c.l.b16 %v7758
      %v7852 = vunpack.c.l.b16 %v7759
      %v7853 = vunpack.c.l.b16 %v7760
      %v7854 = vunpack.c.l.b16 %v7761
      %v7855 = vunpack.c.l.b16 %v7762
      %v7856 = vunpack.c.l.b16 %v7763
      %v7857 = vunpack.c.l.b16 %v7764
      %v7858 = vunpack.c.l.b16 %v7765
      %v7859 = vunpack.c.l.b16 %v7766
      %v7860 = vunpack.c.l.b16 %v7767
      %v7861 = vunpack.c.l.b16 %v7768
      %v7862 = vunpack.c.l.b16 %v7769
      %v7863 = vunpack.c.l.b16 %v7770
      %v7864 = vunpack.c.l.b16 %v7771
      %v7865 = vunpack.c.l.b16 %v7772
      %v7866 = vunpack.c.l.b16 %v7773
      %v7867 = vunpack.c.l.b16 %v7774
      %v7868 = vunpack.c.l.b16 %v7775
      %v7869 = vunpack.c.l.b16 %v7776
      %v7870 = vunpack.c.l.b16 %v7777
      %v7871 = vunpack.c.l.b16 %v7778
      %v7872 = vunpack.c.l.b16 %v7779
      %v7873 = vunpack.c.l.b16 %v7780
      %v7874 = vunpack.c.l.b16 %v7781
      %v7875 = vpack.c.b16 %v7834, %v7833
      %v7876 = vpack.c.b16 %v7836, %v7835
      %v7877 = vpack.c.b16 %v7838, %v7837
      %v7878 = vpack.c.b16 %v7840, %v7839
      %v7879 = vpack.c.b16 %v7842, %v7841
      %v7880 = vpack.c.b16 %v7844, %v7843
      %v7881 = vpack.c.b16 %v7846, %v7845
      %v7882 = vpack.c.b16 %v7848, %v7847
      %v7883 = vpack.c.b16 %v7850, %v7849
      %v7884 = vpack.c.b16 %v7852, %v7851
      %v7885 = vpack.c.b16 %v7854, %v7853
      %v7886 = vpack.c.b16 %v7856, %v7855
      %v7887 = vpack.c.b16 %v7858, %v7857
      %v7888 = vpack.c.b16 %v7860, %v7859
      %v7889 = vpack.c.b16 %v7862, %v7861
      %v7890 = vpack.c.b16 %v7864, %v7863
      %v7891 = vpack.c.b16 %v7866, %v7865
      %v7892 = vpack.c.b16 %v7868, %v7867
      %v7893 = vpack.c.b16 %v7870, %v7869
      %v7894 = vpack.c.b16 %v7872, %v7871
      %v7895 = vpack.c.b16 %v7874, %v7873
      %v7897 = vshrl.u32 %v7875, 16
      %v7899 = vrot.slane %v7897, 3
      %v7900 = vshll.u32 %v7875, 16
      %v7902 = vrot.slane %v7900, 4
      %v7903 = vor.u32 %v7899, %v7902
      %v7905 = vshrl.u32 %v7876, 16
      %v7907 = vrot.slane %v7905, 3
      %v7908 = vshll.u32 %v7876, 16
      %v7910 = vrot.slane %v7908, 4
      %v7911 = vor.u32 %v7907, %v7910
      %v7912 = vsel %vm2544, %v7903, %v7911
      %v7914 = vshrl.u32 %v7877, 16
      %v7916 = vrot.slane %v7914, 3
      %v7917 = vshll.u32 %v7877, 16
      %v7919 = vrot.slane %v7917, 4
      %v7920 = vor.u32 %v7916, %v7919
      %v7921 = vsel %vm2544, %v7911, %v7920
      %v7923 = vshrl.u32 %v7878, 16
      %v7925 = vrot.slane %v7923, 3
      %v7926 = vshll.u32 %v7878, 16
      %v7928 = vrot.slane %v7926, 4
      %v7929 = vor.u32 %v7925, %v7928
      %v7930 = vsel %vm2544, %v7920, %v7929
      %v7932 = vshrl.u32 %v7879, 16
      %v7934 = vrot.slane %v7932, 3
      %v7935 = vshll.u32 %v7879, 16
      %v7937 = vrot.slane %v7935, 4
      %v7938 = vor.u32 %v7934, %v7937
      %v7939 = vsel %vm2544, %v7929, %v7938
      %v7941 = vshrl.u32 %v7880, 16
      %v7943 = vrot.slane %v7941, 3
      %v7944 = vshll.u32 %v7880, 16
      %v7946 = vrot.slane %v7944, 4
      %v7947 = vor.u32 %v7943, %v7946
      %v7948 = vsel %vm2544, %v7938, %v7947
      %v7950 = vshrl.u32 %v7881, 16
      %v7952 = vrot.slane %v7950, 3
      %v7953 = vshll.u32 %v7881, 16
      %v7955 = vrot.slane %v7953, 4
      %v7956 = vor.u32 %v7952, %v7955
      %v7957 = vsel %vm2544, %v7947, %v7956
      %v7959 = vshrl.u32 %v7882, 16
      %v7961 = vrot.slane %v7959, 3
      %v7962 = vshll.u32 %v7882, 16
      %v7964 = vrot.slane %v7962, 4
      %v7965 = vor.u32 %v7961, %v7964
      %v7966 = vsel %vm2544, %v7956, %v7965
      %v7968 = vshrl.u32 %v7883, 16
      %v7970 = vrot.slane %v7968, 3
      %v7971 = vshll.u32 %v7883, 16
      %v7973 = vrot.slane %v7971, 4
      %v7974 = vor.u32 %v7970, %v7973
      %v7975 = vsel %vm2544, %v7965, %v7974
      %v7977 = vshrl.u32 %v7884, 16
      %v7979 = vrot.slane %v7977, 3
      %v7980 = vshll.u32 %v7884, 16
      %v7982 = vrot.slane %v7980, 4
      %v7983 = vor.u32 %v7979, %v7982
      %v7984 = vsel %vm2544, %v7974, %v7983
      %v7986 = vshrl.u32 %v7885, 16
      %v7988 = vrot.slane %v7986, 3
      %v7989 = vshll.u32 %v7885, 16
      %v7991 = vrot.slane %v7989, 4
      %v7992 = vor.u32 %v7988, %v7991
      %v7993 = vsel %vm2544, %v7983, %v7992
      %v7995 = vshrl.u32 %v7886, 16
      %v7997 = vrot.slane %v7995, 3
      %v7998 = vshll.u32 %v7886, 16
      %v8000 = vrot.slane %v7998, 4
      %v8001 = vor.u32 %v7997, %v8000
      %v8002 = vsel %vm2544, %v7992, %v8001
      %v8004 = vshrl.u32 %v7887, 16
      %v8006 = vrot.slane %v8004, 3
      %v8007 = vshll.u32 %v7887, 16
      %v8009 = vrot.slane %v8007, 4
      %v8010 = vor.u32 %v8006, %v8009
      %v8011 = vsel %vm2544, %v8001, %v8010
      %v8013 = vshrl.u32 %v7888, 16
      %v8015 = vrot.slane %v8013, 3
      %v8016 = vshll.u32 %v7888, 16
      %v8018 = vrot.slane %v8016, 4
      %v8019 = vor.u32 %v8015, %v8018
      %v8020 = vsel %vm2544, %v8010, %v8019
      %v8022 = vshrl.u32 %v7889, 16
      %v8024 = vrot.slane %v8022, 3
      %v8025 = vshll.u32 %v7889, 16
      %v8027 = vrot.slane %v8025, 4
      %v8028 = vor.u32 %v8024, %v8027
      %v8029 = vsel %vm2544, %v8019, %v8028
      %v8031 = vshrl.u32 %v7890, 16
      %v8033 = vrot.slane %v8031, 3
      %v8034 = vshll.u32 %v7890, 16
      %v8036 = vrot.slane %v8034, 4
      %v8037 = vor.u32 %v8033, %v8036
      %v8038 = vsel %vm2544, %v8028, %v8037
      %v8040 = vshrl.u32 %v7891, 16
      %v8042 = vrot.slane %v8040, 3
      %v8043 = vshll.u32 %v7891, 16
      %v8045 = vrot.slane %v8043, 4
      %v8046 = vor.u32 %v8042, %v8045
      %v8047 = vsel %vm2544, %v8037, %v8046
      %v8049 = vshrl.u32 %v7892, 16
      %v8051 = vrot.slane %v8049, 3
      %v8052 = vshll.u32 %v7892, 16
      %v8054 = vrot.slane %v8052, 4
      %v8055 = vor.u32 %v8051, %v8054
      %v8056 = vsel %vm2544, %v8046, %v8055
      %v8058 = vshrl.u32 %v7893, 16
      %v8060 = vrot.slane %v8058, 3
      %v8061 = vshll.u32 %v7893, 16
      %v8063 = vrot.slane %v8061, 4
      %v8064 = vor.u32 %v8060, %v8063
      %v8065 = vsel %vm2544, %v8055, %v8064
      %v8067 = vshrl.u32 %v7894, 16
      %v8069 = vrot.slane %v8067, 3
      %v8070 = vshll.u32 %v7894, 16
      %v8072 = vrot.slane %v8070, 4
      %v8073 = vor.u32 %v8069, %v8072
      %v8074 = vsel %vm2544, %v8064, %v8073
      %v8076 = vshrl.u32 %v7895, 16
      %v8078 = vrot.slane %v8076, 3
      %v8079 = vshll.u32 %v7895, 16
      %v8081 = vrot.slane %v8079, 4
      %v8082 = vor.u32 %v8078, %v8081
      %v8083 = vsel %vm2544, %v8073, %v8082
      %v8092 = vunpack.c.l.b16 %v7783
      %v8093 = vunpack.c.l.b16 %v7784
      %v8094 = vunpack.c.l.b16 %v7785
      %v8095 = vunpack.c.l.b16 %v7786
      %v8096 = vunpack.c.l.b16 %v7787
      %v8097 = vunpack.c.l.b16 %v7788
      %v8098 = vunpack.c.l.b16 %v7789
      %v8099 = vunpack.c.l.b16 %v7790
      %v8100 = vpack.c.b16 %v8093, %v8092
      %v8101 = vpack.c.b16 %v8095, %v8094
      %v8102 = vpack.c.b16 %v8097, %v8096
      %v8103 = vpack.c.b16 %v8099, %v8098
      %v8109 = vsel %vm1788, %v7912, 0
      %v8112 = vsel %vm1788, %v7921, 0
      %v8115 = vsel %vm1788, %v7930, 0
      %v8118 = vsel %vm1788, %v7939, 0
      %v8121 = vsel %vm1788, %v7948, 0
      %v8124 = vsel %vm1788, %v7957, 0
      %v8127 = vsel %vm1788, %v7966, 0
      %v8130 = vsel %vm1788, %v7975, 0
      %v8133 = vsel %vm1788, %v7984, 0
      %v8136 = vsel %vm1788, %v7993, 0
      %v8139 = vsel %vm1788, %v8002, 0
      %v8142 = vsel %vm1788, %v8011, 0
      %v8145 = vsel %vm1788, %v8020, 0
      %v8148 = vsel %vm1788, %v8029, 0
      %v8151 = vsel %vm1788, %v8038, 0
      %v8154 = vsel %vm1788, %v8047, 0
      %v8157 = vsel %vm1788, %v8056, 0
      %v8160 = vsel %vm1788, %v8065, 0
      %v8163 = vsel %vm1788, %v8074, 0
      %v8166 = vsel %vm1788, %v8083, 0
      %v8169 = vsel %vm1788, %v8082, 0
      %8171 = vmatprep.subr.bf16.mxu0 0
      %8172 = vmatpush1.bf16.msra.mxu0 0
      %8173 = vmatprep.subr.bf16.mxu0 0
      %8174 = vmatpush1.bf16.msra.mxu0 0
      %8175 = vmatprep.subr.bf16.mxu0 0
      %8176 = vmatpush1.bf16.msra.mxu0 0
      %8177 = vmatprep.subr.bf16.mxu0 0
      %8178 = vmatpush1.bf16.msra.mxu0 0
      %8179 = vmatprep.subr.bf16.mxu0 0
      %8180 = vmatpush1.bf16.msra.mxu0 %v8103
      %8181 = vmatprep.subr.bf16.mxu0 0
      %8182 = vmatpush1.bf16.msra.mxu0 %v8102
      %8183 = vmatprep.subr.bf16.mxu0 0
      %8184 = vmatpush1.bf16.msra.mxu0 %v8101
      %8185 = vmatprep.subr.bf16.mxu0 0
      %8186 = vmatpush1.bf16.msra.mxu0 %v8100
      %8187 = vmatprep.subr.bf16.mxu0 0
      %8188 = vmatpush2.bf16.msra.mxu0 0
      %8189 = vmatprep.subr.bf16.mxu0 0
      %8190 = vmatpush2.bf16.msra.mxu0 0
      %8191 = vmatprep.subr.bf16.mxu0 0
      %8192 = vmatpush2.bf16.msra.mxu0 0
      %8193 = vmatprep.subr.bf16.mxu0 0
      %8194 = vmatpush2.bf16.msra.mxu0 0
      %8195 = vmatprep.subr.bf16.mxu0 0
      %8196 = vmatpush2.bf16.msra.mxu0 0
      %8197 = vmatprep.subr.bf16.mxu0 0
      %8198 = vmatpush2.bf16.msra.mxu0 0
      %8199 = vmatprep.subr.bf16.mxu0 0
      %8200 = vmatpush2.bf16.msra.mxu0 0
      %8201 = vmatprep.subr.bf16.mxu0 0
      %8202 = vmatpush2.bf16.msra.mxu0 0
      %8203 = vmatprep.mubr.bf16.mxu0 0
      %8204 = vmatmul.mubr.bf16.gmra.mxu0 %v8109
      %v8205 = vpop.f32.mrf.mxu0
      %v8206 = vadd.f32 0.0, %v8205
      %v8207 = vpop.f32.mrf.mxu0
      %v8208 = vpop.f32.mrf.mxu0
      %v8209 = vadd.f32 0.0, %v8208
      %v8210 = vpop.f32.mrf.mxu0
      %8211 = vmatprep.mubr.bf16.mxu0 0
      %8212 = vmatmul.mubr.bf16.gmra.mxu0 %v8112
      %v8213 = vpop.f32.mrf.mxu0
      %v8214 = vadd.f32 0.0, %v8213
      %v8215 = vpop.f32.mrf.mxu0
      %v8216 = vpop.f32.mrf.mxu0
      %v8217 = vadd.f32 0.0, %v8216
      %v8218 = vpop.f32.mrf.mxu0
      %8219 = vmatprep.mubr.bf16.mxu0 0
      %8220 = vmatmul.mubr.bf16.gmra.mxu0 %v8115
      %v8221 = vpop.f32.mrf.mxu0
      %v8222 = vadd.f32 0.0, %v8221
      %v8223 = vpop.f32.mrf.mxu0
      %v8224 = vpop.f32.mrf.mxu0
      %v8225 = vadd.f32 0.0, %v8224
      %v8226 = vpop.f32.mrf.mxu0
      %8227 = vmatprep.mubr.bf16.mxu0 0
      %8228 = vmatmul.mubr.bf16.gmra.mxu0 %v8118
      %v8229 = vpop.f32.mrf.mxu0
      %v8230 = vadd.f32 0.0, %v8229
      %v8231 = vpop.f32.mrf.mxu0
      %v8232 = vpop.f32.mrf.mxu0
      %v8233 = vadd.f32 0.0, %v8232
      %v8234 = vpop.f32.mrf.mxu0
      %8235 = vmatprep.mubr.bf16.mxu0 0
      %8236 = vmatmul.mubr.bf16.gmra.mxu0 %v8121
      %v8237 = vpop.f32.mrf.mxu0
      %v8238 = vadd.f32 0.0, %v8237
      %v8239 = vpop.f32.mrf.mxu0
      %v8240 = vpop.f32.mrf.mxu0
      %v8241 = vadd.f32 0.0, %v8240
      %v8242 = vpop.f32.mrf.mxu0
      %8243 = vmatprep.mubr.bf16.mxu0 0
      %8244 = vmatmul.mubr.bf16.gmra.mxu0 %v8124
      %v8245 = vpop.f32.mrf.mxu0
      %v8246 = vadd.f32 0.0, %v8245
      %v8247 = vpop.f32.mrf.mxu0
      %v8248 = vpop.f32.mrf.mxu0
      %v8249 = vadd.f32 0.0, %v8248
      %v8250 = vpop.f32.mrf.mxu0
      %8251 = vmatprep.mubr.bf16.mxu0 0
      %8252 = vmatmul.mubr.bf16.gmra.mxu0 %v8127
      %v8253 = vpop.f32.mrf.mxu0
      %v8254 = vadd.f32 0.0, %v8253
      %v8255 = vpop.f32.mrf.mxu0
      %v8256 = vpop.f32.mrf.mxu0
      %v8257 = vadd.f32 0.0, %v8256
      %v8258 = vpop.f32.mrf.mxu0
      %8259 = vmatprep.mubr.bf16.mxu0 0
      %8260 = vmatmul.mubr.bf16.gmra.mxu0 %v8130
      %v8261 = vpop.f32.mrf.mxu0
      %v8262 = vadd.f32 0.0, %v8261
      %v8263 = vpop.f32.mrf.mxu0
      %v8264 = vpop.f32.mrf.mxu0
      %v8265 = vadd.f32 0.0, %v8264
      %v8266 = vpop.f32.mrf.mxu0
      %8267 = vmatprep.mubr.bf16.mxu0 0
      %8268 = vmatmul.mubr.bf16.gmra.mxu0 %v8133
      %v8269 = vpop.f32.mrf.mxu0
      %v8270 = vadd.f32 0.0, %v8269
      %v8271 = vpop.f32.mrf.mxu0
      %v8272 = vpop.f32.mrf.mxu0
      %v8273 = vadd.f32 0.0, %v8272
      %v8274 = vpop.f32.mrf.mxu0
      %8275 = vmatprep.mubr.bf16.mxu0 0
      %8276 = vmatmul.mubr.bf16.gmra.mxu0 %v8136
      %v8277 = vpop.f32.mrf.mxu0
      %v8278 = vadd.f32 0.0, %v8277
      %v8279 = vpop.f32.mrf.mxu0
      %v8280 = vpop.f32.mrf.mxu0
      %v8281 = vadd.f32 0.0, %v8280
      %v8282 = vpop.f32.mrf.mxu0
      %8283 = vmatprep.mubr.bf16.mxu0 0
      %8284 = vmatmul.mubr.bf16.gmra.mxu0 %v8139
      %v8285 = vpop.f32.mrf.mxu0
      %v8286 = vadd.f32 0.0, %v8285
      %v8287 = vpop.f32.mrf.mxu0
      %v8288 = vpop.f32.mrf.mxu0
      %v8289 = vadd.f32 0.0, %v8288
      %v8290 = vpop.f32.mrf.mxu0
      %8291 = vmatprep.mubr.bf16.mxu0 0
      %8292 = vmatmul.mubr.bf16.gmra.mxu0 %v8142
      %v8293 = vpop.f32.mrf.mxu0
      %v8294 = vadd.f32 0.0, %v8293
      %v8295 = vpop.f32.mrf.mxu0
      %v8296 = vpop.f32.mrf.mxu0
      %v8297 = vadd.f32 0.0, %v8296
      %v8298 = vpop.f32.mrf.mxu0
      %8299 = vmatprep.mubr.bf16.mxu0 0
      %8300 = vmatmul.mubr.bf16.gmra.mxu0 %v8145
      %v8301 = vpop.f32.mrf.mxu0
      %v8302 = vadd.f32 0.0, %v8301
      %v8303 = vpop.f32.mrf.mxu0
      %v8304 = vpop.f32.mrf.mxu0
      %v8305 = vadd.f32 0.0, %v8304
      %v8306 = vpop.f32.mrf.mxu0
      %8307 = vmatprep.mubr.bf16.mxu0 0
      %8308 = vmatmul.mubr.bf16.gmra.mxu0 %v8148
      %v8309 = vpop.f32.mrf.mxu0
      %v8310 = vadd.f32 0.0, %v8309
      %v8311 = vpop.f32.mrf.mxu0
      %v8312 = vpop.f32.mrf.mxu0
      %v8313 = vadd.f32 0.0, %v8312
      %v8314 = vpop.f32.mrf.mxu0
      %8315 = vmatprep.mubr.bf16.mxu0 0
      %8316 = vmatmul.mubr.bf16.gmra.mxu0 %v8151
      %v8317 = vpop.f32.mrf.mxu0
      %v8318 = vadd.f32 0.0, %v8317
      %v8319 = vpop.f32.mrf.mxu0
      %v8320 = vpop.f32.mrf.mxu0
      %v8321 = vadd.f32 0.0, %v8320
      %v8322 = vpop.f32.mrf.mxu0
      %8323 = vmatprep.mubr.bf16.mxu0 0
      %8324 = vmatmul.mubr.bf16.gmra.mxu0 %v8154
      %v8325 = vpop.f32.mrf.mxu0
      %v8326 = vadd.f32 0.0, %v8325
      %v8327 = vpop.f32.mrf.mxu0
      %v8328 = vpop.f32.mrf.mxu0
      %v8329 = vadd.f32 0.0, %v8328
      %v8330 = vpop.f32.mrf.mxu0
      %8331 = vmatprep.mubr.bf16.mxu0 0
      %8332 = vmatmul.mubr.bf16.gmra.mxu0 %v8157
      %v8333 = vpop.f32.mrf.mxu0
      %v8334 = vadd.f32 0.0, %v8333
      %v8335 = vpop.f32.mrf.mxu0
      %v8336 = vpop.f32.mrf.mxu0
      %v8337 = vadd.f32 0.0, %v8336
      %v8338 = vpop.f32.mrf.mxu0
      %8339 = vmatprep.mubr.bf16.mxu0 0
      %8340 = vmatmul.mubr.bf16.gmra.mxu0 %v8160
      %v8341 = vpop.f32.mrf.mxu0
      %v8342 = vadd.f32 0.0, %v8341
      %v8343 = vpop.f32.mrf.mxu0
      %v8344 = vpop.f32.mrf.mxu0
      %v8345 = vadd.f32 0.0, %v8344
      %v8346 = vpop.f32.mrf.mxu0
      %8347 = vmatprep.mubr.bf16.mxu0 0
      %8348 = vmatmul.mubr.bf16.gmra.mxu0 %v8163
      %v8349 = vpop.f32.mrf.mxu0
      %v8350 = vadd.f32 0.0, %v8349
      %v8351 = vpop.f32.mrf.mxu0
      %v8352 = vpop.f32.mrf.mxu0
      %v8353 = vadd.f32 0.0, %v8352
      %v8354 = vpop.f32.mrf.mxu0
      %8355 = vmatprep.mubr.bf16.mxu0 0
      %8356 = vmatmul.mubr.bf16.gmra.mxu0 %v8166
      %v8357 = vpop.f32.mrf.mxu0
      %v8358 = vadd.f32 0.0, %v8357
      %v8359 = vpop.f32.mrf.mxu0
      %v8360 = vpop.f32.mrf.mxu0
      %v8361 = vadd.f32 0.0, %v8360
      %v8362 = vpop.f32.mrf.mxu0
      %8363 = vmatprep.mubr.bf16.mxu0 0
      %8364 = vmatmul.mubr.bf16.gmra.mxu0 %v8169
      %v8365 = vpop.f32.mrf.mxu0
      %v8366 = vadd.f32 0.0, %v8365
      %v8367 = vpop.f32.mrf.mxu0
      %v8368 = vpop.f32.mrf.mxu0
      %v8369 = vpop.f32.mrf.mxu0
      %8370 = vdwg.mxu0
      %v8371 = vadd.f32 %v7699, %v8206
      %v8372 = vadd.f32 %v7700, %v8209
      %v8373 = vadd.f32 %v7701, %v8214
      %v8374 = vadd.f32 %v7702, %v8217
      %v8375 = vadd.f32 %v7703, %v8222
      %v8376 = vadd.f32 %v7704, %v8225
      %v8377 = vadd.f32 %v7705, %v8230
      %v8378 = vadd.f32 %v7706, %v8233
      %v8379 = vadd.f32 %v7707, %v8238
      %v8380 = vadd.f32 %v7708, %v8241
      %v8381 = vadd.f32 %v7709, %v8246
      %v8382 = vadd.f32 %v7710, %v8249
      %v8383 = vadd.f32 %v7711, %v8254
      %v8384 = vadd.f32 %v7712, %v8257
      %v8385 = vadd.f32 %v7713, %v8262
      %v8386 = vadd.f32 %v7714, %v8265
      %v8387 = vadd.f32 %v7715, %v8270
      %v8388 = vadd.f32 %v7716, %v8273
      %v8389 = vadd.f32 %v7717, %v8278
      %v8390 = vadd.f32 %v7718, %v8281
      %v8391 = vadd.f32 %v7719, %v8286
      %v8392 = vadd.f32 %v7720, %v8289
      %v8393 = vadd.f32 %v7721, %v8294
      %v8394 = vadd.f32 %v7722, %v8297
      %v8395 = vadd.f32 %v7723, %v8302
      %v8396 = vadd.f32 %v7724, %v8305
      %v8397 = vadd.f32 %v7725, %v8310
      %v8398 = vadd.f32 %v7726, %v8313
      %v8399 = vadd.f32 %v7727, %v8318
      %v8400 = vadd.f32 %v7728, %v8321
      %v8401 = vadd.f32 %v7729, %v8326
      %v8402 = vadd.f32 %v7730, %v8329
      %v8403 = vadd.f32 %v7731, %v8334
      %v8404 = vadd.f32 %v7732, %v8337
      %v8405 = vadd.f32 %v7733, %v8342
      %v8406 = vadd.f32 %v7734, %v8345
      %v8407 = vadd.f32 %v7735, %v8350
      %v8408 = vadd.f32 %v7736, %v8353
      %v8409 = vadd.f32 %v7737, %v8358
      %v8410 = vadd.f32 %v7738, %v8361
      %v8411 = vadd.f32 %v7739, %v8366
      %s8412 = scalar_lea.vmem %s8, 128
      %v8413 = vld [vmem:[%s8412] sm:$0xf]
      %v8414 = vld [vmem:[%s8412 + $0x4] sm:$0xf]
      %v8415 = vld [vmem:[%s8412 + $0x8] sm:$0xf]
      %v8416 = vld [vmem:[%s8412 + $0xc] sm:$0xf]
      %v8417 = vld [vmem:[%s8412 + $0x10] sm:$0xf]
      %v8418 = vld [vmem:[%s8412 + $0x14] sm:$0xf]
      %v8419 = vld [vmem:[%s8412 + $0x18] sm:$0xf]
      %v8420 = vld [vmem:[%s8412 + $0x1c] sm:$0xf]
      %v8421 = vpack.c.b16 %v7835, %v7834
      %v8422 = vpack.c.b16 %v7837, %v7836
      %v8423 = vpack.c.b16 %v7839, %v7838
      %v8424 = vpack.c.b16 %v7841, %v7840
      %v8425 = vpack.c.b16 %v7843, %v7842
      %v8426 = vpack.c.b16 %v7845, %v7844
      %v8427 = vpack.c.b16 %v7847, %v7846
      %v8428 = vpack.c.b16 %v7849, %v7848
      %v8429 = vpack.c.b16 %v7851, %v7850
      %v8430 = vpack.c.b16 %v7853, %v7852
      %v8431 = vpack.c.b16 %v7855, %v7854
      %v8432 = vpack.c.b16 %v7857, %v7856
      %v8433 = vpack.c.b16 %v7859, %v7858
      %v8434 = vpack.c.b16 %v7861, %v7860
      %v8435 = vpack.c.b16 %v7863, %v7862
      %v8436 = vpack.c.b16 %v7865, %v7864
      %v8437 = vpack.c.b16 %v7867, %v7866
      %v8438 = vpack.c.b16 %v7869, %v7868
      %v8439 = vpack.c.b16 %v7871, %v7870
      %v8440 = vpack.c.b16 %v7873, %v7872
      %v8441 = vpack.c.b16 %v7874, %v7874
      %v8450 = vunpack.c.l.b16 %v8413
      %v8451 = vunpack.c.l.b16 %v8414
      %v8452 = vunpack.c.l.b16 %v8415
      %v8453 = vunpack.c.l.b16 %v8416
      %v8454 = vunpack.c.l.b16 %v8417
      %v8455 = vunpack.c.l.b16 %v8418
      %v8456 = vunpack.c.l.b16 %v8419
      %v8457 = vunpack.c.l.b16 %v8420
      %v8458 = vpack.c.b16 %v8451, %v8450
      %v8459 = vpack.c.b16 %v8453, %v8452
      %v8460 = vpack.c.b16 %v8455, %v8454
      %v8461 = vpack.c.b16 %v8457, %v8456
      %v8467 = vsel %vm1788, %v8421, 0
      %v8470 = vsel %vm1788, %v8422, 0
      %v8473 = vsel %vm1788, %v8423, 0
      %v8476 = vsel %vm1788, %v8424, 0
      %v8479 = vsel %vm1788, %v8425, 0
      %v8482 = vsel %vm1788, %v8426, 0
      %v8485 = vsel %vm1788, %v8427, 0
      %v8488 = vsel %vm1788, %v8428, 0
      %v8491 = vsel %vm1788, %v8429, 0
      %v8494 = vsel %vm1788, %v8430, 0
      %v8497 = vsel %vm1788, %v8431, 0
      %v8500 = vsel %vm1788, %v8432, 0
      %v8503 = vsel %vm1788, %v8433, 0
      %v8506 = vsel %vm1788, %v8434, 0
      %v8509 = vsel %vm1788, %v8435, 0
      %v8512 = vsel %vm1788, %v8436, 0
      %v8515 = vsel %vm1788, %v8437, 0
      %v8518 = vsel %vm1788, %v8438, 0
      %v8521 = vsel %vm1788, %v8439, 0
      %v8524 = vsel %vm1788, %v8440, 0
      %v8527 = vsel %vm1788, %v8441, 0
      %8529 = vmatprep.subr.bf16.mxu0 0
      %8530 = vmatpush1.bf16.msra.mxu0 0
      %8531 = vmatprep.subr.bf16.mxu0 0
      %8532 = vmatpush1.bf16.msra.mxu0 0
      %8533 = vmatprep.subr.bf16.mxu0 0
      %8534 = vmatpush1.bf16.msra.mxu0 0
      %8535 = vmatprep.subr.bf16.mxu0 0
      %8536 = vmatpush1.bf16.msra.mxu0 0
      %8537 = vmatprep.subr.bf16.mxu0 0
      %8538 = vmatpush1.bf16.msra.mxu0 %v8461
      %8539 = vmatprep.subr.bf16.mxu0 0
      %8540 = vmatpush1.bf16.msra.mxu0 %v8460
      %8541 = vmatprep.subr.bf16.mxu0 0
      %8542 = vmatpush1.bf16.msra.mxu0 %v8459
      %8543 = vmatprep.subr.bf16.mxu0 0
      %8544 = vmatpush1.bf16.msra.mxu0 %v8458
      %8545 = vmatprep.subr.bf16.mxu0 0
      %8546 = vmatpush2.bf16.msra.mxu0 0
      %8547 = vmatprep.subr.bf16.mxu0 0
      %8548 = vmatpush2.bf16.msra.mxu0 0
      %8549 = vmatprep.subr.bf16.mxu0 0
      %8550 = vmatpush2.bf16.msra.mxu0 0
      %8551 = vmatprep.subr.bf16.mxu0 0
      %8552 = vmatpush2.bf16.msra.mxu0 0
      %8553 = vmatprep.subr.bf16.mxu0 0
      %8554 = vmatpush2.bf16.msra.mxu0 0
      %8555 = vmatprep.subr.bf16.mxu0 0
      %8556 = vmatpush2.bf16.msra.mxu0 0
      %8557 = vmatprep.subr.bf16.mxu0 0
      %8558 = vmatpush2.bf16.msra.mxu0 0
      %8559 = vmatprep.subr.bf16.mxu0 0
      %8560 = vmatpush2.bf16.msra.mxu0 0
      %8561 = vmatprep.mubr.bf16.mxu0 0
      %8562 = vmatmul.mubr.bf16.gmra.mxu0 %v8467
      %v8563 = vpop.f32.mrf.mxu0
      %v8564 = vadd.f32 0.0, %v8563
      %v8565 = vpop.f32.mrf.mxu0
      %v8566 = vpop.f32.mrf.mxu0
      %v8567 = vadd.f32 0.0, %v8566
      %v8568 = vpop.f32.mrf.mxu0
      %8569 = vmatprep.mubr.bf16.mxu0 0
      %8570 = vmatmul.mubr.bf16.gmra.mxu0 %v8470
      %v8571 = vpop.f32.mrf.mxu0
      %v8572 = vadd.f32 0.0, %v8571
      %v8573 = vpop.f32.mrf.mxu0
      %v8574 = vpop.f32.mrf.mxu0
      %v8575 = vadd.f32 0.0, %v8574
      %v8576 = vpop.f32.mrf.mxu0
      %8577 = vmatprep.mubr.bf16.mxu0 0
      %8578 = vmatmul.mubr.bf16.gmra.mxu0 %v8473
      %v8579 = vpop.f32.mrf.mxu0
      %v8580 = vadd.f32 0.0, %v8579
      %v8581 = vpop.f32.mrf.mxu0
      %v8582 = vpop.f32.mrf.mxu0
      %v8583 = vadd.f32 0.0, %v8582
      %v8584 = vpop.f32.mrf.mxu0
      %8585 = vmatprep.mubr.bf16.mxu0 0
      %8586 = vmatmul.mubr.bf16.gmra.mxu0 %v8476
      %v8587 = vpop.f32.mrf.mxu0
      %v8588 = vadd.f32 0.0, %v8587
      %v8589 = vpop.f32.mrf.mxu0
      %v8590 = vpop.f32.mrf.mxu0
      %v8591 = vadd.f32 0.0, %v8590
      %v8592 = vpop.f32.mrf.mxu0
      %8593 = vmatprep.mubr.bf16.mxu0 0
      %8594 = vmatmul.mubr.bf16.gmra.mxu0 %v8479
      %v8595 = vpop.f32.mrf.mxu0
      %v8596 = vadd.f32 0.0, %v8595
      %v8597 = vpop.f32.mrf.mxu0
      %v8598 = vpop.f32.mrf.mxu0
      %v8599 = vadd.f32 0.0, %v8598
      %v8600 = vpop.f32.mrf.mxu0
      %8601 = vmatprep.mubr.bf16.mxu0 0
      %8602 = vmatmul.mubr.bf16.gmra.mxu0 %v8482
      %v8603 = vpop.f32.mrf.mxu0
      %v8604 = vadd.f32 0.0, %v8603
      %v8605 = vpop.f32.mrf.mxu0
      %v8606 = vpop.f32.mrf.mxu0
      %v8607 = vadd.f32 0.0, %v8606
      %v8608 = vpop.f32.mrf.mxu0
      %8609 = vmatprep.mubr.bf16.mxu0 0
      %8610 = vmatmul.mubr.bf16.gmra.mxu0 %v8485
      %v8611 = vpop.f32.mrf.mxu0
      %v8612 = vadd.f32 0.0, %v8611
      %v8613 = vpop.f32.mrf.mxu0
      %v8614 = vpop.f32.mrf.mxu0
      %v8615 = vadd.f32 0.0, %v8614
      %v8616 = vpop.f32.mrf.mxu0
      %8617 = vmatprep.mubr.bf16.mxu0 0
      %8618 = vmatmul.mubr.bf16.gmra.mxu0 %v8488
      %v8619 = vpop.f32.mrf.mxu0
      %v8620 = vadd.f32 0.0, %v8619
      %v8621 = vpop.f32.mrf.mxu0
      %v8622 = vpop.f32.mrf.mxu0
      %v8623 = vadd.f32 0.0, %v8622
      %v8624 = vpop.f32.mrf.mxu0
      %8625 = vmatprep.mubr.bf16.mxu0 0
      %8626 = vmatmul.mubr.bf16.gmra.mxu0 %v8491
      %v8627 = vpop.f32.mrf.mxu0
      %v8628 = vadd.f32 0.0, %v8627
      %v8629 = vpop.f32.mrf.mxu0
      %v8630 = vpop.f32.mrf.mxu0
      %v8631 = vadd.f32 0.0, %v8630
      %v8632 = vpop.f32.mrf.mxu0
      %8633 = vmatprep.mubr.bf16.mxu0 0
      %8634 = vmatmul.mubr.bf16.gmra.mxu0 %v8494
      %v8635 = vpop.f32.mrf.mxu0
      %v8636 = vadd.f32 0.0, %v8635
      %v8637 = vpop.f32.mrf.mxu0
      %v8638 = vpop.f32.mrf.mxu0
      %v8639 = vadd.f32 0.0, %v8638
      %v8640 = vpop.f32.mrf.mxu0
      %8641 = vmatprep.mubr.bf16.mxu0 0
      %8642 = vmatmul.mubr.bf16.gmra.mxu0 %v8497
      %v8643 = vpop.f32.mrf.mxu0
      %v8644 = vadd.f32 0.0, %v8643
      %v8645 = vpop.f32.mrf.mxu0
      %v8646 = vpop.f32.mrf.mxu0
      %v8647 = vadd.f32 0.0, %v8646
      %v8648 = vpop.f32.mrf.mxu0
      %8649 = vmatprep.mubr.bf16.mxu0 0
      %8650 = vmatmul.mubr.bf16.gmra.mxu0 %v8500
      %v8651 = vpop.f32.mrf.mxu0
      %v8652 = vadd.f32 0.0, %v8651
      %v8653 = vpop.f32.mrf.mxu0
      %v8654 = vpop.f32.mrf.mxu0
      %v8655 = vadd.f32 0.0, %v8654
      %v8656 = vpop.f32.mrf.mxu0
      %8657 = vmatprep.mubr.bf16.mxu0 0
      %8658 = vmatmul.mubr.bf16.gmra.mxu0 %v8503
      %v8659 = vpop.f32.mrf.mxu0
      %v8660 = vadd.f32 0.0, %v8659
      %v8661 = vpop.f32.mrf.mxu0
      %v8662 = vpop.f32.mrf.mxu0
      %v8663 = vadd.f32 0.0, %v8662
      %v8664 = vpop.f32.mrf.mxu0
      %8665 = vmatprep.mubr.bf16.mxu0 0
      %8666 = vmatmul.mubr.bf16.gmra.mxu0 %v8506
      %v8667 = vpop.f32.mrf.mxu0
      %v8668 = vadd.f32 0.0, %v8667
      %v8669 = vpop.f32.mrf.mxu0
      %v8670 = vpop.f32.mrf.mxu0
      %v8671 = vadd.f32 0.0, %v8670
      %v8672 = vpop.f32.mrf.mxu0
      %8673 = vmatprep.mubr.bf16.mxu0 0
      %8674 = vmatmul.mubr.bf16.gmra.mxu0 %v8509
      %v8675 = vpop.f32.mrf.mxu0
      %v8676 = vadd.f32 0.0, %v8675
      %v8677 = vpop.f32.mrf.mxu0
      %v8678 = vpop.f32.mrf.mxu0
      %v8679 = vadd.f32 0.0, %v8678
      %v8680 = vpop.f32.mrf.mxu0
      %8681 = vmatprep.mubr.bf16.mxu0 0
      %8682 = vmatmul.mubr.bf16.gmra.mxu0 %v8512
      %v8683 = vpop.f32.mrf.mxu0
      %v8684 = vadd.f32 0.0, %v8683
      %v8685 = vpop.f32.mrf.mxu0
      %v8686 = vpop.f32.mrf.mxu0
      %v8687 = vadd.f32 0.0, %v8686
      %v8688 = vpop.f32.mrf.mxu0
      %8689 = vmatprep.mubr.bf16.mxu0 0
      %8690 = vmatmul.mubr.bf16.gmra.mxu0 %v8515
      %v8691 = vpop.f32.mrf.mxu0
      %v8692 = vadd.f32 0.0, %v8691
      %v8693 = vpop.f32.mrf.mxu0
      %v8694 = vpop.f32.mrf.mxu0
      %v8695 = vadd.f32 0.0, %v8694
      %v8696 = vpop.f32.mrf.mxu0
      %8697 = vmatprep.mubr.bf16.mxu0 0
      %8698 = vmatmul.mubr.bf16.gmra.mxu0 %v8518
      %v8699 = vpop.f32.mrf.mxu0
      %v8700 = vadd.f32 0.0, %v8699
      %v8701 = vpop.f32.mrf.mxu0
      %v8702 = vpop.f32.mrf.mxu0
      %v8703 = vadd.f32 0.0, %v8702
      %v8704 = vpop.f32.mrf.mxu0
      %8705 = vmatprep.mubr.bf16.mxu0 0
      %8706 = vmatmul.mubr.bf16.gmra.mxu0 %v8521
      %v8707 = vpop.f32.mrf.mxu0
      %v8708 = vadd.f32 0.0, %v8707
      %v8709 = vpop.f32.mrf.mxu0
      %v8710 = vpop.f32.mrf.mxu0
      %v8711 = vadd.f32 0.0, %v8710
      %v8712 = vpop.f32.mrf.mxu0
      %8713 = vmatprep.mubr.bf16.mxu0 0
      %8714 = vmatmul.mubr.bf16.gmra.mxu0 %v8524
      %v8715 = vpop.f32.mrf.mxu0
      %v8716 = vadd.f32 0.0, %v8715
      %v8717 = vpop.f32.mrf.mxu0
      %v8718 = vpop.f32.mrf.mxu0
      %v8719 = vadd.f32 0.0, %v8718
      %v8720 = vpop.f32.mrf.mxu0
      %8721 = vmatprep.mubr.bf16.mxu0 0
      %8722 = vmatmul.mubr.bf16.gmra.mxu0 %v8527
      %v8723 = vpop.f32.mrf.mxu0
      %v8724 = vadd.f32 0.0, %v8723
      %v8725 = vpop.f32.mrf.mxu0
      %v8726 = vpop.f32.mrf.mxu0
      %v8727 = vpop.f32.mrf.mxu0
      %8728 = vdwg.mxu0
      %v8729 = vadd.f32 %v8371, %v8564
      %v8730 = vadd.f32 %v8372, %v8567
      %v8731 = vadd.f32 %v8373, %v8572
      %v8732 = vadd.f32 %v8374, %v8575
      %v8733 = vadd.f32 %v8375, %v8580
      %v8734 = vadd.f32 %v8376, %v8583
      %v8735 = vadd.f32 %v8377, %v8588
      %v8736 = vadd.f32 %v8378, %v8591
      %v8737 = vadd.f32 %v8379, %v8596
      %v8738 = vadd.f32 %v8380, %v8599
      %v8739 = vadd.f32 %v8381, %v8604
      %v8740 = vadd.f32 %v8382, %v8607
      %v8741 = vadd.f32 %v8383, %v8612
      %v8742 = vadd.f32 %v8384, %v8615
      %v8743 = vadd.f32 %v8385, %v8620
      %v8744 = vadd.f32 %v8386, %v8623
      %v8745 = vadd.f32 %v8387, %v8628
      %v8746 = vadd.f32 %v8388, %v8631
      %v8747 = vadd.f32 %v8389, %v8636
      %v8748 = vadd.f32 %v8390, %v8639
      %v8749 = vadd.f32 %v8391, %v8644
      %v8750 = vadd.f32 %v8392, %v8647
      %v8751 = vadd.f32 %v8393, %v8652
      %v8752 = vadd.f32 %v8394, %v8655
      %v8753 = vadd.f32 %v8395, %v8660
      %v8754 = vadd.f32 %v8396, %v8663
      %v8755 = vadd.f32 %v8397, %v8668
      %v8756 = vadd.f32 %v8398, %v8671
      %v8757 = vadd.f32 %v8399, %v8676
      %v8758 = vadd.f32 %v8400, %v8679
      %v8759 = vadd.f32 %v8401, %v8684
      %v8760 = vadd.f32 %v8402, %v8687
      %v8761 = vadd.f32 %v8403, %v8692
      %v8762 = vadd.f32 %v8404, %v8695
      %v8763 = vadd.f32 %v8405, %v8700
      %v8764 = vadd.f32 %v8406, %v8703
      %v8765 = vadd.f32 %v8407, %v8708
      %v8766 = vadd.f32 %v8408, %v8711
      %v8767 = vadd.f32 %v8409, %v8716
      %v8768 = vadd.f32 %v8410, %v8719
      %v8769 = vadd.f32 %v8411, %v8724
      %v8770 = vld [vmem:[#allocation2 + $0xb0] sm:$0x7]
      %s8771 = scalar_lea.vmem %s8, 160
      %v8772 = vld [vmem:[%s8771] sm:$0xf]
      %v8773 = vld [vmem:[%s8771 + $0x4] sm:$0xf]
      %v8774 = vld [vmem:[%s8771 + $0x8] sm:$0xf]
      %v8775 = vld [vmem:[%s8771 + $0xc] sm:$0xf]
      %v8776 = vld [vmem:[%s8771 + $0x10] sm:$0xf]
      %v8777 = vld [vmem:[%s8771 + $0x14] sm:$0xf]
      %v8778 = vld [vmem:[%s8771 + $0x18] sm:$0xf]
      %v8779 = vld [vmem:[%s8771 + $0x1c] sm:$0xf]
      %v8781 = vunpack.c.l.b16 %v8770
      %v8782 = vpack.c.b16 %v8781, %v8781
      %v8783 = vshrl.u32 %v8421, 16
      %v8785 = vshll.u32 %v8421, 16
      %v8787 = vrot.slane %v8785, 1
      %v8788 = vor.u32 %v8783, %v8787
      %v8789 = vshll.u32 %v8422, 16
      %v8791 = vrot.slane %v8789, 1
      %v8792 = vsel %vm4009, %v8788, %v8791
      %v8793 = vshrl.u32 %v8422, 16
      %v8795 = vor.u32 %v8793, %v8791
      %v8796 = vshll.u32 %v8423, 16
      %v8798 = vrot.slane %v8796, 1
      %v8799 = vsel %vm4009, %v8795, %v8798
      %v8800 = vshrl.u32 %v8423, 16
      %v8802 = vor.u32 %v8800, %v8798
      %v8803 = vshll.u32 %v8424, 16
      %v8805 = vrot.slane %v8803, 1
      %v8806 = vsel %vm4009, %v8802, %v8805
      %v8807 = vshrl.u32 %v8424, 16
      %v8809 = vor.u32 %v8807, %v8805
      %v8810 = vshll.u32 %v8425, 16
      %v8812 = vrot.slane %v8810, 1
      %v8813 = vsel %vm4009, %v8809, %v8812
      %v8814 = vshrl.u32 %v8425, 16
      %v8816 = vor.u32 %v8814, %v8812
      %v8817 = vshll.u32 %v8426, 16
      %v8819 = vrot.slane %v8817, 1
      %v8820 = vsel %vm4009, %v8816, %v8819
      %v8821 = vshrl.u32 %v8426, 16
      %v8823 = vor.u32 %v8821, %v8819
      %v8824 = vshll.u32 %v8427, 16
      %v8826 = vrot.slane %v8824, 1
      %v8827 = vsel %vm4009, %v8823, %v8826
      %v8828 = vshrl.u32 %v8427, 16
      %v8830 = vor.u32 %v8828, %v8826
      %v8831 = vshll.u32 %v8428, 16
      %v8833 = vrot.slane %v8831, 1
      %v8834 = vsel %vm4009, %v8830, %v8833
      %v8835 = vshrl.u32 %v8428, 16
      %v8837 = vor.u32 %v8835, %v8833
      %v8838 = vshll.u32 %v8429, 16
      %v8840 = vrot.slane %v8838, 1
      %v8841 = vsel %vm4009, %v8837, %v8840
      %v8842 = vshrl.u32 %v8429, 16
      %v8844 = vor.u32 %v8842, %v8840
      %v8845 = vshll.u32 %v8430, 16
      %v8847 = vrot.slane %v8845, 1
      %v8848 = vsel %vm4009, %v8844, %v8847
      %v8849 = vshrl.u32 %v8430, 16
      %v8851 = vor.u32 %v8849, %v8847
      %v8852 = vshll.u32 %v8431, 16
      %v8854 = vrot.slane %v8852, 1
      %v8855 = vsel %vm4009, %v8851, %v8854
      %v8856 = vshrl.u32 %v8431, 16
      %v8858 = vor.u32 %v8856, %v8854
      %v8859 = vshll.u32 %v8432, 16
      %v8861 = vrot.slane %v8859, 1
      %v8862 = vsel %vm4009, %v8858, %v8861
      %v8863 = vshrl.u32 %v8432, 16
      %v8865 = vor.u32 %v8863, %v8861
      %v8866 = vshll.u32 %v8433, 16
      %v8868 = vrot.slane %v8866, 1
      %v8869 = vsel %vm4009, %v8865, %v8868
      %v8870 = vshrl.u32 %v8433, 16
      %v8872 = vor.u32 %v8870, %v8868
      %v8873 = vshll.u32 %v8434, 16
      %v8875 = vrot.slane %v8873, 1
      %v8876 = vsel %vm4009, %v8872, %v8875
      %v8877 = vshrl.u32 %v8434, 16
      %v8879 = vor.u32 %v8877, %v8875
      %v8880 = vshll.u32 %v8435, 16
      %v8882 = vrot.slane %v8880, 1
      %v8883 = vsel %vm4009, %v8879, %v8882
      %v8884 = vshrl.u32 %v8435, 16
      %v8886 = vor.u32 %v8884, %v8882
      %v8887 = vshll.u32 %v8436, 16
      %v8889 = vrot.slane %v8887, 1
      %v8890 = vsel %vm4009, %v8886, %v8889
      %v8891 = vshrl.u32 %v8436, 16
      %v8893 = vor.u32 %v8891, %v8889
      %v8894 = vshll.u32 %v8437, 16
      %v8896 = vrot.slane %v8894, 1
      %v8897 = vsel %vm4009, %v8893, %v8896
      %v8898 = vshrl.u32 %v8437, 16
      %v8900 = vor.u32 %v8898, %v8896
      %v8901 = vshll.u32 %v8438, 16
      %v8903 = vrot.slane %v8901, 1
      %v8904 = vsel %vm4009, %v8900, %v8903
      %v8905 = vshrl.u32 %v8438, 16
      %v8907 = vor.u32 %v8905, %v8903
      %v8908 = vshll.u32 %v8439, 16
      %v8910 = vrot.slane %v8908, 1
      %v8911 = vsel %vm4009, %v8907, %v8910
      %v8912 = vshrl.u32 %v8439, 16
      %v8914 = vor.u32 %v8912, %v8910
      %v8915 = vshll.u32 %v8440, 16
      %v8917 = vrot.slane %v8915, 1
      %v8918 = vsel %vm4009, %v8914, %v8917
      %v8919 = vshrl.u32 %v8440, 16
      %v8921 = vor.u32 %v8919, %v8917
      %v8923 = vshll.u32 %v8782, 16
      %v8925 = vrot.slane %v8923, 1
      %v8926 = vsel %vm4009, %v8921, %v8925
      %v8927 = vshrl.u32 %v8782, 16
      %v8929 = vor.u32 %v8927, %v8925
      %v8938 = vunpack.c.l.b16 %v8772
      %v8939 = vunpack.c.l.b16 %v8773
      %v8940 = vunpack.c.l.b16 %v8774
      %v8941 = vunpack.c.l.b16 %v8775
      %v8942 = vunpack.c.l.b16 %v8776
      %v8943 = vunpack.c.l.b16 %v8777
      %v8944 = vunpack.c.l.b16 %v8778
      %v8945 = vunpack.c.l.b16 %v8779
      %v8946 = vpack.c.b16 %v8939, %v8938
      %v8947 = vpack.c.b16 %v8941, %v8940
      %v8948 = vpack.c.b16 %v8943, %v8942
      %v8949 = vpack.c.b16 %v8945, %v8944
      %v8955 = vsel %vm1788, %v8792, 0
      %v8958 = vsel %vm1788, %v8799, 0
      %v8961 = vsel %vm1788, %v8806, 0
      %v8964 = vsel %vm1788, %v8813, 0
      %v8967 = vsel %vm1788, %v8820, 0
      %v8970 = vsel %vm1788, %v8827, 0
      %v8973 = vsel %vm1788, %v8834, 0
      %v8976 = vsel %vm1788, %v8841, 0
      %v8979 = vsel %vm1788, %v8848, 0
      %v8982 = vsel %vm1788, %v8855, 0
      %v8985 = vsel %vm1788, %v8862, 0
      %v8988 = vsel %vm1788, %v8869, 0
      %v8991 = vsel %vm1788, %v8876, 0
      %v8994 = vsel %vm1788, %v8883, 0
      %v8997 = vsel %vm1788, %v8890, 0
      %v9000 = vsel %vm1788, %v8897, 0
      %v9003 = vsel %vm1788, %v8904, 0
      %v9006 = vsel %vm1788, %v8911, 0
      %v9009 = vsel %vm1788, %v8918, 0
      %v9012 = vsel %vm1788, %v8926, 0
      %v9015 = vsel %vm1788, %v8929, 0
      %9017 = vmatprep.subr.bf16.mxu0 0
      %9018 = vmatpush1.bf16.msra.mxu0 0
      %9019 = vmatprep.subr.bf16.mxu0 0
      %9020 = vmatpush1.bf16.msra.mxu0 0
      %9021 = vmatprep.subr.bf16.mxu0 0
      %9022 = vmatpush1.bf16.msra.mxu0 0
      %9023 = vmatprep.subr.bf16.mxu0 0
      %9024 = vmatpush1.bf16.msra.mxu0 0
      %9025 = vmatprep.subr.bf16.mxu0 0
      %9026 = vmatpush1.bf16.msra.mxu0 %v8949
      %9027 = vmatprep.subr.bf16.mxu0 0
      %9028 = vmatpush1.bf16.msra.mxu0 %v8948
      %9029 = vmatprep.subr.bf16.mxu0 0
      %9030 = vmatpush1.bf16.msra.mxu0 %v8947
      %9031 = vmatprep.subr.bf16.mxu0 0
      %9032 = vmatpush1.bf16.msra.mxu0 %v8946
      %9033 = vmatprep.subr.bf16.mxu0 0
      %9034 = vmatpush2.bf16.msra.mxu0 0
      %9035 = vmatprep.subr.bf16.mxu0 0
      %9036 = vmatpush2.bf16.msra.mxu0 0
      %9037 = vmatprep.subr.bf16.mxu0 0
      %9038 = vmatpush2.bf16.msra.mxu0 0
      %9039 = vmatprep.subr.bf16.mxu0 0
      %9040 = vmatpush2.bf16.msra.mxu0 0
      %9041 = vmatprep.subr.bf16.mxu0 0
      %9042 = vmatpush2.bf16.msra.mxu0 0
      %9043 = vmatprep.subr.bf16.mxu0 0
      %9044 = vmatpush2.bf16.msra.mxu0 0
      %9045 = vmatprep.subr.bf16.mxu0 0
      %9046 = vmatpush2.bf16.msra.mxu0 0
      %9047 = vmatprep.subr.bf16.mxu0 0
      %9048 = vmatpush2.bf16.msra.mxu0 0
      %9049 = vmatprep.mubr.bf16.mxu0 0
      %9050 = vmatmul.mubr.bf16.gmra.mxu0 %v8955
      %v9051 = vpop.f32.mrf.mxu0
      %v9052 = vadd.f32 0.0, %v9051
      %v9053 = vpop.f32.mrf.mxu0
      %v9054 = vpop.f32.mrf.mxu0
      %v9055 = vadd.f32 0.0, %v9054
      %v9056 = vpop.f32.mrf.mxu0
      %9057 = vmatprep.mubr.bf16.mxu0 0
      %9058 = vmatmul.mubr.bf16.gmra.mxu0 %v8958
      %v9059 = vpop.f32.mrf.mxu0
      %v9060 = vadd.f32 0.0, %v9059
      %v9061 = vpop.f32.mrf.mxu0
      %v9062 = vpop.f32.mrf.mxu0
      %v9063 = vadd.f32 0.0, %v9062
      %v9064 = vpop.f32.mrf.mxu0
      %9065 = vmatprep.mubr.bf16.mxu0 0
      %9066 = vmatmul.mubr.bf16.gmra.mxu0 %v8961
      %v9067 = vpop.f32.mrf.mxu0
      %v9068 = vadd.f32 0.0, %v9067
      %v9069 = vpop.f32.mrf.mxu0
      %v9070 = vpop.f32.mrf.mxu0
      %v9071 = vadd.f32 0.0, %v9070
      %v9072 = vpop.f32.mrf.mxu0
      %9073 = vmatprep.mubr.bf16.mxu0 0
      %9074 = vmatmul.mubr.bf16.gmra.mxu0 %v8964
      %v9075 = vpop.f32.mrf.mxu0
      %v9076 = vadd.f32 0.0, %v9075
      %v9077 = vpop.f32.mrf.mxu0
      %v9078 = vpop.f32.mrf.mxu0
      %v9079 = vadd.f32 0.0, %v9078
      %v9080 = vpop.f32.mrf.mxu0
      %9081 = vmatprep.mubr.bf16.mxu0 0
      %9082 = vmatmul.mubr.bf16.gmra.mxu0 %v8967
      %v9083 = vpop.f32.mrf.mxu0
      %v9084 = vadd.f32 0.0, %v9083
      %v9085 = vpop.f32.mrf.mxu0
      %v9086 = vpop.f32.mrf.mxu0
      %v9087 = vadd.f32 0.0, %v9086
      %v9088 = vpop.f32.mrf.mxu0
      %9089 = vmatprep.mubr.bf16.mxu0 0
      %9090 = vmatmul.mubr.bf16.gmra.mxu0 %v8970
      %v9091 = vpop.f32.mrf.mxu0
      %v9092 = vadd.f32 0.0, %v9091
      %v9093 = vpop.f32.mrf.mxu0
      %v9094 = vpop.f32.mrf.mxu0
      %v9095 = vadd.f32 0.0, %v9094
      %v9096 = vpop.f32.mrf.mxu0
      %9097 = vmatprep.mubr.bf16.mxu0 0
      %9098 = vmatmul.mubr.bf16.gmra.mxu0 %v8973
      %v9099 = vpop.f32.mrf.mxu0
      %v9100 = vadd.f32 0.0, %v9099
      %v9101 = vpop.f32.mrf.mxu0
      %v9102 = vpop.f32.mrf.mxu0
      %v9103 = vadd.f32 0.0, %v9102
      %v9104 = vpop.f32.mrf.mxu0
      %9105 = vmatprep.mubr.bf16.mxu0 0
      %9106 = vmatmul.mubr.bf16.gmra.mxu0 %v8976
      %v9107 = vpop.f32.mrf.mxu0
      %v9108 = vadd.f32 0.0, %v9107
      %v9109 = vpop.f32.mrf.mxu0
      %v9110 = vpop.f32.mrf.mxu0
      %v9111 = vadd.f32 0.0, %v9110
      %v9112 = vpop.f32.mrf.mxu0
      %9113 = vmatprep.mubr.bf16.mxu0 0
      %9114 = vmatmul.mubr.bf16.gmra.mxu0 %v8979
      %v9115 = vpop.f32.mrf.mxu0
      %v9116 = vadd.f32 0.0, %v9115
      %v9117 = vpop.f32.mrf.mxu0
      %v9118 = vpop.f32.mrf.mxu0
      %v9119 = vadd.f32 0.0, %v9118
      %v9120 = vpop.f32.mrf.mxu0
      %9121 = vmatprep.mubr.bf16.mxu0 0
      %9122 = vmatmul.mubr.bf16.gmra.mxu0 %v8982
      %v9123 = vpop.f32.mrf.mxu0
      %v9124 = vadd.f32 0.0, %v9123
      %v9125 = vpop.f32.mrf.mxu0
      %v9126 = vpop.f32.mrf.mxu0
      %v9127 = vadd.f32 0.0, %v9126
      %v9128 = vpop.f32.mrf.mxu0
      %9129 = vmatprep.mubr.bf16.mxu0 0
      %9130 = vmatmul.mubr.bf16.gmra.mxu0 %v8985
      %v9131 = vpop.f32.mrf.mxu0
      %v9132 = vadd.f32 0.0, %v9131
      %v9133 = vpop.f32.mrf.mxu0
      %v9134 = vpop.f32.mrf.mxu0
      %v9135 = vadd.f32 0.0, %v9134
      %v9136 = vpop.f32.mrf.mxu0
      %9137 = vmatprep.mubr.bf16.mxu0 0
      %9138 = vmatmul.mubr.bf16.gmra.mxu0 %v8988
      %v9139 = vpop.f32.mrf.mxu0
      %v9140 = vadd.f32 0.0, %v9139
      %v9141 = vpop.f32.mrf.mxu0
      %v9142 = vpop.f32.mrf.mxu0
      %v9143 = vadd.f32 0.0, %v9142
      %v9144 = vpop.f32.mrf.mxu0
      %9145 = vmatprep.mubr.bf16.mxu0 0
      %9146 = vmatmul.mubr.bf16.gmra.mxu0 %v8991
      %v9147 = vpop.f32.mrf.mxu0
      %v9148 = vadd.f32 0.0, %v9147
      %v9149 = vpop.f32.mrf.mxu0
      %v9150 = vpop.f32.mrf.mxu0
      %v9151 = vadd.f32 0.0, %v9150
      %v9152 = vpop.f32.mrf.mxu0
      %9153 = vmatprep.mubr.bf16.mxu0 0
      %9154 = vmatmul.mubr.bf16.gmra.mxu0 %v8994
      %v9155 = vpop.f32.mrf.mxu0
      %v9156 = vadd.f32 0.0, %v9155
      %v9157 = vpop.f32.mrf.mxu0
      %v9158 = vpop.f32.mrf.mxu0
      %v9159 = vadd.f32 0.0, %v9158
      %v9160 = vpop.f32.mrf.mxu0
      %9161 = vmatprep.mubr.bf16.mxu0 0
      %9162 = vmatmul.mubr.bf16.gmra.mxu0 %v8997
      %v9163 = vpop.f32.mrf.mxu0
      %v9164 = vadd.f32 0.0, %v9163
      %v9165 = vpop.f32.mrf.mxu0
      %v9166 = vpop.f32.mrf.mxu0
      %v9167 = vadd.f32 0.0, %v9166
      %v9168 = vpop.f32.mrf.mxu0
      %9169 = vmatprep.mubr.bf16.mxu0 0
      %9170 = vmatmul.mubr.bf16.gmra.mxu0 %v9000
      %v9171 = vpop.f32.mrf.mxu0
      %v9172 = vadd.f32 0.0, %v9171
      %v9173 = vpop.f32.mrf.mxu0
      %v9174 = vpop.f32.mrf.mxu0
      %v9175 = vadd.f32 0.0, %v9174
      %v9176 = vpop.f32.mrf.mxu0
      %9177 = vmatprep.mubr.bf16.mxu0 0
      %9178 = vmatmul.mubr.bf16.gmra.mxu0 %v9003
      %v9179 = vpop.f32.mrf.mxu0
      %v9180 = vadd.f32 0.0, %v9179
      %v9181 = vpop.f32.mrf.mxu0
      %v9182 = vpop.f32.mrf.mxu0
      %v9183 = vadd.f32 0.0, %v9182
      %v9184 = vpop.f32.mrf.mxu0
      %9185 = vmatprep.mubr.bf16.mxu0 0
      %9186 = vmatmul.mubr.bf16.gmra.mxu0 %v9006
      %v9187 = vpop.f32.mrf.mxu0
      %v9188 = vadd.f32 0.0, %v9187
      %v9189 = vpop.f32.mrf.mxu0
      %v9190 = vpop.f32.mrf.mxu0
      %v9191 = vadd.f32 0.0, %v9190
      %v9192 = vpop.f32.mrf.mxu0
      %9193 = vmatprep.mubr.bf16.mxu0 0
      %9194 = vmatmul.mubr.bf16.gmra.mxu0 %v9009
      %v9195 = vpop.f32.mrf.mxu0
      %v9196 = vadd.f32 0.0, %v9195
      %v9197 = vpop.f32.mrf.mxu0
      %v9198 = vpop.f32.mrf.mxu0
      %v9199 = vadd.f32 0.0, %v9198
      %v9200 = vpop.f32.mrf.mxu0
      %9201 = vmatprep.mubr.bf16.mxu0 0
      %9202 = vmatmul.mubr.bf16.gmra.mxu0 %v9012
      %v9203 = vpop.f32.mrf.mxu0
      %v9204 = vadd.f32 0.0, %v9203
      %v9205 = vpop.f32.mrf.mxu0
      %v9206 = vpop.f32.mrf.mxu0
      %v9207 = vadd.f32 0.0, %v9206
      %v9208 = vpop.f32.mrf.mxu0
      %9209 = vmatprep.mubr.bf16.mxu0 0
      %9210 = vmatmul.mubr.bf16.gmra.mxu0 %v9015
      %v9211 = vpop.f32.mrf.mxu0
      %v9212 = vadd.f32 0.0, %v9211
      %v9213 = vpop.f32.mrf.mxu0
      %v9214 = vpop.f32.mrf.mxu0
      %v9215 = vpop.f32.mrf.mxu0
      %9216 = vdwg.mxu0
      %v9217 = vadd.f32 %v8729, %v9052
      %v9218 = vadd.f32 %v8730, %v9055
      %v9219 = vadd.f32 %v8731, %v9060
      %v9220 = vadd.f32 %v8732, %v9063
      %v9221 = vadd.f32 %v8733, %v9068
      %v9222 = vadd.f32 %v8734, %v9071
      %v9223 = vadd.f32 %v8735, %v9076
      %v9224 = vadd.f32 %v8736, %v9079
      %v9225 = vadd.f32 %v8737, %v9084
      %v9226 = vadd.f32 %v8738, %v9087
      %v9227 = vadd.f32 %v8739, %v9092
      %v9228 = vadd.f32 %v8740, %v9095
      %v9229 = vadd.f32 %v8741, %v9100
      %v9230 = vadd.f32 %v8742, %v9103
      %v9231 = vadd.f32 %v8743, %v9108
      %v9232 = vadd.f32 %v8744, %v9111
      %v9233 = vadd.f32 %v8745, %v9116
      %v9234 = vadd.f32 %v8746, %v9119
      %v9235 = vadd.f32 %v8747, %v9124
      %v9236 = vadd.f32 %v8748, %v9127
      %v9237 = vadd.f32 %v8749, %v9132
      %v9238 = vadd.f32 %v8750, %v9135
      %v9239 = vadd.f32 %v8751, %v9140
      %v9240 = vadd.f32 %v8752, %v9143
      %v9241 = vadd.f32 %v8753, %v9148
      %v9242 = vadd.f32 %v8754, %v9151
      %v9243 = vadd.f32 %v8755, %v9156
      %v9244 = vadd.f32 %v8756, %v9159
      %v9245 = vadd.f32 %v8757, %v9164
      %v9246 = vadd.f32 %v8758, %v9167
      %v9247 = vadd.f32 %v8759, %v9172
      %v9248 = vadd.f32 %v8760, %v9175
      %v9249 = vadd.f32 %v8761, %v9180
      %v9250 = vadd.f32 %v8762, %v9183
      %v9251 = vadd.f32 %v8763, %v9188
      %v9252 = vadd.f32 %v8764, %v9191
      %v9253 = vadd.f32 %v8765, %v9196
      %v9254 = vadd.f32 %v8766, %v9199
      %v9255 = vadd.f32 %v8767, %v9204
      %v9256 = vadd.f32 %v8768, %v9207
      %v9257 = vadd.f32 %v8769, %v9212
      %v9258 = vld [vmem:[#allocation2 + $0x18] sm:$0xf]
      %v9259 = vld [vmem:[#allocation2 + $0x1c] sm:$0xf]
      %v9260 = vld [vmem:[#allocation2 + $0x20] sm:$0xf]
      %v9261 = vld [vmem:[#allocation2 + $0x24] sm:$0xf]
      %v9262 = vld [vmem:[#allocation2 + $0x28] sm:$0xf]
      %v9263 = vld [vmem:[#allocation2 + $0x2c] sm:$0xf]
      %v9264 = vld [vmem:[#allocation2 + $0x30] sm:$0xf]
      %v9265 = vld [vmem:[#allocation2 + $0x34] sm:$0xf]
      %v9266 = vld [vmem:[#allocation2 + $0x38] sm:$0xf]
      %v9267 = vld [vmem:[#allocation2 + $0x3c] sm:$0xf]
      %v9268 = vld [vmem:[#allocation2 + $0x40] sm:$0xf]
      %v9269 = vld [vmem:[#allocation2 + $0x44] sm:$0xf]
      %v9270 = vld [vmem:[#allocation2 + $0x48] sm:$0xf]
      %v9271 = vld [vmem:[#allocation2 + $0x4c] sm:$0xf]
      %v9272 = vld [vmem:[#allocation2 + $0x50] sm:$0xf]
      %v9273 = vld [vmem:[#allocation2 + $0x54] sm:$0xf]
      %v9274 = vld [vmem:[#allocation2 + $0x58] sm:$0xf]
      %v9275 = vld [vmem:[#allocation2 + $0x5c] sm:$0xf]
      %v9276 = vld [vmem:[#allocation2 + $0x60] sm:$0xf]
      %v9277 = vld [vmem:[#allocation2 + $0x64] sm:$0xf]
      %v9278 = vld [vmem:[#allocation2 + $0x68] sm:$0xf]
      %v9279 = vld [vmem:[#allocation2 + $0x6c] sm:$0xf]
      %v9280 = vld [vmem:[#allocation2 + $0x70] sm:$0xf]
      %v9281 = vld [vmem:[#allocation2 + $0x74] sm:$0xf]
      %v9282 = vld [vmem:[#allocation2 + $0x78] sm:$0xf]
      %v9283 = vld [vmem:[#allocation2 + $0x7c] sm:$0xf]
      %v9284 = vld [vmem:[#allocation2 + $0x80] sm:$0xf]
      %v9285 = vld [vmem:[#allocation2 + $0x84] sm:$0xf]
      %v9286 = vld [vmem:[#allocation2 + $0x88] sm:$0xf]
      %v9287 = vld [vmem:[#allocation2 + $0x8c] sm:$0xf]
      %v9288 = vld [vmem:[#allocation2 + $0x90] sm:$0xf]
      %v9289 = vld [vmem:[#allocation2 + $0x94] sm:$0xf]
      %v9290 = vld [vmem:[#allocation2 + $0x98] sm:$0xf]
      %v9291 = vld [vmem:[#allocation2 + $0x9c] sm:$0xf]
      %v9292 = vld [vmem:[#allocation2 + $0xa0] sm:$0xf]
      %v9293 = vld [vmem:[#allocation2 + $0xa4] sm:$0xf]
      %v9294 = vld [vmem:[#allocation2 + $0xa8] sm:$0xf]
      %v9295 = vld [vmem:[#allocation2 + $0xac] sm:$0xf]
      %v9296 = vld [vmem:[#allocation2 + $0xb0] sm:$0xf]
      %v9297 = vld [vmem:[#allocation2 + $0xb4] sm:$0xf]
      %v9298 = vld [vmem:[#allocation2 + $0xb8] sm:$0x7]
      %s9299 = scalar_lea.vmem %s8, 192
      %v9300 = vld [vmem:[%s9299] sm:$0xf]
      %v9301 = vld [vmem:[%s9299 + $0x4] sm:$0xf]
      %v9302 = vld [vmem:[%s9299 + $0x8] sm:$0xf]
      %v9303 = vld [vmem:[%s9299 + $0xc] sm:$0xf]
      %v9304 = vld [vmem:[%s9299 + $0x10] sm:$0xf]
      %v9305 = vld [vmem:[%s9299 + $0x14] sm:$0xf]
      %v9306 = vld [vmem:[%s9299 + $0x18] sm:$0xf]
      %v9307 = vld [vmem:[%s9299 + $0x1c] sm:$0xf]
      %v9349 = vunpack.c.l.b16 %v9258
      %v9350 = vunpack.c.l.b16 %v9259
      %v9351 = vunpack.c.l.b16 %v9260
      %v9352 = vunpack.c.l.b16 %v9261
      %v9353 = vunpack.c.l.b16 %v9262
      %v9354 = vunpack.c.l.b16 %v9263
      %v9355 = vunpack.c.l.b16 %v9264
      %v9356 = vunpack.c.l.b16 %v9265
      %v9357 = vunpack.c.l.b16 %v9266
      %v9358 = vunpack.c.l.b16 %v9267
      %v9359 = vunpack.c.l.b16 %v9268
      %v9360 = vunpack.c.l.b16 %v9269
      %v9361 = vunpack.c.l.b16 %v9270
      %v9362 = vunpack.c.l.b16 %v9271
      %v9363 = vunpack.c.l.b16 %v9272
      %v9364 = vunpack.c.l.b16 %v9273
      %v9365 = vunpack.c.l.b16 %v9274
      %v9366 = vunpack.c.l.b16 %v9275
      %v9367 = vunpack.c.l.b16 %v9276
      %v9368 = vunpack.c.l.b16 %v9277
      %v9369 = vunpack.c.l.b16 %v9278
      %v9370 = vunpack.c.l.b16 %v9279
      %v9371 = vunpack.c.l.b16 %v9280
      %v9372 = vunpack.c.l.b16 %v9281
      %v9373 = vunpack.c.l.b16 %v9282
      %v9374 = vunpack.c.l.b16 %v9283
      %v9375 = vunpack.c.l.b16 %v9284
      %v9376 = vunpack.c.l.b16 %v9285
      %v9377 = vunpack.c.l.b16 %v9286
      %v9378 = vunpack.c.l.b16 %v9287
      %v9379 = vunpack.c.l.b16 %v9288
      %v9380 = vunpack.c.l.b16 %v9289
      %v9381 = vunpack.c.l.b16 %v9290
      %v9382 = vunpack.c.l.b16 %v9291
      %v9383 = vunpack.c.l.b16 %v9292
      %v9384 = vunpack.c.l.b16 %v9293
      %v9385 = vunpack.c.l.b16 %v9294
      %v9386 = vunpack.c.l.b16 %v9295
      %v9387 = vunpack.c.l.b16 %v9296
      %v9388 = vunpack.c.l.b16 %v9297
      %v9389 = vunpack.c.l.b16 %v9298
      %v9390 = vpack.c.b16 %v9350, %v9349
      %v9391 = vpack.c.b16 %v9352, %v9351
      %v9392 = vpack.c.b16 %v9354, %v9353
      %v9393 = vpack.c.b16 %v9356, %v9355
      %v9394 = vpack.c.b16 %v9358, %v9357
      %v9395 = vpack.c.b16 %v9360, %v9359
      %v9396 = vpack.c.b16 %v9362, %v9361
      %v9397 = vpack.c.b16 %v9364, %v9363
      %v9398 = vpack.c.b16 %v9366, %v9365
      %v9399 = vpack.c.b16 %v9368, %v9367
      %v9400 = vpack.c.b16 %v9370, %v9369
      %v9401 = vpack.c.b16 %v9372, %v9371
      %v9402 = vpack.c.b16 %v9374, %v9373
      %v9403 = vpack.c.b16 %v9376, %v9375
      %v9404 = vpack.c.b16 %v9378, %v9377
      %v9405 = vpack.c.b16 %v9380, %v9379
      %v9406 = vpack.c.b16 %v9382, %v9381
      %v9407 = vpack.c.b16 %v9384, %v9383
      %v9408 = vpack.c.b16 %v9386, %v9385
      %v9409 = vpack.c.b16 %v9388, %v9387
      %v9410 = vpack.c.b16 %v9389, %v9389
      %v9412 = vshrl.u32 %v9390, 16
      %v9414 = vshll.u32 %v9390, 16
      %v9416 = vrot.slane %v9414, 1
      %v9417 = vor.u32 %v9412, %v9416
      %v9419 = vshll.u32 %v9391, 16
      %v9421 = vrot.slane %v9419, 1
      %v9422 = vsel %vm4009, %v9417, %v9421
      %v9423 = vshrl.u32 %v9391, 16
      %v9425 = vor.u32 %v9423, %v9421
      %v9427 = vshll.u32 %v9392, 16
      %v9429 = vrot.slane %v9427, 1
      %v9430 = vsel %vm4009, %v9425, %v9429
      %v9431 = vshrl.u32 %v9392, 16
      %v9433 = vor.u32 %v9431, %v9429
      %v9435 = vshll.u32 %v9393, 16
      %v9437 = vrot.slane %v9435, 1
      %v9438 = vsel %vm4009, %v9433, %v9437
      %v9439 = vshrl.u32 %v9393, 16
      %v9441 = vor.u32 %v9439, %v9437
      %v9443 = vshll.u32 %v9394, 16
      %v9445 = vrot.slane %v9443, 1
      %v9446 = vsel %vm4009, %v9441, %v9445
      %v9447 = vshrl.u32 %v9394, 16
      %v9449 = vor.u32 %v9447, %v9445
      %v9451 = vshll.u32 %v9395, 16
      %v9453 = vrot.slane %v9451, 1
      %v9454 = vsel %vm4009, %v9449, %v9453
      %v9455 = vshrl.u32 %v9395, 16
      %v9457 = vor.u32 %v9455, %v9453
      %v9459 = vshll.u32 %v9396, 16
      %v9461 = vrot.slane %v9459, 1
      %v9462 = vsel %vm4009, %v9457, %v9461
      %v9463 = vshrl.u32 %v9396, 16
      %v9465 = vor.u32 %v9463, %v9461
      %v9467 = vshll.u32 %v9397, 16
      %v9469 = vrot.slane %v9467, 1
      %v9470 = vsel %vm4009, %v9465, %v9469
      %v9471 = vshrl.u32 %v9397, 16
      %v9473 = vor.u32 %v9471, %v9469
      %v9475 = vshll.u32 %v9398, 16
      %v9477 = vrot.slane %v9475, 1
      %v9478 = vsel %vm4009, %v9473, %v9477
      %v9479 = vshrl.u32 %v9398, 16
      %v9481 = vor.u32 %v9479, %v9477
      %v9483 = vshll.u32 %v9399, 16
      %v9485 = vrot.slane %v9483, 1
      %v9486 = vsel %vm4009, %v9481, %v9485
      %v9487 = vshrl.u32 %v9399, 16
      %v9489 = vor.u32 %v9487, %v9485
      %v9491 = vshll.u32 %v9400, 16
      %v9493 = vrot.slane %v9491, 1
      %v9494 = vsel %vm4009, %v9489, %v9493
      %v9495 = vshrl.u32 %v9400, 16
      %v9497 = vor.u32 %v9495, %v9493
      %v9499 = vshll.u32 %v9401, 16
      %v9501 = vrot.slane %v9499, 1
      %v9502 = vsel %vm4009, %v9497, %v9501
      %v9503 = vshrl.u32 %v9401, 16
      %v9505 = vor.u32 %v9503, %v9501
      %v9507 = vshll.u32 %v9402, 16
      %v9509 = vrot.slane %v9507, 1
      %v9510 = vsel %vm4009, %v9505, %v9509
      %v9511 = vshrl.u32 %v9402, 16
      %v9513 = vor.u32 %v9511, %v9509
      %v9515 = vshll.u32 %v9403, 16
      %v9517 = vrot.slane %v9515, 1
      %v9518 = vsel %vm4009, %v9513, %v9517
      %v9519 = vshrl.u32 %v9403, 16
      %v9521 = vor.u32 %v9519, %v9517
      %v9523 = vshll.u32 %v9404, 16
      %v9525 = vrot.slane %v9523, 1
      %v9526 = vsel %vm4009, %v9521, %v9525
      %v9527 = vshrl.u32 %v9404, 16
      %v9529 = vor.u32 %v9527, %v9525
      %v9531 = vshll.u32 %v9405, 16
      %v9533 = vrot.slane %v9531, 1
      %v9534 = vsel %vm4009, %v9529, %v9533
      %v9535 = vshrl.u32 %v9405, 16
      %v9537 = vor.u32 %v9535, %v9533
      %v9539 = vshll.u32 %v9406, 16
      %v9541 = vrot.slane %v9539, 1
      %v9542 = vsel %vm4009, %v9537, %v9541
      %v9543 = vshrl.u32 %v9406, 16
      %v9545 = vor.u32 %v9543, %v9541
      %v9547 = vshll.u32 %v9407, 16
      %v9549 = vrot.slane %v9547, 1
      %v9550 = vsel %vm4009, %v9545, %v9549
      %v9551 = vshrl.u32 %v9407, 16
      %v9553 = vor.u32 %v9551, %v9549
      %v9555 = vshll.u32 %v9408, 16
      %v9557 = vrot.slane %v9555, 1
      %v9558 = vsel %vm4009, %v9553, %v9557
      %v9559 = vshrl.u32 %v9408, 16
      %v9561 = vor.u32 %v9559, %v9557
      %v9563 = vshll.u32 %v9409, 16
      %v9565 = vrot.slane %v9563, 1
      %v9566 = vsel %vm4009, %v9561, %v9565
      %v9567 = vshrl.u32 %v9409, 16
      %v9569 = vor.u32 %v9567, %v9565
      %v9571 = vshll.u32 %v9410, 16
      %v9573 = vrot.slane %v9571, 1
      %v9574 = vsel %vm4009, %v9569, %v9573
      %v9575 = vshrl.u32 %v9410, 16
      %v9577 = vor.u32 %v9575, %v9573
      %v9586 = vunpack.c.l.b16 %v9300
      %v9587 = vunpack.c.l.b16 %v9301
      %v9588 = vunpack.c.l.b16 %v9302
      %v9589 = vunpack.c.l.b16 %v9303
      %v9590 = vunpack.c.l.b16 %v9304
      %v9591 = vunpack.c.l.b16 %v9305
      %v9592 = vunpack.c.l.b16 %v9306
      %v9593 = vunpack.c.l.b16 %v9307
      %v9594 = vpack.c.b16 %v9587, %v9586
      %v9595 = vpack.c.b16 %v9589, %v9588
      %v9596 = vpack.c.b16 %v9591, %v9590
      %v9597 = vpack.c.b16 %v9593, %v9592
      %v9603 = vsel %vm1788, %v9422, 0
      %v9606 = vsel %vm1788, %v9430, 0
      %v9609 = vsel %vm1788, %v9438, 0
      %v9612 = vsel %vm1788, %v9446, 0
      %v9615 = vsel %vm1788, %v9454, 0
      %v9618 = vsel %vm1788, %v9462, 0
      %v9621 = vsel %vm1788, %v9470, 0
      %v9624 = vsel %vm1788, %v9478, 0
      %v9627 = vsel %vm1788, %v9486, 0
      %v9630 = vsel %vm1788, %v9494, 0
      %v9633 = vsel %vm1788, %v9502, 0
      %v9636 = vsel %vm1788, %v9510, 0
      %v9639 = vsel %vm1788, %v9518, 0
      %v9642 = vsel %vm1788, %v9526, 0
      %v9645 = vsel %vm1788, %v9534, 0
      %v9648 = vsel %vm1788, %v9542, 0
      %v9651 = vsel %vm1788, %v9550, 0
      %v9654 = vsel %vm1788, %v9558, 0
      %v9657 = vsel %vm1788, %v9566, 0
      %v9660 = vsel %vm1788, %v9574, 0
      %v9663 = vsel %vm1788, %v9577, 0
      %9665 = vmatprep.subr.bf16.mxu0 0
      %9666 = vmatpush1.bf16.msra.mxu0 0
      %9667 = vmatprep.subr.bf16.mxu0 0
      %9668 = vmatpush1.bf16.msra.mxu0 0
      %9669 = vmatprep.subr.bf16.mxu0 0
      %9670 = vmatpush1.bf16.msra.mxu0 0
      %9671 = vmatprep.subr.bf16.mxu0 0
      %9672 = vmatpush1.bf16.msra.mxu0 0
      %9673 = vmatprep.subr.bf16.mxu0 0
      %9674 = vmatpush1.bf16.msra.mxu0 %v9597
      %9675 = vmatprep.subr.bf16.mxu0 0
      %9676 = vmatpush1.bf16.msra.mxu0 %v9596
      %9677 = vmatprep.subr.bf16.mxu0 0
      %9678 = vmatpush1.bf16.msra.mxu0 %v9595
      %9679 = vmatprep.subr.bf16.mxu0 0
      %9680 = vmatpush1.bf16.msra.mxu0 %v9594
      %9681 = vmatprep.subr.bf16.mxu0 0
      %9682 = vmatpush2.bf16.msra.mxu0 0
      %9683 = vmatprep.subr.bf16.mxu0 0
      %9684 = vmatpush2.bf16.msra.mxu0 0
      %9685 = vmatprep.subr.bf16.mxu0 0
      %9686 = vmatpush2.bf16.msra.mxu0 0
      %9687 = vmatprep.subr.bf16.mxu0 0
      %9688 = vmatpush2.bf16.msra.mxu0 0
      %9689 = vmatprep.subr.bf16.mxu0 0
      %9690 = vmatpush2.bf16.msra.mxu0 0
      %9691 = vmatprep.subr.bf16.mxu0 0
      %9692 = vmatpush2.bf16.msra.mxu0 0
      %9693 = vmatprep.subr.bf16.mxu0 0
      %9694 = vmatpush2.bf16.msra.mxu0 0
      %9695 = vmatprep.subr.bf16.mxu0 0
      %9696 = vmatpush2.bf16.msra.mxu0 0
      %9697 = vmatprep.mubr.bf16.mxu0 0
      %9698 = vmatmul.mubr.bf16.gmra.mxu0 %v9603
      %v9699 = vpop.f32.mrf.mxu0
      %v9700 = vadd.f32 0.0, %v9699
      %v9701 = vpop.f32.mrf.mxu0
      %v9702 = vpop.f32.mrf.mxu0
      %v9703 = vadd.f32 0.0, %v9702
      %v9704 = vpop.f32.mrf.mxu0
      %9705 = vmatprep.mubr.bf16.mxu0 0
      %9706 = vmatmul.mubr.bf16.gmra.mxu0 %v9606
      %v9707 = vpop.f32.mrf.mxu0
      %v9708 = vadd.f32 0.0, %v9707
      %v9709 = vpop.f32.mrf.mxu0
      %v9710 = vpop.f32.mrf.mxu0
      %v9711 = vadd.f32 0.0, %v9710
      %v9712 = vpop.f32.mrf.mxu0
      %9713 = vmatprep.mubr.bf16.mxu0 0
      %9714 = vmatmul.mubr.bf16.gmra.mxu0 %v9609
      %v9715 = vpop.f32.mrf.mxu0
      %v9716 = vadd.f32 0.0, %v9715
      %v9717 = vpop.f32.mrf.mxu0
      %v9718 = vpop.f32.mrf.mxu0
      %v9719 = vadd.f32 0.0, %v9718
      %v9720 = vpop.f32.mrf.mxu0
      %9721 = vmatprep.mubr.bf16.mxu0 0
      %9722 = vmatmul.mubr.bf16.gmra.mxu0 %v9612
      %v9723 = vpop.f32.mrf.mxu0
      %v9724 = vadd.f32 0.0, %v9723
      %v9725 = vpop.f32.mrf.mxu0
      %v9726 = vpop.f32.mrf.mxu0
      %v9727 = vadd.f32 0.0, %v9726
      %v9728 = vpop.f32.mrf.mxu0
      %9729 = vmatprep.mubr.bf16.mxu0 0
      %9730 = vmatmul.mubr.bf16.gmra.mxu0 %v9615
      %v9731 = vpop.f32.mrf.mxu0
      %v9732 = vadd.f32 0.0, %v9731
      %v9733 = vpop.f32.mrf.mxu0
      %v9734 = vpop.f32.mrf.mxu0
      %v9735 = vadd.f32 0.0, %v9734
      %v9736 = vpop.f32.mrf.mxu0
      %9737 = vmatprep.mubr.bf16.mxu0 0
      %9738 = vmatmul.mubr.bf16.gmra.mxu0 %v9618
      %v9739 = vpop.f32.mrf.mxu0
      %v9740 = vadd.f32 0.0, %v9739
      %v9741 = vpop.f32.mrf.mxu0
      %v9742 = vpop.f32.mrf.mxu0
      %v9743 = vadd.f32 0.0, %v9742
      %v9744 = vpop.f32.mrf.mxu0
      %9745 = vmatprep.mubr.bf16.mxu0 0
      %9746 = vmatmul.mubr.bf16.gmra.mxu0 %v9621
      %v9747 = vpop.f32.mrf.mxu0
      %v9748 = vadd.f32 0.0, %v9747
      %v9749 = vpop.f32.mrf.mxu0
      %v9750 = vpop.f32.mrf.mxu0
      %v9751 = vadd.f32 0.0, %v9750
      %v9752 = vpop.f32.mrf.mxu0
      %9753 = vmatprep.mubr.bf16.mxu0 0
      %9754 = vmatmul.mubr.bf16.gmra.mxu0 %v9624
      %v9755 = vpop.f32.mrf.mxu0
      %v9756 = vadd.f32 0.0, %v9755
      %v9757 = vpop.f32.mrf.mxu0
      %v9758 = vpop.f32.mrf.mxu0
      %v9759 = vadd.f32 0.0, %v9758
      %v9760 = vpop.f32.mrf.mxu0
      %9761 = vmatprep.mubr.bf16.mxu0 0
      %9762 = vmatmul.mubr.bf16.gmra.mxu0 %v9627
      %v9763 = vpop.f32.mrf.mxu0
      %v9764 = vadd.f32 0.0, %v9763
      %v9765 = vpop.f32.mrf.mxu0
      %v9766 = vpop.f32.mrf.mxu0
      %v9767 = vadd.f32 0.0, %v9766
      %v9768 = vpop.f32.mrf.mxu0
      %9769 = vmatprep.mubr.bf16.mxu0 0
      %9770 = vmatmul.mubr.bf16.gmra.mxu0 %v9630
      %v9771 = vpop.f32.mrf.mxu0
      %v9772 = vadd.f32 0.0, %v9771
      %v9773 = vpop.f32.mrf.mxu0
      %v9774 = vpop.f32.mrf.mxu0
      %v9775 = vadd.f32 0.0, %v9774
      %v9776 = vpop.f32.mrf.mxu0
      %9777 = vmatprep.mubr.bf16.mxu0 0
      %9778 = vmatmul.mubr.bf16.gmra.mxu0 %v9633
      %v9779 = vpop.f32.mrf.mxu0
      %v9780 = vadd.f32 0.0, %v9779
      %v9781 = vpop.f32.mrf.mxu0
      %v9782 = vpop.f32.mrf.mxu0
      %v9783 = vadd.f32 0.0, %v9782
      %v9784 = vpop.f32.mrf.mxu0
      %9785 = vmatprep.mubr.bf16.mxu0 0
      %9786 = vmatmul.mubr.bf16.gmra.mxu0 %v9636
      %v9787 = vpop.f32.mrf.mxu0
      %v9788 = vadd.f32 0.0, %v9787
      %v9789 = vpop.f32.mrf.mxu0
      %v9790 = vpop.f32.mrf.mxu0
      %v9791 = vadd.f32 0.0, %v9790
      %v9792 = vpop.f32.mrf.mxu0
      %9793 = vmatprep.mubr.bf16.mxu0 0
      %9794 = vmatmul.mubr.bf16.gmra.mxu0 %v9639
      %v9795 = vpop.f32.mrf.mxu0
      %v9796 = vadd.f32 0.0, %v9795
      %v9797 = vpop.f32.mrf.mxu0
      %v9798 = vpop.f32.mrf.mxu0
      %v9799 = vadd.f32 0.0, %v9798
      %v9800 = vpop.f32.mrf.mxu0
      %9801 = vmatprep.mubr.bf16.mxu0 0
      %9802 = vmatmul.mubr.bf16.gmra.mxu0 %v9642
      %v9803 = vpop.f32.mrf.mxu0
      %v9804 = vadd.f32 0.0, %v9803
      %v9805 = vpop.f32.mrf.mxu0
      %v9806 = vpop.f32.mrf.mxu0
      %v9807 = vadd.f32 0.0, %v9806
      %v9808 = vpop.f32.mrf.mxu0
      %9809 = vmatprep.mubr.bf16.mxu0 0
      %9810 = vmatmul.mubr.bf16.gmra.mxu0 %v9645
      %v9811 = vpop.f32.mrf.mxu0
      %v9812 = vadd.f32 0.0, %v9811
      %v9813 = vpop.f32.mrf.mxu0
      %v9814 = vpop.f32.mrf.mxu0
      %v9815 = vadd.f32 0.0, %v9814
      %v9816 = vpop.f32.mrf.mxu0
      %9817 = vmatprep.mubr.bf16.mxu0 0
      %9818 = vmatmul.mubr.bf16.gmra.mxu0 %v9648
      %v9819 = vpop.f32.mrf.mxu0
      %v9820 = vadd.f32 0.0, %v9819
      %v9821 = vpop.f32.mrf.mxu0
      %v9822 = vpop.f32.mrf.mxu0
      %v9823 = vadd.f32 0.0, %v9822
      %v9824 = vpop.f32.mrf.mxu0
      %9825 = vmatprep.mubr.bf16.mxu0 0
      %9826 = vmatmul.mubr.bf16.gmra.mxu0 %v9651
      %v9827 = vpop.f32.mrf.mxu0
      %v9828 = vadd.f32 0.0, %v9827
      %v9829 = vpop.f32.mrf.mxu0
      %v9830 = vpop.f32.mrf.mxu0
      %v9831 = vadd.f32 0.0, %v9830
      %v9832 = vpop.f32.mrf.mxu0
      %9833 = vmatprep.mubr.bf16.mxu0 0
      %9834 = vmatmul.mubr.bf16.gmra.mxu0 %v9654
      %v9835 = vpop.f32.mrf.mxu0
      %v9836 = vadd.f32 0.0, %v9835
      %v9837 = vpop.f32.mrf.mxu0
      %v9838 = vpop.f32.mrf.mxu0
      %v9839 = vadd.f32 0.0, %v9838
      %v9840 = vpop.f32.mrf.mxu0
      %9841 = vmatprep.mubr.bf16.mxu0 0
      %9842 = vmatmul.mubr.bf16.gmra.mxu0 %v9657
      %v9843 = vpop.f32.mrf.mxu0
      %v9844 = vadd.f32 0.0, %v9843
      %v9845 = vpop.f32.mrf.mxu0
      %v9846 = vpop.f32.mrf.mxu0
      %v9847 = vadd.f32 0.0, %v9846
      %v9848 = vpop.f32.mrf.mxu0
      %9849 = vmatprep.mubr.bf16.mxu0 0
      %9850 = vmatmul.mubr.bf16.gmra.mxu0 %v9660
      %v9851 = vpop.f32.mrf.mxu0
      %v9852 = vadd.f32 0.0, %v9851
      %v9853 = vpop.f32.mrf.mxu0
      %v9854 = vpop.f32.mrf.mxu0
      %v9855 = vadd.f32 0.0, %v9854
      %v9856 = vpop.f32.mrf.mxu0
      %9857 = vmatprep.mubr.bf16.mxu0 0
      %9858 = vmatmul.mubr.bf16.gmra.mxu0 %v9663
      %v9859 = vpop.f32.mrf.mxu0
      %v9860 = vadd.f32 0.0, %v9859
      %v9861 = vpop.f32.mrf.mxu0
      %v9862 = vpop.f32.mrf.mxu0
      %v9863 = vpop.f32.mrf.mxu0
      %9864 = vdwg.mxu0
      %v9865 = vadd.f32 %v9217, %v9700
      %v9866 = vadd.f32 %v9218, %v9703
      %v9867 = vadd.f32 %v9219, %v9708
      %v9868 = vadd.f32 %v9220, %v9711
      %v9869 = vadd.f32 %v9221, %v9716
      %v9870 = vadd.f32 %v9222, %v9719
      %v9871 = vadd.f32 %v9223, %v9724
      %v9872 = vadd.f32 %v9224, %v9727
      %v9873 = vadd.f32 %v9225, %v9732
      %v9874 = vadd.f32 %v9226, %v9735
      %v9875 = vadd.f32 %v9227, %v9740
      %v9876 = vadd.f32 %v9228, %v9743
      %v9877 = vadd.f32 %v9229, %v9748
      %v9878 = vadd.f32 %v9230, %v9751
      %v9879 = vadd.f32 %v9231, %v9756
      %v9880 = vadd.f32 %v9232, %v9759
      %v9881 = vadd.f32 %v9233, %v9764
      %v9882 = vadd.f32 %v9234, %v9767
      %v9883 = vadd.f32 %v9235, %v9772
      %v9884 = vadd.f32 %v9236, %v9775
      %v9885 = vadd.f32 %v9237, %v9780
      %v9886 = vadd.f32 %v9238, %v9783
      %v9887 = vadd.f32 %v9239, %v9788
      %v9888 = vadd.f32 %v9240, %v9791
      %v9889 = vadd.f32 %v9241, %v9796
      %v9890 = vadd.f32 %v9242, %v9799
      %v9891 = vadd.f32 %v9243, %v9804
      %v9892 = vadd.f32 %v9244, %v9807
      %v9893 = vadd.f32 %v9245, %v9812
      %v9894 = vadd.f32 %v9246, %v9815
      %v9895 = vadd.f32 %v9247, %v9820
      %v9896 = vadd.f32 %v9248, %v9823
      %v9897 = vadd.f32 %v9249, %v9828
      %v9898 = vadd.f32 %v9250, %v9831
      %v9899 = vadd.f32 %v9251, %v9836
      %v9900 = vadd.f32 %v9252, %v9839
      %v9901 = vadd.f32 %v9253, %v9844
      %v9902 = vadd.f32 %v9254, %v9847
      %v9903 = vadd.f32 %v9255, %v9852
      %v9904 = vadd.f32 %v9256, %v9855
      %v9905 = vadd.f32 %v9257, %v9860
      %v9906 = vld [vmem:[#allocation2 + $0x18] sm:$0xe]
      %s9907 = scalar_lea.vmem %s8, 224
      %v9908 = vld [vmem:[%s9907] sm:$0xf]
      %v9909 = vld [vmem:[%s9907 + $0x4] sm:$0xf]
      %v9910 = vld [vmem:[%s9907 + $0x8] sm:$0xf]
      %v9911 = vld [vmem:[%s9907 + $0xc] sm:$0xf]
      %v9912 = vld [vmem:[%s9907 + $0x10] sm:$0xf]
      %v9913 = vld [vmem:[%s9907 + $0x14] sm:$0xf]
      %v9914 = vld [vmem:[%s9907 + $0x18] sm:$0xf]
      %v9915 = vld [vmem:[%s9907 + $0x1c] sm:$0xf]
      %v9917 = vunpack.c.l.b16 %v9906
      %v9918 = vpack.c.b16 %v9350, %v9917
      %v9919 = vrot.slane %v9918, 1
      %v9920 = vrot.slane %v9391, 1
      %v9921 = vsel %vm5146, %v9919, %v9920
      %v9922 = vrot.slane %v9392, 1
      %v9923 = vsel %vm5146, %v9920, %v9922
      %v9924 = vrot.slane %v9393, 1
      %v9925 = vsel %vm5146, %v9922, %v9924
      %v9926 = vrot.slane %v9394, 1
      %v9927 = vsel %vm5146, %v9924, %v9926
      %v9928 = vrot.slane %v9395, 1
      %v9929 = vsel %vm5146, %v9926, %v9928
      %v9930 = vrot.slane %v9396, 1
      %v9931 = vsel %vm5146, %v9928, %v9930
      %v9932 = vrot.slane %v9397, 1
      %v9933 = vsel %vm5146, %v9930, %v9932
      %v9934 = vrot.slane %v9398, 1
      %v9935 = vsel %vm5146, %v9932, %v9934
      %v9936 = vrot.slane %v9399, 1
      %v9937 = vsel %vm5146, %v9934, %v9936
      %v9938 = vrot.slane %v9400, 1
      %v9939 = vsel %vm5146, %v9936, %v9938
      %v9940 = vrot.slane %v9401, 1
      %v9941 = vsel %vm5146, %v9938, %v9940
      %v9942 = vrot.slane %v9402, 1
      %v9943 = vsel %vm5146, %v9940, %v9942
      %v9944 = vrot.slane %v9403, 1
      %v9945 = vsel %vm5146, %v9942, %v9944
      %v9946 = vrot.slane %v9404, 1
      %v9947 = vsel %vm5146, %v9944, %v9946
      %v9948 = vrot.slane %v9405, 1
      %v9949 = vsel %vm5146, %v9946, %v9948
      %v9950 = vrot.slane %v9406, 1
      %v9951 = vsel %vm5146, %v9948, %v9950
      %v9952 = vrot.slane %v9407, 1
      %v9953 = vsel %vm5146, %v9950, %v9952
      %v9954 = vrot.slane %v9408, 1
      %v9955 = vsel %vm5146, %v9952, %v9954
      %v9956 = vrot.slane %v9409, 1
      %v9957 = vsel %vm5146, %v9954, %v9956
      %v9958 = vrot.slane %v9410, 1
      %v9959 = vsel %vm5146, %v9956, %v9958
      %v9968 = vunpack.c.l.b16 %v9908
      %v9969 = vunpack.c.l.b16 %v9909
      %v9970 = vunpack.c.l.b16 %v9910
      %v9971 = vunpack.c.l.b16 %v9911
      %v9972 = vunpack.c.l.b16 %v9912
      %v9973 = vunpack.c.l.b16 %v9913
      %v9974 = vunpack.c.l.b16 %v9914
      %v9975 = vunpack.c.l.b16 %v9915
      %v9976 = vpack.c.b16 %v9969, %v9968
      %v9977 = vpack.c.b16 %v9971, %v9970
      %v9978 = vpack.c.b16 %v9973, %v9972
      %v9979 = vpack.c.b16 %v9975, %v9974
      %v9985 = vsel %vm1788, %v9921, 0
      %v9988 = vsel %vm1788, %v9923, 0
      %v9991 = vsel %vm1788, %v9925, 0
      %v9994 = vsel %vm1788, %v9927, 0
      %v9997 = vsel %vm1788, %v9929, 0
      %v10000 = vsel %vm1788, %v9931, 0
      %v10003 = vsel %vm1788, %v9933, 0
      %v10006 = vsel %vm1788, %v9935, 0
      %v10009 = vsel %vm1788, %v9937, 0
      %v10012 = vsel %vm1788, %v9939, 0
      %v10015 = vsel %vm1788, %v9941, 0
      %v10018 = vsel %vm1788, %v9943, 0
      %v10021 = vsel %vm1788, %v9945, 0
      %v10024 = vsel %vm1788, %v9947, 0
      %v10027 = vsel %vm1788, %v9949, 0
      %v10030 = vsel %vm1788, %v9951, 0
      %v10033 = vsel %vm1788, %v9953, 0
      %v10036 = vsel %vm1788, %v9955, 0
      %v10039 = vsel %vm1788, %v9957, 0
      %v10042 = vsel %vm1788, %v9959, 0
      %v10045 = vsel %vm1788, %v9958, 0
      %10047 = vmatprep.subr.bf16.mxu0 0
      %10048 = vmatpush1.bf16.msra.mxu0 0
      %10049 = vmatprep.subr.bf16.mxu0 0
      %10050 = vmatpush1.bf16.msra.mxu0 0
      %10051 = vmatprep.subr.bf16.mxu0 0
      %10052 = vmatpush1.bf16.msra.mxu0 0
      %10053 = vmatprep.subr.bf16.mxu0 0
      %10054 = vmatpush1.bf16.msra.mxu0 0
      %10055 = vmatprep.subr.bf16.mxu0 0
      %10056 = vmatpush1.bf16.msra.mxu0 %v9979
      %10057 = vmatprep.subr.bf16.mxu0 0
      %10058 = vmatpush1.bf16.msra.mxu0 %v9978
      %10059 = vmatprep.subr.bf16.mxu0 0
      %10060 = vmatpush1.bf16.msra.mxu0 %v9977
      %10061 = vmatprep.subr.bf16.mxu0 0
      %10062 = vmatpush1.bf16.msra.mxu0 %v9976
      %10063 = vmatprep.subr.bf16.mxu0 0
      %10064 = vmatpush2.bf16.msra.mxu0 0
      %10065 = vmatprep.subr.bf16.mxu0 0
      %10066 = vmatpush2.bf16.msra.mxu0 0
      %10067 = vmatprep.subr.bf16.mxu0 0
      %10068 = vmatpush2.bf16.msra.mxu0 0
      %10069 = vmatprep.subr.bf16.mxu0 0
      %10070 = vmatpush2.bf16.msra.mxu0 0
      %10071 = vmatprep.subr.bf16.mxu0 0
      %10072 = vmatpush2.bf16.msra.mxu0 0
      %10073 = vmatprep.subr.bf16.mxu0 0
      %10074 = vmatpush2.bf16.msra.mxu0 0
      %10075 = vmatprep.subr.bf16.mxu0 0
      %10076 = vmatpush2.bf16.msra.mxu0 0
      %10077 = vmatprep.subr.bf16.mxu0 0
      %10078 = vmatpush2.bf16.msra.mxu0 0
      %10079 = vmatprep.mubr.bf16.mxu0 0
      %10080 = vmatmul.mubr.bf16.gmra.mxu0 %v9985
      %v10081 = vpop.f32.mrf.mxu0
      %v10082 = vadd.f32 0.0, %v10081
      %v10083 = vpop.f32.mrf.mxu0
      %v10084 = vpop.f32.mrf.mxu0
      %v10085 = vadd.f32 0.0, %v10084
      %v10086 = vpop.f32.mrf.mxu0
      %10087 = vmatprep.mubr.bf16.mxu0 0
      %10088 = vmatmul.mubr.bf16.gmra.mxu0 %v9988
      %v10089 = vpop.f32.mrf.mxu0
      %v10090 = vadd.f32 0.0, %v10089
      %v10091 = vpop.f32.mrf.mxu0
      %v10092 = vpop.f32.mrf.mxu0
      %v10093 = vadd.f32 0.0, %v10092
      %v10094 = vpop.f32.mrf.mxu0
      %10095 = vmatprep.mubr.bf16.mxu0 0
      %10096 = vmatmul.mubr.bf16.gmra.mxu0 %v9991
      %v10097 = vpop.f32.mrf.mxu0
      %v10098 = vadd.f32 0.0, %v10097
      %v10099 = vpop.f32.mrf.mxu0
      %v10100 = vpop.f32.mrf.mxu0
      %v10101 = vadd.f32 0.0, %v10100
      %v10102 = vpop.f32.mrf.mxu0
      %10103 = vmatprep.mubr.bf16.mxu0 0
      %10104 = vmatmul.mubr.bf16.gmra.mxu0 %v9994
      %v10105 = vpop.f32.mrf.mxu0
      %v10106 = vadd.f32 0.0, %v10105
      %v10107 = vpop.f32.mrf.mxu0
      %v10108 = vpop.f32.mrf.mxu0
      %v10109 = vadd.f32 0.0, %v10108
      %v10110 = vpop.f32.mrf.mxu0
      %10111 = vmatprep.mubr.bf16.mxu0 0
      %10112 = vmatmul.mubr.bf16.gmra.mxu0 %v9997
      %v10113 = vpop.f32.mrf.mxu0
      %v10114 = vadd.f32 0.0, %v10113
      %v10115 = vpop.f32.mrf.mxu0
      %v10116 = vpop.f32.mrf.mxu0
      %v10117 = vadd.f32 0.0, %v10116
      %v10118 = vpop.f32.mrf.mxu0
      %10119 = vmatprep.mubr.bf16.mxu0 0
      %10120 = vmatmul.mubr.bf16.gmra.mxu0 %v10000
      %v10121 = vpop.f32.mrf.mxu0
      %v10122 = vadd.f32 0.0, %v10121
      %v10123 = vpop.f32.mrf.mxu0
      %v10124 = vpop.f32.mrf.mxu0
      %v10125 = vadd.f32 0.0, %v10124
      %v10126 = vpop.f32.mrf.mxu0
      %10127 = vmatprep.mubr.bf16.mxu0 0
      %10128 = vmatmul.mubr.bf16.gmra.mxu0 %v10003
      %v10129 = vpop.f32.mrf.mxu0
      %v10130 = vadd.f32 0.0, %v10129
      %v10131 = vpop.f32.mrf.mxu0
      %v10132 = vpop.f32.mrf.mxu0
      %v10133 = vadd.f32 0.0, %v10132
      %v10134 = vpop.f32.mrf.mxu0
      %10135 = vmatprep.mubr.bf16.mxu0 0
      %10136 = vmatmul.mubr.bf16.gmra.mxu0 %v10006
      %v10137 = vpop.f32.mrf.mxu0
      %v10138 = vadd.f32 0.0, %v10137
      %v10139 = vpop.f32.mrf.mxu0
      %v10140 = vpop.f32.mrf.mxu0
      %v10141 = vadd.f32 0.0, %v10140
      %v10142 = vpop.f32.mrf.mxu0
      %10143 = vmatprep.mubr.bf16.mxu0 0
      %10144 = vmatmul.mubr.bf16.gmra.mxu0 %v10009
      %v10145 = vpop.f32.mrf.mxu0
      %v10146 = vadd.f32 0.0, %v10145
      %v10147 = vpop.f32.mrf.mxu0
      %v10148 = vpop.f32.mrf.mxu0
      %v10149 = vadd.f32 0.0, %v10148
      %v10150 = vpop.f32.mrf.mxu0
      %10151 = vmatprep.mubr.bf16.mxu0 0
      %10152 = vmatmul.mubr.bf16.gmra.mxu0 %v10012
      %v10153 = vpop.f32.mrf.mxu0
      %v10154 = vadd.f32 0.0, %v10153
      %v10155 = vpop.f32.mrf.mxu0
      %v10156 = vpop.f32.mrf.mxu0
      %v10157 = vadd.f32 0.0, %v10156
      %v10158 = vpop.f32.mrf.mxu0
      %10159 = vmatprep.mubr.bf16.mxu0 0
      %10160 = vmatmul.mubr.bf16.gmra.mxu0 %v10015
      %v10161 = vpop.f32.mrf.mxu0
      %v10162 = vadd.f32 0.0, %v10161
      %v10163 = vpop.f32.mrf.mxu0
      %v10164 = vpop.f32.mrf.mxu0
      %v10165 = vadd.f32 0.0, %v10164
      %v10166 = vpop.f32.mrf.mxu0
      %10167 = vmatprep.mubr.bf16.mxu0 0
      %10168 = vmatmul.mubr.bf16.gmra.mxu0 %v10018
      %v10169 = vpop.f32.mrf.mxu0
      %v10170 = vadd.f32 0.0, %v10169
      %v10171 = vpop.f32.mrf.mxu0
      %v10172 = vpop.f32.mrf.mxu0
      %v10173 = vadd.f32 0.0, %v10172
      %v10174 = vpop.f32.mrf.mxu0
      %10175 = vmatprep.mubr.bf16.mxu0 0
      %10176 = vmatmul.mubr.bf16.gmra.mxu0 %v10021
      %v10177 = vpop.f32.mrf.mxu0
      %v10178 = vadd.f32 0.0, %v10177
      %v10179 = vpop.f32.mrf.mxu0
      %v10180 = vpop.f32.mrf.mxu0
      %v10181 = vadd.f32 0.0, %v10180
      %v10182 = vpop.f32.mrf.mxu0
      %10183 = vmatprep.mubr.bf16.mxu0 0
      %10184 = vmatmul.mubr.bf16.gmra.mxu0 %v10024
      %v10185 = vpop.f32.mrf.mxu0
      %v10186 = vadd.f32 0.0, %v10185
      %v10187 = vpop.f32.mrf.mxu0
      %v10188 = vpop.f32.mrf.mxu0
      %v10189 = vadd.f32 0.0, %v10188
      %v10190 = vpop.f32.mrf.mxu0
      %10191 = vmatprep.mubr.bf16.mxu0 0
      %10192 = vmatmul.mubr.bf16.gmra.mxu0 %v10027
      %v10193 = vpop.f32.mrf.mxu0
      %v10194 = vadd.f32 0.0, %v10193
      %v10195 = vpop.f32.mrf.mxu0
      %v10196 = vpop.f32.mrf.mxu0
      %v10197 = vadd.f32 0.0, %v10196
      %v10198 = vpop.f32.mrf.mxu0
      %10199 = vmatprep.mubr.bf16.mxu0 0
      %10200 = vmatmul.mubr.bf16.gmra.mxu0 %v10030
      %v10201 = vpop.f32.mrf.mxu0
      %v10202 = vadd.f32 0.0, %v10201
      %v10203 = vpop.f32.mrf.mxu0
      %v10204 = vpop.f32.mrf.mxu0
      %v10205 = vadd.f32 0.0, %v10204
      %v10206 = vpop.f32.mrf.mxu0
      %10207 = vmatprep.mubr.bf16.mxu0 0
      %10208 = vmatmul.mubr.bf16.gmra.mxu0 %v10033
      %v10209 = vpop.f32.mrf.mxu0
      %v10210 = vadd.f32 0.0, %v10209
      %v10211 = vpop.f32.mrf.mxu0
      %v10212 = vpop.f32.mrf.mxu0
      %v10213 = vadd.f32 0.0, %v10212
      %v10214 = vpop.f32.mrf.mxu0
      %10215 = vmatprep.mubr.bf16.mxu0 0
      %10216 = vmatmul.mubr.bf16.gmra.mxu0 %v10036
      %v10217 = vpop.f32.mrf.mxu0
      %v10218 = vadd.f32 0.0, %v10217
      %v10219 = vpop.f32.mrf.mxu0
      %v10220 = vpop.f32.mrf.mxu0
      %v10221 = vadd.f32 0.0, %v10220
      %v10222 = vpop.f32.mrf.mxu0
      %10223 = vmatprep.mubr.bf16.mxu0 0
      %10224 = vmatmul.mubr.bf16.gmra.mxu0 %v10039
      %v10225 = vpop.f32.mrf.mxu0
      %v10226 = vadd.f32 0.0, %v10225
      %v10227 = vpop.f32.mrf.mxu0
      %v10228 = vpop.f32.mrf.mxu0
      %v10229 = vadd.f32 0.0, %v10228
      %v10230 = vpop.f32.mrf.mxu0
      %10231 = vmatprep.mubr.bf16.mxu0 0
      %10232 = vmatmul.mubr.bf16.gmra.mxu0 %v10042
      %v10233 = vpop.f32.mrf.mxu0
      %v10234 = vadd.f32 0.0, %v10233
      %v10235 = vpop.f32.mrf.mxu0
      %v10236 = vpop.f32.mrf.mxu0
      %v10237 = vadd.f32 0.0, %v10236
      %v10238 = vpop.f32.mrf.mxu0
      %10239 = vmatprep.mubr.bf16.mxu0 0
      %10240 = vmatmul.mubr.bf16.gmra.mxu0 %v10045
      %v10241 = vpop.f32.mrf.mxu0
      %v10242 = vadd.f32 0.0, %v10241
      %v10243 = vpop.f32.mrf.mxu0
      %v10244 = vpop.f32.mrf.mxu0
      %v10245 = vpop.f32.mrf.mxu0
      %10246 = vdwg.mxu0
      %v10247 = vadd.f32 %v9865, %v10082
      %v10248 = vadd.f32 %v9866, %v10085
      %v10249 = vadd.f32 %v9867, %v10090
      %v10250 = vadd.f32 %v9868, %v10093
      %v10251 = vadd.f32 %v9869, %v10098
      %v10252 = vadd.f32 %v9870, %v10101
      %v10253 = vadd.f32 %v9871, %v10106
      %v10254 = vadd.f32 %v9872, %v10109
      %v10255 = vadd.f32 %v9873, %v10114
      %v10256 = vadd.f32 %v9874, %v10117
      %v10257 = vadd.f32 %v9875, %v10122
      %v10258 = vadd.f32 %v9876, %v10125
      %v10259 = vadd.f32 %v9877, %v10130
      %v10260 = vadd.f32 %v9878, %v10133
      %v10261 = vadd.f32 %v9879, %v10138
      %v10262 = vadd.f32 %v9880, %v10141
      %v10263 = vadd.f32 %v9881, %v10146
      %v10264 = vadd.f32 %v9882, %v10149
      %v10265 = vadd.f32 %v9883, %v10154
      %v10266 = vadd.f32 %v9884, %v10157
      %v10267 = vadd.f32 %v9885, %v10162
      %v10268 = vadd.f32 %v9886, %v10165
      %v10269 = vadd.f32 %v9887, %v10170
      %v10270 = vadd.f32 %v9888, %v10173
      %v10271 = vadd.f32 %v9889, %v10178
      %v10272 = vadd.f32 %v9890, %v10181
      %v10273 = vadd.f32 %v9891, %v10186
      %v10274 = vadd.f32 %v9892, %v10189
      %v10275 = vadd.f32 %v9893, %v10194
      %v10276 = vadd.f32 %v9894, %v10197
      %v10277 = vadd.f32 %v9895, %v10202
      %v10278 = vadd.f32 %v9896, %v10205
      %v10279 = vadd.f32 %v9897, %v10210
      %v10280 = vadd.f32 %v9898, %v10213
      %v10281 = vadd.f32 %v9899, %v10218
      %v10282 = vadd.f32 %v9900, %v10221
      %v10283 = vadd.f32 %v9901, %v10226
      %v10284 = vadd.f32 %v9902, %v10229
      %v10285 = vadd.f32 %v9903, %v10234
      %v10286 = vadd.f32 %v9904, %v10237
      %v10287 = vadd.f32 %v9905, %v10242
      %v10288 = vld [vmem:[#allocation2 + $0xb8] sm:$0xf]
      %s10289 = scalar_lea.vmem %s8, 256
      %v10290 = vld [vmem:[%s10289] sm:$0xf]
      %v10291 = vld [vmem:[%s10289 + $0x4] sm:$0xf]
      %v10292 = vld [vmem:[%s10289 + $0x8] sm:$0xf]
      %v10293 = vld [vmem:[%s10289 + $0xc] sm:$0xf]
      %v10294 = vld [vmem:[%s10289 + $0x10] sm:$0xf]
      %v10295 = vld [vmem:[%s10289 + $0x14] sm:$0xf]
      %v10296 = vld [vmem:[%s10289 + $0x18] sm:$0xf]
      %v10297 = vld [vmem:[%s10289 + $0x1c] sm:$0xf]
      %v10299 = vunpack.c.l.b16 %v10288
      %v10300 = vpack.c.b16 %v10299, %v10299
      %v10302 = vshrl.u32 %v9918, 16
      %v10304 = vrot.slane %v10302, 1
      %v10305 = vshll.u32 %v9918, 16
      %v10307 = vrot.slane %v10305, 2
      %v10308 = vor.u32 %v10304, %v10307
      %v10309 = vrot.slane %v9423, 1
      %v10310 = vrot.slane %v9419, 2
      %v10311 = vor.u32 %v10309, %v10310
      %v10312 = vsel %vm5529, %v10308, %v10311
      %v10313 = vrot.slane %v9431, 1
      %v10314 = vrot.slane %v9427, 2
      %v10315 = vor.u32 %v10313, %v10314
      %v10316 = vsel %vm5529, %v10311, %v10315
      %v10317 = vrot.slane %v9439, 1
      %v10318 = vrot.slane %v9435, 2
      %v10319 = vor.u32 %v10317, %v10318
      %v10320 = vsel %vm5529, %v10315, %v10319
      %v10321 = vrot.slane %v9447, 1
      %v10322 = vrot.slane %v9443, 2
      %v10323 = vor.u32 %v10321, %v10322
      %v10324 = vsel %vm5529, %v10319, %v10323
      %v10325 = vrot.slane %v9455, 1
      %v10326 = vrot.slane %v9451, 2
      %v10327 = vor.u32 %v10325, %v10326
      %v10328 = vsel %vm5529, %v10323, %v10327
      %v10329 = vrot.slane %v9463, 1
      %v10330 = vrot.slane %v9459, 2
      %v10331 = vor.u32 %v10329, %v10330
      %v10332 = vsel %vm5529, %v10327, %v10331
      %v10333 = vrot.slane %v9471, 1
      %v10334 = vrot.slane %v9467, 2
      %v10335 = vor.u32 %v10333, %v10334
      %v10336 = vsel %vm5529, %v10331, %v10335
      %v10337 = vrot.slane %v9479, 1
      %v10338 = vrot.slane %v9475, 2
      %v10339 = vor.u32 %v10337, %v10338
      %v10340 = vsel %vm5529, %v10335, %v10339
      %v10341 = vrot.slane %v9487, 1
      %v10342 = vrot.slane %v9483, 2
      %v10343 = vor.u32 %v10341, %v10342
      %v10344 = vsel %vm5529, %v10339, %v10343
      %v10345 = vrot.slane %v9495, 1
      %v10346 = vrot.slane %v9491, 2
      %v10347 = vor.u32 %v10345, %v10346
      %v10348 = vsel %vm5529, %v10343, %v10347
      %v10349 = vrot.slane %v9503, 1
      %v10350 = vrot.slane %v9499, 2
      %v10351 = vor.u32 %v10349, %v10350
      %v10352 = vsel %vm5529, %v10347, %v10351
      %v10353 = vrot.slane %v9511, 1
      %v10354 = vrot.slane %v9507, 2
      %v10355 = vor.u32 %v10353, %v10354
      %v10356 = vsel %vm5529, %v10351, %v10355
      %v10357 = vrot.slane %v9519, 1
      %v10358 = vrot.slane %v9515, 2
      %v10359 = vor.u32 %v10357, %v10358
      %v10360 = vsel %vm5529, %v10355, %v10359
      %v10361 = vrot.slane %v9527, 1
      %v10362 = vrot.slane %v9523, 2
      %v10363 = vor.u32 %v10361, %v10362
      %v10364 = vsel %vm5529, %v10359, %v10363
      %v10365 = vrot.slane %v9535, 1
      %v10366 = vrot.slane %v9531, 2
      %v10367 = vor.u32 %v10365, %v10366
      %v10368 = vsel %vm5529, %v10363, %v10367
      %v10369 = vrot.slane %v9543, 1
      %v10370 = vrot.slane %v9539, 2
      %v10371 = vor.u32 %v10369, %v10370
      %v10372 = vsel %vm5529, %v10367, %v10371
      %v10373 = vrot.slane %v9551, 1
      %v10374 = vrot.slane %v9547, 2
      %v10375 = vor.u32 %v10373, %v10374
      %v10376 = vsel %vm5529, %v10371, %v10375
      %v10377 = vrot.slane %v9559, 1
      %v10378 = vrot.slane %v9555, 2
      %v10379 = vor.u32 %v10377, %v10378
      %v10380 = vsel %vm5529, %v10375, %v10379
      %v10381 = vrot.slane %v9567, 1
      %v10382 = vrot.slane %v9563, 2
      %v10383 = vor.u32 %v10381, %v10382
      %v10384 = vsel %vm5529, %v10379, %v10383
      %v10386 = vshrl.u32 %v10300, 16
      %v10388 = vrot.slane %v10386, 1
      %v10389 = vshll.u32 %v10300, 16
      %v10391 = vrot.slane %v10389, 2
      %v10392 = vor.u32 %v10388, %v10391
      %v10393 = vsel %vm5529, %v10383, %v10392
      %v10402 = vunpack.c.l.b16 %v10290
      %v10403 = vunpack.c.l.b16 %v10291
      %v10404 = vunpack.c.l.b16 %v10292
      %v10405 = vunpack.c.l.b16 %v10293
      %v10406 = vunpack.c.l.b16 %v10294
      %v10407 = vunpack.c.l.b16 %v10295
      %v10408 = vunpack.c.l.b16 %v10296
      %v10409 = vunpack.c.l.b16 %v10297
      %v10410 = vpack.c.b16 %v10403, %v10402
      %v10411 = vpack.c.b16 %v10405, %v10404
      %v10412 = vpack.c.b16 %v10407, %v10406
      %v10413 = vpack.c.b16 %v10409, %v10408
      %v10419 = vsel %vm1788, %v10312, 0
      %v10422 = vsel %vm1788, %v10316, 0
      %v10425 = vsel %vm1788, %v10320, 0
      %v10428 = vsel %vm1788, %v10324, 0
      %v10431 = vsel %vm1788, %v10328, 0
      %v10434 = vsel %vm1788, %v10332, 0
      %v10437 = vsel %vm1788, %v10336, 0
      %v10440 = vsel %vm1788, %v10340, 0
      %v10443 = vsel %vm1788, %v10344, 0
      %v10446 = vsel %vm1788, %v10348, 0
      %v10449 = vsel %vm1788, %v10352, 0
      %v10452 = vsel %vm1788, %v10356, 0
      %v10455 = vsel %vm1788, %v10360, 0
      %v10458 = vsel %vm1788, %v10364, 0
      %v10461 = vsel %vm1788, %v10368, 0
      %v10464 = vsel %vm1788, %v10372, 0
      %v10467 = vsel %vm1788, %v10376, 0
      %v10470 = vsel %vm1788, %v10380, 0
      %v10473 = vsel %vm1788, %v10384, 0
      %v10476 = vsel %vm1788, %v10393, 0
      %v10479 = vsel %vm1788, %v10392, 0
      %10481 = vmatprep.subr.bf16.mxu0 0
      %10482 = vmatpush1.bf16.msra.mxu0 0
      %10483 = vmatprep.subr.bf16.mxu0 0
      %10484 = vmatpush1.bf16.msra.mxu0 0
      %10485 = vmatprep.subr.bf16.mxu0 0
      %10486 = vmatpush1.bf16.msra.mxu0 0
      %10487 = vmatprep.subr.bf16.mxu0 0
      %10488 = vmatpush1.bf16.msra.mxu0 0
      %10489 = vmatprep.subr.bf16.mxu0 0
      %10490 = vmatpush1.bf16.msra.mxu0 %v10413
      %10491 = vmatprep.subr.bf16.mxu0 0
      %10492 = vmatpush1.bf16.msra.mxu0 %v10412
      %10493 = vmatprep.subr.bf16.mxu0 0
      %10494 = vmatpush1.bf16.msra.mxu0 %v10411
      %10495 = vmatprep.subr.bf16.mxu0 0
      %10496 = vmatpush1.bf16.msra.mxu0 %v10410
      %10497 = vmatprep.subr.bf16.mxu0 0
      %10498 = vmatpush2.bf16.msra.mxu0 0
      %10499 = vmatprep.subr.bf16.mxu0 0
      %10500 = vmatpush2.bf16.msra.mxu0 0
      %10501 = vmatprep.subr.bf16.mxu0 0
      %10502 = vmatpush2.bf16.msra.mxu0 0
      %10503 = vmatprep.subr.bf16.mxu0 0
      %10504 = vmatpush2.bf16.msra.mxu0 0
      %10505 = vmatprep.subr.bf16.mxu0 0
      %10506 = vmatpush2.bf16.msra.mxu0 0
      %10507 = vmatprep.subr.bf16.mxu0 0
      %10508 = vmatpush2.bf16.msra.mxu0 0
      %10509 = vmatprep.subr.bf16.mxu0 0
      %10510 = vmatpush2.bf16.msra.mxu0 0
      %10511 = vmatprep.subr.bf16.mxu0 0
      %10512 = vmatpush2.bf16.msra.mxu0 0
      %10513 = vmatprep.mubr.bf16.mxu0 0
      %10514 = vmatmul.mubr.bf16.gmra.mxu0 %v10419
      %v10515 = vpop.f32.mrf.mxu0
      %v10516 = vadd.f32 0.0, %v10515
      %v10517 = vpop.f32.mrf.mxu0
      %v10518 = vpop.f32.mrf.mxu0
      %v10519 = vadd.f32 0.0, %v10518
      %v10520 = vpop.f32.mrf.mxu0
      %10521 = vmatprep.mubr.bf16.mxu0 0
      %10522 = vmatmul.mubr.bf16.gmra.mxu0 %v10422
      %v10523 = vpop.f32.mrf.mxu0
      %v10524 = vadd.f32 0.0, %v10523
      %v10525 = vpop.f32.mrf.mxu0
      %v10526 = vpop.f32.mrf.mxu0
      %v10527 = vadd.f32 0.0, %v10526
      %v10528 = vpop.f32.mrf.mxu0
      %10529 = vmatprep.mubr.bf16.mxu0 0
      %10530 = vmatmul.mubr.bf16.gmra.mxu0 %v10425
      %v10531 = vpop.f32.mrf.mxu0
      %v10532 = vadd.f32 0.0, %v10531
      %v10533 = vpop.f32.mrf.mxu0
      %v10534 = vpop.f32.mrf.mxu0
      %v10535 = vadd.f32 0.0, %v10534
      %v10536 = vpop.f32.mrf.mxu0
      %10537 = vmatprep.mubr.bf16.mxu0 0
      %10538 = vmatmul.mubr.bf16.gmra.mxu0 %v10428
      %v10539 = vpop.f32.mrf.mxu0
      %v10540 = vadd.f32 0.0, %v10539
      %v10541 = vpop.f32.mrf.mxu0
      %v10542 = vpop.f32.mrf.mxu0
      %v10543 = vadd.f32 0.0, %v10542
      %v10544 = vpop.f32.mrf.mxu0
      %10545 = vmatprep.mubr.bf16.mxu0 0
      %10546 = vmatmul.mubr.bf16.gmra.mxu0 %v10431
      %v10547 = vpop.f32.mrf.mxu0
      %v10548 = vadd.f32 0.0, %v10547
      %v10549 = vpop.f32.mrf.mxu0
      %v10550 = vpop.f32.mrf.mxu0
      %v10551 = vadd.f32 0.0, %v10550
      %v10552 = vpop.f32.mrf.mxu0
      %10553 = vmatprep.mubr.bf16.mxu0 0
      %10554 = vmatmul.mubr.bf16.gmra.mxu0 %v10434
      %v10555 = vpop.f32.mrf.mxu0
      %v10556 = vadd.f32 0.0, %v10555
      %v10557 = vpop.f32.mrf.mxu0
      %v10558 = vpop.f32.mrf.mxu0
      %v10559 = vadd.f32 0.0, %v10558
      %v10560 = vpop.f32.mrf.mxu0
      %10561 = vmatprep.mubr.bf16.mxu0 0
      %10562 = vmatmul.mubr.bf16.gmra.mxu0 %v10437
      %v10563 = vpop.f32.mrf.mxu0
      %v10564 = vadd.f32 0.0, %v10563
      %v10565 = vpop.f32.mrf.mxu0
      %v10566 = vpop.f32.mrf.mxu0
      %v10567 = vadd.f32 0.0, %v10566
      %v10568 = vpop.f32.mrf.mxu0
      %10569 = vmatprep.mubr.bf16.mxu0 0
      %10570 = vmatmul.mubr.bf16.gmra.mxu0 %v10440
      %v10571 = vpop.f32.mrf.mxu0
      %v10572 = vadd.f32 0.0, %v10571
      %v10573 = vpop.f32.mrf.mxu0
      %v10574 = vpop.f32.mrf.mxu0
      %v10575 = vadd.f32 0.0, %v10574
      %v10576 = vpop.f32.mrf.mxu0
      %10577 = vmatprep.mubr.bf16.mxu0 0
      %10578 = vmatmul.mubr.bf16.gmra.mxu0 %v10443
      %v10579 = vpop.f32.mrf.mxu0
      %v10580 = vadd.f32 0.0, %v10579
      %v10581 = vpop.f32.mrf.mxu0
      %v10582 = vpop.f32.mrf.mxu0
      %v10583 = vadd.f32 0.0, %v10582
      %v10584 = vpop.f32.mrf.mxu0
      %10585 = vmatprep.mubr.bf16.mxu0 0
      %10586 = vmatmul.mubr.bf16.gmra.mxu0 %v10446
      %v10587 = vpop.f32.mrf.mxu0
      %v10588 = vadd.f32 0.0, %v10587
      %v10589 = vpop.f32.mrf.mxu0
      %v10590 = vpop.f32.mrf.mxu0
      %v10591 = vadd.f32 0.0, %v10590
      %v10592 = vpop.f32.mrf.mxu0
      %10593 = vmatprep.mubr.bf16.mxu0 0
      %10594 = vmatmul.mubr.bf16.gmra.mxu0 %v10449
      %v10595 = vpop.f32.mrf.mxu0
      %v10596 = vadd.f32 0.0, %v10595
      %v10597 = vpop.f32.mrf.mxu0
      %v10598 = vpop.f32.mrf.mxu0
      %v10599 = vadd.f32 0.0, %v10598
      %v10600 = vpop.f32.mrf.mxu0
      %10601 = vmatprep.mubr.bf16.mxu0 0
      %10602 = vmatmul.mubr.bf16.gmra.mxu0 %v10452
      %v10603 = vpop.f32.mrf.mxu0
      %v10604 = vadd.f32 0.0, %v10603
      %v10605 = vpop.f32.mrf.mxu0
      %v10606 = vpop.f32.mrf.mxu0
      %v10607 = vadd.f32 0.0, %v10606
      %v10608 = vpop.f32.mrf.mxu0
      %10609 = vmatprep.mubr.bf16.mxu0 0
      %10610 = vmatmul.mubr.bf16.gmra.mxu0 %v10455
      %v10611 = vpop.f32.mrf.mxu0
      %v10612 = vadd.f32 0.0, %v10611
      %v10613 = vpop.f32.mrf.mxu0
      %v10614 = vpop.f32.mrf.mxu0
      %v10615 = vadd.f32 0.0, %v10614
      %v10616 = vpop.f32.mrf.mxu0
      %10617 = vmatprep.mubr.bf16.mxu0 0
      %10618 = vmatmul.mubr.bf16.gmra.mxu0 %v10458
      %v10619 = vpop.f32.mrf.mxu0
      %v10620 = vadd.f32 0.0, %v10619
      %v10621 = vpop.f32.mrf.mxu0
      %v10622 = vpop.f32.mrf.mxu0
      %v10623 = vadd.f32 0.0, %v10622
      %v10624 = vpop.f32.mrf.mxu0
      %10625 = vmatprep.mubr.bf16.mxu0 0
      %10626 = vmatmul.mubr.bf16.gmra.mxu0 %v10461
      %v10627 = vpop.f32.mrf.mxu0
      %v10628 = vadd.f32 0.0, %v10627
      %v10629 = vpop.f32.mrf.mxu0
      %v10630 = vpop.f32.mrf.mxu0
      %v10631 = vadd.f32 0.0, %v10630
      %v10632 = vpop.f32.mrf.mxu0
      %10633 = vmatprep.mubr.bf16.mxu0 0
      %10634 = vmatmul.mubr.bf16.gmra.mxu0 %v10464
      %v10635 = vpop.f32.mrf.mxu0
      %v10636 = vadd.f32 0.0, %v10635
      %v10637 = vpop.f32.mrf.mxu0
      %v10638 = vpop.f32.mrf.mxu0
      %v10639 = vadd.f32 0.0, %v10638
      %v10640 = vpop.f32.mrf.mxu0
      %10641 = vmatprep.mubr.bf16.mxu0 0
      %10642 = vmatmul.mubr.bf16.gmra.mxu0 %v10467
      %v10643 = vpop.f32.mrf.mxu0
      %v10644 = vadd.f32 0.0, %v10643
      %v10645 = vpop.f32.mrf.mxu0
      %v10646 = vpop.f32.mrf.mxu0
      %v10647 = vadd.f32 0.0, %v10646
      %v10648 = vpop.f32.mrf.mxu0
      %10649 = vmatprep.mubr.bf16.mxu0 0
      %10650 = vmatmul.mubr.bf16.gmra.mxu0 %v10470
      %v10651 = vpop.f32.mrf.mxu0
      %v10652 = vadd.f32 0.0, %v10651
      %v10653 = vpop.f32.mrf.mxu0
      %v10654 = vpop.f32.mrf.mxu0
      %v10655 = vadd.f32 0.0, %v10654
      %v10656 = vpop.f32.mrf.mxu0
      %10657 = vmatprep.mubr.bf16.mxu0 0
      %10658 = vmatmul.mubr.bf16.gmra.mxu0 %v10473
      %v10659 = vpop.f32.mrf.mxu0
      %v10660 = vadd.f32 0.0, %v10659
      %v10661 = vpop.f32.mrf.mxu0
      %v10662 = vpop.f32.mrf.mxu0
      %v10663 = vadd.f32 0.0, %v10662
      %v10664 = vpop.f32.mrf.mxu0
      %10665 = vmatprep.mubr.bf16.mxu0 0
      %10666 = vmatmul.mubr.bf16.gmra.mxu0 %v10476
      %v10667 = vpop.f32.mrf.mxu0
      %v10668 = vadd.f32 0.0, %v10667
      %v10669 = vpop.f32.mrf.mxu0
      %v10670 = vpop.f32.mrf.mxu0
      %v10671 = vadd.f32 0.0, %v10670
      %v10672 = vpop.f32.mrf.mxu0
      %10673 = vmatprep.mubr.bf16.mxu0 0
      %10674 = vmatmul.mubr.bf16.gmra.mxu0 %v10479
      %v10675 = vpop.f32.mrf.mxu0
      %v10676 = vadd.f32 0.0, %v10675
      %v10677 = vpop.f32.mrf.mxu0
      %v10678 = vpop.f32.mrf.mxu0
      %v10679 = vpop.f32.mrf.mxu0
      %10680 = vdwg.mxu0
      %v10681 = vadd.f32 %v10247, %v10516
      %v10682 = vadd.f32 %v10248, %v10519
      %v10683 = vadd.f32 %v10249, %v10524
      %v10684 = vadd.f32 %v10250, %v10527
      %v10685 = vadd.f32 %v10251, %v10532
      %v10686 = vadd.f32 %v10252, %v10535
      %v10687 = vadd.f32 %v10253, %v10540
      %v10688 = vadd.f32 %v10254, %v10543
      %v10689 = vadd.f32 %v10255, %v10548
      %v10690 = vadd.f32 %v10256, %v10551
      %v10691 = vadd.f32 %v10257, %v10556
      %v10692 = vadd.f32 %v10258, %v10559
      %v10693 = vadd.f32 %v10259, %v10564
      %v10694 = vadd.f32 %v10260, %v10567
      %v10695 = vadd.f32 %v10261, %v10572
      %v10696 = vadd.f32 %v10262, %v10575
      %v10697 = vadd.f32 %v10263, %v10580
      %v10698 = vadd.f32 %v10264, %v10583
      %v10699 = vadd.f32 %v10265, %v10588
      %v10700 = vadd.f32 %v10266, %v10591
      %v10701 = vadd.f32 %v10267, %v10596
      %v10702 = vadd.f32 %v10268, %v10599
      %v10703 = vadd.f32 %v10269, %v10604
      %v10704 = vadd.f32 %v10270, %v10607
      %v10705 = vadd.f32 %v10271, %v10612
      %v10706 = vadd.f32 %v10272, %v10615
      %v10707 = vadd.f32 %v10273, %v10620
      %v10708 = vadd.f32 %v10274, %v10623
      %v10709 = vadd.f32 %v10275, %v10628
      %v10710 = vadd.f32 %v10276, %v10631
      %v10711 = vadd.f32 %v10277, %v10636
      %v10712 = vadd.f32 %v10278, %v10639
      %v10713 = vadd.f32 %v10279, %v10644
      %v10714 = vadd.f32 %v10280, %v10647
      %v10715 = vadd.f32 %v10281, %v10652
      %v10716 = vadd.f32 %v10282, %v10655
      %v10717 = vadd.f32 %v10283, %v10660
      %v10718 = vadd.f32 %v10284, %v10663
      %v10719 = vadd.f32 %v10285, %v10668
      %v10720 = vadd.f32 %v10286, %v10671
      %v10721 = vadd.f32 %v10287, %v10676
      %v10722 = vld [vmem:[%s9] sm:$0x1]
      %v10724 = vlaneseq
      %v10725 = vshrl.u32 %v10724, 7
      %v10726 = vsub.s32 0, %v10725
      %v10727 = vrot.slane %v10722, %v10726
      %v10729 = vmul.f32 %v10681, %v10727
      %v10730 = vmul.f32 %v10682, %v10727
      %v10731 = vmul.f32 %v10683, %v10727
      %v10732 = vmul.f32 %v10684, %v10727
      %v10733 = vmul.f32 %v10685, %v10727
      %v10734 = vmul.f32 %v10686, %v10727
      %v10735 = vmul.f32 %v10687, %v10727
      %v10736 = vmul.f32 %v10688, %v10727
      %v10737 = vmul.f32 %v10689, %v10727
      %v10738 = vmul.f32 %v10690, %v10727
      %v10739 = vmul.f32 %v10691, %v10727
      %v10740 = vmul.f32 %v10692, %v10727
      %v10741 = vmul.f32 %v10693, %v10727
      %v10742 = vmul.f32 %v10694, %v10727
      %v10743 = vmul.f32 %v10695, %v10727
      %v10744 = vmul.f32 %v10696, %v10727
      %v10745 = vmul.f32 %v10697, %v10727
      %v10746 = vmul.f32 %v10698, %v10727
      %v10747 = vmul.f32 %v10699, %v10727
      %v10748 = vmul.f32 %v10700, %v10727
      %v10749 = vmul.f32 %v10701, %v10727
      %v10750 = vmul.f32 %v10702, %v10727
      %v10751 = vmul.f32 %v10703, %v10727
      %v10752 = vmul.f32 %v10704, %v10727
      %v10753 = vmul.f32 %v10705, %v10727
      %v10754 = vmul.f32 %v10706, %v10727
      %v10755 = vmul.f32 %v10707, %v10727
      %v10756 = vmul.f32 %v10708, %v10727
      %v10757 = vmul.f32 %v10709, %v10727
      %v10758 = vmul.f32 %v10710, %v10727
      %v10759 = vmul.f32 %v10711, %v10727
      %v10760 = vmul.f32 %v10712, %v10727
      %v10761 = vmul.f32 %v10713, %v10727
      %v10762 = vmul.f32 %v10714, %v10727
      %v10763 = vmul.f32 %v10715, %v10727
      %v10764 = vmul.f32 %v10716, %v10727
      %v10765 = vmul.f32 %v10717, %v10727
      %v10766 = vmul.f32 %v10718, %v10727
      %v10767 = vmul.f32 %v10719, %v10727
      %v10768 = vmul.f32 %v10720, %v10727
      %v10769 = vmul.f32 %v10721, %v10727
      %v10770 = vld [vmem:[%s10] sm:$0x1]
      %v10772 = vlaneseq
      %v10773 = vshrl.u32 %v10772, 7
      %v10774 = vsub.s32 0, %v10773
      %v10775 = vrot.slane %v10770, %v10774
      %v10777 = vadd.f32 %v10729, %v10775
      %v10778 = vadd.f32 %v10730, %v10775
      %v10779 = vadd.f32 %v10731, %v10775
      %v10780 = vadd.f32 %v10732, %v10775
      %v10781 = vadd.f32 %v10733, %v10775
      %v10782 = vadd.f32 %v10734, %v10775
      %v10783 = vadd.f32 %v10735, %v10775
      %v10784 = vadd.f32 %v10736, %v10775
      %v10785 = vadd.f32 %v10737, %v10775
      %v10786 = vadd.f32 %v10738, %v10775
      %v10787 = vadd.f32 %v10739, %v10775
      %v10788 = vadd.f32 %v10740, %v10775
      %v10789 = vadd.f32 %v10741, %v10775
      %v10790 = vadd.f32 %v10742, %v10775
      %v10791 = vadd.f32 %v10743, %v10775
      %v10792 = vadd.f32 %v10744, %v10775
      %v10793 = vadd.f32 %v10745, %v10775
      %v10794 = vadd.f32 %v10746, %v10775
      %v10795 = vadd.f32 %v10747, %v10775
      %v10796 = vadd.f32 %v10748, %v10775
      %v10797 = vadd.f32 %v10749, %v10775
      %v10798 = vadd.f32 %v10750, %v10775
      %v10799 = vadd.f32 %v10751, %v10775
      %v10800 = vadd.f32 %v10752, %v10775
      %v10801 = vadd.f32 %v10753, %v10775
      %v10802 = vadd.f32 %v10754, %v10775
      %v10803 = vadd.f32 %v10755, %v10775
      %v10804 = vadd.f32 %v10756, %v10775
      %v10805 = vadd.f32 %v10757, %v10775
      %v10806 = vadd.f32 %v10758, %v10775
      %v10807 = vadd.f32 %v10759, %v10775
      %v10808 = vadd.f32 %v10760, %v10775
      %v10809 = vadd.f32 %v10761, %v10775
      %v10810 = vadd.f32 %v10762, %v10775
      %v10811 = vadd.f32 %v10763, %v10775
      %v10812 = vadd.f32 %v10764, %v10775
      %v10813 = vadd.f32 %v10765, %v10775
      %v10814 = vadd.f32 %v10766, %v10775
      %v10815 = vadd.f32 %v10767, %v10775
      %v10816 = vadd.f32 %v10768, %v10775
      %v10817 = vadd.f32 %v10769, %v10775
      %v10818 = vmax.f32 %v10777, 0.0
      %v10819 = vmax.f32 %v10778, 0.0
      %v10820 = vmax.f32 %v10779, 0.0
      %v10821 = vmax.f32 %v10780, 0.0
      %v10822 = vmax.f32 %v10781, 0.0
      %v10823 = vmax.f32 %v10782, 0.0
      %v10824 = vmax.f32 %v10783, 0.0
      %v10825 = vmax.f32 %v10784, 0.0
      %v10826 = vmax.f32 %v10785, 0.0
      %v10827 = vmax.f32 %v10786, 0.0
      %v10828 = vmax.f32 %v10787, 0.0
      %v10829 = vmax.f32 %v10788, 0.0
      %v10830 = vmax.f32 %v10789, 0.0
      %v10831 = vmax.f32 %v10790, 0.0
      %v10832 = vmax.f32 %v10791, 0.0
      %v10833 = vmax.f32 %v10792, 0.0
      %v10834 = vmax.f32 %v10793, 0.0
      %v10835 = vmax.f32 %v10794, 0.0
      %v10836 = vmax.f32 %v10795, 0.0
      %v10837 = vmax.f32 %v10796, 0.0
      %v10838 = vmax.f32 %v10797, 0.0
      %v10839 = vmax.f32 %v10798, 0.0
      %v10840 = vmax.f32 %v10799, 0.0
      %v10841 = vmax.f32 %v10800, 0.0
      %v10842 = vmax.f32 %v10801, 0.0
      %v10843 = vmax.f32 %v10802, 0.0
      %v10844 = vmax.f32 %v10803, 0.0
      %v10845 = vmax.f32 %v10804, 0.0
      %v10846 = vmax.f32 %v10805, 0.0
      %v10847 = vmax.f32 %v10806, 0.0
      %v10848 = vmax.f32 %v10807, 0.0
      %v10849 = vmax.f32 %v10808, 0.0
      %v10850 = vmax.f32 %v10809, 0.0
      %v10851 = vmax.f32 %v10810, 0.0
      %v10852 = vmax.f32 %v10811, 0.0
      %v10853 = vmax.f32 %v10812, 0.0
      %v10854 = vmax.f32 %v10813, 0.0
      %v10855 = vmax.f32 %v10814, 0.0
      %v10856 = vmax.f32 %v10815, 0.0
      %v10857 = vmax.f32 %v10816, 0.0
      %v10858 = vmax.f32 %v10817, 0.0
      %v10859 = vpack.c.bf16 %v10819, %v10818
      %v10860 = vpack.c.bf16 %v10821, %v10820
      %v10861 = vpack.c.bf16 %v10823, %v10822
      %v10862 = vpack.c.bf16 %v10825, %v10824
      %v10863 = vpack.c.bf16 %v10827, %v10826
      %v10864 = vpack.c.bf16 %v10829, %v10828
      %v10865 = vpack.c.bf16 %v10831, %v10830
      %v10866 = vpack.c.bf16 %v10833, %v10832
      %v10867 = vpack.c.bf16 %v10835, %v10834
      %v10868 = vpack.c.bf16 %v10837, %v10836
      %v10869 = vpack.c.bf16 %v10839, %v10838
      %v10870 = vpack.c.bf16 %v10841, %v10840
      %v10871 = vpack.c.bf16 %v10843, %v10842
      %v10872 = vpack.c.bf16 %v10845, %v10844
      %v10873 = vpack.c.bf16 %v10847, %v10846
      %v10874 = vpack.c.bf16 %v10849, %v10848
      %v10875 = vpack.c.bf16 %v10851, %v10850
      %v10876 = vpack.c.bf16 %v10853, %v10852
      %v10877 = vpack.c.bf16 %v10855, %v10854
      %v10878 = vpack.c.bf16 %v10857, %v10856
      %v10879 = vpack.c.bf16 %v10858, %v10858
      %v10880 = vld [vmem:[%s11] sm:$0xf]
      %v10881 = vld [vmem:[%s11 + $0x4] sm:$0xf]
      %v10882 = vld [vmem:[%s11 + $0x8] sm:$0xf]
      %v10883 = vld [vmem:[%s11 + $0xc] sm:$0xf]
      %v10884 = vld [vmem:[%s11 + $0x10] sm:$0xf]
      %v10885 = vld [vmem:[%s11 + $0x14] sm:$0xf]
      %v10886 = vld [vmem:[%s11 + $0x18] sm:$0xf]
      %v10887 = vld [vmem:[%s11 + $0x1c] sm:$0xf]
      %v10888 = vld [vmem:[%s12] sm:$0x1]
      %v10890 = vlaneseq
      %v10891 = vshrl.u32 %v10890, 7
      %v10892 = vsub.s32 0, %v10891
      %v10893 = vrot.slane %v10888, %v10892
      %v10903 = vunpack.c.l.b16 %v10880
      %v10904 = vunpack.c.l.b16 %v10881
      %v10905 = vunpack.c.l.b16 %v10882
      %v10906 = vunpack.c.l.b16 %v10883
      %v10907 = vunpack.c.l.b16 %v10884
      %v10908 = vunpack.c.l.b16 %v10885
      %v10909 = vunpack.c.l.b16 %v10886
      %v10910 = vunpack.c.l.b16 %v10887
      %v10911 = vpack.c.b16 %v10904, %v10903
      %v10912 = vpack.c.b16 %v10906, %v10905
      %v10913 = vpack.c.b16 %v10908, %v10907
      %v10914 = vpack.c.b16 %v10910, %v10909
      %v10920 = vsel %vm1788, %v10859, 0
      %v10923 = vsel %vm1788, %v10860, 0
      %v10926 = vsel %vm1788, %v10861, 0
      %v10929 = vsel %vm1788, %v10862, 0
      %v10932 = vsel %vm1788, %v10863, 0
      %v10935 = vsel %vm1788, %v10864, 0
      %v10938 = vsel %vm1788, %v10865, 0
      %v10941 = vsel %vm1788, %v10866, 0
      %v10944 = vsel %vm1788, %v10867, 0
      %v10947 = vsel %vm1788, %v10868, 0
      %v10950 = vsel %vm1788, %v10869, 0
      %v10953 = vsel %vm1788, %v10870, 0
      %v10956 = vsel %vm1788, %v10871, 0
      %v10959 = vsel %vm1788, %v10872, 0
      %v10962 = vsel %vm1788, %v10873, 0
      %v10965 = vsel %vm1788, %v10874, 0
      %v10968 = vsel %vm1788, %v10875, 0
      %v10971 = vsel %vm1788, %v10876, 0
      %v10974 = vsel %vm1788, %v10877, 0
      %v10977 = vsel %vm1788, %v10878, 0
      %v10980 = vsel %vm1788, %v10879, 0
      %10982 = vmatprep.subr.bf16.mxu0 0
      %10983 = vmatpush1.bf16.msra.mxu0 0
      %10984 = vmatprep.subr.bf16.mxu0 0
      %10985 = vmatpush1.bf16.msra.mxu0 0
      %10986 = vmatprep.subr.bf16.mxu0 0
      %10987 = vmatpush1.bf16.msra.mxu0 0
      %10988 = vmatprep.subr.bf16.mxu0 0
      %10989 = vmatpush1.bf16.msra.mxu0 0
      %10990 = vmatprep.subr.bf16.mxu0 0
      %10991 = vmatpush1.bf16.msra.mxu0 %v10914
      %10992 = vmatprep.subr.bf16.mxu0 0
      %10993 = vmatpush1.bf16.msra.mxu0 %v10913
      %10994 = vmatprep.subr.bf16.mxu0 0
      %10995 = vmatpush1.bf16.msra.mxu0 %v10912
      %10996 = vmatprep.subr.bf16.mxu0 0
      %10997 = vmatpush1.bf16.msra.mxu0 %v10911
      %10998 = vmatprep.subr.bf16.mxu0 0
      %10999 = vmatpush2.bf16.msra.mxu0 0
      %11000 = vmatprep.subr.bf16.mxu0 0
      %11001 = vmatpush2.bf16.msra.mxu0 0
      %11002 = vmatprep.subr.bf16.mxu0 0
      %11003 = vmatpush2.bf16.msra.mxu0 0
      %11004 = vmatprep.subr.bf16.mxu0 0
      %11005 = vmatpush2.bf16.msra.mxu0 0
      %11006 = vmatprep.subr.bf16.mxu0 0
      %11007 = vmatpush2.bf16.msra.mxu0 0
      %11008 = vmatprep.subr.bf16.mxu0 0
      %11009 = vmatpush2.bf16.msra.mxu0 0
      %11010 = vmatprep.subr.bf16.mxu0 0
      %11011 = vmatpush2.bf16.msra.mxu0 0
      %11012 = vmatprep.subr.bf16.mxu0 0
      %11013 = vmatpush2.bf16.msra.mxu0 0
      %11014 = vmatprep.mubr.bf16.mxu0 0
      %11015 = vmatmul.mubr.bf16.gmra.mxu0 %v10920
      %v11016 = vpop.f32.mrf.mxu0
      %v11017 = vadd.f32 %v10893, %v11016
      %v11018 = vpop.f32.mrf.mxu0
      %v11019 = vpop.f32.mrf.mxu0
      %v11020 = vadd.f32 %v10893, %v11019
      %v11021 = vpop.f32.mrf.mxu0
      %11022 = vmatprep.mubr.bf16.mxu0 0
      %11023 = vmatmul.mubr.bf16.gmra.mxu0 %v10923
      %v11024 = vpop.f32.mrf.mxu0
      %v11025 = vadd.f32 %v10893, %v11024
      %v11026 = vpop.f32.mrf.mxu0
      %v11027 = vpop.f32.mrf.mxu0
      %v11028 = vadd.f32 %v10893, %v11027
      %v11029 = vpop.f32.mrf.mxu0
      %11030 = vmatprep.mubr.bf16.mxu0 0
      %11031 = vmatmul.mubr.bf16.gmra.mxu0 %v10926
      %v11032 = vpop.f32.mrf.mxu0
      %v11033 = vadd.f32 %v10893, %v11032
      %v11034 = vpop.f32.mrf.mxu0
      %v11035 = vpop.f32.mrf.mxu0
      %v11036 = vadd.f32 %v10893, %v11035
      %v11037 = vpop.f32.mrf.mxu0
      %11038 = vmatprep.mubr.bf16.mxu0 0
      %11039 = vmatmul.mubr.bf16.gmra.mxu0 %v10929
      %v11040 = vpop.f32.mrf.mxu0
      %v11041 = vadd.f32 %v10893, %v11040
      %v11042 = vpop.f32.mrf.mxu0
      %v11043 = vpop.f32.mrf.mxu0
      %v11044 = vadd.f32 %v10893, %v11043
      %v11045 = vpop.f32.mrf.mxu0
      %11046 = vmatprep.mubr.bf16.mxu0 0
      %11047 = vmatmul.mubr.bf16.gmra.mxu0 %v10932
      %v11048 = vpop.f32.mrf.mxu0
      %v11049 = vadd.f32 %v10893, %v11048
      %v11050 = vpop.f32.mrf.mxu0
      %v11051 = vpop.f32.mrf.mxu0
      %v11052 = vadd.f32 %v10893, %v11051
      %v11053 = vpop.f32.mrf.mxu0
      %11054 = vmatprep.mubr.bf16.mxu0 0
      %11055 = vmatmul.mubr.bf16.gmra.mxu0 %v10935
      %v11056 = vpop.f32.mrf.mxu0
      %v11057 = vadd.f32 %v10893, %v11056
      %v11058 = vpop.f32.mrf.mxu0
      %v11059 = vpop.f32.mrf.mxu0
      %v11060 = vadd.f32 %v10893, %v11059
      %v11061 = vpop.f32.mrf.mxu0
      %11062 = vmatprep.mubr.bf16.mxu0 0
      %11063 = vmatmul.mubr.bf16.gmra.mxu0 %v10938
      %v11064 = vpop.f32.mrf.mxu0
      %v11065 = vadd.f32 %v10893, %v11064
      %v11066 = vpop.f32.mrf.mxu0
      %v11067 = vpop.f32.mrf.mxu0
      %v11068 = vadd.f32 %v10893, %v11067
      %v11069 = vpop.f32.mrf.mxu0
      %11070 = vmatprep.mubr.bf16.mxu0 0
      %11071 = vmatmul.mubr.bf16.gmra.mxu0 %v10941
      %v11072 = vpop.f32.mrf.mxu0
      %v11073 = vadd.f32 %v10893, %v11072
      %v11074 = vpop.f32.mrf.mxu0
      %v11075 = vpop.f32.mrf.mxu0
      %v11076 = vadd.f32 %v10893, %v11075
      %v11077 = vpop.f32.mrf.mxu0
      %11078 = vmatprep.mubr.bf16.mxu0 0
      %11079 = vmatmul.mubr.bf16.gmra.mxu0 %v10944
      %v11080 = vpop.f32.mrf.mxu0
      %v11081 = vadd.f32 %v10893, %v11080
      %v11082 = vpop.f32.mrf.mxu0
      %v11083 = vpop.f32.mrf.mxu0
      %v11084 = vadd.f32 %v10893, %v11083
      %v11085 = vpop.f32.mrf.mxu0
      %11086 = vmatprep.mubr.bf16.mxu0 0
      %11087 = vmatmul.mubr.bf16.gmra.mxu0 %v10947
      %v11088 = vpop.f32.mrf.mxu0
      %v11089 = vadd.f32 %v10893, %v11088
      %v11090 = vpop.f32.mrf.mxu0
      %v11091 = vpop.f32.mrf.mxu0
      %v11092 = vadd.f32 %v10893, %v11091
      %v11093 = vpop.f32.mrf.mxu0
      %11094 = vmatprep.mubr.bf16.mxu0 0
      %11095 = vmatmul.mubr.bf16.gmra.mxu0 %v10950
      %v11096 = vpop.f32.mrf.mxu0
      %v11097 = vadd.f32 %v10893, %v11096
      %v11098 = vpop.f32.mrf.mxu0
      %v11099 = vpop.f32.mrf.mxu0
      %v11100 = vadd.f32 %v10893, %v11099
      %v11101 = vpop.f32.mrf.mxu0
      %11102 = vmatprep.mubr.bf16.mxu0 0
      %11103 = vmatmul.mubr.bf16.gmra.mxu0 %v10953
      %v11104 = vpop.f32.mrf.mxu0
      %v11105 = vadd.f32 %v10893, %v11104
      %v11106 = vpop.f32.mrf.mxu0
      %v11107 = vpop.f32.mrf.mxu0
      %v11108 = vadd.f32 %v10893, %v11107
      %v11109 = vpop.f32.mrf.mxu0
      %11110 = vmatprep.mubr.bf16.mxu0 0
      %11111 = vmatmul.mubr.bf16.gmra.mxu0 %v10956
      %v11112 = vpop.f32.mrf.mxu0
      %v11113 = vadd.f32 %v10893, %v11112
      %v11114 = vpop.f32.mrf.mxu0
      %v11115 = vpop.f32.mrf.mxu0
      %v11116 = vadd.f32 %v10893, %v11115
      %v11117 = vpop.f32.mrf.mxu0
      %11118 = vmatprep.mubr.bf16.mxu0 0
      %11119 = vmatmul.mubr.bf16.gmra.mxu0 %v10959
      %v11120 = vpop.f32.mrf.mxu0
      %v11121 = vadd.f32 %v10893, %v11120
      %v11122 = vpop.f32.mrf.mxu0
      %v11123 = vpop.f32.mrf.mxu0
      %v11124 = vadd.f32 %v10893, %v11123
      %v11125 = vpop.f32.mrf.mxu0
      %11126 = vmatprep.mubr.bf16.mxu0 0
      %11127 = vmatmul.mubr.bf16.gmra.mxu0 %v10962
      %v11128 = vpop.f32.mrf.mxu0
      %v11129 = vadd.f32 %v10893, %v11128
      %v11130 = vpop.f32.mrf.mxu0
      %v11131 = vpop.f32.mrf.mxu0
      %v11132 = vadd.f32 %v10893, %v11131
      %v11133 = vpop.f32.mrf.mxu0
      %11134 = vmatprep.mubr.bf16.mxu0 0
      %11135 = vmatmul.mubr.bf16.gmra.mxu0 %v10965
      %v11136 = vpop.f32.mrf.mxu0
      %v11137 = vadd.f32 %v10893, %v11136
      %v11138 = vpop.f32.mrf.mxu0
      %v11139 = vpop.f32.mrf.mxu0
      %v11140 = vadd.f32 %v10893, %v11139
      %v11141 = vpop.f32.mrf.mxu0
      %11142 = vmatprep.mubr.bf16.mxu0 0
      %11143 = vmatmul.mubr.bf16.gmra.mxu0 %v10968
      %v11144 = vpop.f32.mrf.mxu0
      %v11145 = vadd.f32 %v10893, %v11144
      %v11146 = vpop.f32.mrf.mxu0
      %v11147 = vpop.f32.mrf.mxu0
      %v11148 = vadd.f32 %v10893, %v11147
      %v11149 = vpop.f32.mrf.mxu0
      %11150 = vmatprep.mubr.bf16.mxu0 0
      %11151 = vmatmul.mubr.bf16.gmra.mxu0 %v10971
      %v11152 = vpop.f32.mrf.mxu0
      %v11153 = vadd.f32 %v10893, %v11152
      %v11154 = vpop.f32.mrf.mxu0
      %v11155 = vpop.f32.mrf.mxu0
      %v11156 = vadd.f32 %v10893, %v11155
      %v11157 = vpop.f32.mrf.mxu0
      %11158 = vmatprep.mubr.bf16.mxu0 0
      %11159 = vmatmul.mubr.bf16.gmra.mxu0 %v10974
      %v11160 = vpop.f32.mrf.mxu0
      %v11161 = vadd.f32 %v10893, %v11160
      %v11162 = vpop.f32.mrf.mxu0
      %v11163 = vpop.f32.mrf.mxu0
      %v11164 = vadd.f32 %v10893, %v11163
      %v11165 = vpop.f32.mrf.mxu0
      %11166 = vmatprep.mubr.bf16.mxu0 0
      %11167 = vmatmul.mubr.bf16.gmra.mxu0 %v10977
      %v11168 = vpop.f32.mrf.mxu0
      %v11169 = vadd.f32 %v10893, %v11168
      %v11170 = vpop.f32.mrf.mxu0
      %v11171 = vpop.f32.mrf.mxu0
      %v11172 = vadd.f32 %v10893, %v11171
      %v11173 = vpop.f32.mrf.mxu0
      %11174 = vmatprep.mubr.bf16.mxu0 0
      %11175 = vmatmul.mubr.bf16.gmra.mxu0 %v10980
      %v11176 = vpop.f32.mrf.mxu0
      %v11177 = vadd.f32 %v10893, %v11176
      %v11178 = vpop.f32.mrf.mxu0
      %v11179 = vpop.f32.mrf.mxu0
      %v11180 = vpop.f32.mrf.mxu0
      %11181 = vdwg.mxu0
      %11182 = vst [vmem:[%s440] sm:$0xff] %v11017
      %11183 = vst [vmem:[%s440 + $0x8] sm:$0xff] %v11020
      %11184 = vst [vmem:[%s440 + $0x10] sm:$0xff] %v11025
      %11185 = vst [vmem:[%s440 + $0x18] sm:$0xff] %v11028
      %11186 = vst [vmem:[%s440 + $0x20] sm:$0xff] %v11033
      %11187 = vst [vmem:[%s440 + $0x28] sm:$0xff] %v11036
      %11188 = vst [vmem:[%s440 + $0x30] sm:$0xff] %v11041
      %11189 = vst [vmem:[%s440 + $0x38] sm:$0xff] %v11044
      %11190 = vst [vmem:[%s440 + $0x40] sm:$0xff] %v11049
      %11191 = vst [vmem:[%s440 + $0x48] sm:$0xff] %v11052
      %11192 = vst [vmem:[%s440 + $0x50] sm:$0xff] %v11057
      %11193 = vst [vmem:[%s440 + $0x58] sm:$0xff] %v11060
      %11194 = vst [vmem:[%s440 + $0x60] sm:$0xff] %v11065
      %11195 = vst [vmem:[%s440 + $0x68] sm:$0xff] %v11068
      %11196 = vst [vmem:[%s440 + $0x70] sm:$0xff] %v11073
      %11197 = vst [vmem:[%s440 + $0x78] sm:$0xff] %v11076
      %11198 = vst [vmem:[%s440 + $0x80] sm:$0xff] %v11081
      %11199 = vst [vmem:[%s440 + $0x88] sm:$0xff] %v11084
      %11200 = vst [vmem:[%s440 + $0x90] sm:$0xff] %v11089
      %11201 = vst [vmem:[%s440 + $0x98] sm:$0xff] %v11092
      %11202 = vst [vmem:[%s440 + $0xa0] sm:$0xff] %v11097
      %11203 = vst [vmem:[%s440 + $0xa8] sm:$0xff] %v11100
      %11204 = vst [vmem:[%s440 + $0xb0] sm:$0xff] %v11105
      %11205 = vst [vmem:[%s440 + $0xb8] sm:$0xff] %v11108
      %11206 = vst [vmem:[%s440 + $0xc0] sm:$0xff] %v11113
      %11207 = vst [vmem:[%s440 + $0xc8] sm:$0xff] %v11116
      %11208 = vst [vmem:[%s440 + $0xd0] sm:$0xff] %v11121
      %11209 = vst [vmem:[%s440 + $0xd8] sm:$0xff] %v11124
      %11210 = vst [vmem:[%s440 + $0xe0] sm:$0xff] %v11129
      %11211 = vst [vmem:[%s440 + $0xe8] sm:$0xff] %v11132
      %11212 = vst [vmem:[%s440 + $0xf0] sm:$0xff] %v11137
      %11213 = vst [vmem:[%s440 + $0xf8] sm:$0xff] %v11140
      %11214 = vst [vmem:[%s440 + $0x100] sm:$0xff] %v11145
      %11215 = vst [vmem:[%s440 + $0x108] sm:$0xff] %v11148
      %11216 = vst [vmem:[%s440 + $0x110] sm:$0xff] %v11153
      %11217 = vst [vmem:[%s440 + $0x118] sm:$0xff] %v11156
      %11218 = vst [vmem:[%s440 + $0x120] sm:$0xff] %v11161
      %11219 = vst [vmem:[%s440 + $0x128] sm:$0xff] %v11164
      %11220 = vst [vmem:[%s440 + $0x130] sm:$0xff] %v11169
      %11221 = vst [vmem:[%s440 + $0x138] sm:$0xff] %v11172
      %11222 = vst [vmem:[%s440 + $0x140] sm:$0xf] %v11177
      %p11223 = scmp.lt.s32.totalorder %s24, 1
      %s11224 = scalar_select %p11223, %s24, 1
      %s11225 = smul.addr %s11224, 41
      %s11226 = smul.addr %s11225, 8
      %s11227 = scalar_lea.vmem %s13, %s11226
      // Predicated region
      $region73: #{small_object_head_forward.1} parent=71 // pred_check
        %p11228 = pneg %p320
      $region74: #{small_object_head_forward.1} parent=71 // pred_check_branch
        %11230 = sbr.rel (%p11228) target = $region76
      $region75: #{small_object_head_forward.1} parent=71 // pred_region
        _
      $region76: #{small_object_head_forward.1} parent=71 // pred_fallthru
        _
    $region72: #{small_object_head_forward.1} parent=5 // pred_fallthru
      _
    %p11231 = scmp.le.s32.totalorder 2, %s19
    // Predicated region
    $region77: #{small_object_head_forward.1} parent=5 // pred_check
      %p11232 = pneg %p11231
    $region78: #{small_object_head_forward.1} parent=5 // pred_check_branch
      %11234 = sbr.rel (%p11232) target = $region80
    $region79: #{small_object_head_forward.1} parent=5 // pred_region
      %s11235 = ssub.s32 %s19, 2
      // Predicated region
      $region81: #{small_object_head_forward.1} parent=79 // pred_check
        %p11236 = pneg %p326
      $region82: #{small_object_head_forward.1} parent=79 // pred_check_branch
        %11238 = sbr.rel (%p11236) target = $region84
      $region83: #{small_object_head_forward.1} parent=79 // pred_region
        %p11239 = scmp.lt.s32.totalorder %s25, 1
        %s11240 = scalar_select %p11239, %s25, 1
        %s11241 = smul.addr %s11240, 41
        %s11242 = smul.addr %s11241, 8
        %s11243 = scalar_lea.vmem %s13, %s11242
      $region84: #{small_object_head_forward.1} parent=79 // pred_fallthru
        _
    $region80: #{small_object_head_forward.1} parent=5 // pred_fallthru
      _
  $region6: #{small_object_head_forward.1} parent=0 // loop_footer
    %s23 = sadd.s32 1, %s19
  $region7: #{small_object_head_forward.1} parent=0 // loop_footer_branch
    %18 = sbr.rel target = $region3
  $region8: #{small_object_head_forward.1} parent=0 // loop_exit
    _

</llo_original>
